<compile_context>
chip_gen: v7x
topology: tpu7x:2x2x1
jax: 0.10.0
libtpu: 0.0.40
codegen_flags: <defaults>
</compile_context>

<pallas_src>
import functools

import jax
import jax.numpy as jnp
from jax.experimental import pallas as pl
from jax.experimental.pallas import tpu as pltpu

INPUT_DIM = 1
HIDDEN_DIM = 200
NUM_LAYERS = 2
OUTPUT_DIM = 1
SEQ_LEN = 100          # hard-coded by the PyTorch forward: x.view(-1, 100, 1)

HP = 256               # hidden dim padded to a lane/MXU-friendly multiple of 128
G4 = 4 * HP            # 4 concatenated gates (PyTorch order i, f, g, o)

# MXU operand dtype (accumulation is always f32 via preferred_element_type).
MATMUL_DTYPE = jnp.bfloat16


def _sigmoid(x):
    # sigmoid(x) == 0.5 * tanh(0.5*x) + 0.5 : one EUP push instead of exp+recip.
    return 0.5 * jnp.tanh(0.5 * x) + 0.5


# ------------------------------ fused kernel --------------------------------
def _lstm_fused_kernel(x_ref, wih0_ref, b0_ref, whh0_ref, w1_ref, b1_ref,
                       fcw_ref, fcb_ref, out_ref,
                       proj_ref, h01_sc, c0_sc, c1_sc, *, T, B_pad):
    """Whole-model forward; everything VMEM-resident.

      x_ref    : (T*B_pad, 1)   f32   time-major input values
      wih0_ref : (1, G4)        f32   layer-0 input weights (gate-concat, padded)
      b0_ref   : (1, G4)        f32   layer-0 combined bias (b_ih + b_hh)
      whh0_ref : (HP, G4)       bf16  layer-0 recurrent weights (pre-cast)
      w1_ref   : (2*HP, G4)     bf16  [W_ih_1 ; W_hh_1] stacked (pre-cast)
      b1_ref   : (B_pad, G4)    f32   layer-1 combined bias (pre-broadcast)
      fcw_ref  : (HP, 1) f32, fcb_ref : (1, 1) f32
      out_ref  : (B_pad, 1) f32
      proj_ref : scratch (T*B_pad, G4)  hoisted layer-0 gate pre-activations
      h01_sc   : scratch (B_pad, 2*HP)  [h_layer0 | h_layer1]
      c0_sc,c1_sc : scratch (B_pad, HP) cell states
    """
    # ---- hoisted layer-0 input projection for ALL timesteps (D_in == 1 =>
    #      a single broadcast multiply; bias folded in).  Off the serial path. ----
    proj_ref[...] = x_ref[...] * wih0_ref[...] + b0_ref[...]

    h01_sc[...] = jnp.zeros_like(h01_sc)
    c0_sc[...] = jnp.zeros_like(c0_sc)
    c1_sc[...] = jnp.zeros_like(c1_sc)

    def lstm_cell(gates, c_prev):
        i_g = _sigmoid(gates[:, 0 * HP:1 * HP])
        f_g = _sigmoid(gates[:, 1 * HP:2 * HP])
        g_g = jnp.tanh(gates[:, 2 * HP:3 * HP])
        o_g = _sigmoid(gates[:, 3 * HP:4 * HP])
        c_new = f_g * c_prev + i_g * g_g
        h_new = o_g * jnp.tanh(c_new)
        return h_new, c_new

    # ---- prologue: layer-0 step for t = 0 (h0_{-1} == 0 => no matmul). ----
    h0_new, c0_new = lstm_cell(proj_ref[pl.ds(0, B_pad), :], c0_sc[...])
    c0_sc[...] = c0_new
    h01_sc[:, :HP] = h0_new

    # ---- interleaved recurrence: combined step t (1..T) updates layer 0 at
    #      time t and layer 1 at time t-1 -> two independent MXU chains/step.
    #      At t == T the layer-0 half is spurious but provably dead (h0_T is
    #      never consumed), which keeps the loop body branch-free. ----
    def one_step(t):
        h_prev = h01_sc[...]                        # [h0_{t-1} | h1_{t-2}], f32
        h_prev_m = h_prev.astype(MATMUL_DTYPE)      # only per-step cast (8x512)
        row = pl.multiple_of(jnp.minimum(t, T - 1) * B_pad, B_pad)
        g0 = jnp.dot(h_prev_m[:, :HP], whh0_ref[...],
                     preferred_element_type=jnp.float32)
        g0 = g0 + proj_ref[pl.ds(row, B_pad), :]
        g1 = jnp.dot(h_prev_m, w1_ref[...],
                     preferred_element_type=jnp.float32) + b1_ref[...]
        h0_n, c0_n = lstm_cell(g0, c0_sc[...])      # layer 0, time t
        h1_n, c1_n = lstm_cell(g1, c1_sc[...])      # layer 1, time t-1
        c0_sc[...] = c0_n
        c1_sc[...] = c1_n
        h01_sc[:, :HP] = h0_n
        h01_sc[:, HP:] = h1_n

    def pair(k, carry):                             # manual 2x unroll
        one_step(2 * k + 1)
        one_step(2 * k + 2)
        return carry

    jax.lax.fori_loop(0, T // 2, pair, 0)
    # TODO(synk): nn.LSTM dropout=0.2 between layers is train-mode only; inference => identity.

    # ---- fused final Linear on the last layer-1 hidden state. ----
    out_ref[...] = jnp.dot(h01_sc[:, HP:], fcw_ref[...],
                           preferred_element_type=jnp.float32) + fcb_ref[...]


def _lstm_fused_call(x_flat, p, T, B_pad):
    assert T % 2 == 0, "pairwise-unrolled recurrence assumes an even seq_len"
    b1_b = jnp.broadcast_to(p["b_1"], (B_pad, G4))   # hoisted out of the loop
    kernel = functools.partial(_lstm_fused_kernel, T=T, B_pad=B_pad)
    vmem = pl.BlockSpec(memory_space=pltpu.MemorySpace.VMEM)  # whole array in VMEM
    return pl.pallas_call(
        kernel,
        out_shape=jax.ShapeDtypeStruct((B_pad, OUTPUT_DIM), jnp.float32),
        in_specs=[vmem] * 8,
        out_specs=vmem,
        scratch_shapes=[
            pltpu.VMEM((T * B_pad, G4), jnp.float32),   # layer-0 gate pre-acts
            pltpu.VMEM((B_pad, 2 * HP), jnp.float32),   # [h0 | h1]
            pltpu.VMEM((B_pad, HP), jnp.float32),       # c0
            pltpu.VMEM((B_pad, HP), jnp.float32),       # c1
        ],
    )(x_flat, p["w_ih_0"], p["b_0"], p["w_hh_0"], p["w_1"], b1_b,
      p["fc_w"], p["fc_b"])


# ------------------------------ parameters ----------------------------------
def init_params(key):
    """Unpacked per-gate parameters (used by the pure-JAX reference)."""
    k = 1.0 / jnp.sqrt(jnp.float32(HIDDEN_DIM))   # PyTorch LSTM/Linear init scale
    params = {}
    d_in = INPUT_DIM
    for layer in range(NUM_LAYERS):
        key, k1, k2, k3 = jax.random.split(key, 4)
        params[f"w_ih_{layer}"] = jax.random.uniform(
            k1, (4, d_in, HIDDEN_DIM), jnp.float32, -k, k)
        params[f"w_hh_{layer}"] = jax.random.uniform(
            k2, (4, HIDDEN_DIM, HIDDEN_DIM), jnp.float32, -k, k)
        # combined bias (b_ih + b_hh); forward semantics identical.
        params[f"b_{layer}"] = jax.random.uniform(
            k3, (4, HIDDEN_DIM), jnp.float32, -2 * k, 2 * k)
        d_in = HIDDEN_DIM
    key, k1, k2 = jax.random.split(key, 3)
    params["fc_w"] = jax.random.uniform(k1, (HIDDEN_DIM, OUTPUT_DIM), jnp.float32, -k, k)
    params["fc_b"] = jax.random.uniform(k2, (1, OUTPUT_DIM), jnp.float32, -k, k)
    return params


def pack_params(params):
    """One-time layout prep: concatenate gates, zero-pad H->HP, pre-cast to bf16."""
    def pack_gate_w(w):                       # (4, Din, H) -> (Din, G4)
        din = w.shape[1]
        out = jnp.zeros((din, G4), jnp.float32)
        for g in range(4):
            out = out.at[:, g * HP:g * HP + HIDDEN_DIM].set(w[g])
        return out

    def pad_rows(w, rows):                    # (Din, :) -> (rows, :)
        return jnp.pad(w, ((0, rows - w.shape[0]), (0, 0)))

    def pack_b(b):                            # (4, H) -> (1, G4)
        out = jnp.zeros((1, G4), jnp.float32)
        for g in range(4):
            out = out.at[0, g * HP:g * HP + HIDDEN_DIM].set(b[g])
        return out

    whh0 = pad_rows(pack_gate_w(params["w_hh_0"]), HP)            # (HP, G4)
    wih1 = pad_rows(pack_gate_w(params["w_ih_1"]), HP)            # (HP, G4)
    whh1 = pad_rows(pack_gate_w(params["w_hh_1"]), HP)            # (HP, G4)
    w1 = jnp.concatenate([wih1, whh1], axis=0)                    # (2*HP, G4)

    return {
        "w_ih_0": pack_gate_w(params["w_ih_0"]),                  # (1, G4)  f32
        "b_0": pack_b(params["b_0"]),                             # (1, G4)  f32
        "w_hh_0": whh0.astype(MATMUL_DTYPE),                      # (HP, G4) bf16
        "w_1": w1.astype(MATMUL_DTYPE),                           # (2HP,G4) bf16
        "b_1": pack_b(params["b_1"]),                             # (1, G4)  f32
        "fc_w": jnp.pad(params["fc_w"], ((0, HP - HIDDEN_DIM), (0, 0))),  # (HP, 1)
        "fc_b": params["fc_b"],                                   # (1, 1)
    }


# ------------------------------ model forward --------------------------------
@jax.jit
def lstm_model_forward(x, packed):
    # Matches: out, _ = lstm(x.view(-1, 100, 1), (h0, c0)); fc(out[:, -1, :]).squeeze()
    x = x.reshape(-1, SEQ_LEN, INPUT_DIM).astype(jnp.float32)    # (B, 100, 1)
    B = x.shape[0]
    B_pad = ((B + 7) // 8) * 8                                   # sublane-align batch
    x_tm = jnp.transpose(x, (1, 0, 2))                           # (T, B, 1)
    x_tm = jnp.pad(x_tm, ((0, 0), (0, B_pad - B), (0, 0)))       # (T, B_pad, 1)
    x_flat = x_tm.reshape(SEQ_LEN * B_pad, INPUT_DIM)            # (T*B_pad, 1)
    out = _lstm_fused_call(x_flat, packed, SEQ_LEN, B_pad)       # (B_pad, 1)
    return jnp.squeeze(out[:B])                                  # (B,)


# ------------------------------ pure-JAX reference ----------------------------
def lstm_model_ref(x, params, matmul_dtype=jnp.float32):
    """matmul_dtype=f32 -> PyTorch-f32 semantics; bf16 -> mirrors the kernel's
    MXU precision policy (bf16 operands, f32 accumulation)."""
    f32 = jnp.float32
    hi = jax.lax.Precision.HIGHEST

    def mm(a, b):
        if matmul_dtype == jnp.float32:
            return jnp.dot(a, b, precision=hi, preferred_element_type=f32)
        return jnp.dot(a.astype(matmul_dtype), b.astype(matmul_dtype),
                       preferred_element_type=f32)

    x = x.reshape(-1, SEQ_LEN, INPUT_DIM).astype(f32)
    h_seq = jnp.transpose(x, (1, 0, 2))                          # (T, B, D)
    B = h_seq.shape[1]
    for layer in range(NUM_LAYERS):
        w_ih = params[f"w_ih_{layer}"]
        w_hh = params[f"w_hh_{layer}"]
        b = params[f"b_{layer}"]
        d_in = w_ih.shape[1]

        def step(carry, x_t, w_ih=w_ih, w_hh=w_hh, b=b, d_in=d_in):
            h, c = carry
            pre = []
            for g in range(4):
                if d_in == 1:          # scalar input: exact f32 (matches kernel)
                    x_term = x_t * w_ih[g][0]
                else:
                    x_term = mm(x_t, w_ih[g])
                pre.append(x_term + mm(h, w_hh[g]) + b[g])
            i = jax.nn.sigmoid(pre[0])
            f = jax.nn.sigmoid(pre[1])
            g_ = jnp.tanh(pre[2])
            o = jax.nn.sigmoid(pre[3])
            c = f * c + i * g_
            h = o * jnp.tanh(c)
            return (h, c), h

        init = (jnp.zeros((B, HIDDEN_DIM), f32), jnp.zeros((B, HIDDEN_DIM), f32))
        _, h_seq = jax.lax.scan(step, init, h_seq)
    h_last = h_seq[-1]
    return jnp.squeeze(jnp.dot(h_last, params["fc_w"], precision=hi)
                       + params["fc_b"])


if __name__ == "__main__":
    key = jax.random.PRNGKey(0)
    key, pkey, xkey = jax.random.split(key, 3)
    params = init_params(pkey)
    packed = pack_params(params)      # one-time layout prep (outside the hot path)

    B = 2
    x = jax.random.normal(xkey, (B, SEQ_LEN, INPUT_DIM), jnp.float32)

    out = jax.block_until_ready(lstm_model_forward(x, packed))
    # reference with the SAME precision policy (bf16 MXU operands, f32 acc):
    ref_policy = jax.block_until_ready(lstm_model_ref(x, params, MATMUL_DTYPE))
    # full-f32 reference (PyTorch-equivalent forward semantics):
    ref_f32 = jax.block_until_ready(lstm_model_ref(x, params, jnp.float32))

    assert out.shape == (B,), out.shape
    assert jnp.allclose(out, ref_policy, atol=5e-3, rtol=5e-3), (out, ref_policy)
    assert jnp.allclose(out, ref_f32, atol=3e-2, rtol=3e-2), (out, ref_f32)

    print("KERNEL_OK")
</pallas_src>

<mosaic_0001>
module attributes {stable_mosaic.version = 11 : i64} {
  func.func @_lstm_fused_kernel(%arg0: memref<800x1xf32, #tpu.memory_space<vmem>>, %arg1: memref<1x1024xf32, #tpu.memory_space<vmem>>, %arg2: memref<1x1024xf32, #tpu.memory_space<vmem>>, %arg3: memref<256x1024xbf16, #tpu.memory_space<vmem>>, %arg4: memref<512x1024xbf16, #tpu.memory_space<vmem>>, %arg5: memref<8x1024xf32, #tpu.memory_space<vmem>>, %arg6: memref<256x1xf32, #tpu.memory_space<vmem>>, %arg7: memref<1x1xf32, #tpu.memory_space<vmem>>, %arg8: memref<8x1xf32, #tpu.memory_space<vmem>>, %arg9: memref<800x1024xf32, #tpu.memory_space<vmem>>, %arg10: memref<8x512xf32, #tpu.memory_space<vmem>>, %arg11: memref<8x256xf32, #tpu.memory_space<vmem>>, %arg12: memref<8x256xf32, #tpu.memory_space<vmem>>) attributes {dimension_semantics = [], scalar_prefetch = 0 : i64, scratch_operands = 4 : i64, tpu.core_type = #tpu.core_type<tc>} {
    %c0 = arith.constant 0 : index
    %c0_0 = arith.constant 0 : index
    %0 = vector.load %arg0[%c0, %c0_0] : memref<800x1xf32, #tpu.memory_space<vmem>>, vector<800x1xf32>
    %c0_1 = arith.constant 0 : index
    %c0_2 = arith.constant 0 : index
    %1 = vector.load %arg1[%c0_1, %c0_2] : memref<1x1024xf32, #tpu.memory_space<vmem>>, vector<1x1024xf32>
    %2 = vector.broadcast %0 : vector<800x1xf32> to vector<800x1024xf32>
    %3 = vector.broadcast %1 : vector<1x1024xf32> to vector<800x1024xf32>
    %4 = arith.mulf %2, %3 : vector<800x1024xf32>
    %c0_3 = arith.constant 0 : index
    %c0_4 = arith.constant 0 : index
    %5 = vector.load %arg2[%c0_3, %c0_4] : memref<1x1024xf32, #tpu.memory_space<vmem>>, vector<1x1024xf32>
    %6 = vector.broadcast %5 : vector<1x1024xf32> to vector<800x1024xf32>
    %7 = arith.addf %4, %6 : vector<800x1024xf32>
    %c0_5 = arith.constant 0 : index
    %c0_6 = arith.constant 0 : index
    %8 = vector.load %arg9[%c0_5, %c0_6] : memref<800x1024xf32, #tpu.memory_space<vmem>>, vector<800x1024xf32>
    tpu.vector_store %arg9[%c0_5, %c0_6], %7 {strides = array<i32>} : memref<800x1024xf32, #tpu.memory_space<vmem>>, vector<800x1024xf32>,
    %cst = arith.constant 0.000000e+00 : f32
    %9 = vector.broadcast %cst : f32 to vector<8x512xf32>
    %c0_7 = arith.constant 0 : index
    %c0_8 = arith.constant 0 : index
    %10 = vector.load %arg10[%c0_7, %c0_8] : memref<8x512xf32, #tpu.memory_space<vmem>>, vector<8x512xf32>
    tpu.vector_store %arg10[%c0_7, %c0_8], %9 {strides = array<i32>} : memref<8x512xf32, #tpu.memory_space<vmem>>, vector<8x512xf32>,
    %cst_9 = arith.constant 0.000000e+00 : f32
    %11 = vector.broadcast %cst_9 : f32 to vector<8x256xf32>
    %c0_10 = arith.constant 0 : index
    %c0_11 = arith.constant 0 : index
    %12 = vector.load %arg11[%c0_10, %c0_11] : memref<8x256xf32, #tpu.memory_space<vmem>>, vector<8x256xf32>
    tpu.vector_store %arg11[%c0_10, %c0_11], %11 {strides = array<i32>} : memref<8x256xf32, #tpu.memory_space<vmem>>, vector<8x256xf32>,
    %cst_12 = arith.constant 0.000000e+00 : f32
    %13 = vector.broadcast %cst_12 : f32 to vector<8x256xf32>
    %c0_13 = arith.constant 0 : index
    %c0_14 = arith.constant 0 : index
    %14 = vector.load %arg12[%c0_13, %c0_14] : memref<8x256xf32, #tpu.memory_space<vmem>>, vector<8x256xf32>
    tpu.vector_store %arg12[%c0_13, %c0_14], %13 {strides = array<i32>} : memref<8x256xf32, #tpu.memory_space<vmem>>, vector<8x256xf32>,
    %c0_15 = arith.constant 0 : index
    %c0_16 = arith.constant 0 : index
    %15 = vector.load %arg9[%c0_15, %c0_16] : memref<800x1024xf32, #tpu.memory_space<vmem>>, vector<8x1024xf32>
    %c0_17 = arith.constant 0 : index
    %c0_18 = arith.constant 0 : index
    %16 = vector.load %arg11[%c0_17, %c0_18] : memref<8x256xf32, #tpu.memory_space<vmem>>, vector<8x256xf32>
    %17 = vector.extract_strided_slice %15 {offsets = [0, 0], sizes = [8, 256], strides = [1, 1]} : vector<8x1024xf32> to vector<8x256xf32>
    %cst_19 = arith.constant 5.000000e-01 : f32
    %18 = vector.broadcast %cst_19 : f32 to vector<8x256xf32>
    %19 = arith.mulf %18, %17 : vector<8x256xf32>
    %20 = math.tanh %19 : vector<8x256xf32>
    %cst_20 = arith.constant 5.000000e-01 : f32
    %21 = vector.broadcast %cst_20 : f32 to vector<8x256xf32>
    %22 = arith.mulf %21, %20 : vector<8x256xf32>
    %cst_21 = arith.constant 5.000000e-01 : f32
    %23 = vector.broadcast %cst_21 : f32 to vector<8x256xf32>
    %24 = arith.addf %22, %23 : vector<8x256xf32>
    %25 = vector.extract_strided_slice %15 {offsets = [0, 256], sizes = [8, 256], strides = [1, 1]} : vector<8x1024xf32> to vector<8x256xf32>
    %cst_22 = arith.constant 5.000000e-01 : f32
    %26 = vector.broadcast %cst_22 : f32 to vector<8x256xf32>
    %27 = arith.mulf %26, %25 : vector<8x256xf32>
    %28 = math.tanh %27 : vector<8x256xf32>
    %cst_23 = arith.constant 5.000000e-01 : f32
    %29 = vector.broadcast %cst_23 : f32 to vector<8x256xf32>
    %30 = arith.mulf %29, %28 : vector<8x256xf32>
    %cst_24 = arith.constant 5.000000e-01 : f32
    %31 = vector.broadcast %cst_24 : f32 to vector<8x256xf32>
    %32 = arith.addf %30, %31 : vector<8x256xf32>
    %33 = vector.extract_strided_slice %15 {offsets = [0, 512], sizes = [8, 256], strides = [1, 1]} : vector<8x1024xf32> to vector<8x256xf32>
    %34 = math.tanh %33 : vector<8x256xf32>
    %35 = vector.extract_strided_slice %15 {offsets = [0, 768], sizes = [8, 256], strides = [1, 1]} : vector<8x1024xf32> to vector<8x256xf32>
    %cst_25 = arith.constant 5.000000e-01 : f32
    %36 = vector.broadcast %cst_25 : f32 to vector<8x256xf32>
    %37 = arith.mulf %36, %35 : vector<8x256xf32>
    %38 = math.tanh %37 : vector<8x256xf32>
    %cst_26 = arith.constant 5.000000e-01 : f32
    %39 = vector.broadcast %cst_26 : f32 to vector<8x256xf32>
    %40 = arith.mulf %39, %38 : vector<8x256xf32>
    %cst_27 = arith.constant 5.000000e-01 : f32
    %41 = vector.broadcast %cst_27 : f32 to vector<8x256xf32>
    %42 = arith.addf %40, %41 : vector<8x256xf32>
    %43 = arith.mulf %32, %16 : vector<8x256xf32>
    %44 = arith.mulf %24, %34 : vector<8x256xf32>
    %45 = arith.addf %43, %44 : vector<8x256xf32>
    %46 = math.tanh %45 : vector<8x256xf32>
    %47 = arith.mulf %42, %46 : vector<8x256xf32>
    %c0_28 = arith.constant 0 : index
    %c0_29 = arith.constant 0 : index
    %48 = vector.load %arg11[%c0_28, %c0_29] : memref<8x256xf32, #tpu.memory_space<vmem>>, vector<8x256xf32>
    tpu.vector_store %arg11[%c0_28, %c0_29], %45 {strides = array<i32>} : memref<8x256xf32, #tpu.memory_space<vmem>>, vector<8x256xf32>,
    %c0_30 = arith.constant 0 : index
    %c0_31 = arith.constant 0 : index
    %49 = vector.load %arg10[%c0_30, %c0_31] : memref<8x512xf32, #tpu.memory_space<vmem>>, vector<8x256xf32>
    tpu.vector_store %arg10[%c0_30, %c0_31], %47 {strides = array<i32>} : memref<8x512xf32, #tpu.memory_space<vmem>>, vector<8x256xf32>,
    %c0_i32 = arith.constant 0 : i32
    %c50_i32 = arith.constant 50 : i32
    %50 = arith.addi %c0_i32, %c50_i32 : i32
    %c1_i32 = arith.constant 1 : i32
    scf.for %arg13 = %c0_i32 to %50 step %c1_i32  : i32 {
      %c2_i32 = arith.constant 2 : i32
      %58 = arith.muli %c2_i32, %arg13 : i32
      %c1_i32_41 = arith.constant 1 : i32
      %59 = arith.addi %58, %c1_i32_41 : i32
      %c0_42 = arith.constant 0 : index
      %c0_43 = arith.constant 0 : index
      %60 = vector.load %arg10[%c0_42, %c0_43] : memref<8x512xf32, #tpu.memory_space<vmem>>, vector<8x512xf32>
      %61 = arith.truncf %60 : vector<8x512xf32> to vector<8x512xbf16>
      %c99_i32 = arith.constant 99 : i32
      %62 = arith.minsi %59, %c99_i32 : i32
      %c8_i32 = arith.constant 8 : i32
      %63 = arith.muli %62, %c8_i32 : i32
      %64 = tpu.assume_multiple %63, 8 : i32
      %65 = vector.extract_strided_slice %61 {offsets = [0, 0], sizes = [8, 256], strides = [1, 1]} : vector<8x512xbf16> to vector<8x256xbf16>
      %c0_44 = arith.constant 0 : index
      %c0_45 = arith.constant 0 : index
      %66 = vector.load %arg3[%c0_44, %c0_45] : memref<256x1024xbf16, #tpu.memory_space<vmem>>, vector<256x1024xbf16>
      %cst_46 = arith.constant dense<0.000000e+00> : vector<8x1024xf32>
      %67 = tpu.matmul %65, %66, %cst_46 {dimension_numbers = #tpu.dot_dimension_numbers<[1], [0], [0], [1], [0, 0, 1, 1], [], []>} : vector<8x256xbf16>, vector<256x1024xbf16>, vector<8x1024xf32> -> vector<8x1024xf32>
      %68 = arith.index_cast %64 : i32 to index
      %c0_47 = arith.constant 0 : index
      %69 = vector.load %arg9[%68, %c0_47] : memref<800x1024xf32, #tpu.memory_space<vmem>>, vector<8x1024xf32>
      %70 = arith.addf %67, %69 : vector<8x1024xf32>
      %c0_48 = arith.constant 0 : index
      %c0_49 = arith.constant 0 : index
      %71 = vector.load %arg4[%c0_48, %c0_49] : memref<512x1024xbf16, #tpu.memory_space<vmem>>, vector<512x1024xbf16>
      %cst_50 = arith.constant dense<0.000000e+00> : vector<8x1024xf32>
      %72 = tpu.matmul %61, %71, %cst_50 {dimension_numbers = #tpu.dot_dimension_numbers<[1], [0], [0], [1], [0, 0, 1, 1], [], []>} : vector<8x512xbf16>, vector<512x1024xbf16>, vector<8x1024xf32> -> vector<8x1024xf32>
      %c0_51 = arith.constant 0 : index
      %c0_52 = arith.constant 0 : index
      %73 = vector.load %arg5[%c0_51, %c0_52] : memref<8x1024xf32, #tpu.memory_space<vmem>>, vector<8x1024xf32>
      %74 = arith.addf %72, %73 : vector<8x1024xf32>
      %c0_53 = arith.constant 0 : index
      %c0_54 = arith.constant 0 : index
      %75 = vector.load %arg11[%c0_53, %c0_54] : memref<8x256xf32, #tpu.memory_space<vmem>>, vector<8x256xf32>
      %76 = vector.extract_strided_slice %70 {offsets = [0, 0], sizes = [8, 256], strides = [1, 1]} : vector<8x1024xf32> to vector<8x256xf32>
      %cst_55 = arith.constant 5.000000e-01 : f32
      %77 = vector.broadcast %cst_55 : f32 to vector<8x256xf32>
      %78 = arith.mulf %77, %76 : vector<8x256xf32>
      %79 = math.tanh %78 : vector<8x256xf32>
      %cst_56 = arith.constant 5.000000e-01 : f32
      %80 = vector.broadcast %cst_56 : f32 to vector<8x256xf32>
      %81 = arith.mulf %80, %79 : vector<8x256xf32>
      %cst_57 = arith.constant 5.000000e-01 : f32
      %82 = vector.broadcast %cst_57 : f32 to vector<8x256xf32>
      %83 = arith.addf %81, %82 : vector<8x256xf32>
      %84 = vector.extract_strided_slice %70 {offsets = [0, 256], sizes = [8, 256], strides = [1, 1]} : vector<8x1024xf32> to vector<8x256xf32>
      %cst_58 = arith.constant 5.000000e-01 : f32
      %85 = vector.broadcast %cst_58 : f32 to vector<8x256xf32>
      %86 = arith.mulf %85, %84 : vector<8x256xf32>
      %87 = math.tanh %86 : vector<8x256xf32>
      %cst_59 = arith.constant 5.000000e-01 : f32
      %88 = vector.broadcast %cst_59 : f32 to vector<8x256xf32>
      %89 = arith.mulf %88, %87 : vector<8x256xf32>
      %cst_60 = arith.constant 5.000000e-01 : f32
      %90 = vector.broadcast %cst_60 : f32 to vector<8x256xf32>
      %91 = arith.addf %89, %90 : vector<8x256xf32>
      %92 = vector.extract_strided_slice %70 {offsets = [0, 512], sizes = [8, 256], strides = [1, 1]} : vector<8x1024xf32> to vector<8x256xf32>
      %93 = math.tanh %92 : vector<8x256xf32>
      %94 = vector.extract_strided_slice %70 {offsets = [0, 768], sizes = [8, 256], strides = [1, 1]} : vector<8x1024xf32> to vector<8x256xf32>
      %cst_61 = arith.constant 5.000000e-01 : f32
      %95 = vector.broadcast %cst_61 : f32 to vector<8x256xf32>
      %96 = arith.mulf %95, %94 : vector<8x256xf32>
      %97 = math.tanh %96 : vector<8x256xf32>
      %cst_62 = arith.constant 5.000000e-01 : f32
      %98 = vector.broadcast %cst_62 : f32 to vector<8x256xf32>
      %99 = arith.mulf %98, %97 : vector<8x256xf32>
      %cst_63 = arith.constant 5.000000e-01 : f32
      %100 = vector.broadcast %cst_63 : f32 to vector<8x256xf32>
      %101 = arith.addf %99, %100 : vector<8x256xf32>
      %102 = arith.mulf %91, %75 : vector<8x256xf32>
      %103 = arith.mulf %83, %93 : vector<8x256xf32>
      %104 = arith.addf %102, %103 : vector<8x256xf32>
      %105 = math.tanh %104 : vector<8x256xf32>
      %106 = arith.mulf %101, %105 : vector<8x256xf32>
      %c0_64 = arith.constant 0 : index
      %c0_65 = arith.constant 0 : index
      %107 = vector.load %arg12[%c0_64, %c0_65] : memref<8x256xf32, #tpu.memory_space<vmem>>, vector<8x256xf32>
      %108 = vector.extract_strided_slice %74 {offsets = [0, 0], sizes = [8, 256], strides = [1, 1]} : vector<8x1024xf32> to vector<8x256xf32>
      %cst_66 = arith.constant 5.000000e-01 : f32
      %109 = vector.broadcast %cst_66 : f32 to vector<8x256xf32>
      %110 = arith.mulf %109, %108 : vector<8x256xf32>
      %111 = math.tanh %110 : vector<8x256xf32>
      %cst_67 = arith.constant 5.000000e-01 : f32
      %112 = vector.broadcast %cst_67 : f32 to vector<8x256xf32>
      %113 = arith.mulf %112, %111 : vector<8x256xf32>
      %cst_68 = arith.constant 5.000000e-01 : f32
      %114 = vector.broadcast %cst_68 : f32 to vector<8x256xf32>
      %115 = arith.addf %113, %114 : vector<8x256xf32>
      %116 = vector.extract_strided_slice %74 {offsets = [0, 256], sizes = [8, 256], strides = [1, 1]} : vector<8x1024xf32> to vector<8x256xf32>
      %cst_69 = arith.constant 5.000000e-01 : f32
      %117 = vector.broadcast %cst_69 : f32 to vector<8x256xf32>
      %118 = arith.mulf %117, %116 : vector<8x256xf32>
      %119 = math.tanh %118 : vector<8x256xf32>
      %cst_70 = arith.constant 5.000000e-01 : f32
      %120 = vector.broadcast %cst_70 : f32 to vector<8x256xf32>
      %121 = arith.mulf %120, %119 : vector<8x256xf32>
      %cst_71 = arith.constant 5.000000e-01 : f32
      %122 = vector.broadcast %cst_71 : f32 to vector<8x256xf32>
      %123 = arith.addf %121, %122 : vector<8x256xf32>
      %124 = vector.extract_strided_slice %74 {offsets = [0, 512], sizes = [8, 256], strides = [1, 1]} : vector<8x1024xf32> to vector<8x256xf32>
      %125 = math.tanh %124 : vector<8x256xf32>
      %126 = vector.extract_strided_slice %74 {offsets = [0, 768], sizes = [8, 256], strides = [1, 1]} : vector<8x1024xf32> to vector<8x256xf32>
      %cst_72 = arith.constant 5.000000e-01 : f32
      %127 = vector.broadcast %cst_72 : f32 to vector<8x256xf32>
      %128 = arith.mulf %127, %126 : vector<8x256xf32>
      %129 = math.tanh %128 : vector<8x256xf32>
      %cst_73 = arith.constant 5.000000e-01 : f32
      %130 = vector.broadcast %cst_73 : f32 to vector<8x256xf32>
      %131 = arith.mulf %130, %129 : vector<8x256xf32>
      %cst_74 = arith.constant 5.000000e-01 : f32
      %132 = vector.broadcast %cst_74 : f32 to vector<8x256xf32>
      %133 = arith.addf %131, %132 : vector<8x256xf32>
      %134 = arith.mulf %123, %107 : vector<8x256xf32>
      %135 = arith.mulf %115, %125 : vector<8x256xf32>
      %136 = arith.addf %134, %135 : vector<8x256xf32>
      %137 = math.tanh %136 : vector<8x256xf32>
      %138 = arith.mulf %133, %137 : vector<8x256xf32>
      %c0_75 = arith.constant 0 : index
      %c0_76 = arith.constant 0 : index
      %139 = vector.load %arg11[%c0_75, %c0_76] : memref<8x256xf32, #tpu.memory_space<vmem>>, vector<8x256xf32>
      tpu.vector_store %arg11[%c0_75, %c0_76], %104 {strides = array<i32>} : memref<8x256xf32, #tpu.memory_space<vmem>>, vector<8x256xf32>,
      %c0_77 = arith.constant 0 : index
      %c0_78 = arith.constant 0 : index
      %140 = vector.load %arg12[%c0_77, %c0_78] : memref<8x256xf32, #tpu.memory_space<vmem>>, vector<8x256xf32>
      tpu.vector_store %arg12[%c0_77, %c0_78], %136 {strides = array<i32>} : memref<8x256xf32, #tpu.memory_space<vmem>>, vector<8x256xf32>,
      %c0_79 = arith.constant 0 : index
      %c0_80 = arith.constant 0 : index
      %141 = vector.load %arg10[%c0_79, %c0_80] : memref<8x512xf32, #tpu.memory_space<vmem>>, vector<8x256xf32>
      tpu.vector_store %arg10[%c0_79, %c0_80], %106 {strides = array<i32>} : memref<8x512xf32, #tpu.memory_space<vmem>>, vector<8x256xf32>,
      %c0_81 = arith.constant 0 : index
      %c256_82 = arith.constant 256 : index
      %142 = vector.load %arg10[%c0_81, %c256_82] : memref<8x512xf32, #tpu.memory_space<vmem>>, vector<8x256xf32>
      tpu.vector_store %arg10[%c0_81, %c256_82], %138 {strides = array<i32>} : memref<8x512xf32, #tpu.memory_space<vmem>>, vector<8x256xf32>,
      %c2_i32_83 = arith.constant 2 : i32
      %143 = arith.muli %c2_i32_83, %arg13 : i32
      %c2_i32_84 = arith.constant 2 : i32
      %144 = arith.addi %143, %c2_i32_84 : i32
      %c0_85 = arith.constant 0 : index
      %c0_86 = arith.constant 0 : index
      %145 = vector.load %arg10[%c0_85, %c0_86] : memref<8x512xf32, #tpu.memory_space<vmem>>, vector<8x512xf32>
      %146 = arith.truncf %145 : vector<8x512xf32> to vector<8x512xbf16>
      %c99_i32_87 = arith.constant 99 : i32
      %147 = arith.minsi %144, %c99_i32_87 : i32
      %c8_i32_88 = arith.constant 8 : i32
      %148 = arith.muli %147, %c8_i32_88 : i32
      %149 = tpu.assume_multiple %148, 8 : i32
      %150 = vector.extract_strided_slice %146 {offsets = [0, 0], sizes = [8, 256], strides = [1, 1]} : vector<8x512xbf16> to vector<8x256xbf16>
      %c0_89 = arith.constant 0 : index
      %c0_90 = arith.constant 0 : index
      %151 = vector.load %arg3[%c0_89, %c0_90] : memref<256x1024xbf16, #tpu.memory_space<vmem>>, vector<256x1024xbf16>
      %cst_91 = arith.constant dense<0.000000e+00> : vector<8x1024xf32>
      %152 = tpu.matmul %150, %151, %cst_91 {dimension_numbers = #tpu.dot_dimension_numbers<[1], [0], [0], [1], [0, 0, 1, 1], [], []>} : vector<8x256xbf16>, vector<256x1024xbf16>, vector<8x1024xf32> -> vector<8x1024xf32>
      %153 = arith.index_cast %149 : i32 to index
      %c0_92 = arith.constant 0 : index
      %154 = vector.load %arg9[%153, %c0_92] : memref<800x1024xf32, #tpu.memory_space<vmem>>, vector<8x1024xf32>
      %155 = arith.addf %152, %154 : vector<8x1024xf32>
      %c0_93 = arith.constant 0 : index
      %c0_94 = arith.constant 0 : index
      %156 = vector.load %arg4[%c0_93, %c0_94] : memref<512x1024xbf16, #tpu.memory_space<vmem>>, vector<512x1024xbf16>
      %cst_95 = arith.constant dense<0.000000e+00> : vector<8x1024xf32>
      %157 = tpu.matmul %146, %156, %cst_95 {dimension_numbers = #tpu.dot_dimension_numbers<[1], [0], [0], [1], [0, 0, 1, 1], [], []>} : vector<8x512xbf16>, vector<512x1024xbf16>, vector<8x1024xf32> -> vector<8x1024xf32>
      %c0_96 = arith.constant 0 : index
      %c0_97 = arith.constant 0 : index
      %158 = vector.load %arg5[%c0_96, %c0_97] : memref<8x1024xf32, #tpu.memory_space<vmem>>, vector<8x1024xf32>
      %159 = arith.addf %157, %158 : vector<8x1024xf32>
      %c0_98 = arith.constant 0 : index
      %c0_99 = arith.constant 0 : index
      %160 = vector.load %arg11[%c0_98, %c0_99] : memref<8x256xf32, #tpu.memory_space<vmem>>, vector<8x256xf32>
      %161 = vector.extract_strided_slice %155 {offsets = [0, 0], sizes = [8, 256], strides = [1, 1]} : vector<8x1024xf32> to vector<8x256xf32>
      %cst_100 = arith.constant 5.000000e-01 : f32
      %162 = vector.broadcast %cst_100 : f32 to vector<8x256xf32>
      %163 = arith.mulf %162, %161 : vector<8x256xf32>
      %164 = math.tanh %163 : vector<8x256xf32>
      %cst_101 = arith.constant 5.000000e-01 : f32
      %165 = vector.broadcast %cst_101 : f32 to vector<8x256xf32>
      %166 = arith.mulf %165, %164 : vector<8x256xf32>
      %cst_102 = arith.constant 5.000000e-01 : f32
      %167 = vector.broadcast %cst_102 : f32 to vector<8x256xf32>
      %168 = arith.addf %166, %167 : vector<8x256xf32>
      %169 = vector.extract_strided_slice %155 {offsets = [0, 256], sizes = [8, 256], strides = [1, 1]} : vector<8x1024xf32> to vector<8x256xf32>
      %cst_103 = arith.constant 5.000000e-01 : f32
      %170 = vector.broadcast %cst_103 : f32 to vector<8x256xf32>
      %171 = arith.mulf %170, %169 : vector<8x256xf32>
      %172 = math.tanh %171 : vector<8x256xf32>
      %cst_104 = arith.constant 5.000000e-01 : f32
      %173 = vector.broadcast %cst_104 : f32 to vector<8x256xf32>
      %174 = arith.mulf %173, %172 : vector<8x256xf32>
      %cst_105 = arith.constant 5.000000e-01 : f32
      %175 = vector.broadcast %cst_105 : f32 to vector<8x256xf32>
      %176 = arith.addf %174, %175 : vector<8x256xf32>
      %177 = vector.extract_strided_slice %155 {offsets = [0, 512], sizes = [8, 256], strides = [1, 1]} : vector<8x1024xf32> to vector<8x256xf32>
      %178 = math.tanh %177 : vector<8x256xf32>
      %179 = vector.extract_strided_slice %155 {offsets = [0, 768], sizes = [8, 256], strides = [1, 1]} : vector<8x1024xf32> to vector<8x256xf32>
      %cst_106 = arith.constant 5.000000e-01 : f32
      %180 = vector.broadcast %cst_106 : f32 to vector<8x256xf32>
      %181 = arith.mulf %180, %179 : vector<8x256xf32>
      %182 = math.tanh %181 : vector<8x256xf32>
      %cst_107 = arith.constant 5.000000e-01 : f32
      %183 = vector.broadcast %cst_107 : f32 to vector<8x256xf32>
      %184 = arith.mulf %183, %182 : vector<8x256xf32>
      %cst_108 = arith.constant 5.000000e-01 : f32
      %185 = vector.broadcast %cst_108 : f32 to vector<8x256xf32>
      %186 = arith.addf %184, %185 : vector<8x256xf32>
      %187 = arith.mulf %176, %160 : vector<8x256xf32>
      %188 = arith.mulf %168, %178 : vector<8x256xf32>
      %189 = arith.addf %187, %188 : vector<8x256xf32>
      %190 = math.tanh %189 : vector<8x256xf32>
      %191 = arith.mulf %186, %190 : vector<8x256xf32>
      %c0_109 = arith.constant 0 : index
      %c0_110 = arith.constant 0 : index
      %192 = vector.load %arg12[%c0_109, %c0_110] : memref<8x256xf32, #tpu.memory_space<vmem>>, vector<8x256xf32>
      %193 = vector.extract_strided_slice %159 {offsets = [0, 0], sizes = [8, 256], strides = [1, 1]} : vector<8x1024xf32> to vector<8x256xf32>
      %cst_111 = arith.constant 5.000000e-01 : f32
      %194 = vector.broadcast %cst_111 : f32 to vector<8x256xf32>
      %195 = arith.mulf %194, %193 : vector<8x256xf32>
      %196 = math.tanh %195 : vector<8x256xf32>
      %cst_112 = arith.constant 5.000000e-01 : f32
      %197 = vector.broadcast %cst_112 : f32 to vector<8x256xf32>
      %198 = arith.mulf %197, %196 : vector<8x256xf32>
      %cst_113 = arith.constant 5.000000e-01 : f32
      %199 = vector.broadcast %cst_113 : f32 to vector<8x256xf32>
      %200 = arith.addf %198, %199 : vector<8x256xf32>
      %201 = vector.extract_strided_slice %159 {offsets = [0, 256], sizes = [8, 256], strides = [1, 1]} : vector<8x1024xf32> to vector<8x256xf32>
      %cst_114 = arith.constant 5.000000e-01 : f32
      %202 = vector.broadcast %cst_114 : f32 to vector<8x256xf32>
      %203 = arith.mulf %202, %201 : vector<8x256xf32>
      %204 = math.tanh %203 : vector<8x256xf32>
      %cst_115 = arith.constant 5.000000e-01 : f32
      %205 = vector.broadcast %cst_115 : f32 to vector<8x256xf32>
      %206 = arith.mulf %205, %204 : vector<8x256xf32>
      %cst_116 = arith.constant 5.000000e-01 : f32
      %207 = vector.broadcast %cst_116 : f32 to vector<8x256xf32>
      %208 = arith.addf %206, %207 : vector<8x256xf32>
      %209 = vector.extract_strided_slice %159 {offsets = [0, 512], sizes = [8, 256], strides = [1, 1]} : vector<8x1024xf32> to vector<8x256xf32>
      %210 = math.tanh %209 : vector<8x256xf32>
      %211 = vector.extract_strided_slice %159 {offsets = [0, 768], sizes = [8, 256], strides = [1, 1]} : vector<8x1024xf32> to vector<8x256xf32>
      %cst_117 = arith.constant 5.000000e-01 : f32
      %212 = vector.broadcast %cst_117 : f32 to vector<8x256xf32>
      %213 = arith.mulf %212, %211 : vector<8x256xf32>
      %214 = math.tanh %213 : vector<8x256xf32>
      %cst_118 = arith.constant 5.000000e-01 : f32
      %215 = vector.broadcast %cst_118 : f32 to vector<8x256xf32>
      %216 = arith.mulf %215, %214 : vector<8x256xf32>
      %cst_119 = arith.constant 5.000000e-01 : f32
      %217 = vector.broadcast %cst_119 : f32 to vector<8x256xf32>
      %218 = arith.addf %216, %217 : vector<8x256xf32>
      %219 = arith.mulf %208, %192 : vector<8x256xf32>
      %220 = arith.mulf %200, %210 : vector<8x256xf32>
      %221 = arith.addf %219, %220 : vector<8x256xf32>
      %222 = math.tanh %221 : vector<8x256xf32>
      %223 = arith.mulf %218, %222 : vector<8x256xf32>
      %c0_120 = arith.constant 0 : index
      %c0_121 = arith.constant 0 : index
      %224 = vector.load %arg11[%c0_120, %c0_121] : memref<8x256xf32, #tpu.memory_space<vmem>>, vector<8x256xf32>
      tpu.vector_store %arg11[%c0_120, %c0_121], %189 {strides = array<i32>} : memref<8x256xf32, #tpu.memory_space<vmem>>, vector<8x256xf32>,
      %c0_122 = arith.constant 0 : index
      %c0_123 = arith.constant 0 : index
      %225 = vector.load %arg12[%c0_122, %c0_123] : memref<8x256xf32, #tpu.memory_space<vmem>>, vector<8x256xf32>
      tpu.vector_store %arg12[%c0_122, %c0_123], %221 {strides = array<i32>} : memref<8x256xf32, #tpu.memory_space<vmem>>, vector<8x256xf32>,
      %c0_124 = arith.constant 0 : index
      %c0_125 = arith.constant 0 : index
      %226 = vector.load %arg10[%c0_124, %c0_125] : memref<8x512xf32, #tpu.memory_space<vmem>>, vector<8x256xf32>
      tpu.vector_store %arg10[%c0_124, %c0_125], %191 {strides = array<i32>} : memref<8x512xf32, #tpu.memory_space<vmem>>, vector<8x256xf32>,
      %c0_126 = arith.constant 0 : index
      %c256_127 = arith.constant 256 : index
      %227 = vector.load %arg10[%c0_126, %c256_127] : memref<8x512xf32, #tpu.memory_space<vmem>>, vector<8x256xf32>
      tpu.vector_store %arg10[%c0_126, %c256_127], %223 {strides = array<i32>} : memref<8x512xf32, #tpu.memory_space<vmem>>, vector<8x256xf32>,
    }
    %c50_i32_32 = arith.constant 50 : i32
    %c0_33 = arith.constant 0 : index
    %c256 = arith.constant 256 : index
    %51 = vector.load %arg10[%c0_33, %c256] : memref<8x512xf32, #tpu.memory_space<vmem>>, vector<8x256xf32>
    %c0_34 = arith.constant 0 : index
    %c0_35 = arith.constant 0 : index
    %52 = vector.load %arg6[%c0_34, %c0_35] : memref<256x1xf32, #tpu.memory_space<vmem>>, vector<256x1xf32>
    %cst_36 = arith.constant dense<0.000000e+00> : vector<8x1xf32>
    %53 = tpu.matmul %51, %52, %cst_36 {dimension_numbers = #tpu.dot_dimension_numbers<[1], [0], [0], [1], [0, 0, 1, 1], [], []>} : vector<8x256xf32>, vector<256x1xf32>, vector<8x1xf32> -> vector<8x1xf32>
    %c0_37 = arith.constant 0 : index
    %c0_38 = arith.constant 0 : index
    %54 = vector.load %arg7[%c0_37, %c0_38] : memref<1x1xf32, #tpu.memory_space<vmem>>, vector<1x1xf32>
    %55 = vector.broadcast %54 : vector<1x1xf32> to vector<8x1xf32>
    %56 = arith.addf %53, %55 : vector<8x1xf32>
    %c0_39 = arith.constant 0 : index
    %c0_40 = arith.constant 0 : index
    %57 = vector.load %arg8[%c0_39, %c0_40] : memref<8x1xf32, #tpu.memory_space<vmem>>, vector<8x1xf32>
    tpu.vector_store %arg8[%c0_39, %c0_40], %56 {strides = array<i32>} : memref<8x1xf32, #tpu.memory_space<vmem>>, vector<8x1xf32>,
    return
  }
}

</mosaic_0001>

<llo_original>
// kernel: lstm_model_forward.1
$region0: #{lstm_model_forward.1}
  #allocation0 [shape = 'u32[]', space=smem, size = 0x4, offset = 0x4, fixed_abs, tag = 'smem constant byte address 0x4 - core index']
  #allocation1 [shape = 'u32[144,128]{1,0:T(1,128)}', space=vmem, size = 0x12000, scoped, tag = 'internal scratch']
  #allocation2 [shape = 'f32[800,1024]{1,0:T(8,128)}', space=vmem, size = 0x320000, scoped, tag = 'scratch operand']
  #allocation3 [shape = 'f32[8,512]{1,0:T(8,128)}', space=vmem, size = 0x4000, scoped, tag = 'scratch operand']
  #allocation4 [shape = 'f32[8,256]{1,0:T(8,128)}', space=vmem, size = 0x2000, scoped, tag = 'scratch operand']
  #allocation5 [shape = 'f32[8,256]{1,0:T(8,128)}', space=vmem, size = 0x2000, scoped, tag = 'scratch operand']
  #allocation6 [shape = 'f32[1,1]{1,0:T(1,128)S(1)}', space=vmem, size = 0x200, scoped, tag = 'scoped memory for lstm_model_forward.1']
  %s0 = inlined_call_operand.vmem [shape: f32[800,1], index: 0, kind: input, shape index: {}]
  %s1 = inlined_call_operand.vmem [shape: f32[1,1024], index: 1, kind: input, shape index: {}]
  %s2 = inlined_call_operand.vmem [shape: f32[1,1024], index: 2, kind: input, shape index: {}]
  %s3 = inlined_call_operand.vmem [shape: bf16[256,1024], index: 3, kind: input, shape index: {}]
  %s4 = inlined_call_operand.hbm [shape: bf16[512,1024], index: 4, kind: input, shape index: {}]
  %s5 = inlined_call_operand.vmem [shape: f32[8,1024], index: 5, kind: input, shape index: {}]
  %s6 = inlined_call_operand.vmem [shape: f32[256,1], index: 6, kind: input, shape index: {}]
  %s7 = inlined_call_operand.<no memory space> [shape: f32[1,1], index: 7, kind: input, shape index: {}]
  %s8 = inlined_call_operand.vmem [shape: f32[8,1], index: 8, kind: output, shape index: {}]
  %s9 = sld [smem:[#allocation0]]
  $region53: #{lstm_model_forward.1} parent=0
    _
  %s11 = ssub.s32 1, %s9
  %s12 = scalar_select 0, %s11, %s9
  %v13 = vstv %s7
  %14 = vst [vmem:[#allocation6] sm:$0x1] %v13
  $region1: #{lstm_model_forward.1} parent=0
    #allocation7 [shape = 'u8[1048576]{0}', space=vmem, size = 0x100000, scoped, tag = 'input window, operand 4, single buffered']
    #allocation8 [shape = 's32[1]{0}', space=sflag, size = 0x4, scoped, tag = 'scoped memory for lstm_model_forward.1']
    %15 = vsyncpa [#allocation8], 0
    // Predicated region
    $region2: #{lstm_model_forward.1} parent=1 // pred_check
      _
    $region3: #{lstm_model_forward.1} parent=1 // pred_check_branch
      %17 = sbr.rel (0) target = $region5
    $region4: #{lstm_model_forward.1} parent=1 // pred_region
      _
    $region5: #{lstm_model_forward.1} parent=1 // pred_fallthru
      _
    // Predicated region
    $region6: #{lstm_model_forward.1} parent=1 // pred_check
      _
    $region7: #{lstm_model_forward.1} parent=1 // pred_check_branch
      %19 = sbr.rel (0) target = $region9
    $region8: #{lstm_model_forward.1} parent=1 // pred_region
      _
    $region9: #{lstm_model_forward.1} parent=1 // pred_fallthru
      _
    // Predicated region
    $region10: #{lstm_model_forward.1} parent=1 // pred_check
      _
    $region11: #{lstm_model_forward.1} parent=1 // pred_check_branch
      %21 = sbr.rel (0) target = $region13
    $region12: #{lstm_model_forward.1} parent=1 // pred_region
      _
    $region13: #{lstm_model_forward.1} parent=1 // pred_fallthru
      _
    // Predicated region
    $region14: #{lstm_model_forward.1} parent=1 // pred_check
      _
    $region15: #{lstm_model_forward.1} parent=1 // pred_check_branch
      %23 = sbr.rel (0) target = $region17
    $region16: #{lstm_model_forward.1} parent=1 // pred_region
      _
    $region17: #{lstm_model_forward.1} parent=1 // pred_fallthru
      _
    // Predicated region
    $region18: #{lstm_model_forward.1} parent=1 // pred_check
      _
    $region19: #{lstm_model_forward.1} parent=1 // pred_check_branch
      %25 = sbr.rel (0) target = $region21
    $region20: #{lstm_model_forward.1} parent=1 // pred_region
      %s27 = ssub.s32 32768, 32768
      %28 = vsyncadd [#allocation8], %s27
      %s29 = sshll.u32 [#allocation7], 4
      %s30 = int_to_ptr.vmem [resolvable:$true] %s29
      %35 = dma.hbm_to_vmem [thread:$0]  %s4, 32768, %s30, [#allocation8], 512, 512, 32
    $region21: #{lstm_model_forward.1} parent=1 // pred_fallthru
      _
    // Predicated region
    $region22: #{lstm_model_forward.1} parent=1 // pred_check
      _
    $region23: #{lstm_model_forward.1} parent=1 // pred_check_branch
      %37 = sbr.rel (0) target = $region25
    $region24: #{lstm_model_forward.1} parent=1 // pred_region
      _
    $region25: #{lstm_model_forward.1} parent=1 // pred_fallthru
      _
    // Predicated region
    $region26: #{lstm_model_forward.1} parent=1 // pred_check
      _
    $region27: #{lstm_model_forward.1} parent=1 // pred_check_branch
      %39 = sbr.rel (0) target = $region29
    $region28: #{lstm_model_forward.1} parent=1 // pred_region
      _
    $region29: #{lstm_model_forward.1} parent=1 // pred_fallthru
      _
    // Predicated region
    $region30: #{lstm_model_forward.1} parent=1 // pred_check
      _
    $region31: #{lstm_model_forward.1} parent=1 // pred_check_branch
      %41 = sbr.rel (0) target = $region33
    $region32: #{lstm_model_forward.1} parent=1 // pred_region
      _
    $region33: #{lstm_model_forward.1} parent=1 // pred_fallthru
      _
    // Predicated region
    $region34: #{lstm_model_forward.1} parent=1 // pred_check
      _
    $region35: #{lstm_model_forward.1} parent=1 // pred_check_branch
      %43 = sbr.rel (0) target = $region37
    $region36: #{lstm_model_forward.1} parent=1 // pred_region
      %44 = dma.done [#allocation8], 32768
    $region37: #{lstm_model_forward.1} parent=1 // pred_fallthru
      _
    %v45 = vld [vmem:[%s0] sm:$0xff]
    %v46 = vld [vmem:[%s0 + $0x8] sm:$0xff]
    %v47 = vld [vmem:[%s0 + $0x10] sm:$0xff]
    %v48 = vld [vmem:[%s0 + $0x18] sm:$0xff]
    %v49 = vld [vmem:[%s0 + $0x20] sm:$0xff]
    %v50 = vld [vmem:[%s0 + $0x28] sm:$0xff]
    %v51 = vld [vmem:[%s0 + $0x30] sm:$0xff]
    %v52 = vld [vmem:[%s0 + $0x38] sm:$0xff]
    %v53 = vld [vmem:[%s0 + $0x40] sm:$0xff]
    %v54 = vld [vmem:[%s0 + $0x48] sm:$0xff]
    %v55 = vld [vmem:[%s0 + $0x50] sm:$0xff]
    %v56 = vld [vmem:[%s0 + $0x58] sm:$0xff]
    %v57 = vld [vmem:[%s0 + $0x60] sm:$0xff]
    %v58 = vld [vmem:[%s0 + $0x68] sm:$0xff]
    %v59 = vld [vmem:[%s0 + $0x70] sm:$0xff]
    %v60 = vld [vmem:[%s0 + $0x78] sm:$0xff]
    %v61 = vld [vmem:[%s0 + $0x80] sm:$0xff]
    %v62 = vld [vmem:[%s0 + $0x88] sm:$0xff]
    %v63 = vld [vmem:[%s0 + $0x90] sm:$0xff]
    %v64 = vld [vmem:[%s0 + $0x98] sm:$0xff]
    %v65 = vld [vmem:[%s0 + $0xa0] sm:$0xff]
    %v66 = vld [vmem:[%s0 + $0xa8] sm:$0xff]
    %v67 = vld [vmem:[%s0 + $0xb0] sm:$0xff]
    %v68 = vld [vmem:[%s0 + $0xb8] sm:$0xff]
    %v69 = vld [vmem:[%s0 + $0xc0] sm:$0xff]
    %v70 = vld [vmem:[%s0 + $0xc8] sm:$0xff]
    %v71 = vld [vmem:[%s0 + $0xd0] sm:$0xff]
    %v72 = vld [vmem:[%s0 + $0xd8] sm:$0xff]
    %v73 = vld [vmem:[%s0 + $0xe0] sm:$0xff]
    %v74 = vld [vmem:[%s0 + $0xe8] sm:$0xff]
    %v75 = vld [vmem:[%s0 + $0xf0] sm:$0xff]
    %v76 = vld [vmem:[%s0 + $0xf8] sm:$0xff]
    %v77 = vld [vmem:[%s0 + $0x100] sm:$0xff]
    %v78 = vld [vmem:[%s0 + $0x108] sm:$0xff]
    %v79 = vld [vmem:[%s0 + $0x110] sm:$0xff]
    %v80 = vld [vmem:[%s0 + $0x118] sm:$0xff]
    %v81 = vld [vmem:[%s0 + $0x120] sm:$0xff]
    %v82 = vld [vmem:[%s0 + $0x128] sm:$0xff]
    %v83 = vld [vmem:[%s0 + $0x130] sm:$0xff]
    %v84 = vld [vmem:[%s0 + $0x138] sm:$0xff]
    %v85 = vld [vmem:[%s0 + $0x140] sm:$0xff]
    %v86 = vld [vmem:[%s0 + $0x148] sm:$0xff]
    %v87 = vld [vmem:[%s0 + $0x150] sm:$0xff]
    %v88 = vld [vmem:[%s0 + $0x158] sm:$0xff]
    %v89 = vld [vmem:[%s0 + $0x160] sm:$0xff]
    %v90 = vld [vmem:[%s0 + $0x168] sm:$0xff]
    %v91 = vld [vmem:[%s0 + $0x170] sm:$0xff]
    %v92 = vld [vmem:[%s0 + $0x178] sm:$0xff]
    %v93 = vld [vmem:[%s0 + $0x180] sm:$0xff]
    %v94 = vld [vmem:[%s0 + $0x188] sm:$0xff]
    %v95 = vld [vmem:[%s0 + $0x190] sm:$0xff]
    %v96 = vld [vmem:[%s0 + $0x198] sm:$0xff]
    %v97 = vld [vmem:[%s0 + $0x1a0] sm:$0xff]
    %v98 = vld [vmem:[%s0 + $0x1a8] sm:$0xff]
    %v99 = vld [vmem:[%s0 + $0x1b0] sm:$0xff]
    %v100 = vld [vmem:[%s0 + $0x1b8] sm:$0xff]
    %v101 = vld [vmem:[%s0 + $0x1c0] sm:$0xff]
    %v102 = vld [vmem:[%s0 + $0x1c8] sm:$0xff]
    %v103 = vld [vmem:[%s0 + $0x1d0] sm:$0xff]
    %v104 = vld [vmem:[%s0 + $0x1d8] sm:$0xff]
    %v105 = vld [vmem:[%s0 + $0x1e0] sm:$0xff]
    %v106 = vld [vmem:[%s0 + $0x1e8] sm:$0xff]
    %v107 = vld [vmem:[%s0 + $0x1f0] sm:$0xff]
    %v108 = vld [vmem:[%s0 + $0x1f8] sm:$0xff]
    %v109 = vld [vmem:[%s0 + $0x200] sm:$0xff]
    %v110 = vld [vmem:[%s0 + $0x208] sm:$0xff]
    %v111 = vld [vmem:[%s0 + $0x210] sm:$0xff]
    %v112 = vld [vmem:[%s0 + $0x218] sm:$0xff]
    %v113 = vld [vmem:[%s0 + $0x220] sm:$0xff]
    %v114 = vld [vmem:[%s0 + $0x228] sm:$0xff]
    %v115 = vld [vmem:[%s0 + $0x230] sm:$0xff]
    %v116 = vld [vmem:[%s0 + $0x238] sm:$0xff]
    %v117 = vld [vmem:[%s0 + $0x240] sm:$0xff]
    %v118 = vld [vmem:[%s0 + $0x248] sm:$0xff]
    %v119 = vld [vmem:[%s0 + $0x250] sm:$0xff]
    %v120 = vld [vmem:[%s0 + $0x258] sm:$0xff]
    %v121 = vld [vmem:[%s0 + $0x260] sm:$0xff]
    %v122 = vld [vmem:[%s0 + $0x268] sm:$0xff]
    %v123 = vld [vmem:[%s0 + $0x270] sm:$0xff]
    %v124 = vld [vmem:[%s0 + $0x278] sm:$0xff]
    %v125 = vld [vmem:[%s0 + $0x280] sm:$0xff]
    %v126 = vld [vmem:[%s0 + $0x288] sm:$0xff]
    %v127 = vld [vmem:[%s0 + $0x290] sm:$0xff]
    %v128 = vld [vmem:[%s0 + $0x298] sm:$0xff]
    %v129 = vld [vmem:[%s0 + $0x2a0] sm:$0xff]
    %v130 = vld [vmem:[%s0 + $0x2a8] sm:$0xff]
    %v131 = vld [vmem:[%s0 + $0x2b0] sm:$0xff]
    %v132 = vld [vmem:[%s0 + $0x2b8] sm:$0xff]
    %v133 = vld [vmem:[%s0 + $0x2c0] sm:$0xff]
    %v134 = vld [vmem:[%s0 + $0x2c8] sm:$0xff]
    %v135 = vld [vmem:[%s0 + $0x2d0] sm:$0xff]
    %v136 = vld [vmem:[%s0 + $0x2d8] sm:$0xff]
    %v137 = vld [vmem:[%s0 + $0x2e0] sm:$0xff]
    %v138 = vld [vmem:[%s0 + $0x2e8] sm:$0xff]
    %v139 = vld [vmem:[%s0 + $0x2f0] sm:$0xff]
    %v140 = vld [vmem:[%s0 + $0x2f8] sm:$0xff]
    %v141 = vld [vmem:[%s0 + $0x300] sm:$0xff]
    %v142 = vld [vmem:[%s0 + $0x308] sm:$0xff]
    %v143 = vld [vmem:[%s0 + $0x310] sm:$0xff]
    %v144 = vld [vmem:[%s0 + $0x318] sm:$0xff]
    %v145 = vld [vmem:[%s1] sm:$0xff]
    %147 = vset.pattern.permute.xlu0 0
    %148 = vperm.xlu0 %147, %v45
    %v149 = vpop.permute.xlu0 %148
    %152 = vset.pattern.permute.xlu0 0
    %153 = vperm.xlu0 %152, %v46
    %v154 = vpop.permute.xlu0 %153
    %157 = vset.pattern.permute.xlu0 0
    %158 = vperm.xlu0 %157, %v47
    %v159 = vpop.permute.xlu0 %158
    %162 = vset.pattern.permute.xlu0 0
    %163 = vperm.xlu0 %162, %v48
    %v164 = vpop.permute.xlu0 %163
    %167 = vset.pattern.permute.xlu0 0
    %168 = vperm.xlu0 %167, %v49
    %v169 = vpop.permute.xlu0 %168
    %172 = vset.pattern.permute.xlu0 0
    %173 = vperm.xlu0 %172, %v50
    %v174 = vpop.permute.xlu0 %173
    %177 = vset.pattern.permute.xlu0 0
    %178 = vperm.xlu0 %177, %v51
    %v179 = vpop.permute.xlu0 %178
    %182 = vset.pattern.permute.xlu0 0
    %183 = vperm.xlu0 %182, %v52
    %v184 = vpop.permute.xlu0 %183
    %187 = vset.pattern.permute.xlu0 0
    %188 = vperm.xlu0 %187, %v53
    %v189 = vpop.permute.xlu0 %188
    %192 = vset.pattern.permute.xlu0 0
    %193 = vperm.xlu0 %192, %v54
    %v194 = vpop.permute.xlu0 %193
    %197 = vset.pattern.permute.xlu0 0
    %198 = vperm.xlu0 %197, %v55
    %v199 = vpop.permute.xlu0 %198
    %202 = vset.pattern.permute.xlu0 0
    %203 = vperm.xlu0 %202, %v56
    %v204 = vpop.permute.xlu0 %203
    %207 = vset.pattern.permute.xlu0 0
    %208 = vperm.xlu0 %207, %v57
    %v209 = vpop.permute.xlu0 %208
    %212 = vset.pattern.permute.xlu0 0
    %213 = vperm.xlu0 %212, %v58
    %v214 = vpop.permute.xlu0 %213
    %217 = vset.pattern.permute.xlu0 0
    %218 = vperm.xlu0 %217, %v59
    %v219 = vpop.permute.xlu0 %218
    %222 = vset.pattern.permute.xlu0 0
    %223 = vperm.xlu0 %222, %v60
    %v224 = vpop.permute.xlu0 %223
    %227 = vset.pattern.permute.xlu0 0
    %228 = vperm.xlu0 %227, %v61
    %v229 = vpop.permute.xlu0 %228
    %232 = vset.pattern.permute.xlu0 0
    %233 = vperm.xlu0 %232, %v62
    %v234 = vpop.permute.xlu0 %233
    %237 = vset.pattern.permute.xlu0 0
    %238 = vperm.xlu0 %237, %v63
    %v239 = vpop.permute.xlu0 %238
    %242 = vset.pattern.permute.xlu0 0
    %243 = vperm.xlu0 %242, %v64
    %v244 = vpop.permute.xlu0 %243
    %247 = vset.pattern.permute.xlu0 0
    %248 = vperm.xlu0 %247, %v65
    %v249 = vpop.permute.xlu0 %248
    %252 = vset.pattern.permute.xlu0 0
    %253 = vperm.xlu0 %252, %v66
    %v254 = vpop.permute.xlu0 %253
    %257 = vset.pattern.permute.xlu0 0
    %258 = vperm.xlu0 %257, %v67
    %v259 = vpop.permute.xlu0 %258
    %262 = vset.pattern.permute.xlu0 0
    %263 = vperm.xlu0 %262, %v68
    %v264 = vpop.permute.xlu0 %263
    %267 = vset.pattern.permute.xlu0 0
    %268 = vperm.xlu0 %267, %v69
    %v269 = vpop.permute.xlu0 %268
    %272 = vset.pattern.permute.xlu0 0
    %273 = vperm.xlu0 %272, %v70
    %v274 = vpop.permute.xlu0 %273
    %277 = vset.pattern.permute.xlu0 0
    %278 = vperm.xlu0 %277, %v71
    %v279 = vpop.permute.xlu0 %278
    %282 = vset.pattern.permute.xlu0 0
    %283 = vperm.xlu0 %282, %v72
    %v284 = vpop.permute.xlu0 %283
    %287 = vset.pattern.permute.xlu0 0
    %288 = vperm.xlu0 %287, %v73
    %v289 = vpop.permute.xlu0 %288
    %292 = vset.pattern.permute.xlu0 0
    %293 = vperm.xlu0 %292, %v74
    %v294 = vpop.permute.xlu0 %293
    %297 = vset.pattern.permute.xlu0 0
    %298 = vperm.xlu0 %297, %v75
    %v299 = vpop.permute.xlu0 %298
    %302 = vset.pattern.permute.xlu0 0
    %303 = vperm.xlu0 %302, %v76
    %v304 = vpop.permute.xlu0 %303
    %307 = vset.pattern.permute.xlu0 0
    %308 = vperm.xlu0 %307, %v77
    %v309 = vpop.permute.xlu0 %308
    %312 = vset.pattern.permute.xlu0 0
    %313 = vperm.xlu0 %312, %v78
    %v314 = vpop.permute.xlu0 %313
    %317 = vset.pattern.permute.xlu0 0
    %318 = vperm.xlu0 %317, %v79
    %v319 = vpop.permute.xlu0 %318
    %322 = vset.pattern.permute.xlu0 0
    %323 = vperm.xlu0 %322, %v80
    %v324 = vpop.permute.xlu0 %323
    %327 = vset.pattern.permute.xlu0 0
    %328 = vperm.xlu0 %327, %v81
    %v329 = vpop.permute.xlu0 %328
    %332 = vset.pattern.permute.xlu0 0
    %333 = vperm.xlu0 %332, %v82
    %v334 = vpop.permute.xlu0 %333
    %337 = vset.pattern.permute.xlu0 0
    %338 = vperm.xlu0 %337, %v83
    %v339 = vpop.permute.xlu0 %338
    %342 = vset.pattern.permute.xlu0 0
    %343 = vperm.xlu0 %342, %v84
    %v344 = vpop.permute.xlu0 %343
    %347 = vset.pattern.permute.xlu0 0
    %348 = vperm.xlu0 %347, %v85
    %v349 = vpop.permute.xlu0 %348
    %352 = vset.pattern.permute.xlu0 0
    %353 = vperm.xlu0 %352, %v86
    %v354 = vpop.permute.xlu0 %353
    %357 = vset.pattern.permute.xlu0 0
    %358 = vperm.xlu0 %357, %v87
    %v359 = vpop.permute.xlu0 %358
    %362 = vset.pattern.permute.xlu0 0
    %363 = vperm.xlu0 %362, %v88
    %v364 = vpop.permute.xlu0 %363
    %367 = vset.pattern.permute.xlu0 0
    %368 = vperm.xlu0 %367, %v89
    %v369 = vpop.permute.xlu0 %368
    %372 = vset.pattern.permute.xlu0 0
    %373 = vperm.xlu0 %372, %v90
    %v374 = vpop.permute.xlu0 %373
    %377 = vset.pattern.permute.xlu0 0
    %378 = vperm.xlu0 %377, %v91
    %v379 = vpop.permute.xlu0 %378
    %382 = vset.pattern.permute.xlu0 0
    %383 = vperm.xlu0 %382, %v92
    %v384 = vpop.permute.xlu0 %383
    %387 = vset.pattern.permute.xlu0 0
    %388 = vperm.xlu0 %387, %v93
    %v389 = vpop.permute.xlu0 %388
    %392 = vset.pattern.permute.xlu0 0
    %393 = vperm.xlu0 %392, %v94
    %v394 = vpop.permute.xlu0 %393
    %397 = vset.pattern.permute.xlu0 0
    %398 = vperm.xlu0 %397, %v95
    %v399 = vpop.permute.xlu0 %398
    %402 = vset.pattern.permute.xlu0 0
    %403 = vperm.xlu0 %402, %v96
    %v404 = vpop.permute.xlu0 %403
    %407 = vset.pattern.permute.xlu0 0
    %408 = vperm.xlu0 %407, %v97
    %v409 = vpop.permute.xlu0 %408
    %412 = vset.pattern.permute.xlu0 0
    %413 = vperm.xlu0 %412, %v98
    %v414 = vpop.permute.xlu0 %413
    %417 = vset.pattern.permute.xlu0 0
    %418 = vperm.xlu0 %417, %v99
    %v419 = vpop.permute.xlu0 %418
    %422 = vset.pattern.permute.xlu0 0
    %423 = vperm.xlu0 %422, %v100
    %v424 = vpop.permute.xlu0 %423
    %427 = vset.pattern.permute.xlu0 0
    %428 = vperm.xlu0 %427, %v101
    %v429 = vpop.permute.xlu0 %428
    %432 = vset.pattern.permute.xlu0 0
    %433 = vperm.xlu0 %432, %v102
    %v434 = vpop.permute.xlu0 %433
    %437 = vset.pattern.permute.xlu0 0
    %438 = vperm.xlu0 %437, %v103
    %v439 = vpop.permute.xlu0 %438
    %442 = vset.pattern.permute.xlu0 0
    %443 = vperm.xlu0 %442, %v104
    %v444 = vpop.permute.xlu0 %443
    %447 = vset.pattern.permute.xlu0 0
    %448 = vperm.xlu0 %447, %v105
    %v449 = vpop.permute.xlu0 %448
    %452 = vset.pattern.permute.xlu0 0
    %453 = vperm.xlu0 %452, %v106
    %v454 = vpop.permute.xlu0 %453
    %457 = vset.pattern.permute.xlu0 0
    %458 = vperm.xlu0 %457, %v107
    %v459 = vpop.permute.xlu0 %458
    %462 = vset.pattern.permute.xlu0 0
    %463 = vperm.xlu0 %462, %v108
    %v464 = vpop.permute.xlu0 %463
    %467 = vset.pattern.permute.xlu0 0
    %468 = vperm.xlu0 %467, %v109
    %v469 = vpop.permute.xlu0 %468
    %472 = vset.pattern.permute.xlu0 0
    %473 = vperm.xlu0 %472, %v110
    %v474 = vpop.permute.xlu0 %473
    %477 = vset.pattern.permute.xlu0 0
    %478 = vperm.xlu0 %477, %v111
    %v479 = vpop.permute.xlu0 %478
    %482 = vset.pattern.permute.xlu0 0
    %483 = vperm.xlu0 %482, %v112
    %v484 = vpop.permute.xlu0 %483
    %487 = vset.pattern.permute.xlu0 0
    %488 = vperm.xlu0 %487, %v113
    %v489 = vpop.permute.xlu0 %488
    %492 = vset.pattern.permute.xlu0 0
    %493 = vperm.xlu0 %492, %v114
    %v494 = vpop.permute.xlu0 %493
    %497 = vset.pattern.permute.xlu0 0
    %498 = vperm.xlu0 %497, %v115
    %v499 = vpop.permute.xlu0 %498
    %502 = vset.pattern.permute.xlu0 0
    %503 = vperm.xlu0 %502, %v116
    %v504 = vpop.permute.xlu0 %503
    %507 = vset.pattern.permute.xlu0 0
    %508 = vperm.xlu0 %507, %v117
    %v509 = vpop.permute.xlu0 %508
    %512 = vset.pattern.permute.xlu0 0
    %513 = vperm.xlu0 %512, %v118
    %v514 = vpop.permute.xlu0 %513
    %517 = vset.pattern.permute.xlu0 0
    %518 = vperm.xlu0 %517, %v119
    %v519 = vpop.permute.xlu0 %518
    %522 = vset.pattern.permute.xlu0 0
    %523 = vperm.xlu0 %522, %v120
    %v524 = vpop.permute.xlu0 %523
    %527 = vset.pattern.permute.xlu0 0
    %528 = vperm.xlu0 %527, %v121
    %v529 = vpop.permute.xlu0 %528
    %532 = vset.pattern.permute.xlu0 0
    %533 = vperm.xlu0 %532, %v122
    %v534 = vpop.permute.xlu0 %533
    %537 = vset.pattern.permute.xlu0 0
    %538 = vperm.xlu0 %537, %v123
    %v539 = vpop.permute.xlu0 %538
    %542 = vset.pattern.permute.xlu0 0
    %543 = vperm.xlu0 %542, %v124
    %v544 = vpop.permute.xlu0 %543
    %547 = vset.pattern.permute.xlu0 0
    %548 = vperm.xlu0 %547, %v125
    %v549 = vpop.permute.xlu0 %548
    %552 = vset.pattern.permute.xlu0 0
    %553 = vperm.xlu0 %552, %v126
    %v554 = vpop.permute.xlu0 %553
    %557 = vset.pattern.permute.xlu0 0
    %558 = vperm.xlu0 %557, %v127
    %v559 = vpop.permute.xlu0 %558
    %562 = vset.pattern.permute.xlu0 0
    %563 = vperm.xlu0 %562, %v128
    %v564 = vpop.permute.xlu0 %563
    %567 = vset.pattern.permute.xlu0 0
    %568 = vperm.xlu0 %567, %v129
    %v569 = vpop.permute.xlu0 %568
    %572 = vset.pattern.permute.xlu0 0
    %573 = vperm.xlu0 %572, %v130
    %v574 = vpop.permute.xlu0 %573
    %577 = vset.pattern.permute.xlu0 0
    %578 = vperm.xlu0 %577, %v131
    %v579 = vpop.permute.xlu0 %578
    %582 = vset.pattern.permute.xlu0 0
    %583 = vperm.xlu0 %582, %v132
    %v584 = vpop.permute.xlu0 %583
    %587 = vset.pattern.permute.xlu0 0
    %588 = vperm.xlu0 %587, %v133
    %v589 = vpop.permute.xlu0 %588
    %592 = vset.pattern.permute.xlu0 0
    %593 = vperm.xlu0 %592, %v134
    %v594 = vpop.permute.xlu0 %593
    %597 = vset.pattern.permute.xlu0 0
    %598 = vperm.xlu0 %597, %v135
    %v599 = vpop.permute.xlu0 %598
    %602 = vset.pattern.permute.xlu0 0
    %603 = vperm.xlu0 %602, %v136
    %v604 = vpop.permute.xlu0 %603
    %607 = vset.pattern.permute.xlu0 0
    %608 = vperm.xlu0 %607, %v137
    %v609 = vpop.permute.xlu0 %608
    %612 = vset.pattern.permute.xlu0 0
    %613 = vperm.xlu0 %612, %v138
    %v614 = vpop.permute.xlu0 %613
    %617 = vset.pattern.permute.xlu0 0
    %618 = vperm.xlu0 %617, %v139
    %v619 = vpop.permute.xlu0 %618
    %622 = vset.pattern.permute.xlu0 0
    %623 = vperm.xlu0 %622, %v140
    %v624 = vpop.permute.xlu0 %623
    %627 = vset.pattern.permute.xlu0 0
    %628 = vperm.xlu0 %627, %v141
    %v629 = vpop.permute.xlu0 %628
    %632 = vset.pattern.permute.xlu0 0
    %633 = vperm.xlu0 %632, %v142
    %v634 = vpop.permute.xlu0 %633
    %637 = vset.pattern.permute.xlu0 0
    %638 = vperm.xlu0 %637, %v143
    %v639 = vpop.permute.xlu0 %638
    %642 = vset.pattern.permute.xlu0 0
    %643 = vperm.xlu0 %642, %v144
    %v644 = vpop.permute.xlu0 %643
    %v647 = vlaneseq
    %v648 = vshrl.u32 %v647, 7
    %v649 = vsub.s32 0, %v648
    %v650 = vrot.slane %v145, %v649
    %v651 = vlaneseq
    %v652 = vshrl.u32 %v651, 7
    %v653 = vsub.s32 1, %v652
    %v654 = vrot.slane %v145, %v653
    %v655 = vlaneseq
    %v656 = vshrl.u32 %v655, 7
    %v657 = vsub.s32 2, %v656
    %v658 = vrot.slane %v145, %v657
    %v659 = vlaneseq
    %v660 = vshrl.u32 %v659, 7
    %v661 = vsub.s32 3, %v660
    %v662 = vrot.slane %v145, %v661
    %v663 = vlaneseq
    %v664 = vshrl.u32 %v663, 7
    %v665 = vsub.s32 4, %v664
    %v666 = vrot.slane %v145, %v665
    %v667 = vlaneseq
    %v668 = vshrl.u32 %v667, 7
    %v669 = vsub.s32 5, %v668
    %v670 = vrot.slane %v145, %v669
    %v671 = vlaneseq
    %v672 = vshrl.u32 %v671, 7
    %v673 = vsub.s32 6, %v672
    %v674 = vrot.slane %v145, %v673
    %v675 = vlaneseq
    %v676 = vshrl.u32 %v675, 7
    %v677 = vsub.s32 7, %v676
    %v678 = vrot.slane %v145, %v677
    %v687 = vmul.f32 %v149, %v650
    %v688 = vmul.f32 %v149, %v654
    %v689 = vmul.f32 %v149, %v658
    %v690 = vmul.f32 %v149, %v662
    %v691 = vmul.f32 %v149, %v666
    %v692 = vmul.f32 %v149, %v670
    %v693 = vmul.f32 %v149, %v674
    %v694 = vmul.f32 %v149, %v678
    %v695 = vmul.f32 %v154, %v650
    %v696 = vmul.f32 %v154, %v654
    %v697 = vmul.f32 %v154, %v658
    %v698 = vmul.f32 %v154, %v662
    %v699 = vmul.f32 %v154, %v666
    %v700 = vmul.f32 %v154, %v670
    %v701 = vmul.f32 %v154, %v674
    %v702 = vmul.f32 %v154, %v678
    %v703 = vmul.f32 %v159, %v650
    %v704 = vmul.f32 %v159, %v654
    %v705 = vmul.f32 %v159, %v658
    %v706 = vmul.f32 %v159, %v662
    %v707 = vmul.f32 %v159, %v666
    %v708 = vmul.f32 %v159, %v670
    %v709 = vmul.f32 %v159, %v674
    %v710 = vmul.f32 %v159, %v678
    %v711 = vmul.f32 %v164, %v650
    %v712 = vmul.f32 %v164, %v654
    %v713 = vmul.f32 %v164, %v658
    %v714 = vmul.f32 %v164, %v662
    %v715 = vmul.f32 %v164, %v666
    %v716 = vmul.f32 %v164, %v670
    %v717 = vmul.f32 %v164, %v674
    %v718 = vmul.f32 %v164, %v678
    %v719 = vmul.f32 %v169, %v650
    %v720 = vmul.f32 %v169, %v654
    %v721 = vmul.f32 %v169, %v658
    %v722 = vmul.f32 %v169, %v662
    %v723 = vmul.f32 %v169, %v666
    %v724 = vmul.f32 %v169, %v670
    %v725 = vmul.f32 %v169, %v674
    %v726 = vmul.f32 %v169, %v678
    %v727 = vmul.f32 %v174, %v650
    %v728 = vmul.f32 %v174, %v654
    %v729 = vmul.f32 %v174, %v658
    %v730 = vmul.f32 %v174, %v662
    %v731 = vmul.f32 %v174, %v666
    %v732 = vmul.f32 %v174, %v670
    %v733 = vmul.f32 %v174, %v674
    %v734 = vmul.f32 %v174, %v678
    %v735 = vmul.f32 %v179, %v650
    %v736 = vmul.f32 %v179, %v654
    %v737 = vmul.f32 %v179, %v658
    %v738 = vmul.f32 %v179, %v662
    %v739 = vmul.f32 %v179, %v666
    %v740 = vmul.f32 %v179, %v670
    %v741 = vmul.f32 %v179, %v674
    %v742 = vmul.f32 %v179, %v678
    %v743 = vmul.f32 %v184, %v650
    %v744 = vmul.f32 %v184, %v654
    %v745 = vmul.f32 %v184, %v658
    %v746 = vmul.f32 %v184, %v662
    %v747 = vmul.f32 %v184, %v666
    %v748 = vmul.f32 %v184, %v670
    %v749 = vmul.f32 %v184, %v674
    %v750 = vmul.f32 %v184, %v678
    %v751 = vmul.f32 %v189, %v650
    %v752 = vmul.f32 %v189, %v654
    %v753 = vmul.f32 %v189, %v658
    %v754 = vmul.f32 %v189, %v662
    %v755 = vmul.f32 %v189, %v666
    %v756 = vmul.f32 %v189, %v670
    %v757 = vmul.f32 %v189, %v674
    %v758 = vmul.f32 %v189, %v678
    %v759 = vmul.f32 %v194, %v650
    %v760 = vmul.f32 %v194, %v654
    %v761 = vmul.f32 %v194, %v658
    %v762 = vmul.f32 %v194, %v662
    %v763 = vmul.f32 %v194, %v666
    %v764 = vmul.f32 %v194, %v670
    %v765 = vmul.f32 %v194, %v674
    %v766 = vmul.f32 %v194, %v678
    %v767 = vmul.f32 %v199, %v650
    %v768 = vmul.f32 %v199, %v654
    %v769 = vmul.f32 %v199, %v658
    %v770 = vmul.f32 %v199, %v662
    %v771 = vmul.f32 %v199, %v666
    %v772 = vmul.f32 %v199, %v670
    %v773 = vmul.f32 %v199, %v674
    %v774 = vmul.f32 %v199, %v678
    %v775 = vmul.f32 %v204, %v650
    %v776 = vmul.f32 %v204, %v654
    %v777 = vmul.f32 %v204, %v658
    %v778 = vmul.f32 %v204, %v662
    %v779 = vmul.f32 %v204, %v666
    %v780 = vmul.f32 %v204, %v670
    %v781 = vmul.f32 %v204, %v674
    %v782 = vmul.f32 %v204, %v678
    %v783 = vmul.f32 %v209, %v650
    %v784 = vmul.f32 %v209, %v654
    %v785 = vmul.f32 %v209, %v658
    %v786 = vmul.f32 %v209, %v662
    %v787 = vmul.f32 %v209, %v666
    %v788 = vmul.f32 %v209, %v670
    %v789 = vmul.f32 %v209, %v674
    %v790 = vmul.f32 %v209, %v678
    %v791 = vmul.f32 %v214, %v650
    %v792 = vmul.f32 %v214, %v654
    %v793 = vmul.f32 %v214, %v658
    %v794 = vmul.f32 %v214, %v662
    %v795 = vmul.f32 %v214, %v666
    %v796 = vmul.f32 %v214, %v670
    %v797 = vmul.f32 %v214, %v674
    %v798 = vmul.f32 %v214, %v678
    %v799 = vmul.f32 %v219, %v650
    %v800 = vmul.f32 %v219, %v654
    %v801 = vmul.f32 %v219, %v658
    %v802 = vmul.f32 %v219, %v662
    %v803 = vmul.f32 %v219, %v666
    %v804 = vmul.f32 %v219, %v670
    %v805 = vmul.f32 %v219, %v674
    %v806 = vmul.f32 %v219, %v678
    %v807 = vmul.f32 %v224, %v650
    %v808 = vmul.f32 %v224, %v654
    %v809 = vmul.f32 %v224, %v658
    %v810 = vmul.f32 %v224, %v662
    %v811 = vmul.f32 %v224, %v666
    %v812 = vmul.f32 %v224, %v670
    %v813 = vmul.f32 %v224, %v674
    %v814 = vmul.f32 %v224, %v678
    %v815 = vmul.f32 %v229, %v650
    %v816 = vmul.f32 %v229, %v654
    %v817 = vmul.f32 %v229, %v658
    %v818 = vmul.f32 %v229, %v662
    %v819 = vmul.f32 %v229, %v666
    %v820 = vmul.f32 %v229, %v670
    %v821 = vmul.f32 %v229, %v674
    %v822 = vmul.f32 %v229, %v678
    %v823 = vmul.f32 %v234, %v650
    %v824 = vmul.f32 %v234, %v654
    %v825 = vmul.f32 %v234, %v658
    %v826 = vmul.f32 %v234, %v662
    %v827 = vmul.f32 %v234, %v666
    %v828 = vmul.f32 %v234, %v670
    %v829 = vmul.f32 %v234, %v674
    %v830 = vmul.f32 %v234, %v678
    %v831 = vmul.f32 %v239, %v650
    %v832 = vmul.f32 %v239, %v654
    %v833 = vmul.f32 %v239, %v658
    %v834 = vmul.f32 %v239, %v662
    %v835 = vmul.f32 %v239, %v666
    %v836 = vmul.f32 %v239, %v670
    %v837 = vmul.f32 %v239, %v674
    %v838 = vmul.f32 %v239, %v678
    %v839 = vmul.f32 %v244, %v650
    %v840 = vmul.f32 %v244, %v654
    %v841 = vmul.f32 %v244, %v658
    %v842 = vmul.f32 %v244, %v662
    %v843 = vmul.f32 %v244, %v666
    %v844 = vmul.f32 %v244, %v670
    %v845 = vmul.f32 %v244, %v674
    %v846 = vmul.f32 %v244, %v678
    %v847 = vmul.f32 %v249, %v650
    %v848 = vmul.f32 %v249, %v654
    %v849 = vmul.f32 %v249, %v658
    %v850 = vmul.f32 %v249, %v662
    %v851 = vmul.f32 %v249, %v666
    %v852 = vmul.f32 %v249, %v670
    %v853 = vmul.f32 %v249, %v674
    %v854 = vmul.f32 %v249, %v678
    %v855 = vmul.f32 %v254, %v650
    %v856 = vmul.f32 %v254, %v654
    %v857 = vmul.f32 %v254, %v658
    %v858 = vmul.f32 %v254, %v662
    %v859 = vmul.f32 %v254, %v666
    %v860 = vmul.f32 %v254, %v670
    %v861 = vmul.f32 %v254, %v674
    %v862 = vmul.f32 %v254, %v678
    %v863 = vmul.f32 %v259, %v650
    %v864 = vmul.f32 %v259, %v654
    %v865 = vmul.f32 %v259, %v658
    %v866 = vmul.f32 %v259, %v662
    %v867 = vmul.f32 %v259, %v666
    %v868 = vmul.f32 %v259, %v670
    %v869 = vmul.f32 %v259, %v674
    %v870 = vmul.f32 %v259, %v678
    %v871 = vmul.f32 %v264, %v650
    %v872 = vmul.f32 %v264, %v654
    %v873 = vmul.f32 %v264, %v658
    %v874 = vmul.f32 %v264, %v662
    %v875 = vmul.f32 %v264, %v666
    %v876 = vmul.f32 %v264, %v670
    %v877 = vmul.f32 %v264, %v674
    %v878 = vmul.f32 %v264, %v678
    %v879 = vmul.f32 %v269, %v650
    %v880 = vmul.f32 %v269, %v654
    %v881 = vmul.f32 %v269, %v658
    %v882 = vmul.f32 %v269, %v662
    %v883 = vmul.f32 %v269, %v666
    %v884 = vmul.f32 %v269, %v670
    %v885 = vmul.f32 %v269, %v674
    %v886 = vmul.f32 %v269, %v678
    %v887 = vmul.f32 %v274, %v650
    %v888 = vmul.f32 %v274, %v654
    %v889 = vmul.f32 %v274, %v658
    %v890 = vmul.f32 %v274, %v662
    %v891 = vmul.f32 %v274, %v666
    %v892 = vmul.f32 %v274, %v670
    %v893 = vmul.f32 %v274, %v674
    %v894 = vmul.f32 %v274, %v678
    %v895 = vmul.f32 %v279, %v650
    %v896 = vmul.f32 %v279, %v654
    %v897 = vmul.f32 %v279, %v658
    %v898 = vmul.f32 %v279, %v662
    %v899 = vmul.f32 %v279, %v666
    %v900 = vmul.f32 %v279, %v670
    %v901 = vmul.f32 %v279, %v674
    %v902 = vmul.f32 %v279, %v678
    %v903 = vmul.f32 %v284, %v650
    %v904 = vmul.f32 %v284, %v654
    %v905 = vmul.f32 %v284, %v658
    %v906 = vmul.f32 %v284, %v662
    %v907 = vmul.f32 %v284, %v666
    %v908 = vmul.f32 %v284, %v670
    %v909 = vmul.f32 %v284, %v674
    %v910 = vmul.f32 %v284, %v678
    %v911 = vmul.f32 %v289, %v650
    %v912 = vmul.f32 %v289, %v654
    %v913 = vmul.f32 %v289, %v658
    %v914 = vmul.f32 %v289, %v662
    %v915 = vmul.f32 %v289, %v666
    %v916 = vmul.f32 %v289, %v670
    %v917 = vmul.f32 %v289, %v674
    %v918 = vmul.f32 %v289, %v678
    %v919 = vmul.f32 %v294, %v650
    %v920 = vmul.f32 %v294, %v654
    %v921 = vmul.f32 %v294, %v658
    %v922 = vmul.f32 %v294, %v662
    %v923 = vmul.f32 %v294, %v666
    %v924 = vmul.f32 %v294, %v670
    %v925 = vmul.f32 %v294, %v674
    %v926 = vmul.f32 %v294, %v678
    %v927 = vmul.f32 %v299, %v650
    %v928 = vmul.f32 %v299, %v654
    %v929 = vmul.f32 %v299, %v658
    %v930 = vmul.f32 %v299, %v662
    %v931 = vmul.f32 %v299, %v666
    %v932 = vmul.f32 %v299, %v670
    %v933 = vmul.f32 %v299, %v674
    %v934 = vmul.f32 %v299, %v678
    %v935 = vmul.f32 %v304, %v650
    %v936 = vmul.f32 %v304, %v654
    %v937 = vmul.f32 %v304, %v658
    %v938 = vmul.f32 %v304, %v662
    %v939 = vmul.f32 %v304, %v666
    %v940 = vmul.f32 %v304, %v670
    %v941 = vmul.f32 %v304, %v674
    %v942 = vmul.f32 %v304, %v678
    %v943 = vmul.f32 %v309, %v650
    %v944 = vmul.f32 %v309, %v654
    %v945 = vmul.f32 %v309, %v658
    %v946 = vmul.f32 %v309, %v662
    %v947 = vmul.f32 %v309, %v666
    %v948 = vmul.f32 %v309, %v670
    %v949 = vmul.f32 %v309, %v674
    %v950 = vmul.f32 %v309, %v678
    %v951 = vmul.f32 %v314, %v650
    %v952 = vmul.f32 %v314, %v654
    %v953 = vmul.f32 %v314, %v658
    %v954 = vmul.f32 %v314, %v662
    %v955 = vmul.f32 %v314, %v666
    %v956 = vmul.f32 %v314, %v670
    %v957 = vmul.f32 %v314, %v674
    %v958 = vmul.f32 %v314, %v678
    %v959 = vmul.f32 %v319, %v650
    %v960 = vmul.f32 %v319, %v654
    %v961 = vmul.f32 %v319, %v658
    %v962 = vmul.f32 %v319, %v662
    %v963 = vmul.f32 %v319, %v666
    %v964 = vmul.f32 %v319, %v670
    %v965 = vmul.f32 %v319, %v674
    %v966 = vmul.f32 %v319, %v678
    %v967 = vmul.f32 %v324, %v650
    %v968 = vmul.f32 %v324, %v654
    %v969 = vmul.f32 %v324, %v658
    %v970 = vmul.f32 %v324, %v662
    %v971 = vmul.f32 %v324, %v666
    %v972 = vmul.f32 %v324, %v670
    %v973 = vmul.f32 %v324, %v674
    %v974 = vmul.f32 %v324, %v678
    %v975 = vmul.f32 %v329, %v650
    %v976 = vmul.f32 %v329, %v654
    %v977 = vmul.f32 %v329, %v658
    %v978 = vmul.f32 %v329, %v662
    %v979 = vmul.f32 %v329, %v666
    %v980 = vmul.f32 %v329, %v670
    %v981 = vmul.f32 %v329, %v674
    %v982 = vmul.f32 %v329, %v678
    %v983 = vmul.f32 %v334, %v650
    %v984 = vmul.f32 %v334, %v654
    %v985 = vmul.f32 %v334, %v658
    %v986 = vmul.f32 %v334, %v662
    %v987 = vmul.f32 %v334, %v666
    %v988 = vmul.f32 %v334, %v670
    %v989 = vmul.f32 %v334, %v674
    %v990 = vmul.f32 %v334, %v678
    %v991 = vmul.f32 %v339, %v650
    %v992 = vmul.f32 %v339, %v654
    %v993 = vmul.f32 %v339, %v658
    %v994 = vmul.f32 %v339, %v662
    %v995 = vmul.f32 %v339, %v666
    %v996 = vmul.f32 %v339, %v670
    %v997 = vmul.f32 %v339, %v674
    %v998 = vmul.f32 %v339, %v678
    %v999 = vmul.f32 %v344, %v650
    %v1000 = vmul.f32 %v344, %v654
    %v1001 = vmul.f32 %v344, %v658
    %v1002 = vmul.f32 %v344, %v662
    %v1003 = vmul.f32 %v344, %v666
    %v1004 = vmul.f32 %v344, %v670
    %v1005 = vmul.f32 %v344, %v674
    %v1006 = vmul.f32 %v344, %v678
    %v1007 = vmul.f32 %v349, %v650
    %v1008 = vmul.f32 %v349, %v654
    %v1009 = vmul.f32 %v349, %v658
    %v1010 = vmul.f32 %v349, %v662
    %v1011 = vmul.f32 %v349, %v666
    %v1012 = vmul.f32 %v349, %v670
    %v1013 = vmul.f32 %v349, %v674
    %v1014 = vmul.f32 %v349, %v678
    %v1015 = vmul.f32 %v354, %v650
    %v1016 = vmul.f32 %v354, %v654
    %v1017 = vmul.f32 %v354, %v658
    %v1018 = vmul.f32 %v354, %v662
    %v1019 = vmul.f32 %v354, %v666
    %v1020 = vmul.f32 %v354, %v670
    %v1021 = vmul.f32 %v354, %v674
    %v1022 = vmul.f32 %v354, %v678
    %v1023 = vmul.f32 %v359, %v650
    %v1024 = vmul.f32 %v359, %v654
    %v1025 = vmul.f32 %v359, %v658
    %v1026 = vmul.f32 %v359, %v662
    %v1027 = vmul.f32 %v359, %v666
    %v1028 = vmul.f32 %v359, %v670
    %v1029 = vmul.f32 %v359, %v674
    %v1030 = vmul.f32 %v359, %v678
    %v1031 = vmul.f32 %v364, %v650
    %v1032 = vmul.f32 %v364, %v654
    %v1033 = vmul.f32 %v364, %v658
    %v1034 = vmul.f32 %v364, %v662
    %v1035 = vmul.f32 %v364, %v666
    %v1036 = vmul.f32 %v364, %v670
    %v1037 = vmul.f32 %v364, %v674
    %v1038 = vmul.f32 %v364, %v678
    %v1039 = vmul.f32 %v369, %v650
    %v1040 = vmul.f32 %v369, %v654
    %v1041 = vmul.f32 %v369, %v658
    %v1042 = vmul.f32 %v369, %v662
    %v1043 = vmul.f32 %v369, %v666
    %v1044 = vmul.f32 %v369, %v670
    %v1045 = vmul.f32 %v369, %v674
    %v1046 = vmul.f32 %v369, %v678
    %v1047 = vmul.f32 %v374, %v650
    %v1048 = vmul.f32 %v374, %v654
    %v1049 = vmul.f32 %v374, %v658
    %v1050 = vmul.f32 %v374, %v662
    %v1051 = vmul.f32 %v374, %v666
    %v1052 = vmul.f32 %v374, %v670
    %v1053 = vmul.f32 %v374, %v674
    %v1054 = vmul.f32 %v374, %v678
    %v1055 = vmul.f32 %v379, %v650
    %v1056 = vmul.f32 %v379, %v654
    %v1057 = vmul.f32 %v379, %v658
    %v1058 = vmul.f32 %v379, %v662
    %v1059 = vmul.f32 %v379, %v666
    %v1060 = vmul.f32 %v379, %v670
    %v1061 = vmul.f32 %v379, %v674
    %v1062 = vmul.f32 %v379, %v678
    %v1063 = vmul.f32 %v384, %v650
    %v1064 = vmul.f32 %v384, %v654
    %v1065 = vmul.f32 %v384, %v658
    %v1066 = vmul.f32 %v384, %v662
    %v1067 = vmul.f32 %v384, %v666
    %v1068 = vmul.f32 %v384, %v670
    %v1069 = vmul.f32 %v384, %v674
    %v1070 = vmul.f32 %v384, %v678
    %v1071 = vmul.f32 %v389, %v650
    %v1072 = vmul.f32 %v389, %v654
    %v1073 = vmul.f32 %v389, %v658
    %v1074 = vmul.f32 %v389, %v662
    %v1075 = vmul.f32 %v389, %v666
    %v1076 = vmul.f32 %v389, %v670
    %v1077 = vmul.f32 %v389, %v674
    %v1078 = vmul.f32 %v389, %v678
    %v1079 = vmul.f32 %v394, %v650
    %v1080 = vmul.f32 %v394, %v654
    %v1081 = vmul.f32 %v394, %v658
    %v1082 = vmul.f32 %v394, %v662
    %v1083 = vmul.f32 %v394, %v666
    %v1084 = vmul.f32 %v394, %v670
    %v1085 = vmul.f32 %v394, %v674
    %v1086 = vmul.f32 %v394, %v678
    %v1087 = vmul.f32 %v399, %v650
    %v1088 = vmul.f32 %v399, %v654
    %v1089 = vmul.f32 %v399, %v658
    %v1090 = vmul.f32 %v399, %v662
    %v1091 = vmul.f32 %v399, %v666
    %v1092 = vmul.f32 %v399, %v670
    %v1093 = vmul.f32 %v399, %v674
    %v1094 = vmul.f32 %v399, %v678
    %v1095 = vmul.f32 %v404, %v650
    %v1096 = vmul.f32 %v404, %v654
    %v1097 = vmul.f32 %v404, %v658
    %v1098 = vmul.f32 %v404, %v662
    %v1099 = vmul.f32 %v404, %v666
    %v1100 = vmul.f32 %v404, %v670
    %v1101 = vmul.f32 %v404, %v674
    %v1102 = vmul.f32 %v404, %v678
    %v1103 = vmul.f32 %v409, %v650
    %v1104 = vmul.f32 %v409, %v654
    %v1105 = vmul.f32 %v409, %v658
    %v1106 = vmul.f32 %v409, %v662
    %v1107 = vmul.f32 %v409, %v666
    %v1108 = vmul.f32 %v409, %v670
    %v1109 = vmul.f32 %v409, %v674
    %v1110 = vmul.f32 %v409, %v678
    %v1111 = vmul.f32 %v414, %v650
    %v1112 = vmul.f32 %v414, %v654
    %v1113 = vmul.f32 %v414, %v658
    %v1114 = vmul.f32 %v414, %v662
    %v1115 = vmul.f32 %v414, %v666
    %v1116 = vmul.f32 %v414, %v670
    %v1117 = vmul.f32 %v414, %v674
    %v1118 = vmul.f32 %v414, %v678
    %v1119 = vmul.f32 %v419, %v650
    %v1120 = vmul.f32 %v419, %v654
    %v1121 = vmul.f32 %v419, %v658
    %v1122 = vmul.f32 %v419, %v662
    %v1123 = vmul.f32 %v419, %v666
    %v1124 = vmul.f32 %v419, %v670
    %v1125 = vmul.f32 %v419, %v674
    %v1126 = vmul.f32 %v419, %v678
    %v1127 = vmul.f32 %v424, %v650
    %v1128 = vmul.f32 %v424, %v654
    %v1129 = vmul.f32 %v424, %v658
    %v1130 = vmul.f32 %v424, %v662
    %v1131 = vmul.f32 %v424, %v666
    %v1132 = vmul.f32 %v424, %v670
    %v1133 = vmul.f32 %v424, %v674
    %v1134 = vmul.f32 %v424, %v678
    %v1135 = vmul.f32 %v429, %v650
    %v1136 = vmul.f32 %v429, %v654
    %v1137 = vmul.f32 %v429, %v658
    %v1138 = vmul.f32 %v429, %v662
    %v1139 = vmul.f32 %v429, %v666
    %v1140 = vmul.f32 %v429, %v670
    %v1141 = vmul.f32 %v429, %v674
    %v1142 = vmul.f32 %v429, %v678
    %v1143 = vmul.f32 %v434, %v650
    %v1144 = vmul.f32 %v434, %v654
    %v1145 = vmul.f32 %v434, %v658
    %v1146 = vmul.f32 %v434, %v662
    %v1147 = vmul.f32 %v434, %v666
    %v1148 = vmul.f32 %v434, %v670
    %v1149 = vmul.f32 %v434, %v674
    %v1150 = vmul.f32 %v434, %v678
    %v1151 = vmul.f32 %v439, %v650
    %v1152 = vmul.f32 %v439, %v654
    %v1153 = vmul.f32 %v439, %v658
    %v1154 = vmul.f32 %v439, %v662
    %v1155 = vmul.f32 %v439, %v666
    %v1156 = vmul.f32 %v439, %v670
    %v1157 = vmul.f32 %v439, %v674
    %v1158 = vmul.f32 %v439, %v678
    %v1159 = vmul.f32 %v444, %v650
    %v1160 = vmul.f32 %v444, %v654
    %v1161 = vmul.f32 %v444, %v658
    %v1162 = vmul.f32 %v444, %v662
    %v1163 = vmul.f32 %v444, %v666
    %v1164 = vmul.f32 %v444, %v670
    %v1165 = vmul.f32 %v444, %v674
    %v1166 = vmul.f32 %v444, %v678
    %v1167 = vmul.f32 %v449, %v650
    %v1168 = vmul.f32 %v449, %v654
    %v1169 = vmul.f32 %v449, %v658
    %v1170 = vmul.f32 %v449, %v662
    %v1171 = vmul.f32 %v449, %v666
    %v1172 = vmul.f32 %v449, %v670
    %v1173 = vmul.f32 %v449, %v674
    %v1174 = vmul.f32 %v449, %v678
    %v1175 = vmul.f32 %v454, %v650
    %v1176 = vmul.f32 %v454, %v654
    %v1177 = vmul.f32 %v454, %v658
    %v1178 = vmul.f32 %v454, %v662
    %v1179 = vmul.f32 %v454, %v666
    %v1180 = vmul.f32 %v454, %v670
    %v1181 = vmul.f32 %v454, %v674
    %v1182 = vmul.f32 %v454, %v678
    %v1183 = vmul.f32 %v459, %v650
    %v1184 = vmul.f32 %v459, %v654
    %v1185 = vmul.f32 %v459, %v658
    %v1186 = vmul.f32 %v459, %v662
    %v1187 = vmul.f32 %v459, %v666
    %v1188 = vmul.f32 %v459, %v670
    %v1189 = vmul.f32 %v459, %v674
    %v1190 = vmul.f32 %v459, %v678
    %v1191 = vmul.f32 %v464, %v650
    %v1192 = vmul.f32 %v464, %v654
    %v1193 = vmul.f32 %v464, %v658
    %v1194 = vmul.f32 %v464, %v662
    %v1195 = vmul.f32 %v464, %v666
    %v1196 = vmul.f32 %v464, %v670
    %v1197 = vmul.f32 %v464, %v674
    %v1198 = vmul.f32 %v464, %v678
    %v1199 = vmul.f32 %v469, %v650
    %v1200 = vmul.f32 %v469, %v654
    %v1201 = vmul.f32 %v469, %v658
    %v1202 = vmul.f32 %v469, %v662
    %v1203 = vmul.f32 %v469, %v666
    %v1204 = vmul.f32 %v469, %v670
    %v1205 = vmul.f32 %v469, %v674
    %v1206 = vmul.f32 %v469, %v678
    %v1207 = vmul.f32 %v474, %v650
    %v1208 = vmul.f32 %v474, %v654
    %v1209 = vmul.f32 %v474, %v658
    %v1210 = vmul.f32 %v474, %v662
    %v1211 = vmul.f32 %v474, %v666
    %v1212 = vmul.f32 %v474, %v670
    %v1213 = vmul.f32 %v474, %v674
    %v1214 = vmul.f32 %v474, %v678
    %v1215 = vmul.f32 %v479, %v650
    %v1216 = vmul.f32 %v479, %v654
    %v1217 = vmul.f32 %v479, %v658
    %v1218 = vmul.f32 %v479, %v662
    %v1219 = vmul.f32 %v479, %v666
    %v1220 = vmul.f32 %v479, %v670
    %v1221 = vmul.f32 %v479, %v674
    %v1222 = vmul.f32 %v479, %v678
    %v1223 = vmul.f32 %v484, %v650
    %v1224 = vmul.f32 %v484, %v654
    %v1225 = vmul.f32 %v484, %v658
    %v1226 = vmul.f32 %v484, %v662
    %v1227 = vmul.f32 %v484, %v666
    %v1228 = vmul.f32 %v484, %v670
    %v1229 = vmul.f32 %v484, %v674
    %v1230 = vmul.f32 %v484, %v678
    %v1231 = vmul.f32 %v489, %v650
    %v1232 = vmul.f32 %v489, %v654
    %v1233 = vmul.f32 %v489, %v658
    %v1234 = vmul.f32 %v489, %v662
    %v1235 = vmul.f32 %v489, %v666
    %v1236 = vmul.f32 %v489, %v670
    %v1237 = vmul.f32 %v489, %v674
    %v1238 = vmul.f32 %v489, %v678
    %v1239 = vmul.f32 %v494, %v650
    %v1240 = vmul.f32 %v494, %v654
    %v1241 = vmul.f32 %v494, %v658
    %v1242 = vmul.f32 %v494, %v662
    %v1243 = vmul.f32 %v494, %v666
    %v1244 = vmul.f32 %v494, %v670
    %v1245 = vmul.f32 %v494, %v674
    %v1246 = vmul.f32 %v494, %v678
    %v1247 = vmul.f32 %v499, %v650
    %v1248 = vmul.f32 %v499, %v654
    %v1249 = vmul.f32 %v499, %v658
    %v1250 = vmul.f32 %v499, %v662
    %v1251 = vmul.f32 %v499, %v666
    %v1252 = vmul.f32 %v499, %v670
    %v1253 = vmul.f32 %v499, %v674
    %v1254 = vmul.f32 %v499, %v678
    %v1255 = vmul.f32 %v504, %v650
    %v1256 = vmul.f32 %v504, %v654
    %v1257 = vmul.f32 %v504, %v658
    %v1258 = vmul.f32 %v504, %v662
    %v1259 = vmul.f32 %v504, %v666
    %v1260 = vmul.f32 %v504, %v670
    %v1261 = vmul.f32 %v504, %v674
    %v1262 = vmul.f32 %v504, %v678
    %v1263 = vmul.f32 %v509, %v650
    %v1264 = vmul.f32 %v509, %v654
    %v1265 = vmul.f32 %v509, %v658
    %v1266 = vmul.f32 %v509, %v662
    %v1267 = vmul.f32 %v509, %v666
    %v1268 = vmul.f32 %v509, %v670
    %v1269 = vmul.f32 %v509, %v674
    %v1270 = vmul.f32 %v509, %v678
    %v1271 = vmul.f32 %v514, %v650
    %v1272 = vmul.f32 %v514, %v654
    %v1273 = vmul.f32 %v514, %v658
    %v1274 = vmul.f32 %v514, %v662
    %v1275 = vmul.f32 %v514, %v666
    %v1276 = vmul.f32 %v514, %v670
    %v1277 = vmul.f32 %v514, %v674
    %v1278 = vmul.f32 %v514, %v678
    %v1279 = vmul.f32 %v519, %v650
    %v1280 = vmul.f32 %v519, %v654
    %v1281 = vmul.f32 %v519, %v658
    %v1282 = vmul.f32 %v519, %v662
    %v1283 = vmul.f32 %v519, %v666
    %v1284 = vmul.f32 %v519, %v670
    %v1285 = vmul.f32 %v519, %v674
    %v1286 = vmul.f32 %v519, %v678
    %v1287 = vmul.f32 %v524, %v650
    %v1288 = vmul.f32 %v524, %v654
    %v1289 = vmul.f32 %v524, %v658
    %v1290 = vmul.f32 %v524, %v662
    %v1291 = vmul.f32 %v524, %v666
    %v1292 = vmul.f32 %v524, %v670
    %v1293 = vmul.f32 %v524, %v674
    %v1294 = vmul.f32 %v524, %v678
    %v1295 = vmul.f32 %v529, %v650
    %v1296 = vmul.f32 %v529, %v654
    %v1297 = vmul.f32 %v529, %v658
    %v1298 = vmul.f32 %v529, %v662
    %v1299 = vmul.f32 %v529, %v666
    %v1300 = vmul.f32 %v529, %v670
    %v1301 = vmul.f32 %v529, %v674
    %v1302 = vmul.f32 %v529, %v678
    %v1303 = vmul.f32 %v534, %v650
    %v1304 = vmul.f32 %v534, %v654
    %v1305 = vmul.f32 %v534, %v658
    %v1306 = vmul.f32 %v534, %v662
    %v1307 = vmul.f32 %v534, %v666
    %v1308 = vmul.f32 %v534, %v670
    %v1309 = vmul.f32 %v534, %v674
    %v1310 = vmul.f32 %v534, %v678
    %v1311 = vmul.f32 %v539, %v650
    %v1312 = vmul.f32 %v539, %v654
    %v1313 = vmul.f32 %v539, %v658
    %v1314 = vmul.f32 %v539, %v662
    %v1315 = vmul.f32 %v539, %v666
    %v1316 = vmul.f32 %v539, %v670
    %v1317 = vmul.f32 %v539, %v674
    %v1318 = vmul.f32 %v539, %v678
    %v1319 = vmul.f32 %v544, %v650
    %v1320 = vmul.f32 %v544, %v654
    %v1321 = vmul.f32 %v544, %v658
    %v1322 = vmul.f32 %v544, %v662
    %v1323 = vmul.f32 %v544, %v666
    %v1324 = vmul.f32 %v544, %v670
    %v1325 = vmul.f32 %v544, %v674
    %v1326 = vmul.f32 %v544, %v678
    %v1327 = vmul.f32 %v549, %v650
    %v1328 = vmul.f32 %v549, %v654
    %v1329 = vmul.f32 %v549, %v658
    %v1330 = vmul.f32 %v549, %v662
    %v1331 = vmul.f32 %v549, %v666
    %v1332 = vmul.f32 %v549, %v670
    %v1333 = vmul.f32 %v549, %v674
    %v1334 = vmul.f32 %v549, %v678
    %v1335 = vmul.f32 %v554, %v650
    %v1336 = vmul.f32 %v554, %v654
    %v1337 = vmul.f32 %v554, %v658
    %v1338 = vmul.f32 %v554, %v662
    %v1339 = vmul.f32 %v554, %v666
    %v1340 = vmul.f32 %v554, %v670
    %v1341 = vmul.f32 %v554, %v674
    %v1342 = vmul.f32 %v554, %v678
    %v1343 = vmul.f32 %v559, %v650
    %v1344 = vmul.f32 %v559, %v654
    %v1345 = vmul.f32 %v559, %v658
    %v1346 = vmul.f32 %v559, %v662
    %v1347 = vmul.f32 %v559, %v666
    %v1348 = vmul.f32 %v559, %v670
    %v1349 = vmul.f32 %v559, %v674
    %v1350 = vmul.f32 %v559, %v678
    %v1351 = vmul.f32 %v564, %v650
    %v1352 = vmul.f32 %v564, %v654
    %v1353 = vmul.f32 %v564, %v658
    %v1354 = vmul.f32 %v564, %v662
    %v1355 = vmul.f32 %v564, %v666
    %v1356 = vmul.f32 %v564, %v670
    %v1357 = vmul.f32 %v564, %v674
    %v1358 = vmul.f32 %v564, %v678
    %v1359 = vmul.f32 %v569, %v650
    %v1360 = vmul.f32 %v569, %v654
    %v1361 = vmul.f32 %v569, %v658
    %v1362 = vmul.f32 %v569, %v662
    %v1363 = vmul.f32 %v569, %v666
    %v1364 = vmul.f32 %v569, %v670
    %v1365 = vmul.f32 %v569, %v674
    %v1366 = vmul.f32 %v569, %v678
    %v1367 = vmul.f32 %v574, %v650
    %v1368 = vmul.f32 %v574, %v654
    %v1369 = vmul.f32 %v574, %v658
    %v1370 = vmul.f32 %v574, %v662
    %v1371 = vmul.f32 %v574, %v666
    %v1372 = vmul.f32 %v574, %v670
    %v1373 = vmul.f32 %v574, %v674
    %v1374 = vmul.f32 %v574, %v678
    %v1375 = vmul.f32 %v579, %v650
    %v1376 = vmul.f32 %v579, %v654
    %v1377 = vmul.f32 %v579, %v658
    %v1378 = vmul.f32 %v579, %v662
    %v1379 = vmul.f32 %v579, %v666
    %v1380 = vmul.f32 %v579, %v670
    %v1381 = vmul.f32 %v579, %v674
    %v1382 = vmul.f32 %v579, %v678
    %v1383 = vmul.f32 %v584, %v650
    %v1384 = vmul.f32 %v584, %v654
    %v1385 = vmul.f32 %v584, %v658
    %v1386 = vmul.f32 %v584, %v662
    %v1387 = vmul.f32 %v584, %v666
    %v1388 = vmul.f32 %v584, %v670
    %v1389 = vmul.f32 %v584, %v674
    %v1390 = vmul.f32 %v584, %v678
    %v1391 = vmul.f32 %v589, %v650
    %v1392 = vmul.f32 %v589, %v654
    %v1393 = vmul.f32 %v589, %v658
    %v1394 = vmul.f32 %v589, %v662
    %v1395 = vmul.f32 %v589, %v666
    %v1396 = vmul.f32 %v589, %v670
    %v1397 = vmul.f32 %v589, %v674
    %v1398 = vmul.f32 %v589, %v678
    %v1399 = vmul.f32 %v594, %v650
    %v1400 = vmul.f32 %v594, %v654
    %v1401 = vmul.f32 %v594, %v658
    %v1402 = vmul.f32 %v594, %v662
    %v1403 = vmul.f32 %v594, %v666
    %v1404 = vmul.f32 %v594, %v670
    %v1405 = vmul.f32 %v594, %v674
    %v1406 = vmul.f32 %v594, %v678
    %v1407 = vmul.f32 %v599, %v650
    %v1408 = vmul.f32 %v599, %v654
    %v1409 = vmul.f32 %v599, %v658
    %v1410 = vmul.f32 %v599, %v662
    %v1411 = vmul.f32 %v599, %v666
    %v1412 = vmul.f32 %v599, %v670
    %v1413 = vmul.f32 %v599, %v674
    %v1414 = vmul.f32 %v599, %v678
    %v1415 = vmul.f32 %v604, %v650
    %v1416 = vmul.f32 %v604, %v654
    %v1417 = vmul.f32 %v604, %v658
    %v1418 = vmul.f32 %v604, %v662
    %v1419 = vmul.f32 %v604, %v666
    %v1420 = vmul.f32 %v604, %v670
    %v1421 = vmul.f32 %v604, %v674
    %v1422 = vmul.f32 %v604, %v678
    %v1423 = vmul.f32 %v609, %v650
    %v1424 = vmul.f32 %v609, %v654
    %v1425 = vmul.f32 %v609, %v658
    %v1426 = vmul.f32 %v609, %v662
    %v1427 = vmul.f32 %v609, %v666
    %v1428 = vmul.f32 %v609, %v670
    %v1429 = vmul.f32 %v609, %v674
    %v1430 = vmul.f32 %v609, %v678
    %v1431 = vmul.f32 %v614, %v650
    %v1432 = vmul.f32 %v614, %v654
    %v1433 = vmul.f32 %v614, %v658
    %v1434 = vmul.f32 %v614, %v662
    %v1435 = vmul.f32 %v614, %v666
    %v1436 = vmul.f32 %v614, %v670
    %v1437 = vmul.f32 %v614, %v674
    %v1438 = vmul.f32 %v614, %v678
    %v1439 = vmul.f32 %v619, %v650
    %v1440 = vmul.f32 %v619, %v654
    %v1441 = vmul.f32 %v619, %v658
    %v1442 = vmul.f32 %v619, %v662
    %v1443 = vmul.f32 %v619, %v666
    %v1444 = vmul.f32 %v619, %v670
    %v1445 = vmul.f32 %v619, %v674
    %v1446 = vmul.f32 %v619, %v678
    %v1447 = vmul.f32 %v624, %v650
    %v1448 = vmul.f32 %v624, %v654
    %v1449 = vmul.f32 %v624, %v658
    %v1450 = vmul.f32 %v624, %v662
    %v1451 = vmul.f32 %v624, %v666
    %v1452 = vmul.f32 %v624, %v670
    %v1453 = vmul.f32 %v624, %v674
    %v1454 = vmul.f32 %v624, %v678
    %v1455 = vmul.f32 %v629, %v650
    %v1456 = vmul.f32 %v629, %v654
    %v1457 = vmul.f32 %v629, %v658
    %v1458 = vmul.f32 %v629, %v662
    %v1459 = vmul.f32 %v629, %v666
    %v1460 = vmul.f32 %v629, %v670
    %v1461 = vmul.f32 %v629, %v674
    %v1462 = vmul.f32 %v629, %v678
    %v1463 = vmul.f32 %v634, %v650
    %v1464 = vmul.f32 %v634, %v654
    %v1465 = vmul.f32 %v634, %v658
    %v1466 = vmul.f32 %v634, %v662
    %v1467 = vmul.f32 %v634, %v666
    %v1468 = vmul.f32 %v634, %v670
    %v1469 = vmul.f32 %v634, %v674
    %v1470 = vmul.f32 %v634, %v678
    %v1471 = vmul.f32 %v639, %v650
    %v1472 = vmul.f32 %v639, %v654
    %v1473 = vmul.f32 %v639, %v658
    %v1474 = vmul.f32 %v639, %v662
    %v1475 = vmul.f32 %v639, %v666
    %v1476 = vmul.f32 %v639, %v670
    %v1477 = vmul.f32 %v639, %v674
    %v1478 = vmul.f32 %v639, %v678
    %v1479 = vmul.f32 %v644, %v650
    %v1480 = vmul.f32 %v644, %v654
    %v1481 = vmul.f32 %v644, %v658
    %v1482 = vmul.f32 %v644, %v662
    %v1483 = vmul.f32 %v644, %v666
    %v1484 = vmul.f32 %v644, %v670
    %v1485 = vmul.f32 %v644, %v674
    %v1486 = vmul.f32 %v644, %v678
    %v1487 = vld [vmem:[%s2] sm:$0xff]
    %v1489 = vlaneseq
    %v1490 = vshrl.u32 %v1489, 7
    %v1491 = vsub.s32 0, %v1490
    %v1492 = vrot.slane %v1487, %v1491
    %v1493 = vlaneseq
    %v1494 = vshrl.u32 %v1493, 7
    %v1495 = vsub.s32 1, %v1494
    %v1496 = vrot.slane %v1487, %v1495
    %v1497 = vlaneseq
    %v1498 = vshrl.u32 %v1497, 7
    %v1499 = vsub.s32 2, %v1498
    %v1500 = vrot.slane %v1487, %v1499
    %v1501 = vlaneseq
    %v1502 = vshrl.u32 %v1501, 7
    %v1503 = vsub.s32 3, %v1502
    %v1504 = vrot.slane %v1487, %v1503
    %v1505 = vlaneseq
    %v1506 = vshrl.u32 %v1505, 7
    %v1507 = vsub.s32 4, %v1506
    %v1508 = vrot.slane %v1487, %v1507
    %v1509 = vlaneseq
    %v1510 = vshrl.u32 %v1509, 7
    %v1511 = vsub.s32 5, %v1510
    %v1512 = vrot.slane %v1487, %v1511
    %v1513 = vlaneseq
    %v1514 = vshrl.u32 %v1513, 7
    %v1515 = vsub.s32 6, %v1514
    %v1516 = vrot.slane %v1487, %v1515
    %v1517 = vlaneseq
    %v1518 = vshrl.u32 %v1517, 7
    %v1519 = vsub.s32 7, %v1518
    %v1520 = vrot.slane %v1487, %v1519
    %v1529 = vadd.f32 %v687, %v1492
    %v1530 = vadd.f32 %v688, %v1496
    %v1531 = vadd.f32 %v689, %v1500
    %v1532 = vadd.f32 %v690, %v1504
    %v1533 = vadd.f32 %v691, %v1508
    %v1534 = vadd.f32 %v692, %v1512
    %v1535 = vadd.f32 %v693, %v1516
    %v1536 = vadd.f32 %v694, %v1520
    %v1537 = vadd.f32 %v695, %v1492
    %v1538 = vadd.f32 %v696, %v1496
    %v1539 = vadd.f32 %v697, %v1500
    %v1540 = vadd.f32 %v698, %v1504
    %v1541 = vadd.f32 %v699, %v1508
    %v1542 = vadd.f32 %v700, %v1512
    %v1543 = vadd.f32 %v701, %v1516
    %v1544 = vadd.f32 %v702, %v1520
    %v1545 = vadd.f32 %v703, %v1492
    %v1546 = vadd.f32 %v704, %v1496
    %v1547 = vadd.f32 %v705, %v1500
    %v1548 = vadd.f32 %v706, %v1504
    %v1549 = vadd.f32 %v707, %v1508
    %v1550 = vadd.f32 %v708, %v1512
    %v1551 = vadd.f32 %v709, %v1516
    %v1552 = vadd.f32 %v710, %v1520
    %v1553 = vadd.f32 %v711, %v1492
    %v1554 = vadd.f32 %v712, %v1496
    %v1555 = vadd.f32 %v713, %v1500
    %v1556 = vadd.f32 %v714, %v1504
    %v1557 = vadd.f32 %v715, %v1508
    %v1558 = vadd.f32 %v716, %v1512
    %v1559 = vadd.f32 %v717, %v1516
    %v1560 = vadd.f32 %v718, %v1520
    %v1561 = vadd.f32 %v719, %v1492
    %v1562 = vadd.f32 %v720, %v1496
    %v1563 = vadd.f32 %v721, %v1500
    %v1564 = vadd.f32 %v722, %v1504
    %v1565 = vadd.f32 %v723, %v1508
    %v1566 = vadd.f32 %v724, %v1512
    %v1567 = vadd.f32 %v725, %v1516
    %v1568 = vadd.f32 %v726, %v1520
    %v1569 = vadd.f32 %v727, %v1492
    %v1570 = vadd.f32 %v728, %v1496
    %v1571 = vadd.f32 %v729, %v1500
    %v1572 = vadd.f32 %v730, %v1504
    %v1573 = vadd.f32 %v731, %v1508
    %v1574 = vadd.f32 %v732, %v1512
    %v1575 = vadd.f32 %v733, %v1516
    %v1576 = vadd.f32 %v734, %v1520
    %v1577 = vadd.f32 %v735, %v1492
    %v1578 = vadd.f32 %v736, %v1496
    %v1579 = vadd.f32 %v737, %v1500
    %v1580 = vadd.f32 %v738, %v1504
    %v1581 = vadd.f32 %v739, %v1508
    %v1582 = vadd.f32 %v740, %v1512
    %v1583 = vadd.f32 %v741, %v1516
    %v1584 = vadd.f32 %v742, %v1520
    %v1585 = vadd.f32 %v743, %v1492
    %v1586 = vadd.f32 %v744, %v1496
    %v1587 = vadd.f32 %v745, %v1500
    %v1588 = vadd.f32 %v746, %v1504
    %v1589 = vadd.f32 %v747, %v1508
    %v1590 = vadd.f32 %v748, %v1512
    %v1591 = vadd.f32 %v749, %v1516
    %v1592 = vadd.f32 %v750, %v1520
    %v1593 = vadd.f32 %v751, %v1492
    %v1594 = vadd.f32 %v752, %v1496
    %v1595 = vadd.f32 %v753, %v1500
    %v1596 = vadd.f32 %v754, %v1504
    %v1597 = vadd.f32 %v755, %v1508
    %v1598 = vadd.f32 %v756, %v1512
    %v1599 = vadd.f32 %v757, %v1516
    %v1600 = vadd.f32 %v758, %v1520
    %v1601 = vadd.f32 %v759, %v1492
    %v1602 = vadd.f32 %v760, %v1496
    %v1603 = vadd.f32 %v761, %v1500
    %v1604 = vadd.f32 %v762, %v1504
    %v1605 = vadd.f32 %v763, %v1508
    %v1606 = vadd.f32 %v764, %v1512
    %v1607 = vadd.f32 %v765, %v1516
    %v1608 = vadd.f32 %v766, %v1520
    %v1609 = vadd.f32 %v767, %v1492
    %v1610 = vadd.f32 %v768, %v1496
    %v1611 = vadd.f32 %v769, %v1500
    %v1612 = vadd.f32 %v770, %v1504
    %v1613 = vadd.f32 %v771, %v1508
    %v1614 = vadd.f32 %v772, %v1512
    %v1615 = vadd.f32 %v773, %v1516
    %v1616 = vadd.f32 %v774, %v1520
    %v1617 = vadd.f32 %v775, %v1492
    %v1618 = vadd.f32 %v776, %v1496
    %v1619 = vadd.f32 %v777, %v1500
    %v1620 = vadd.f32 %v778, %v1504
    %v1621 = vadd.f32 %v779, %v1508
    %v1622 = vadd.f32 %v780, %v1512
    %v1623 = vadd.f32 %v781, %v1516
    %v1624 = vadd.f32 %v782, %v1520
    %v1625 = vadd.f32 %v783, %v1492
    %v1626 = vadd.f32 %v784, %v1496
    %v1627 = vadd.f32 %v785, %v1500
    %v1628 = vadd.f32 %v786, %v1504
    %v1629 = vadd.f32 %v787, %v1508
    %v1630 = vadd.f32 %v788, %v1512
    %v1631 = vadd.f32 %v789, %v1516
    %v1632 = vadd.f32 %v790, %v1520
    %v1633 = vadd.f32 %v791, %v1492
    %v1634 = vadd.f32 %v792, %v1496
    %v1635 = vadd.f32 %v793, %v1500
    %v1636 = vadd.f32 %v794, %v1504
    %v1637 = vadd.f32 %v795, %v1508
    %v1638 = vadd.f32 %v796, %v1512
    %v1639 = vadd.f32 %v797, %v1516
    %v1640 = vadd.f32 %v798, %v1520
    %v1641 = vadd.f32 %v799, %v1492
    %v1642 = vadd.f32 %v800, %v1496
    %v1643 = vadd.f32 %v801, %v1500
    %v1644 = vadd.f32 %v802, %v1504
    %v1645 = vadd.f32 %v803, %v1508
    %v1646 = vadd.f32 %v804, %v1512
    %v1647 = vadd.f32 %v805, %v1516
    %v1648 = vadd.f32 %v806, %v1520
    %v1649 = vadd.f32 %v807, %v1492
    %v1650 = vadd.f32 %v808, %v1496
    %v1651 = vadd.f32 %v809, %v1500
    %v1652 = vadd.f32 %v810, %v1504
    %v1653 = vadd.f32 %v811, %v1508
    %v1654 = vadd.f32 %v812, %v1512
    %v1655 = vadd.f32 %v813, %v1516
    %v1656 = vadd.f32 %v814, %v1520
    %v1657 = vadd.f32 %v815, %v1492
    %v1658 = vadd.f32 %v816, %v1496
    %v1659 = vadd.f32 %v817, %v1500
    %v1660 = vadd.f32 %v818, %v1504
    %v1661 = vadd.f32 %v819, %v1508
    %v1662 = vadd.f32 %v820, %v1512
    %v1663 = vadd.f32 %v821, %v1516
    %v1664 = vadd.f32 %v822, %v1520
    %v1665 = vadd.f32 %v823, %v1492
    %v1666 = vadd.f32 %v824, %v1496
    %v1667 = vadd.f32 %v825, %v1500
    %v1668 = vadd.f32 %v826, %v1504
    %v1669 = vadd.f32 %v827, %v1508
    %v1670 = vadd.f32 %v828, %v1512
    %v1671 = vadd.f32 %v829, %v1516
    %v1672 = vadd.f32 %v830, %v1520
    %v1673 = vadd.f32 %v831, %v1492
    %v1674 = vadd.f32 %v832, %v1496
    %v1675 = vadd.f32 %v833, %v1500
    %v1676 = vadd.f32 %v834, %v1504
    %v1677 = vadd.f32 %v835, %v1508
    %v1678 = vadd.f32 %v836, %v1512
    %v1679 = vadd.f32 %v837, %v1516
    %v1680 = vadd.f32 %v838, %v1520
    %v1681 = vadd.f32 %v839, %v1492
    %v1682 = vadd.f32 %v840, %v1496
    %v1683 = vadd.f32 %v841, %v1500
    %v1684 = vadd.f32 %v842, %v1504
    %v1685 = vadd.f32 %v843, %v1508
    %v1686 = vadd.f32 %v844, %v1512
    %v1687 = vadd.f32 %v845, %v1516
    %v1688 = vadd.f32 %v846, %v1520
    %v1689 = vadd.f32 %v847, %v1492
    %v1690 = vadd.f32 %v848, %v1496
    %v1691 = vadd.f32 %v849, %v1500
    %v1692 = vadd.f32 %v850, %v1504
    %v1693 = vadd.f32 %v851, %v1508
    %v1694 = vadd.f32 %v852, %v1512
    %v1695 = vadd.f32 %v853, %v1516
    %v1696 = vadd.f32 %v854, %v1520
    %v1697 = vadd.f32 %v855, %v1492
    %v1698 = vadd.f32 %v856, %v1496
    %v1699 = vadd.f32 %v857, %v1500
    %v1700 = vadd.f32 %v858, %v1504
    %v1701 = vadd.f32 %v859, %v1508
    %v1702 = vadd.f32 %v860, %v1512
    %v1703 = vadd.f32 %v861, %v1516
    %v1704 = vadd.f32 %v862, %v1520
    %v1705 = vadd.f32 %v863, %v1492
    %v1706 = vadd.f32 %v864, %v1496
    %v1707 = vadd.f32 %v865, %v1500
    %v1708 = vadd.f32 %v866, %v1504
    %v1709 = vadd.f32 %v867, %v1508
    %v1710 = vadd.f32 %v868, %v1512
    %v1711 = vadd.f32 %v869, %v1516
    %v1712 = vadd.f32 %v870, %v1520
    %v1713 = vadd.f32 %v871, %v1492
    %v1714 = vadd.f32 %v872, %v1496
    %v1715 = vadd.f32 %v873, %v1500
    %v1716 = vadd.f32 %v874, %v1504
    %v1717 = vadd.f32 %v875, %v1508
    %v1718 = vadd.f32 %v876, %v1512
    %v1719 = vadd.f32 %v877, %v1516
    %v1720 = vadd.f32 %v878, %v1520
    %v1721 = vadd.f32 %v879, %v1492
    %v1722 = vadd.f32 %v880, %v1496
    %v1723 = vadd.f32 %v881, %v1500
    %v1724 = vadd.f32 %v882, %v1504
    %v1725 = vadd.f32 %v883, %v1508
    %v1726 = vadd.f32 %v884, %v1512
    %v1727 = vadd.f32 %v885, %v1516
    %v1728 = vadd.f32 %v886, %v1520
    %v1729 = vadd.f32 %v887, %v1492
    %v1730 = vadd.f32 %v888, %v1496
    %v1731 = vadd.f32 %v889, %v1500
    %v1732 = vadd.f32 %v890, %v1504
    %v1733 = vadd.f32 %v891, %v1508
    %v1734 = vadd.f32 %v892, %v1512
    %v1735 = vadd.f32 %v893, %v1516
    %v1736 = vadd.f32 %v894, %v1520
    %v1737 = vadd.f32 %v895, %v1492
    %v1738 = vadd.f32 %v896, %v1496
    %v1739 = vadd.f32 %v897, %v1500
    %v1740 = vadd.f32 %v898, %v1504
    %v1741 = vadd.f32 %v899, %v1508
    %v1742 = vadd.f32 %v900, %v1512
    %v1743 = vadd.f32 %v901, %v1516
    %v1744 = vadd.f32 %v902, %v1520
    %v1745 = vadd.f32 %v903, %v1492
    %v1746 = vadd.f32 %v904, %v1496
    %v1747 = vadd.f32 %v905, %v1500
    %v1748 = vadd.f32 %v906, %v1504
    %v1749 = vadd.f32 %v907, %v1508
    %v1750 = vadd.f32 %v908, %v1512
    %v1751 = vadd.f32 %v909, %v1516
    %v1752 = vadd.f32 %v910, %v1520
    %v1753 = vadd.f32 %v911, %v1492
    %v1754 = vadd.f32 %v912, %v1496
    %v1755 = vadd.f32 %v913, %v1500
    %v1756 = vadd.f32 %v914, %v1504
    %v1757 = vadd.f32 %v915, %v1508
    %v1758 = vadd.f32 %v916, %v1512
    %v1759 = vadd.f32 %v917, %v1516
    %v1760 = vadd.f32 %v918, %v1520
    %v1761 = vadd.f32 %v919, %v1492
    %v1762 = vadd.f32 %v920, %v1496
    %v1763 = vadd.f32 %v921, %v1500
    %v1764 = vadd.f32 %v922, %v1504
    %v1765 = vadd.f32 %v923, %v1508
    %v1766 = vadd.f32 %v924, %v1512
    %v1767 = vadd.f32 %v925, %v1516
    %v1768 = vadd.f32 %v926, %v1520
    %v1769 = vadd.f32 %v927, %v1492
    %v1770 = vadd.f32 %v928, %v1496
    %v1771 = vadd.f32 %v929, %v1500
    %v1772 = vadd.f32 %v930, %v1504
    %v1773 = vadd.f32 %v931, %v1508
    %v1774 = vadd.f32 %v932, %v1512
    %v1775 = vadd.f32 %v933, %v1516
    %v1776 = vadd.f32 %v934, %v1520
    %v1777 = vadd.f32 %v935, %v1492
    %v1778 = vadd.f32 %v936, %v1496
    %v1779 = vadd.f32 %v937, %v1500
    %v1780 = vadd.f32 %v938, %v1504
    %v1781 = vadd.f32 %v939, %v1508
    %v1782 = vadd.f32 %v940, %v1512
    %v1783 = vadd.f32 %v941, %v1516
    %v1784 = vadd.f32 %v942, %v1520
    %v1785 = vadd.f32 %v943, %v1492
    %v1786 = vadd.f32 %v944, %v1496
    %v1787 = vadd.f32 %v945, %v1500
    %v1788 = vadd.f32 %v946, %v1504
    %v1789 = vadd.f32 %v947, %v1508
    %v1790 = vadd.f32 %v948, %v1512
    %v1791 = vadd.f32 %v949, %v1516
    %v1792 = vadd.f32 %v950, %v1520
    %v1793 = vadd.f32 %v951, %v1492
    %v1794 = vadd.f32 %v952, %v1496
    %v1795 = vadd.f32 %v953, %v1500
    %v1796 = vadd.f32 %v954, %v1504
    %v1797 = vadd.f32 %v955, %v1508
    %v1798 = vadd.f32 %v956, %v1512
    %v1799 = vadd.f32 %v957, %v1516
    %v1800 = vadd.f32 %v958, %v1520
    %v1801 = vadd.f32 %v959, %v1492
    %v1802 = vadd.f32 %v960, %v1496
    %v1803 = vadd.f32 %v961, %v1500
    %v1804 = vadd.f32 %v962, %v1504
    %v1805 = vadd.f32 %v963, %v1508
    %v1806 = vadd.f32 %v964, %v1512
    %v1807 = vadd.f32 %v965, %v1516
    %v1808 = vadd.f32 %v966, %v1520
    %v1809 = vadd.f32 %v967, %v1492
    %v1810 = vadd.f32 %v968, %v1496
    %v1811 = vadd.f32 %v969, %v1500
    %v1812 = vadd.f32 %v970, %v1504
    %v1813 = vadd.f32 %v971, %v1508
    %v1814 = vadd.f32 %v972, %v1512
    %v1815 = vadd.f32 %v973, %v1516
    %v1816 = vadd.f32 %v974, %v1520
    %v1817 = vadd.f32 %v975, %v1492
    %v1818 = vadd.f32 %v976, %v1496
    %v1819 = vadd.f32 %v977, %v1500
    %v1820 = vadd.f32 %v978, %v1504
    %v1821 = vadd.f32 %v979, %v1508
    %v1822 = vadd.f32 %v980, %v1512
    %v1823 = vadd.f32 %v981, %v1516
    %v1824 = vadd.f32 %v982, %v1520
    %v1825 = vadd.f32 %v983, %v1492
    %v1826 = vadd.f32 %v984, %v1496
    %v1827 = vadd.f32 %v985, %v1500
    %v1828 = vadd.f32 %v986, %v1504
    %v1829 = vadd.f32 %v987, %v1508
    %v1830 = vadd.f32 %v988, %v1512
    %v1831 = vadd.f32 %v989, %v1516
    %v1832 = vadd.f32 %v990, %v1520
    %v1833 = vadd.f32 %v991, %v1492
    %v1834 = vadd.f32 %v992, %v1496
    %v1835 = vadd.f32 %v993, %v1500
    %v1836 = vadd.f32 %v994, %v1504
    %v1837 = vadd.f32 %v995, %v1508
    %v1838 = vadd.f32 %v996, %v1512
    %v1839 = vadd.f32 %v997, %v1516
    %v1840 = vadd.f32 %v998, %v1520
    %v1841 = vadd.f32 %v999, %v1492
    %v1842 = vadd.f32 %v1000, %v1496
    %v1843 = vadd.f32 %v1001, %v1500
    %v1844 = vadd.f32 %v1002, %v1504
    %v1845 = vadd.f32 %v1003, %v1508
    %v1846 = vadd.f32 %v1004, %v1512
    %v1847 = vadd.f32 %v1005, %v1516
    %v1848 = vadd.f32 %v1006, %v1520
    %v1849 = vadd.f32 %v1007, %v1492
    %v1850 = vadd.f32 %v1008, %v1496
    %v1851 = vadd.f32 %v1009, %v1500
    %v1852 = vadd.f32 %v1010, %v1504
    %v1853 = vadd.f32 %v1011, %v1508
    %v1854 = vadd.f32 %v1012, %v1512
    %v1855 = vadd.f32 %v1013, %v1516
    %v1856 = vadd.f32 %v1014, %v1520
    %v1857 = vadd.f32 %v1015, %v1492
    %v1858 = vadd.f32 %v1016, %v1496
    %v1859 = vadd.f32 %v1017, %v1500
    %v1860 = vadd.f32 %v1018, %v1504
    %v1861 = vadd.f32 %v1019, %v1508
    %v1862 = vadd.f32 %v1020, %v1512
    %v1863 = vadd.f32 %v1021, %v1516
    %v1864 = vadd.f32 %v1022, %v1520
    %v1865 = vadd.f32 %v1023, %v1492
    %v1866 = vadd.f32 %v1024, %v1496
    %v1867 = vadd.f32 %v1025, %v1500
    %v1868 = vadd.f32 %v1026, %v1504
    %v1869 = vadd.f32 %v1027, %v1508
    %v1870 = vadd.f32 %v1028, %v1512
    %v1871 = vadd.f32 %v1029, %v1516
    %v1872 = vadd.f32 %v1030, %v1520
    %v1873 = vadd.f32 %v1031, %v1492
    %v1874 = vadd.f32 %v1032, %v1496
    %v1875 = vadd.f32 %v1033, %v1500
    %v1876 = vadd.f32 %v1034, %v1504
    %v1877 = vadd.f32 %v1035, %v1508
    %v1878 = vadd.f32 %v1036, %v1512
    %v1879 = vadd.f32 %v1037, %v1516
    %v1880 = vadd.f32 %v1038, %v1520
    %v1881 = vadd.f32 %v1039, %v1492
    %v1882 = vadd.f32 %v1040, %v1496
    %v1883 = vadd.f32 %v1041, %v1500
    %v1884 = vadd.f32 %v1042, %v1504
    %v1885 = vadd.f32 %v1043, %v1508
    %v1886 = vadd.f32 %v1044, %v1512
    %v1887 = vadd.f32 %v1045, %v1516
    %v1888 = vadd.f32 %v1046, %v1520
    %v1889 = vadd.f32 %v1047, %v1492
    %v1890 = vadd.f32 %v1048, %v1496
    %v1891 = vadd.f32 %v1049, %v1500
    %v1892 = vadd.f32 %v1050, %v1504
    %v1893 = vadd.f32 %v1051, %v1508
    %v1894 = vadd.f32 %v1052, %v1512
    %v1895 = vadd.f32 %v1053, %v1516
    %v1896 = vadd.f32 %v1054, %v1520
    %v1897 = vadd.f32 %v1055, %v1492
    %v1898 = vadd.f32 %v1056, %v1496
    %v1899 = vadd.f32 %v1057, %v1500
    %v1900 = vadd.f32 %v1058, %v1504
    %v1901 = vadd.f32 %v1059, %v1508
    %v1902 = vadd.f32 %v1060, %v1512
    %v1903 = vadd.f32 %v1061, %v1516
    %v1904 = vadd.f32 %v1062, %v1520
    %v1905 = vadd.f32 %v1063, %v1492
    %v1906 = vadd.f32 %v1064, %v1496
    %v1907 = vadd.f32 %v1065, %v1500
    %v1908 = vadd.f32 %v1066, %v1504
    %v1909 = vadd.f32 %v1067, %v1508
    %v1910 = vadd.f32 %v1068, %v1512
    %v1911 = vadd.f32 %v1069, %v1516
    %v1912 = vadd.f32 %v1070, %v1520
    %v1913 = vadd.f32 %v1071, %v1492
    %v1914 = vadd.f32 %v1072, %v1496
    %v1915 = vadd.f32 %v1073, %v1500
    %v1916 = vadd.f32 %v1074, %v1504
    %v1917 = vadd.f32 %v1075, %v1508
    %v1918 = vadd.f32 %v1076, %v1512
    %v1919 = vadd.f32 %v1077, %v1516
    %v1920 = vadd.f32 %v1078, %v1520
    %v1921 = vadd.f32 %v1079, %v1492
    %v1922 = vadd.f32 %v1080, %v1496
    %v1923 = vadd.f32 %v1081, %v1500
    %v1924 = vadd.f32 %v1082, %v1504
    %v1925 = vadd.f32 %v1083, %v1508
    %v1926 = vadd.f32 %v1084, %v1512
    %v1927 = vadd.f32 %v1085, %v1516
    %v1928 = vadd.f32 %v1086, %v1520
    %v1929 = vadd.f32 %v1087, %v1492
    %v1930 = vadd.f32 %v1088, %v1496
    %v1931 = vadd.f32 %v1089, %v1500
    %v1932 = vadd.f32 %v1090, %v1504
    %v1933 = vadd.f32 %v1091, %v1508
    %v1934 = vadd.f32 %v1092, %v1512
    %v1935 = vadd.f32 %v1093, %v1516
    %v1936 = vadd.f32 %v1094, %v1520
    %v1937 = vadd.f32 %v1095, %v1492
    %v1938 = vadd.f32 %v1096, %v1496
    %v1939 = vadd.f32 %v1097, %v1500
    %v1940 = vadd.f32 %v1098, %v1504
    %v1941 = vadd.f32 %v1099, %v1508
    %v1942 = vadd.f32 %v1100, %v1512
    %v1943 = vadd.f32 %v1101, %v1516
    %v1944 = vadd.f32 %v1102, %v1520
    %v1945 = vadd.f32 %v1103, %v1492
    %v1946 = vadd.f32 %v1104, %v1496
    %v1947 = vadd.f32 %v1105, %v1500
    %v1948 = vadd.f32 %v1106, %v1504
    %v1949 = vadd.f32 %v1107, %v1508
    %v1950 = vadd.f32 %v1108, %v1512
    %v1951 = vadd.f32 %v1109, %v1516
    %v1952 = vadd.f32 %v1110, %v1520
    %v1953 = vadd.f32 %v1111, %v1492
    %v1954 = vadd.f32 %v1112, %v1496
    %v1955 = vadd.f32 %v1113, %v1500
    %v1956 = vadd.f32 %v1114, %v1504
    %v1957 = vadd.f32 %v1115, %v1508
    %v1958 = vadd.f32 %v1116, %v1512
    %v1959 = vadd.f32 %v1117, %v1516
    %v1960 = vadd.f32 %v1118, %v1520
    %v1961 = vadd.f32 %v1119, %v1492
    %v1962 = vadd.f32 %v1120, %v1496
    %v1963 = vadd.f32 %v1121, %v1500
    %v1964 = vadd.f32 %v1122, %v1504
    %v1965 = vadd.f32 %v1123, %v1508
    %v1966 = vadd.f32 %v1124, %v1512
    %v1967 = vadd.f32 %v1125, %v1516
    %v1968 = vadd.f32 %v1126, %v1520
    %v1969 = vadd.f32 %v1127, %v1492
    %v1970 = vadd.f32 %v1128, %v1496
    %v1971 = vadd.f32 %v1129, %v1500
    %v1972 = vadd.f32 %v1130, %v1504
    %v1973 = vadd.f32 %v1131, %v1508
    %v1974 = vadd.f32 %v1132, %v1512
    %v1975 = vadd.f32 %v1133, %v1516
    %v1976 = vadd.f32 %v1134, %v1520
    %v1977 = vadd.f32 %v1135, %v1492
    %v1978 = vadd.f32 %v1136, %v1496
    %v1979 = vadd.f32 %v1137, %v1500
    %v1980 = vadd.f32 %v1138, %v1504
    %v1981 = vadd.f32 %v1139, %v1508
    %v1982 = vadd.f32 %v1140, %v1512
    %v1983 = vadd.f32 %v1141, %v1516
    %v1984 = vadd.f32 %v1142, %v1520
    %v1985 = vadd.f32 %v1143, %v1492
    %v1986 = vadd.f32 %v1144, %v1496
    %v1987 = vadd.f32 %v1145, %v1500
    %v1988 = vadd.f32 %v1146, %v1504
    %v1989 = vadd.f32 %v1147, %v1508
    %v1990 = vadd.f32 %v1148, %v1512
    %v1991 = vadd.f32 %v1149, %v1516
    %v1992 = vadd.f32 %v1150, %v1520
    %v1993 = vadd.f32 %v1151, %v1492
    %v1994 = vadd.f32 %v1152, %v1496
    %v1995 = vadd.f32 %v1153, %v1500
    %v1996 = vadd.f32 %v1154, %v1504
    %v1997 = vadd.f32 %v1155, %v1508
    %v1998 = vadd.f32 %v1156, %v1512
    %v1999 = vadd.f32 %v1157, %v1516
    %v2000 = vadd.f32 %v1158, %v1520
    %v2001 = vadd.f32 %v1159, %v1492
    %v2002 = vadd.f32 %v1160, %v1496
    %v2003 = vadd.f32 %v1161, %v1500
    %v2004 = vadd.f32 %v1162, %v1504
    %v2005 = vadd.f32 %v1163, %v1508
    %v2006 = vadd.f32 %v1164, %v1512
    %v2007 = vadd.f32 %v1165, %v1516
    %v2008 = vadd.f32 %v1166, %v1520
    %v2009 = vadd.f32 %v1167, %v1492
    %v2010 = vadd.f32 %v1168, %v1496
    %v2011 = vadd.f32 %v1169, %v1500
    %v2012 = vadd.f32 %v1170, %v1504
    %v2013 = vadd.f32 %v1171, %v1508
    %v2014 = vadd.f32 %v1172, %v1512
    %v2015 = vadd.f32 %v1173, %v1516
    %v2016 = vadd.f32 %v1174, %v1520
    %v2017 = vadd.f32 %v1175, %v1492
    %v2018 = vadd.f32 %v1176, %v1496
    %v2019 = vadd.f32 %v1177, %v1500
    %v2020 = vadd.f32 %v1178, %v1504
    %v2021 = vadd.f32 %v1179, %v1508
    %v2022 = vadd.f32 %v1180, %v1512
    %v2023 = vadd.f32 %v1181, %v1516
    %v2024 = vadd.f32 %v1182, %v1520
    %v2025 = vadd.f32 %v1183, %v1492
    %v2026 = vadd.f32 %v1184, %v1496
    %v2027 = vadd.f32 %v1185, %v1500
    %v2028 = vadd.f32 %v1186, %v1504
    %v2029 = vadd.f32 %v1187, %v1508
    %v2030 = vadd.f32 %v1188, %v1512
    %v2031 = vadd.f32 %v1189, %v1516
    %v2032 = vadd.f32 %v1190, %v1520
    %v2033 = vadd.f32 %v1191, %v1492
    %v2034 = vadd.f32 %v1192, %v1496
    %v2035 = vadd.f32 %v1193, %v1500
    %v2036 = vadd.f32 %v1194, %v1504
    %v2037 = vadd.f32 %v1195, %v1508
    %v2038 = vadd.f32 %v1196, %v1512
    %v2039 = vadd.f32 %v1197, %v1516
    %v2040 = vadd.f32 %v1198, %v1520
    %v2041 = vadd.f32 %v1199, %v1492
    %v2042 = vadd.f32 %v1200, %v1496
    %v2043 = vadd.f32 %v1201, %v1500
    %v2044 = vadd.f32 %v1202, %v1504
    %v2045 = vadd.f32 %v1203, %v1508
    %v2046 = vadd.f32 %v1204, %v1512
    %v2047 = vadd.f32 %v1205, %v1516
    %v2048 = vadd.f32 %v1206, %v1520
    %v2049 = vadd.f32 %v1207, %v1492
    %v2050 = vadd.f32 %v1208, %v1496
    %v2051 = vadd.f32 %v1209, %v1500
    %v2052 = vadd.f32 %v1210, %v1504
    %v2053 = vadd.f32 %v1211, %v1508
    %v2054 = vadd.f32 %v1212, %v1512
    %v2055 = vadd.f32 %v1213, %v1516
    %v2056 = vadd.f32 %v1214, %v1520
    %v2057 = vadd.f32 %v1215, %v1492
    %v2058 = vadd.f32 %v1216, %v1496
    %v2059 = vadd.f32 %v1217, %v1500
    %v2060 = vadd.f32 %v1218, %v1504
    %v2061 = vadd.f32 %v1219, %v1508
    %v2062 = vadd.f32 %v1220, %v1512
    %v2063 = vadd.f32 %v1221, %v1516
    %v2064 = vadd.f32 %v1222, %v1520
    %v2065 = vadd.f32 %v1223, %v1492
    %v2066 = vadd.f32 %v1224, %v1496
    %v2067 = vadd.f32 %v1225, %v1500
    %v2068 = vadd.f32 %v1226, %v1504
    %v2069 = vadd.f32 %v1227, %v1508
    %v2070 = vadd.f32 %v1228, %v1512
    %v2071 = vadd.f32 %v1229, %v1516
    %v2072 = vadd.f32 %v1230, %v1520
    %v2073 = vadd.f32 %v1231, %v1492
    %v2074 = vadd.f32 %v1232, %v1496
    %v2075 = vadd.f32 %v1233, %v1500
    %v2076 = vadd.f32 %v1234, %v1504
    %v2077 = vadd.f32 %v1235, %v1508
    %v2078 = vadd.f32 %v1236, %v1512
    %v2079 = vadd.f32 %v1237, %v1516
    %v2080 = vadd.f32 %v1238, %v1520
    %v2081 = vadd.f32 %v1239, %v1492
    %v2082 = vadd.f32 %v1240, %v1496
    %v2083 = vadd.f32 %v1241, %v1500
    %v2084 = vadd.f32 %v1242, %v1504
    %v2085 = vadd.f32 %v1243, %v1508
    %v2086 = vadd.f32 %v1244, %v1512
    %v2087 = vadd.f32 %v1245, %v1516
    %v2088 = vadd.f32 %v1246, %v1520
    %v2089 = vadd.f32 %v1247, %v1492
    %v2090 = vadd.f32 %v1248, %v1496
    %v2091 = vadd.f32 %v1249, %v1500
    %v2092 = vadd.f32 %v1250, %v1504
    %v2093 = vadd.f32 %v1251, %v1508
    %v2094 = vadd.f32 %v1252, %v1512
    %v2095 = vadd.f32 %v1253, %v1516
    %v2096 = vadd.f32 %v1254, %v1520
    %v2097 = vadd.f32 %v1255, %v1492
    %v2098 = vadd.f32 %v1256, %v1496
    %v2099 = vadd.f32 %v1257, %v1500
    %v2100 = vadd.f32 %v1258, %v1504
    %v2101 = vadd.f32 %v1259, %v1508
    %v2102 = vadd.f32 %v1260, %v1512
    %v2103 = vadd.f32 %v1261, %v1516
    %v2104 = vadd.f32 %v1262, %v1520
    %v2105 = vadd.f32 %v1263, %v1492
    %v2106 = vadd.f32 %v1264, %v1496
    %v2107 = vadd.f32 %v1265, %v1500
    %v2108 = vadd.f32 %v1266, %v1504
    %v2109 = vadd.f32 %v1267, %v1508
    %v2110 = vadd.f32 %v1268, %v1512
    %v2111 = vadd.f32 %v1269, %v1516
    %v2112 = vadd.f32 %v1270, %v1520
    %v2113 = vadd.f32 %v1271, %v1492
    %v2114 = vadd.f32 %v1272, %v1496
    %v2115 = vadd.f32 %v1273, %v1500
    %v2116 = vadd.f32 %v1274, %v1504
    %v2117 = vadd.f32 %v1275, %v1508
    %v2118 = vadd.f32 %v1276, %v1512
    %v2119 = vadd.f32 %v1277, %v1516
    %v2120 = vadd.f32 %v1278, %v1520
    %v2121 = vadd.f32 %v1279, %v1492
    %v2122 = vadd.f32 %v1280, %v1496
    %v2123 = vadd.f32 %v1281, %v1500
    %v2124 = vadd.f32 %v1282, %v1504
    %v2125 = vadd.f32 %v1283, %v1508
    %v2126 = vadd.f32 %v1284, %v1512
    %v2127 = vadd.f32 %v1285, %v1516
    %v2128 = vadd.f32 %v1286, %v1520
    %v2129 = vadd.f32 %v1287, %v1492
    %v2130 = vadd.f32 %v1288, %v1496
    %v2131 = vadd.f32 %v1289, %v1500
    %v2132 = vadd.f32 %v1290, %v1504
    %v2133 = vadd.f32 %v1291, %v1508
    %v2134 = vadd.f32 %v1292, %v1512
    %v2135 = vadd.f32 %v1293, %v1516
    %v2136 = vadd.f32 %v1294, %v1520
    %v2137 = vadd.f32 %v1295, %v1492
    %v2138 = vadd.f32 %v1296, %v1496
    %v2139 = vadd.f32 %v1297, %v1500
    %v2140 = vadd.f32 %v1298, %v1504
    %v2141 = vadd.f32 %v1299, %v1508
    %v2142 = vadd.f32 %v1300, %v1512
    %v2143 = vadd.f32 %v1301, %v1516
    %v2144 = vadd.f32 %v1302, %v1520
    %v2145 = vadd.f32 %v1303, %v1492
    %v2146 = vadd.f32 %v1304, %v1496
    %v2147 = vadd.f32 %v1305, %v1500
    %v2148 = vadd.f32 %v1306, %v1504
    %v2149 = vadd.f32 %v1307, %v1508
    %v2150 = vadd.f32 %v1308, %v1512
    %v2151 = vadd.f32 %v1309, %v1516
    %v2152 = vadd.f32 %v1310, %v1520
    %v2153 = vadd.f32 %v1311, %v1492
    %v2154 = vadd.f32 %v1312, %v1496
    %v2155 = vadd.f32 %v1313, %v1500
    %v2156 = vadd.f32 %v1314, %v1504
    %v2157 = vadd.f32 %v1315, %v1508
    %v2158 = vadd.f32 %v1316, %v1512
    %v2159 = vadd.f32 %v1317, %v1516
    %v2160 = vadd.f32 %v1318, %v1520
    %v2161 = vadd.f32 %v1319, %v1492
    %v2162 = vadd.f32 %v1320, %v1496
    %v2163 = vadd.f32 %v1321, %v1500
    %v2164 = vadd.f32 %v1322, %v1504
    %v2165 = vadd.f32 %v1323, %v1508
    %v2166 = vadd.f32 %v1324, %v1512
    %v2167 = vadd.f32 %v1325, %v1516
    %v2168 = vadd.f32 %v1326, %v1520
    %v2169 = vadd.f32 %v1327, %v1492
    %v2170 = vadd.f32 %v1328, %v1496
    %v2171 = vadd.f32 %v1329, %v1500
    %v2172 = vadd.f32 %v1330, %v1504
    %v2173 = vadd.f32 %v1331, %v1508
    %v2174 = vadd.f32 %v1332, %v1512
    %v2175 = vadd.f32 %v1333, %v1516
    %v2176 = vadd.f32 %v1334, %v1520
    %v2177 = vadd.f32 %v1335, %v1492
    %v2178 = vadd.f32 %v1336, %v1496
    %v2179 = vadd.f32 %v1337, %v1500
    %v2180 = vadd.f32 %v1338, %v1504
    %v2181 = vadd.f32 %v1339, %v1508
    %v2182 = vadd.f32 %v1340, %v1512
    %v2183 = vadd.f32 %v1341, %v1516
    %v2184 = vadd.f32 %v1342, %v1520
    %v2185 = vadd.f32 %v1343, %v1492
    %v2186 = vadd.f32 %v1344, %v1496
    %v2187 = vadd.f32 %v1345, %v1500
    %v2188 = vadd.f32 %v1346, %v1504
    %v2189 = vadd.f32 %v1347, %v1508
    %v2190 = vadd.f32 %v1348, %v1512
    %v2191 = vadd.f32 %v1349, %v1516
    %v2192 = vadd.f32 %v1350, %v1520
    %v2193 = vadd.f32 %v1351, %v1492
    %v2194 = vadd.f32 %v1352, %v1496
    %v2195 = vadd.f32 %v1353, %v1500
    %v2196 = vadd.f32 %v1354, %v1504
    %v2197 = vadd.f32 %v1355, %v1508
    %v2198 = vadd.f32 %v1356, %v1512
    %v2199 = vadd.f32 %v1357, %v1516
    %v2200 = vadd.f32 %v1358, %v1520
    %v2201 = vadd.f32 %v1359, %v1492
    %v2202 = vadd.f32 %v1360, %v1496
    %v2203 = vadd.f32 %v1361, %v1500
    %v2204 = vadd.f32 %v1362, %v1504
    %v2205 = vadd.f32 %v1363, %v1508
    %v2206 = vadd.f32 %v1364, %v1512
    %v2207 = vadd.f32 %v1365, %v1516
    %v2208 = vadd.f32 %v1366, %v1520
    %v2209 = vadd.f32 %v1367, %v1492
    %v2210 = vadd.f32 %v1368, %v1496
    %v2211 = vadd.f32 %v1369, %v1500
    %v2212 = vadd.f32 %v1370, %v1504
    %v2213 = vadd.f32 %v1371, %v1508
    %v2214 = vadd.f32 %v1372, %v1512
    %v2215 = vadd.f32 %v1373, %v1516
    %v2216 = vadd.f32 %v1374, %v1520
    %v2217 = vadd.f32 %v1375, %v1492
    %v2218 = vadd.f32 %v1376, %v1496
    %v2219 = vadd.f32 %v1377, %v1500
    %v2220 = vadd.f32 %v1378, %v1504
    %v2221 = vadd.f32 %v1379, %v1508
    %v2222 = vadd.f32 %v1380, %v1512
    %v2223 = vadd.f32 %v1381, %v1516
    %v2224 = vadd.f32 %v1382, %v1520
    %v2225 = vadd.f32 %v1383, %v1492
    %v2226 = vadd.f32 %v1384, %v1496
    %v2227 = vadd.f32 %v1385, %v1500
    %v2228 = vadd.f32 %v1386, %v1504
    %v2229 = vadd.f32 %v1387, %v1508
    %v2230 = vadd.f32 %v1388, %v1512
    %v2231 = vadd.f32 %v1389, %v1516
    %v2232 = vadd.f32 %v1390, %v1520
    %v2233 = vadd.f32 %v1391, %v1492
    %v2234 = vadd.f32 %v1392, %v1496
    %v2235 = vadd.f32 %v1393, %v1500
    %v2236 = vadd.f32 %v1394, %v1504
    %v2237 = vadd.f32 %v1395, %v1508
    %v2238 = vadd.f32 %v1396, %v1512
    %v2239 = vadd.f32 %v1397, %v1516
    %v2240 = vadd.f32 %v1398, %v1520
    %v2241 = vadd.f32 %v1399, %v1492
    %v2242 = vadd.f32 %v1400, %v1496
    %v2243 = vadd.f32 %v1401, %v1500
    %v2244 = vadd.f32 %v1402, %v1504
    %v2245 = vadd.f32 %v1403, %v1508
    %v2246 = vadd.f32 %v1404, %v1512
    %v2247 = vadd.f32 %v1405, %v1516
    %v2248 = vadd.f32 %v1406, %v1520
    %v2249 = vadd.f32 %v1407, %v1492
    %v2250 = vadd.f32 %v1408, %v1496
    %v2251 = vadd.f32 %v1409, %v1500
    %v2252 = vadd.f32 %v1410, %v1504
    %v2253 = vadd.f32 %v1411, %v1508
    %v2254 = vadd.f32 %v1412, %v1512
    %v2255 = vadd.f32 %v1413, %v1516
    %v2256 = vadd.f32 %v1414, %v1520
    %v2257 = vadd.f32 %v1415, %v1492
    %v2258 = vadd.f32 %v1416, %v1496
    %v2259 = vadd.f32 %v1417, %v1500
    %v2260 = vadd.f32 %v1418, %v1504
    %v2261 = vadd.f32 %v1419, %v1508
    %v2262 = vadd.f32 %v1420, %v1512
    %v2263 = vadd.f32 %v1421, %v1516
    %v2264 = vadd.f32 %v1422, %v1520
    %v2265 = vadd.f32 %v1423, %v1492
    %v2266 = vadd.f32 %v1424, %v1496
    %v2267 = vadd.f32 %v1425, %v1500
    %v2268 = vadd.f32 %v1426, %v1504
    %v2269 = vadd.f32 %v1427, %v1508
    %v2270 = vadd.f32 %v1428, %v1512
    %v2271 = vadd.f32 %v1429, %v1516
    %v2272 = vadd.f32 %v1430, %v1520
    %v2273 = vadd.f32 %v1431, %v1492
    %v2274 = vadd.f32 %v1432, %v1496
    %v2275 = vadd.f32 %v1433, %v1500
    %v2276 = vadd.f32 %v1434, %v1504
    %v2277 = vadd.f32 %v1435, %v1508
    %v2278 = vadd.f32 %v1436, %v1512
    %v2279 = vadd.f32 %v1437, %v1516
    %v2280 = vadd.f32 %v1438, %v1520
    %v2281 = vadd.f32 %v1439, %v1492
    %v2282 = vadd.f32 %v1440, %v1496
    %v2283 = vadd.f32 %v1441, %v1500
    %v2284 = vadd.f32 %v1442, %v1504
    %v2285 = vadd.f32 %v1443, %v1508
    %v2286 = vadd.f32 %v1444, %v1512
    %v2287 = vadd.f32 %v1445, %v1516
    %v2288 = vadd.f32 %v1446, %v1520
    %v2289 = vadd.f32 %v1447, %v1492
    %v2290 = vadd.f32 %v1448, %v1496
    %v2291 = vadd.f32 %v1449, %v1500
    %v2292 = vadd.f32 %v1450, %v1504
    %v2293 = vadd.f32 %v1451, %v1508
    %v2294 = vadd.f32 %v1452, %v1512
    %v2295 = vadd.f32 %v1453, %v1516
    %v2296 = vadd.f32 %v1454, %v1520
    %v2297 = vadd.f32 %v1455, %v1492
    %v2298 = vadd.f32 %v1456, %v1496
    %v2299 = vadd.f32 %v1457, %v1500
    %v2300 = vadd.f32 %v1458, %v1504
    %v2301 = vadd.f32 %v1459, %v1508
    %v2302 = vadd.f32 %v1460, %v1512
    %v2303 = vadd.f32 %v1461, %v1516
    %v2304 = vadd.f32 %v1462, %v1520
    %v2305 = vadd.f32 %v1463, %v1492
    %v2306 = vadd.f32 %v1464, %v1496
    %v2307 = vadd.f32 %v1465, %v1500
    %v2308 = vadd.f32 %v1466, %v1504
    %v2309 = vadd.f32 %v1467, %v1508
    %v2310 = vadd.f32 %v1468, %v1512
    %v2311 = vadd.f32 %v1469, %v1516
    %v2312 = vadd.f32 %v1470, %v1520
    %v2313 = vadd.f32 %v1471, %v1492
    %v2314 = vadd.f32 %v1472, %v1496
    %v2315 = vadd.f32 %v1473, %v1500
    %v2316 = vadd.f32 %v1474, %v1504
    %v2317 = vadd.f32 %v1475, %v1508
    %v2318 = vadd.f32 %v1476, %v1512
    %v2319 = vadd.f32 %v1477, %v1516
    %v2320 = vadd.f32 %v1478, %v1520
    %v2321 = vadd.f32 %v1479, %v1492
    %v2322 = vadd.f32 %v1480, %v1496
    %v2323 = vadd.f32 %v1481, %v1500
    %v2324 = vadd.f32 %v1482, %v1504
    %v2325 = vadd.f32 %v1483, %v1508
    %v2326 = vadd.f32 %v1484, %v1512
    %v2327 = vadd.f32 %v1485, %v1516
    %v2328 = vadd.f32 %v1486, %v1520
    %2329 = vst [vmem:[#allocation2] sm:$0xff] %v1529
    %2330 = vst [vmem:[#allocation2 + $0x8] sm:$0xff] %v1530
    %2331 = vst [vmem:[#allocation2 + $0x10] sm:$0xff] %v1531
    %2332 = vst [vmem:[#allocation2 + $0x18] sm:$0xff] %v1532
    %2333 = vst [vmem:[#allocation2 + $0x20] sm:$0xff] %v1533
    %2334 = vst [vmem:[#allocation2 + $0x28] sm:$0xff] %v1534
    %2335 = vst [vmem:[#allocation2 + $0x30] sm:$0xff] %v1535
    %2336 = vst [vmem:[#allocation2 + $0x38] sm:$0xff] %v1536
    %2337 = vst [vmem:[#allocation2 + $0x40] sm:$0xff] %v1537
    %2338 = vst [vmem:[#allocation2 + $0x48] sm:$0xff] %v1538
    %2339 = vst [vmem:[#allocation2 + $0x50] sm:$0xff] %v1539
    %2340 = vst [vmem:[#allocation2 + $0x58] sm:$0xff] %v1540
    %2341 = vst [vmem:[#allocation2 + $0x60] sm:$0xff] %v1541
    %2342 = vst [vmem:[#allocation2 + $0x68] sm:$0xff] %v1542
    %2343 = vst [vmem:[#allocation2 + $0x70] sm:$0xff] %v1543
    %2344 = vst [vmem:[#allocation2 + $0x78] sm:$0xff] %v1544
    %2345 = vst [vmem:[#allocation2 + $0x80] sm:$0xff] %v1545
    %2346 = vst [vmem:[#allocation2 + $0x88] sm:$0xff] %v1546
    %2347 = vst [vmem:[#allocation2 + $0x90] sm:$0xff] %v1547
    %2348 = vst [vmem:[#allocation2 + $0x98] sm:$0xff] %v1548
    %2349 = vst [vmem:[#allocation2 + $0xa0] sm:$0xff] %v1549
    %2350 = vst [vmem:[#allocation2 + $0xa8] sm:$0xff] %v1550
    %2351 = vst [vmem:[#allocation2 + $0xb0] sm:$0xff] %v1551
    %2352 = vst [vmem:[#allocation2 + $0xb8] sm:$0xff] %v1552
    %2353 = vst [vmem:[#allocation2 + $0xc0] sm:$0xff] %v1553
    %2354 = vst [vmem:[#allocation2 + $0xc8] sm:$0xff] %v1554
    %2355 = vst [vmem:[#allocation2 + $0xd0] sm:$0xff] %v1555
    %2356 = vst [vmem:[#allocation2 + $0xd8] sm:$0xff] %v1556
    %2357 = vst [vmem:[#allocation2 + $0xe0] sm:$0xff] %v1557
    %2358 = vst [vmem:[#allocation2 + $0xe8] sm:$0xff] %v1558
    %2359 = vst [vmem:[#allocation2 + $0xf0] sm:$0xff] %v1559
    %2360 = vst [vmem:[#allocation2 + $0xf8] sm:$0xff] %v1560
    %2361 = vst [vmem:[#allocation2 + $0x100] sm:$0xff] %v1561
    %2362 = vst [vmem:[#allocation2 + $0x108] sm:$0xff] %v1562
    %2363 = vst [vmem:[#allocation2 + $0x110] sm:$0xff] %v1563
    %2364 = vst [vmem:[#allocation2 + $0x118] sm:$0xff] %v1564
    %2365 = vst [vmem:[#allocation2 + $0x120] sm:$0xff] %v1565
    %2366 = vst [vmem:[#allocation2 + $0x128] sm:$0xff] %v1566
    %2367 = vst [vmem:[#allocation2 + $0x130] sm:$0xff] %v1567
    %2368 = vst [vmem:[#allocation2 + $0x138] sm:$0xff] %v1568
    %2369 = vst [vmem:[#allocation2 + $0x140] sm:$0xff] %v1569
    %2370 = vst [vmem:[#allocation2 + $0x148] sm:$0xff] %v1570
    %2371 = vst [vmem:[#allocation2 + $0x150] sm:$0xff] %v1571
    %2372 = vst [vmem:[#allocation2 + $0x158] sm:$0xff] %v1572
    %2373 = vst [vmem:[#allocation2 + $0x160] sm:$0xff] %v1573
    %2374 = vst [vmem:[#allocation2 + $0x168] sm:$0xff] %v1574
    %2375 = vst [vmem:[#allocation2 + $0x170] sm:$0xff] %v1575
    %2376 = vst [vmem:[#allocation2 + $0x178] sm:$0xff] %v1576
    %2377 = vst [vmem:[#allocation2 + $0x180] sm:$0xff] %v1577
    %2378 = vst [vmem:[#allocation2 + $0x188] sm:$0xff] %v1578
    %2379 = vst [vmem:[#allocation2 + $0x190] sm:$0xff] %v1579
    %2380 = vst [vmem:[#allocation2 + $0x198] sm:$0xff] %v1580
    %2381 = vst [vmem:[#allocation2 + $0x1a0] sm:$0xff] %v1581
    %2382 = vst [vmem:[#allocation2 + $0x1a8] sm:$0xff] %v1582
    %2383 = vst [vmem:[#allocation2 + $0x1b0] sm:$0xff] %v1583
    %2384 = vst [vmem:[#allocation2 + $0x1b8] sm:$0xff] %v1584
    %2385 = vst [vmem:[#allocation2 + $0x1c0] sm:$0xff] %v1585
    %2386 = vst [vmem:[#allocation2 + $0x1c8] sm:$0xff] %v1586
    %2387 = vst [vmem:[#allocation2 + $0x1d0] sm:$0xff] %v1587
    %2388 = vst [vmem:[#allocation2 + $0x1d8] sm:$0xff] %v1588
    %2389 = vst [vmem:[#allocation2 + $0x1e0] sm:$0xff] %v1589
    %2390 = vst [vmem:[#allocation2 + $0x1e8] sm:$0xff] %v1590
    %2391 = vst [vmem:[#allocation2 + $0x1f0] sm:$0xff] %v1591
    %2392 = vst [vmem:[#allocation2 + $0x1f8] sm:$0xff] %v1592
    %2393 = vst [vmem:[#allocation2 + $0x200] sm:$0xff] %v1593
    %2394 = vst [vmem:[#allocation2 + $0x208] sm:$0xff] %v1594
    %2395 = vst [vmem:[#allocation2 + $0x210] sm:$0xff] %v1595
    %2396 = vst [vmem:[#allocation2 + $0x218] sm:$0xff] %v1596
    %2397 = vst [vmem:[#allocation2 + $0x220] sm:$0xff] %v1597
    %2398 = vst [vmem:[#allocation2 + $0x228] sm:$0xff] %v1598
    %2399 = vst [vmem:[#allocation2 + $0x230] sm:$0xff] %v1599
    %2400 = vst [vmem:[#allocation2 + $0x238] sm:$0xff] %v1600
    %2401 = vst [vmem:[#allocation2 + $0x240] sm:$0xff] %v1601
    %2402 = vst [vmem:[#allocation2 + $0x248] sm:$0xff] %v1602
    %2403 = vst [vmem:[#allocation2 + $0x250] sm:$0xff] %v1603
    %2404 = vst [vmem:[#allocation2 + $0x258] sm:$0xff] %v1604
    %2405 = vst [vmem:[#allocation2 + $0x260] sm:$0xff] %v1605
    %2406 = vst [vmem:[#allocation2 + $0x268] sm:$0xff] %v1606
    %2407 = vst [vmem:[#allocation2 + $0x270] sm:$0xff] %v1607
    %2408 = vst [vmem:[#allocation2 + $0x278] sm:$0xff] %v1608
    %2409 = vst [vmem:[#allocation2 + $0x280] sm:$0xff] %v1609
    %2410 = vst [vmem:[#allocation2 + $0x288] sm:$0xff] %v1610
    %2411 = vst [vmem:[#allocation2 + $0x290] sm:$0xff] %v1611
    %2412 = vst [vmem:[#allocation2 + $0x298] sm:$0xff] %v1612
    %2413 = vst [vmem:[#allocation2 + $0x2a0] sm:$0xff] %v1613
    %2414 = vst [vmem:[#allocation2 + $0x2a8] sm:$0xff] %v1614
    %2415 = vst [vmem:[#allocation2 + $0x2b0] sm:$0xff] %v1615
    %2416 = vst [vmem:[#allocation2 + $0x2b8] sm:$0xff] %v1616
    %2417 = vst [vmem:[#allocation2 + $0x2c0] sm:$0xff] %v1617
    %2418 = vst [vmem:[#allocation2 + $0x2c8] sm:$0xff] %v1618
    %2419 = vst [vmem:[#allocation2 + $0x2d0] sm:$0xff] %v1619
    %2420 = vst [vmem:[#allocation2 + $0x2d8] sm:$0xff] %v1620
    %2421 = vst [vmem:[#allocation2 + $0x2e0] sm:$0xff] %v1621
    %2422 = vst [vmem:[#allocation2 + $0x2e8] sm:$0xff] %v1622
    %2423 = vst [vmem:[#allocation2 + $0x2f0] sm:$0xff] %v1623
    %2424 = vst [vmem:[#allocation2 + $0x2f8] sm:$0xff] %v1624
    %2425 = vst [vmem:[#allocation2 + $0x300] sm:$0xff] %v1625
    %2426 = vst [vmem:[#allocation2 + $0x308] sm:$0xff] %v1626
    %2427 = vst [vmem:[#allocation2 + $0x310] sm:$0xff] %v1627
    %2428 = vst [vmem:[#allocation2 + $0x318] sm:$0xff] %v1628
    %2429 = vst [vmem:[#allocation2 + $0x320] sm:$0xff] %v1629
    %2430 = vst [vmem:[#allocation2 + $0x328] sm:$0xff] %v1630
    %2431 = vst [vmem:[#allocation2 + $0x330] sm:$0xff] %v1631
    %2432 = vst [vmem:[#allocation2 + $0x338] sm:$0xff] %v1632
    %2433 = vst [vmem:[#allocation2 + $0x340] sm:$0xff] %v1633
    %2434 = vst [vmem:[#allocation2 + $0x348] sm:$0xff] %v1634
    %2435 = vst [vmem:[#allocation2 + $0x350] sm:$0xff] %v1635
    %2436 = vst [vmem:[#allocation2 + $0x358] sm:$0xff] %v1636
    %2437 = vst [vmem:[#allocation2 + $0x360] sm:$0xff] %v1637
    %2438 = vst [vmem:[#allocation2 + $0x368] sm:$0xff] %v1638
    %2439 = vst [vmem:[#allocation2 + $0x370] sm:$0xff] %v1639
    %2440 = vst [vmem:[#allocation2 + $0x378] sm:$0xff] %v1640
    %2441 = vst [vmem:[#allocation2 + $0x380] sm:$0xff] %v1641
    %2442 = vst [vmem:[#allocation2 + $0x388] sm:$0xff] %v1642
    %2443 = vst [vmem:[#allocation2 + $0x390] sm:$0xff] %v1643
    %2444 = vst [vmem:[#allocation2 + $0x398] sm:$0xff] %v1644
    %2445 = vst [vmem:[#allocation2 + $0x3a0] sm:$0xff] %v1645
    %2446 = vst [vmem:[#allocation2 + $0x3a8] sm:$0xff] %v1646
    %2447 = vst [vmem:[#allocation2 + $0x3b0] sm:$0xff] %v1647
    %2448 = vst [vmem:[#allocation2 + $0x3b8] sm:$0xff] %v1648
    %2449 = vst [vmem:[#allocation2 + $0x3c0] sm:$0xff] %v1649
    %2450 = vst [vmem:[#allocation2 + $0x3c8] sm:$0xff] %v1650
    %2451 = vst [vmem:[#allocation2 + $0x3d0] sm:$0xff] %v1651
    %2452 = vst [vmem:[#allocation2 + $0x3d8] sm:$0xff] %v1652
    %2453 = vst [vmem:[#allocation2 + $0x3e0] sm:$0xff] %v1653
    %2454 = vst [vmem:[#allocation2 + $0x3e8] sm:$0xff] %v1654
    %2455 = vst [vmem:[#allocation2 + $0x3f0] sm:$0xff] %v1655
    %2456 = vst [vmem:[#allocation2 + $0x3f8] sm:$0xff] %v1656
    %2457 = vst [vmem:[#allocation2 + $0x400] sm:$0xff] %v1657
    %2458 = vst [vmem:[#allocation2 + $0x408] sm:$0xff] %v1658
    %2459 = vst [vmem:[#allocation2 + $0x410] sm:$0xff] %v1659
    %2460 = vst [vmem:[#allocation2 + $0x418] sm:$0xff] %v1660
    %2461 = vst [vmem:[#allocation2 + $0x420] sm:$0xff] %v1661
    %2462 = vst [vmem:[#allocation2 + $0x428] sm:$0xff] %v1662
    %2463 = vst [vmem:[#allocation2 + $0x430] sm:$0xff] %v1663
    %2464 = vst [vmem:[#allocation2 + $0x438] sm:$0xff] %v1664
    %2465 = vst [vmem:[#allocation2 + $0x440] sm:$0xff] %v1665
    %2466 = vst [vmem:[#allocation2 + $0x448] sm:$0xff] %v1666
    %2467 = vst [vmem:[#allocation2 + $0x450] sm:$0xff] %v1667
    %2468 = vst [vmem:[#allocation2 + $0x458] sm:$0xff] %v1668
    %2469 = vst [vmem:[#allocation2 + $0x460] sm:$0xff] %v1669
    %2470 = vst [vmem:[#allocation2 + $0x468] sm:$0xff] %v1670
    %2471 = vst [vmem:[#allocation2 + $0x470] sm:$0xff] %v1671
    %2472 = vst [vmem:[#allocation2 + $0x478] sm:$0xff] %v1672
    %2473 = vst [vmem:[#allocation2 + $0x480] sm:$0xff] %v1673
    %2474 = vst [vmem:[#allocation2 + $0x488] sm:$0xff] %v1674
    %2475 = vst [vmem:[#allocation2 + $0x490] sm:$0xff] %v1675
    %2476 = vst [vmem:[#allocation2 + $0x498] sm:$0xff] %v1676
    %2477 = vst [vmem:[#allocation2 + $0x4a0] sm:$0xff] %v1677
    %2478 = vst [vmem:[#allocation2 + $0x4a8] sm:$0xff] %v1678
    %2479 = vst [vmem:[#allocation2 + $0x4b0] sm:$0xff] %v1679
    %2480 = vst [vmem:[#allocation2 + $0x4b8] sm:$0xff] %v1680
    %2481 = vst [vmem:[#allocation2 + $0x4c0] sm:$0xff] %v1681
    %2482 = vst [vmem:[#allocation2 + $0x4c8] sm:$0xff] %v1682
    %2483 = vst [vmem:[#allocation2 + $0x4d0] sm:$0xff] %v1683
    %2484 = vst [vmem:[#allocation2 + $0x4d8] sm:$0xff] %v1684
    %2485 = vst [vmem:[#allocation2 + $0x4e0] sm:$0xff] %v1685
    %2486 = vst [vmem:[#allocation2 + $0x4e8] sm:$0xff] %v1686
    %2487 = vst [vmem:[#allocation2 + $0x4f0] sm:$0xff] %v1687
    %2488 = vst [vmem:[#allocation2 + $0x4f8] sm:$0xff] %v1688
    %2489 = vst [vmem:[#allocation2 + $0x500] sm:$0xff] %v1689
    %2490 = vst [vmem:[#allocation2 + $0x508] sm:$0xff] %v1690
    %2491 = vst [vmem:[#allocation2 + $0x510] sm:$0xff] %v1691
    %2492 = vst [vmem:[#allocation2 + $0x518] sm:$0xff] %v1692
    %2493 = vst [vmem:[#allocation2 + $0x520] sm:$0xff] %v1693
    %2494 = vst [vmem:[#allocation2 + $0x528] sm:$0xff] %v1694
    %2495 = vst [vmem:[#allocation2 + $0x530] sm:$0xff] %v1695
    %2496 = vst [vmem:[#allocation2 + $0x538] sm:$0xff] %v1696
    %2497 = vst [vmem:[#allocation2 + $0x540] sm:$0xff] %v1697
    %2498 = vst [vmem:[#allocation2 + $0x548] sm:$0xff] %v1698
    %2499 = vst [vmem:[#allocation2 + $0x550] sm:$0xff] %v1699
    %2500 = vst [vmem:[#allocation2 + $0x558] sm:$0xff] %v1700
    %2501 = vst [vmem:[#allocation2 + $0x560] sm:$0xff] %v1701
    %2502 = vst [vmem:[#allocation2 + $0x568] sm:$0xff] %v1702
    %2503 = vst [vmem:[#allocation2 + $0x570] sm:$0xff] %v1703
    %2504 = vst [vmem:[#allocation2 + $0x578] sm:$0xff] %v1704
    %2505 = vst [vmem:[#allocation2 + $0x580] sm:$0xff] %v1705
    %2506 = vst [vmem:[#allocation2 + $0x588] sm:$0xff] %v1706
    %2507 = vst [vmem:[#allocation2 + $0x590] sm:$0xff] %v1707
    %2508 = vst [vmem:[#allocation2 + $0x598] sm:$0xff] %v1708
    %2509 = vst [vmem:[#allocation2 + $0x5a0] sm:$0xff] %v1709
    %2510 = vst [vmem:[#allocation2 + $0x5a8] sm:$0xff] %v1710
    %2511 = vst [vmem:[#allocation2 + $0x5b0] sm:$0xff] %v1711
    %2512 = vst [vmem:[#allocation2 + $0x5b8] sm:$0xff] %v1712
    %2513 = vst [vmem:[#allocation2 + $0x5c0] sm:$0xff] %v1713
    %2514 = vst [vmem:[#allocation2 + $0x5c8] sm:$0xff] %v1714
    %2515 = vst [vmem:[#allocation2 + $0x5d0] sm:$0xff] %v1715
    %2516 = vst [vmem:[#allocation2 + $0x5d8] sm:$0xff] %v1716
    %2517 = vst [vmem:[#allocation2 + $0x5e0] sm:$0xff] %v1717
    %2518 = vst [vmem:[#allocation2 + $0x5e8] sm:$0xff] %v1718
    %2519 = vst [vmem:[#allocation2 + $0x5f0] sm:$0xff] %v1719
    %2520 = vst [vmem:[#allocation2 + $0x5f8] sm:$0xff] %v1720
    %2521 = vst [vmem:[#allocation2 + $0x600] sm:$0xff] %v1721
    %2522 = vst [vmem:[#allocation2 + $0x608] sm:$0xff] %v1722
    %2523 = vst [vmem:[#allocation2 + $0x610] sm:$0xff] %v1723
    %2524 = vst [vmem:[#allocation2 + $0x618] sm:$0xff] %v1724
    %2525 = vst [vmem:[#allocation2 + $0x620] sm:$0xff] %v1725
    %2526 = vst [vmem:[#allocation2 + $0x628] sm:$0xff] %v1726
    %2527 = vst [vmem:[#allocation2 + $0x630] sm:$0xff] %v1727
    %2528 = vst [vmem:[#allocation2 + $0x638] sm:$0xff] %v1728
    %2529 = vst [vmem:[#allocation2 + $0x640] sm:$0xff] %v1729
    %2530 = vst [vmem:[#allocation2 + $0x648] sm:$0xff] %v1730
    %2531 = vst [vmem:[#allocation2 + $0x650] sm:$0xff] %v1731
    %2532 = vst [vmem:[#allocation2 + $0x658] sm:$0xff] %v1732
    %2533 = vst [vmem:[#allocation2 + $0x660] sm:$0xff] %v1733
    %2534 = vst [vmem:[#allocation2 + $0x668] sm:$0xff] %v1734
    %2535 = vst [vmem:[#allocation2 + $0x670] sm:$0xff] %v1735
    %2536 = vst [vmem:[#allocation2 + $0x678] sm:$0xff] %v1736
    %2537 = vst [vmem:[#allocation2 + $0x680] sm:$0xff] %v1737
    %2538 = vst [vmem:[#allocation2 + $0x688] sm:$0xff] %v1738
    %2539 = vst [vmem:[#allocation2 + $0x690] sm:$0xff] %v1739
    %2540 = vst [vmem:[#allocation2 + $0x698] sm:$0xff] %v1740
    %2541 = vst [vmem:[#allocation2 + $0x6a0] sm:$0xff] %v1741
    %2542 = vst [vmem:[#allocation2 + $0x6a8] sm:$0xff] %v1742
    %2543 = vst [vmem:[#allocation2 + $0x6b0] sm:$0xff] %v1743
    %2544 = vst [vmem:[#allocation2 + $0x6b8] sm:$0xff] %v1744
    %2545 = vst [vmem:[#allocation2 + $0x6c0] sm:$0xff] %v1745
    %2546 = vst [vmem:[#allocation2 + $0x6c8] sm:$0xff] %v1746
    %2547 = vst [vmem:[#allocation2 + $0x6d0] sm:$0xff] %v1747
    %2548 = vst [vmem:[#allocation2 + $0x6d8] sm:$0xff] %v1748
    %2549 = vst [vmem:[#allocation2 + $0x6e0] sm:$0xff] %v1749
    %2550 = vst [vmem:[#allocation2 + $0x6e8] sm:$0xff] %v1750
    %2551 = vst [vmem:[#allocation2 + $0x6f0] sm:$0xff] %v1751
    %2552 = vst [vmem:[#allocation2 + $0x6f8] sm:$0xff] %v1752
    %2553 = vst [vmem:[#allocation2 + $0x700] sm:$0xff] %v1753
    %2554 = vst [vmem:[#allocation2 + $0x708] sm:$0xff] %v1754
    %2555 = vst [vmem:[#allocation2 + $0x710] sm:$0xff] %v1755
    %2556 = vst [vmem:[#allocation2 + $0x718] sm:$0xff] %v1756
    %2557 = vst [vmem:[#allocation2 + $0x720] sm:$0xff] %v1757
    %2558 = vst [vmem:[#allocation2 + $0x728] sm:$0xff] %v1758
    %2559 = vst [vmem:[#allocation2 + $0x730] sm:$0xff] %v1759
    %2560 = vst [vmem:[#allocation2 + $0x738] sm:$0xff] %v1760
    %2561 = vst [vmem:[#allocation2 + $0x740] sm:$0xff] %v1761
    %2562 = vst [vmem:[#allocation2 + $0x748] sm:$0xff] %v1762
    %2563 = vst [vmem:[#allocation2 + $0x750] sm:$0xff] %v1763
    %2564 = vst [vmem:[#allocation2 + $0x758] sm:$0xff] %v1764
    %2565 = vst [vmem:[#allocation2 + $0x760] sm:$0xff] %v1765
    %2566 = vst [vmem:[#allocation2 + $0x768] sm:$0xff] %v1766
    %2567 = vst [vmem:[#allocation2 + $0x770] sm:$0xff] %v1767
    %2568 = vst [vmem:[#allocation2 + $0x778] sm:$0xff] %v1768
    %2569 = vst [vmem:[#allocation2 + $0x780] sm:$0xff] %v1769
    %2570 = vst [vmem:[#allocation2 + $0x788] sm:$0xff] %v1770
    %2571 = vst [vmem:[#allocation2 + $0x790] sm:$0xff] %v1771
    %2572 = vst [vmem:[#allocation2 + $0x798] sm:$0xff] %v1772
    %2573 = vst [vmem:[#allocation2 + $0x7a0] sm:$0xff] %v1773
    %2574 = vst [vmem:[#allocation2 + $0x7a8] sm:$0xff] %v1774
    %2575 = vst [vmem:[#allocation2 + $0x7b0] sm:$0xff] %v1775
    %2576 = vst [vmem:[#allocation2 + $0x7b8] sm:$0xff] %v1776
    %2577 = vst [vmem:[#allocation2 + $0x7c0] sm:$0xff] %v1777
    %2578 = vst [vmem:[#allocation2 + $0x7c8] sm:$0xff] %v1778
    %2579 = vst [vmem:[#allocation2 + $0x7d0] sm:$0xff] %v1779
    %2580 = vst [vmem:[#allocation2 + $0x7d8] sm:$0xff] %v1780
    %2581 = vst [vmem:[#allocation2 + $0x7e0] sm:$0xff] %v1781
    %2582 = vst [vmem:[#allocation2 + $0x7e8] sm:$0xff] %v1782
    %2583 = vst [vmem:[#allocation2 + $0x7f0] sm:$0xff] %v1783
    %2584 = vst [vmem:[#allocation2 + $0x7f8] sm:$0xff] %v1784
    %2585 = vst [vmem:[#allocation2 + $0x800] sm:$0xff] %v1785
    %2586 = vst [vmem:[#allocation2 + $0x808] sm:$0xff] %v1786
    %2587 = vst [vmem:[#allocation2 + $0x810] sm:$0xff] %v1787
    %2588 = vst [vmem:[#allocation2 + $0x818] sm:$0xff] %v1788
    %2589 = vst [vmem:[#allocation2 + $0x820] sm:$0xff] %v1789
    %2590 = vst [vmem:[#allocation2 + $0x828] sm:$0xff] %v1790
    %2591 = vst [vmem:[#allocation2 + $0x830] sm:$0xff] %v1791
    %2592 = vst [vmem:[#allocation2 + $0x838] sm:$0xff] %v1792
    %2593 = vst [vmem:[#allocation2 + $0x840] sm:$0xff] %v1793
    %2594 = vst [vmem:[#allocation2 + $0x848] sm:$0xff] %v1794
    %2595 = vst [vmem:[#allocation2 + $0x850] sm:$0xff] %v1795
    %2596 = vst [vmem:[#allocation2 + $0x858] sm:$0xff] %v1796
    %2597 = vst [vmem:[#allocation2 + $0x860] sm:$0xff] %v1797
    %2598 = vst [vmem:[#allocation2 + $0x868] sm:$0xff] %v1798
    %2599 = vst [vmem:[#allocation2 + $0x870] sm:$0xff] %v1799
    %2600 = vst [vmem:[#allocation2 + $0x878] sm:$0xff] %v1800
    %2601 = vst [vmem:[#allocation2 + $0x880] sm:$0xff] %v1801
    %2602 = vst [vmem:[#allocation2 + $0x888] sm:$0xff] %v1802
    %2603 = vst [vmem:[#allocation2 + $0x890] sm:$0xff] %v1803
    %2604 = vst [vmem:[#allocation2 + $0x898] sm:$0xff] %v1804
    %2605 = vst [vmem:[#allocation2 + $0x8a0] sm:$0xff] %v1805
    %2606 = vst [vmem:[#allocation2 + $0x8a8] sm:$0xff] %v1806
    %2607 = vst [vmem:[#allocation2 + $0x8b0] sm:$0xff] %v1807
    %2608 = vst [vmem:[#allocation2 + $0x8b8] sm:$0xff] %v1808
    %2609 = vst [vmem:[#allocation2 + $0x8c0] sm:$0xff] %v1809
    %2610 = vst [vmem:[#allocation2 + $0x8c8] sm:$0xff] %v1810
    %2611 = vst [vmem:[#allocation2 + $0x8d0] sm:$0xff] %v1811
    %2612 = vst [vmem:[#allocation2 + $0x8d8] sm:$0xff] %v1812
    %2613 = vst [vmem:[#allocation2 + $0x8e0] sm:$0xff] %v1813
    %2614 = vst [vmem:[#allocation2 + $0x8e8] sm:$0xff] %v1814
    %2615 = vst [vmem:[#allocation2 + $0x8f0] sm:$0xff] %v1815
    %2616 = vst [vmem:[#allocation2 + $0x8f8] sm:$0xff] %v1816
    %2617 = vst [vmem:[#allocation2 + $0x900] sm:$0xff] %v1817
    %2618 = vst [vmem:[#allocation2 + $0x908] sm:$0xff] %v1818
    %2619 = vst [vmem:[#allocation2 + $0x910] sm:$0xff] %v1819
    %2620 = vst [vmem:[#allocation2 + $0x918] sm:$0xff] %v1820
    %2621 = vst [vmem:[#allocation2 + $0x920] sm:$0xff] %v1821
    %2622 = vst [vmem:[#allocation2 + $0x928] sm:$0xff] %v1822
    %2623 = vst [vmem:[#allocation2 + $0x930] sm:$0xff] %v1823
    %2624 = vst [vmem:[#allocation2 + $0x938] sm:$0xff] %v1824
    %2625 = vst [vmem:[#allocation2 + $0x940] sm:$0xff] %v1825
    %2626 = vst [vmem:[#allocation2 + $0x948] sm:$0xff] %v1826
    %2627 = vst [vmem:[#allocation2 + $0x950] sm:$0xff] %v1827
    %2628 = vst [vmem:[#allocation2 + $0x958] sm:$0xff] %v1828
    %2629 = vst [vmem:[#allocation2 + $0x960] sm:$0xff] %v1829
    %2630 = vst [vmem:[#allocation2 + $0x968] sm:$0xff] %v1830
    %2631 = vst [vmem:[#allocation2 + $0x970] sm:$0xff] %v1831
    %2632 = vst [vmem:[#allocation2 + $0x978] sm:$0xff] %v1832
    %2633 = vst [vmem:[#allocation2 + $0x980] sm:$0xff] %v1833
    %2634 = vst [vmem:[#allocation2 + $0x988] sm:$0xff] %v1834
    %2635 = vst [vmem:[#allocation2 + $0x990] sm:$0xff] %v1835
    %2636 = vst [vmem:[#allocation2 + $0x998] sm:$0xff] %v1836
    %2637 = vst [vmem:[#allocation2 + $0x9a0] sm:$0xff] %v1837
    %2638 = vst [vmem:[#allocation2 + $0x9a8] sm:$0xff] %v1838
    %2639 = vst [vmem:[#allocation2 + $0x9b0] sm:$0xff] %v1839
    %2640 = vst [vmem:[#allocation2 + $0x9b8] sm:$0xff] %v1840
    %2641 = vst [vmem:[#allocation2 + $0x9c0] sm:$0xff] %v1841
    %2642 = vst [vmem:[#allocation2 + $0x9c8] sm:$0xff] %v1842
    %2643 = vst [vmem:[#allocation2 + $0x9d0] sm:$0xff] %v1843
    %2644 = vst [vmem:[#allocation2 + $0x9d8] sm:$0xff] %v1844
    %2645 = vst [vmem:[#allocation2 + $0x9e0] sm:$0xff] %v1845
    %2646 = vst [vmem:[#allocation2 + $0x9e8] sm:$0xff] %v1846
    %2647 = vst [vmem:[#allocation2 + $0x9f0] sm:$0xff] %v1847
    %2648 = vst [vmem:[#allocation2 + $0x9f8] sm:$0xff] %v1848
    %2649 = vst [vmem:[#allocation2 + $0xa00] sm:$0xff] %v1849
    %2650 = vst [vmem:[#allocation2 + $0xa08] sm:$0xff] %v1850
    %2651 = vst [vmem:[#allocation2 + $0xa10] sm:$0xff] %v1851
    %2652 = vst [vmem:[#allocation2 + $0xa18] sm:$0xff] %v1852
    %2653 = vst [vmem:[#allocation2 + $0xa20] sm:$0xff] %v1853
    %2654 = vst [vmem:[#allocation2 + $0xa28] sm:$0xff] %v1854
    %2655 = vst [vmem:[#allocation2 + $0xa30] sm:$0xff] %v1855
    %2656 = vst [vmem:[#allocation2 + $0xa38] sm:$0xff] %v1856
    %2657 = vst [vmem:[#allocation2 + $0xa40] sm:$0xff] %v1857
    %2658 = vst [vmem:[#allocation2 + $0xa48] sm:$0xff] %v1858
    %2659 = vst [vmem:[#allocation2 + $0xa50] sm:$0xff] %v1859
    %2660 = vst [vmem:[#allocation2 + $0xa58] sm:$0xff] %v1860
    %2661 = vst [vmem:[#allocation2 + $0xa60] sm:$0xff] %v1861
    %2662 = vst [vmem:[#allocation2 + $0xa68] sm:$0xff] %v1862
    %2663 = vst [vmem:[#allocation2 + $0xa70] sm:$0xff] %v1863
    %2664 = vst [vmem:[#allocation2 + $0xa78] sm:$0xff] %v1864
    %2665 = vst [vmem:[#allocation2 + $0xa80] sm:$0xff] %v1865
    %2666 = vst [vmem:[#allocation2 + $0xa88] sm:$0xff] %v1866
    %2667 = vst [vmem:[#allocation2 + $0xa90] sm:$0xff] %v1867
    %2668 = vst [vmem:[#allocation2 + $0xa98] sm:$0xff] %v1868
    %2669 = vst [vmem:[#allocation2 + $0xaa0] sm:$0xff] %v1869
    %2670 = vst [vmem:[#allocation2 + $0xaa8] sm:$0xff] %v1870
    %2671 = vst [vmem:[#allocation2 + $0xab0] sm:$0xff] %v1871
    %2672 = vst [vmem:[#allocation2 + $0xab8] sm:$0xff] %v1872
    %2673 = vst [vmem:[#allocation2 + $0xac0] sm:$0xff] %v1873
    %2674 = vst [vmem:[#allocation2 + $0xac8] sm:$0xff] %v1874
    %2675 = vst [vmem:[#allocation2 + $0xad0] sm:$0xff] %v1875
    %2676 = vst [vmem:[#allocation2 + $0xad8] sm:$0xff] %v1876
    %2677 = vst [vmem:[#allocation2 + $0xae0] sm:$0xff] %v1877
    %2678 = vst [vmem:[#allocation2 + $0xae8] sm:$0xff] %v1878
    %2679 = vst [vmem:[#allocation2 + $0xaf0] sm:$0xff] %v1879
    %2680 = vst [vmem:[#allocation2 + $0xaf8] sm:$0xff] %v1880
    %2681 = vst [vmem:[#allocation2 + $0xb00] sm:$0xff] %v1881
    %2682 = vst [vmem:[#allocation2 + $0xb08] sm:$0xff] %v1882
    %2683 = vst [vmem:[#allocation2 + $0xb10] sm:$0xff] %v1883
    %2684 = vst [vmem:[#allocation2 + $0xb18] sm:$0xff] %v1884
    %2685 = vst [vmem:[#allocation2 + $0xb20] sm:$0xff] %v1885
    %2686 = vst [vmem:[#allocation2 + $0xb28] sm:$0xff] %v1886
    %2687 = vst [vmem:[#allocation2 + $0xb30] sm:$0xff] %v1887
    %2688 = vst [vmem:[#allocation2 + $0xb38] sm:$0xff] %v1888
    %2689 = vst [vmem:[#allocation2 + $0xb40] sm:$0xff] %v1889
    %2690 = vst [vmem:[#allocation2 + $0xb48] sm:$0xff] %v1890
    %2691 = vst [vmem:[#allocation2 + $0xb50] sm:$0xff] %v1891
    %2692 = vst [vmem:[#allocation2 + $0xb58] sm:$0xff] %v1892
    %2693 = vst [vmem:[#allocation2 + $0xb60] sm:$0xff] %v1893
    %2694 = vst [vmem:[#allocation2 + $0xb68] sm:$0xff] %v1894
    %2695 = vst [vmem:[#allocation2 + $0xb70] sm:$0xff] %v1895
    %2696 = vst [vmem:[#allocation2 + $0xb78] sm:$0xff] %v1896
    %2697 = vst [vmem:[#allocation2 + $0xb80] sm:$0xff] %v1897
    %2698 = vst [vmem:[#allocation2 + $0xb88] sm:$0xff] %v1898
    %2699 = vst [vmem:[#allocation2 + $0xb90] sm:$0xff] %v1899
    %2700 = vst [vmem:[#allocation2 + $0xb98] sm:$0xff] %v1900
    %2701 = vst [vmem:[#allocation2 + $0xba0] sm:$0xff] %v1901
    %2702 = vst [vmem:[#allocation2 + $0xba8] sm:$0xff] %v1902
    %2703 = vst [vmem:[#allocation2 + $0xbb0] sm:$0xff] %v1903
    %2704 = vst [vmem:[#allocation2 + $0xbb8] sm:$0xff] %v1904
    %2705 = vst [vmem:[#allocation2 + $0xbc0] sm:$0xff] %v1905
    %2706 = vst [vmem:[#allocation2 + $0xbc8] sm:$0xff] %v1906
    %2707 = vst [vmem:[#allocation2 + $0xbd0] sm:$0xff] %v1907
    %2708 = vst [vmem:[#allocation2 + $0xbd8] sm:$0xff] %v1908
    %2709 = vst [vmem:[#allocation2 + $0xbe0] sm:$0xff] %v1909
    %2710 = vst [vmem:[#allocation2 + $0xbe8] sm:$0xff] %v1910
    %2711 = vst [vmem:[#allocation2 + $0xbf0] sm:$0xff] %v1911
    %2712 = vst [vmem:[#allocation2 + $0xbf8] sm:$0xff] %v1912
    %2713 = vst [vmem:[#allocation2 + $0xc00] sm:$0xff] %v1913
    %2714 = vst [vmem:[#allocation2 + $0xc08] sm:$0xff] %v1914
    %2715 = vst [vmem:[#allocation2 + $0xc10] sm:$0xff] %v1915
    %2716 = vst [vmem:[#allocation2 + $0xc18] sm:$0xff] %v1916
    %2717 = vst [vmem:[#allocation2 + $0xc20] sm:$0xff] %v1917
    %2718 = vst [vmem:[#allocation2 + $0xc28] sm:$0xff] %v1918
    %2719 = vst [vmem:[#allocation2 + $0xc30] sm:$0xff] %v1919
    %2720 = vst [vmem:[#allocation2 + $0xc38] sm:$0xff] %v1920
    %2721 = vst [vmem:[#allocation2 + $0xc40] sm:$0xff] %v1921
    %2722 = vst [vmem:[#allocation2 + $0xc48] sm:$0xff] %v1922
    %2723 = vst [vmem:[#allocation2 + $0xc50] sm:$0xff] %v1923
    %2724 = vst [vmem:[#allocation2 + $0xc58] sm:$0xff] %v1924
    %2725 = vst [vmem:[#allocation2 + $0xc60] sm:$0xff] %v1925
    %2726 = vst [vmem:[#allocation2 + $0xc68] sm:$0xff] %v1926
    %2727 = vst [vmem:[#allocation2 + $0xc70] sm:$0xff] %v1927
    %2728 = vst [vmem:[#allocation2 + $0xc78] sm:$0xff] %v1928
    %2729 = vst [vmem:[#allocation2 + $0xc80] sm:$0xff] %v1929
    %2730 = vst [vmem:[#allocation2 + $0xc88] sm:$0xff] %v1930
    %2731 = vst [vmem:[#allocation2 + $0xc90] sm:$0xff] %v1931
    %2732 = vst [vmem:[#allocation2 + $0xc98] sm:$0xff] %v1932
    %2733 = vst [vmem:[#allocation2 + $0xca0] sm:$0xff] %v1933
    %2734 = vst [vmem:[#allocation2 + $0xca8] sm:$0xff] %v1934
    %2735 = vst [vmem:[#allocation2 + $0xcb0] sm:$0xff] %v1935
    %2736 = vst [vmem:[#allocation2 + $0xcb8] sm:$0xff] %v1936
    %2737 = vst [vmem:[#allocation2 + $0xcc0] sm:$0xff] %v1937
    %2738 = vst [vmem:[#allocation2 + $0xcc8] sm:$0xff] %v1938
    %2739 = vst [vmem:[#allocation2 + $0xcd0] sm:$0xff] %v1939
    %2740 = vst [vmem:[#allocation2 + $0xcd8] sm:$0xff] %v1940
    %2741 = vst [vmem:[#allocation2 + $0xce0] sm:$0xff] %v1941
    %2742 = vst [vmem:[#allocation2 + $0xce8] sm:$0xff] %v1942
    %2743 = vst [vmem:[#allocation2 + $0xcf0] sm:$0xff] %v1943
    %2744 = vst [vmem:[#allocation2 + $0xcf8] sm:$0xff] %v1944
    %2745 = vst [vmem:[#allocation2 + $0xd00] sm:$0xff] %v1945
    %2746 = vst [vmem:[#allocation2 + $0xd08] sm:$0xff] %v1946
    %2747 = vst [vmem:[#allocation2 + $0xd10] sm:$0xff] %v1947
    %2748 = vst [vmem:[#allocation2 + $0xd18] sm:$0xff] %v1948
    %2749 = vst [vmem:[#allocation2 + $0xd20] sm:$0xff] %v1949
    %2750 = vst [vmem:[#allocation2 + $0xd28] sm:$0xff] %v1950
    %2751 = vst [vmem:[#allocation2 + $0xd30] sm:$0xff] %v1951
    %2752 = vst [vmem:[#allocation2 + $0xd38] sm:$0xff] %v1952
    %2753 = vst [vmem:[#allocation2 + $0xd40] sm:$0xff] %v1953
    %2754 = vst [vmem:[#allocation2 + $0xd48] sm:$0xff] %v1954
    %2755 = vst [vmem:[#allocation2 + $0xd50] sm:$0xff] %v1955
    %2756 = vst [vmem:[#allocation2 + $0xd58] sm:$0xff] %v1956
    %2757 = vst [vmem:[#allocation2 + $0xd60] sm:$0xff] %v1957
    %2758 = vst [vmem:[#allocation2 + $0xd68] sm:$0xff] %v1958
    %2759 = vst [vmem:[#allocation2 + $0xd70] sm:$0xff] %v1959
    %2760 = vst [vmem:[#allocation2 + $0xd78] sm:$0xff] %v1960
    %2761 = vst [vmem:[#allocation2 + $0xd80] sm:$0xff] %v1961
    %2762 = vst [vmem:[#allocation2 + $0xd88] sm:$0xff] %v1962
    %2763 = vst [vmem:[#allocation2 + $0xd90] sm:$0xff] %v1963
    %2764 = vst [vmem:[#allocation2 + $0xd98] sm:$0xff] %v1964
    %2765 = vst [vmem:[#allocation2 + $0xda0] sm:$0xff] %v1965
    %2766 = vst [vmem:[#allocation2 + $0xda8] sm:$0xff] %v1966
    %2767 = vst [vmem:[#allocation2 + $0xdb0] sm:$0xff] %v1967
    %2768 = vst [vmem:[#allocation2 + $0xdb8] sm:$0xff] %v1968
    %2769 = vst [vmem:[#allocation2 + $0xdc0] sm:$0xff] %v1969
    %2770 = vst [vmem:[#allocation2 + $0xdc8] sm:$0xff] %v1970
    %2771 = vst [vmem:[#allocation2 + $0xdd0] sm:$0xff] %v1971
    %2772 = vst [vmem:[#allocation2 + $0xdd8] sm:$0xff] %v1972
    %2773 = vst [vmem:[#allocation2 + $0xde0] sm:$0xff] %v1973
    %2774 = vst [vmem:[#allocation2 + $0xde8] sm:$0xff] %v1974
    %2775 = vst [vmem:[#allocation2 + $0xdf0] sm:$0xff] %v1975
    %2776 = vst [vmem:[#allocation2 + $0xdf8] sm:$0xff] %v1976
    %2777 = vst [vmem:[#allocation2 + $0xe00] sm:$0xff] %v1977
    %2778 = vst [vmem:[#allocation2 + $0xe08] sm:$0xff] %v1978
    %2779 = vst [vmem:[#allocation2 + $0xe10] sm:$0xff] %v1979
    %2780 = vst [vmem:[#allocation2 + $0xe18] sm:$0xff] %v1980
    %2781 = vst [vmem:[#allocation2 + $0xe20] sm:$0xff] %v1981
    %2782 = vst [vmem:[#allocation2 + $0xe28] sm:$0xff] %v1982
    %2783 = vst [vmem:[#allocation2 + $0xe30] sm:$0xff] %v1983
    %2784 = vst [vmem:[#allocation2 + $0xe38] sm:$0xff] %v1984
    %2785 = vst [vmem:[#allocation2 + $0xe40] sm:$0xff] %v1985
    %2786 = vst [vmem:[#allocation2 + $0xe48] sm:$0xff] %v1986
    %2787 = vst [vmem:[#allocation2 + $0xe50] sm:$0xff] %v1987
    %2788 = vst [vmem:[#allocation2 + $0xe58] sm:$0xff] %v1988
    %2789 = vst [vmem:[#allocation2 + $0xe60] sm:$0xff] %v1989
    %2790 = vst [vmem:[#allocation2 + $0xe68] sm:$0xff] %v1990
    %2791 = vst [vmem:[#allocation2 + $0xe70] sm:$0xff] %v1991
    %2792 = vst [vmem:[#allocation2 + $0xe78] sm:$0xff] %v1992
    %2793 = vst [vmem:[#allocation2 + $0xe80] sm:$0xff] %v1993
    %2794 = vst [vmem:[#allocation2 + $0xe88] sm:$0xff] %v1994
    %2795 = vst [vmem:[#allocation2 + $0xe90] sm:$0xff] %v1995
    %2796 = vst [vmem:[#allocation2 + $0xe98] sm:$0xff] %v1996
    %2797 = vst [vmem:[#allocation2 + $0xea0] sm:$0xff] %v1997
    %2798 = vst [vmem:[#allocation2 + $0xea8] sm:$0xff] %v1998
    %2799 = vst [vmem:[#allocation2 + $0xeb0] sm:$0xff] %v1999
    %2800 = vst [vmem:[#allocation2 + $0xeb8] sm:$0xff] %v2000
    %2801 = vst [vmem:[#allocation2 + $0xec0] sm:$0xff] %v2001
    %2802 = vst [vmem:[#allocation2 + $0xec8] sm:$0xff] %v2002
    %2803 = vst [vmem:[#allocation2 + $0xed0] sm:$0xff] %v2003
    %2804 = vst [vmem:[#allocation2 + $0xed8] sm:$0xff] %v2004
    %2805 = vst [vmem:[#allocation2 + $0xee0] sm:$0xff] %v2005
    %2806 = vst [vmem:[#allocation2 + $0xee8] sm:$0xff] %v2006
    %2807 = vst [vmem:[#allocation2 + $0xef0] sm:$0xff] %v2007
    %2808 = vst [vmem:[#allocation2 + $0xef8] sm:$0xff] %v2008
    %2809 = vst [vmem:[#allocation2 + $0xf00] sm:$0xff] %v2009
    %2810 = vst [vmem:[#allocation2 + $0xf08] sm:$0xff] %v2010
    %2811 = vst [vmem:[#allocation2 + $0xf10] sm:$0xff] %v2011
    %2812 = vst [vmem:[#allocation2 + $0xf18] sm:$0xff] %v2012
    %2813 = vst [vmem:[#allocation2 + $0xf20] sm:$0xff] %v2013
    %2814 = vst [vmem:[#allocation2 + $0xf28] sm:$0xff] %v2014
    %2815 = vst [vmem:[#allocation2 + $0xf30] sm:$0xff] %v2015
    %2816 = vst [vmem:[#allocation2 + $0xf38] sm:$0xff] %v2016
    %2817 = vst [vmem:[#allocation2 + $0xf40] sm:$0xff] %v2017
    %2818 = vst [vmem:[#allocation2 + $0xf48] sm:$0xff] %v2018
    %2819 = vst [vmem:[#allocation2 + $0xf50] sm:$0xff] %v2019
    %2820 = vst [vmem:[#allocation2 + $0xf58] sm:$0xff] %v2020
    %2821 = vst [vmem:[#allocation2 + $0xf60] sm:$0xff] %v2021
    %2822 = vst [vmem:[#allocation2 + $0xf68] sm:$0xff] %v2022
    %2823 = vst [vmem:[#allocation2 + $0xf70] sm:$0xff] %v2023
    %2824 = vst [vmem:[#allocation2 + $0xf78] sm:$0xff] %v2024
    %2825 = vst [vmem:[#allocation2 + $0xf80] sm:$0xff] %v2025
    %2826 = vst [vmem:[#allocation2 + $0xf88] sm:$0xff] %v2026
    %2827 = vst [vmem:[#allocation2 + $0xf90] sm:$0xff] %v2027
    %2828 = vst [vmem:[#allocation2 + $0xf98] sm:$0xff] %v2028
    %2829 = vst [vmem:[#allocation2 + $0xfa0] sm:$0xff] %v2029
    %2830 = vst [vmem:[#allocation2 + $0xfa8] sm:$0xff] %v2030
    %2831 = vst [vmem:[#allocation2 + $0xfb0] sm:$0xff] %v2031
    %2832 = vst [vmem:[#allocation2 + $0xfb8] sm:$0xff] %v2032
    %2833 = vst [vmem:[#allocation2 + $0xfc0] sm:$0xff] %v2033
    %2834 = vst [vmem:[#allocation2 + $0xfc8] sm:$0xff] %v2034
    %2835 = vst [vmem:[#allocation2 + $0xfd0] sm:$0xff] %v2035
    %2836 = vst [vmem:[#allocation2 + $0xfd8] sm:$0xff] %v2036
    %2837 = vst [vmem:[#allocation2 + $0xfe0] sm:$0xff] %v2037
    %2838 = vst [vmem:[#allocation2 + $0xfe8] sm:$0xff] %v2038
    %2839 = vst [vmem:[#allocation2 + $0xff0] sm:$0xff] %v2039
    %2840 = vst [vmem:[#allocation2 + $0xff8] sm:$0xff] %v2040
    %2841 = vst [vmem:[#allocation2 + $0x1000] sm:$0xff] %v2041
    %2842 = vst [vmem:[#allocation2 + $0x1008] sm:$0xff] %v2042
    %2843 = vst [vmem:[#allocation2 + $0x1010] sm:$0xff] %v2043
    %2844 = vst [vmem:[#allocation2 + $0x1018] sm:$0xff] %v2044
    %2845 = vst [vmem:[#allocation2 + $0x1020] sm:$0xff] %v2045
    %2846 = vst [vmem:[#allocation2 + $0x1028] sm:$0xff] %v2046
    %2847 = vst [vmem:[#allocation2 + $0x1030] sm:$0xff] %v2047
    %2848 = vst [vmem:[#allocation2 + $0x1038] sm:$0xff] %v2048
    %2849 = vst [vmem:[#allocation2 + $0x1040] sm:$0xff] %v2049
    %2850 = vst [vmem:[#allocation2 + $0x1048] sm:$0xff] %v2050
    %2851 = vst [vmem:[#allocation2 + $0x1050] sm:$0xff] %v2051
    %2852 = vst [vmem:[#allocation2 + $0x1058] sm:$0xff] %v2052
    %2853 = vst [vmem:[#allocation2 + $0x1060] sm:$0xff] %v2053
    %2854 = vst [vmem:[#allocation2 + $0x1068] sm:$0xff] %v2054
    %2855 = vst [vmem:[#allocation2 + $0x1070] sm:$0xff] %v2055
    %2856 = vst [vmem:[#allocation2 + $0x1078] sm:$0xff] %v2056
    %2857 = vst [vmem:[#allocation2 + $0x1080] sm:$0xff] %v2057
    %2858 = vst [vmem:[#allocation2 + $0x1088] sm:$0xff] %v2058
    %2859 = vst [vmem:[#allocation2 + $0x1090] sm:$0xff] %v2059
    %2860 = vst [vmem:[#allocation2 + $0x1098] sm:$0xff] %v2060
    %2861 = vst [vmem:[#allocation2 + $0x10a0] sm:$0xff] %v2061
    %2862 = vst [vmem:[#allocation2 + $0x10a8] sm:$0xff] %v2062
    %2863 = vst [vmem:[#allocation2 + $0x10b0] sm:$0xff] %v2063
    %2864 = vst [vmem:[#allocation2 + $0x10b8] sm:$0xff] %v2064
    %2865 = vst [vmem:[#allocation2 + $0x10c0] sm:$0xff] %v2065
    %2866 = vst [vmem:[#allocation2 + $0x10c8] sm:$0xff] %v2066
    %2867 = vst [vmem:[#allocation2 + $0x10d0] sm:$0xff] %v2067
    %2868 = vst [vmem:[#allocation2 + $0x10d8] sm:$0xff] %v2068
    %2869 = vst [vmem:[#allocation2 + $0x10e0] sm:$0xff] %v2069
    %2870 = vst [vmem:[#allocation2 + $0x10e8] sm:$0xff] %v2070
    %2871 = vst [vmem:[#allocation2 + $0x10f0] sm:$0xff] %v2071
    %2872 = vst [vmem:[#allocation2 + $0x10f8] sm:$0xff] %v2072
    %2873 = vst [vmem:[#allocation2 + $0x1100] sm:$0xff] %v2073
    %2874 = vst [vmem:[#allocation2 + $0x1108] sm:$0xff] %v2074
    %2875 = vst [vmem:[#allocation2 + $0x1110] sm:$0xff] %v2075
    %2876 = vst [vmem:[#allocation2 + $0x1118] sm:$0xff] %v2076
    %2877 = vst [vmem:[#allocation2 + $0x1120] sm:$0xff] %v2077
    %2878 = vst [vmem:[#allocation2 + $0x1128] sm:$0xff] %v2078
    %2879 = vst [vmem:[#allocation2 + $0x1130] sm:$0xff] %v2079
    %2880 = vst [vmem:[#allocation2 + $0x1138] sm:$0xff] %v2080
    %2881 = vst [vmem:[#allocation2 + $0x1140] sm:$0xff] %v2081
    %2882 = vst [vmem:[#allocation2 + $0x1148] sm:$0xff] %v2082
    %2883 = vst [vmem:[#allocation2 + $0x1150] sm:$0xff] %v2083
    %2884 = vst [vmem:[#allocation2 + $0x1158] sm:$0xff] %v2084
    %2885 = vst [vmem:[#allocation2 + $0x1160] sm:$0xff] %v2085
    %2886 = vst [vmem:[#allocation2 + $0x1168] sm:$0xff] %v2086
    %2887 = vst [vmem:[#allocation2 + $0x1170] sm:$0xff] %v2087
    %2888 = vst [vmem:[#allocation2 + $0x1178] sm:$0xff] %v2088
    %2889 = vst [vmem:[#allocation2 + $0x1180] sm:$0xff] %v2089
    %2890 = vst [vmem:[#allocation2 + $0x1188] sm:$0xff] %v2090
    %2891 = vst [vmem:[#allocation2 + $0x1190] sm:$0xff] %v2091
    %2892 = vst [vmem:[#allocation2 + $0x1198] sm:$0xff] %v2092
    %2893 = vst [vmem:[#allocation2 + $0x11a0] sm:$0xff] %v2093
    %2894 = vst [vmem:[#allocation2 + $0x11a8] sm:$0xff] %v2094
    %2895 = vst [vmem:[#allocation2 + $0x11b0] sm:$0xff] %v2095
    %2896 = vst [vmem:[#allocation2 + $0x11b8] sm:$0xff] %v2096
    %2897 = vst [vmem:[#allocation2 + $0x11c0] sm:$0xff] %v2097
    %2898 = vst [vmem:[#allocation2 + $0x11c8] sm:$0xff] %v2098
    %2899 = vst [vmem:[#allocation2 + $0x11d0] sm:$0xff] %v2099
    %2900 = vst [vmem:[#allocation2 + $0x11d8] sm:$0xff] %v2100
    %2901 = vst [vmem:[#allocation2 + $0x11e0] sm:$0xff] %v2101
    %2902 = vst [vmem:[#allocation2 + $0x11e8] sm:$0xff] %v2102
    %2903 = vst [vmem:[#allocation2 + $0x11f0] sm:$0xff] %v2103
    %2904 = vst [vmem:[#allocation2 + $0x11f8] sm:$0xff] %v2104
    %2905 = vst [vmem:[#allocation2 + $0x1200] sm:$0xff] %v2105
    %2906 = vst [vmem:[#allocation2 + $0x1208] sm:$0xff] %v2106
    %2907 = vst [vmem:[#allocation2 + $0x1210] sm:$0xff] %v2107
    %2908 = vst [vmem:[#allocation2 + $0x1218] sm:$0xff] %v2108
    %2909 = vst [vmem:[#allocation2 + $0x1220] sm:$0xff] %v2109
    %2910 = vst [vmem:[#allocation2 + $0x1228] sm:$0xff] %v2110
    %2911 = vst [vmem:[#allocation2 + $0x1230] sm:$0xff] %v2111
    %2912 = vst [vmem:[#allocation2 + $0x1238] sm:$0xff] %v2112
    %2913 = vst [vmem:[#allocation2 + $0x1240] sm:$0xff] %v2113
    %2914 = vst [vmem:[#allocation2 + $0x1248] sm:$0xff] %v2114
    %2915 = vst [vmem:[#allocation2 + $0x1250] sm:$0xff] %v2115
    %2916 = vst [vmem:[#allocation2 + $0x1258] sm:$0xff] %v2116
    %2917 = vst [vmem:[#allocation2 + $0x1260] sm:$0xff] %v2117
    %2918 = vst [vmem:[#allocation2 + $0x1268] sm:$0xff] %v2118
    %2919 = vst [vmem:[#allocation2 + $0x1270] sm:$0xff] %v2119
    %2920 = vst [vmem:[#allocation2 + $0x1278] sm:$0xff] %v2120
    %2921 = vst [vmem:[#allocation2 + $0x1280] sm:$0xff] %v2121
    %2922 = vst [vmem:[#allocation2 + $0x1288] sm:$0xff] %v2122
    %2923 = vst [vmem:[#allocation2 + $0x1290] sm:$0xff] %v2123
    %2924 = vst [vmem:[#allocation2 + $0x1298] sm:$0xff] %v2124
    %2925 = vst [vmem:[#allocation2 + $0x12a0] sm:$0xff] %v2125
    %2926 = vst [vmem:[#allocation2 + $0x12a8] sm:$0xff] %v2126
    %2927 = vst [vmem:[#allocation2 + $0x12b0] sm:$0xff] %v2127
    %2928 = vst [vmem:[#allocation2 + $0x12b8] sm:$0xff] %v2128
    %2929 = vst [vmem:[#allocation2 + $0x12c0] sm:$0xff] %v2129
    %2930 = vst [vmem:[#allocation2 + $0x12c8] sm:$0xff] %v2130
    %2931 = vst [vmem:[#allocation2 + $0x12d0] sm:$0xff] %v2131
    %2932 = vst [vmem:[#allocation2 + $0x12d8] sm:$0xff] %v2132
    %2933 = vst [vmem:[#allocation2 + $0x12e0] sm:$0xff] %v2133
    %2934 = vst [vmem:[#allocation2 + $0x12e8] sm:$0xff] %v2134
    %2935 = vst [vmem:[#allocation2 + $0x12f0] sm:$0xff] %v2135
    %2936 = vst [vmem:[#allocation2 + $0x12f8] sm:$0xff] %v2136
    %2937 = vst [vmem:[#allocation2 + $0x1300] sm:$0xff] %v2137
    %2938 = vst [vmem:[#allocation2 + $0x1308] sm:$0xff] %v2138
    %2939 = vst [vmem:[#allocation2 + $0x1310] sm:$0xff] %v2139
    %2940 = vst [vmem:[#allocation2 + $0x1318] sm:$0xff] %v2140
    %2941 = vst [vmem:[#allocation2 + $0x1320] sm:$0xff] %v2141
    %2942 = vst [vmem:[#allocation2 + $0x1328] sm:$0xff] %v2142
    %2943 = vst [vmem:[#allocation2 + $0x1330] sm:$0xff] %v2143
    %2944 = vst [vmem:[#allocation2 + $0x1338] sm:$0xff] %v2144
    %2945 = vst [vmem:[#allocation2 + $0x1340] sm:$0xff] %v2145
    %2946 = vst [vmem:[#allocation2 + $0x1348] sm:$0xff] %v2146
    %2947 = vst [vmem:[#allocation2 + $0x1350] sm:$0xff] %v2147
    %2948 = vst [vmem:[#allocation2 + $0x1358] sm:$0xff] %v2148
    %2949 = vst [vmem:[#allocation2 + $0x1360] sm:$0xff] %v2149
    %2950 = vst [vmem:[#allocation2 + $0x1368] sm:$0xff] %v2150
    %2951 = vst [vmem:[#allocation2 + $0x1370] sm:$0xff] %v2151
    %2952 = vst [vmem:[#allocation2 + $0x1378] sm:$0xff] %v2152
    %2953 = vst [vmem:[#allocation2 + $0x1380] sm:$0xff] %v2153
    %2954 = vst [vmem:[#allocation2 + $0x1388] sm:$0xff] %v2154
    %2955 = vst [vmem:[#allocation2 + $0x1390] sm:$0xff] %v2155
    %2956 = vst [vmem:[#allocation2 + $0x1398] sm:$0xff] %v2156
    %2957 = vst [vmem:[#allocation2 + $0x13a0] sm:$0xff] %v2157
    %2958 = vst [vmem:[#allocation2 + $0x13a8] sm:$0xff] %v2158
    %2959 = vst [vmem:[#allocation2 + $0x13b0] sm:$0xff] %v2159
    %2960 = vst [vmem:[#allocation2 + $0x13b8] sm:$0xff] %v2160
    %2961 = vst [vmem:[#allocation2 + $0x13c0] sm:$0xff] %v2161
    %2962 = vst [vmem:[#allocation2 + $0x13c8] sm:$0xff] %v2162
    %2963 = vst [vmem:[#allocation2 + $0x13d0] sm:$0xff] %v2163
    %2964 = vst [vmem:[#allocation2 + $0x13d8] sm:$0xff] %v2164
    %2965 = vst [vmem:[#allocation2 + $0x13e0] sm:$0xff] %v2165
    %2966 = vst [vmem:[#allocation2 + $0x13e8] sm:$0xff] %v2166
    %2967 = vst [vmem:[#allocation2 + $0x13f0] sm:$0xff] %v2167
    %2968 = vst [vmem:[#allocation2 + $0x13f8] sm:$0xff] %v2168
    %2969 = vst [vmem:[#allocation2 + $0x1400] sm:$0xff] %v2169
    %2970 = vst [vmem:[#allocation2 + $0x1408] sm:$0xff] %v2170
    %2971 = vst [vmem:[#allocation2 + $0x1410] sm:$0xff] %v2171
    %2972 = vst [vmem:[#allocation2 + $0x1418] sm:$0xff] %v2172
    %2973 = vst [vmem:[#allocation2 + $0x1420] sm:$0xff] %v2173
    %2974 = vst [vmem:[#allocation2 + $0x1428] sm:$0xff] %v2174
    %2975 = vst [vmem:[#allocation2 + $0x1430] sm:$0xff] %v2175
    %2976 = vst [vmem:[#allocation2 + $0x1438] sm:$0xff] %v2176
    %2977 = vst [vmem:[#allocation2 + $0x1440] sm:$0xff] %v2177
    %2978 = vst [vmem:[#allocation2 + $0x1448] sm:$0xff] %v2178
    %2979 = vst [vmem:[#allocation2 + $0x1450] sm:$0xff] %v2179
    %2980 = vst [vmem:[#allocation2 + $0x1458] sm:$0xff] %v2180
    %2981 = vst [vmem:[#allocation2 + $0x1460] sm:$0xff] %v2181
    %2982 = vst [vmem:[#allocation2 + $0x1468] sm:$0xff] %v2182
    %2983 = vst [vmem:[#allocation2 + $0x1470] sm:$0xff] %v2183
    %2984 = vst [vmem:[#allocation2 + $0x1478] sm:$0xff] %v2184
    %2985 = vst [vmem:[#allocation2 + $0x1480] sm:$0xff] %v2185
    %2986 = vst [vmem:[#allocation2 + $0x1488] sm:$0xff] %v2186
    %2987 = vst [vmem:[#allocation2 + $0x1490] sm:$0xff] %v2187
    %2988 = vst [vmem:[#allocation2 + $0x1498] sm:$0xff] %v2188
    %2989 = vst [vmem:[#allocation2 + $0x14a0] sm:$0xff] %v2189
    %2990 = vst [vmem:[#allocation2 + $0x14a8] sm:$0xff] %v2190
    %2991 = vst [vmem:[#allocation2 + $0x14b0] sm:$0xff] %v2191
    %2992 = vst [vmem:[#allocation2 + $0x14b8] sm:$0xff] %v2192
    %2993 = vst [vmem:[#allocation2 + $0x14c0] sm:$0xff] %v2193
    %2994 = vst [vmem:[#allocation2 + $0x14c8] sm:$0xff] %v2194
    %2995 = vst [vmem:[#allocation2 + $0x14d0] sm:$0xff] %v2195
    %2996 = vst [vmem:[#allocation2 + $0x14d8] sm:$0xff] %v2196
    %2997 = vst [vmem:[#allocation2 + $0x14e0] sm:$0xff] %v2197
    %2998 = vst [vmem:[#allocation2 + $0x14e8] sm:$0xff] %v2198
    %2999 = vst [vmem:[#allocation2 + $0x14f0] sm:$0xff] %v2199
    %3000 = vst [vmem:[#allocation2 + $0x14f8] sm:$0xff] %v2200
    %3001 = vst [vmem:[#allocation2 + $0x1500] sm:$0xff] %v2201
    %3002 = vst [vmem:[#allocation2 + $0x1508] sm:$0xff] %v2202
    %3003 = vst [vmem:[#allocation2 + $0x1510] sm:$0xff] %v2203
    %3004 = vst [vmem:[#allocation2 + $0x1518] sm:$0xff] %v2204
    %3005 = vst [vmem:[#allocation2 + $0x1520] sm:$0xff] %v2205
    %3006 = vst [vmem:[#allocation2 + $0x1528] sm:$0xff] %v2206
    %3007 = vst [vmem:[#allocation2 + $0x1530] sm:$0xff] %v2207
    %3008 = vst [vmem:[#allocation2 + $0x1538] sm:$0xff] %v2208
    %3009 = vst [vmem:[#allocation2 + $0x1540] sm:$0xff] %v2209
    %3010 = vst [vmem:[#allocation2 + $0x1548] sm:$0xff] %v2210
    %3011 = vst [vmem:[#allocation2 + $0x1550] sm:$0xff] %v2211
    %3012 = vst [vmem:[#allocation2 + $0x1558] sm:$0xff] %v2212
    %3013 = vst [vmem:[#allocation2 + $0x1560] sm:$0xff] %v2213
    %3014 = vst [vmem:[#allocation2 + $0x1568] sm:$0xff] %v2214
    %3015 = vst [vmem:[#allocation2 + $0x1570] sm:$0xff] %v2215
    %3016 = vst [vmem:[#allocation2 + $0x1578] sm:$0xff] %v2216
    %3017 = vst [vmem:[#allocation2 + $0x1580] sm:$0xff] %v2217
    %3018 = vst [vmem:[#allocation2 + $0x1588] sm:$0xff] %v2218
    %3019 = vst [vmem:[#allocation2 + $0x1590] sm:$0xff] %v2219
    %3020 = vst [vmem:[#allocation2 + $0x1598] sm:$0xff] %v2220
    %3021 = vst [vmem:[#allocation2 + $0x15a0] sm:$0xff] %v2221
    %3022 = vst [vmem:[#allocation2 + $0x15a8] sm:$0xff] %v2222
    %3023 = vst [vmem:[#allocation2 + $0x15b0] sm:$0xff] %v2223
    %3024 = vst [vmem:[#allocation2 + $0x15b8] sm:$0xff] %v2224
    %3025 = vst [vmem:[#allocation2 + $0x15c0] sm:$0xff] %v2225
    %3026 = vst [vmem:[#allocation2 + $0x15c8] sm:$0xff] %v2226
    %3027 = vst [vmem:[#allocation2 + $0x15d0] sm:$0xff] %v2227
    %3028 = vst [vmem:[#allocation2 + $0x15d8] sm:$0xff] %v2228
    %3029 = vst [vmem:[#allocation2 + $0x15e0] sm:$0xff] %v2229
    %3030 = vst [vmem:[#allocation2 + $0x15e8] sm:$0xff] %v2230
    %3031 = vst [vmem:[#allocation2 + $0x15f0] sm:$0xff] %v2231
    %3032 = vst [vmem:[#allocation2 + $0x15f8] sm:$0xff] %v2232
    %3033 = vst [vmem:[#allocation2 + $0x1600] sm:$0xff] %v2233
    %3034 = vst [vmem:[#allocation2 + $0x1608] sm:$0xff] %v2234
    %3035 = vst [vmem:[#allocation2 + $0x1610] sm:$0xff] %v2235
    %3036 = vst [vmem:[#allocation2 + $0x1618] sm:$0xff] %v2236
    %3037 = vst [vmem:[#allocation2 + $0x1620] sm:$0xff] %v2237
    %3038 = vst [vmem:[#allocation2 + $0x1628] sm:$0xff] %v2238
    %3039 = vst [vmem:[#allocation2 + $0x1630] sm:$0xff] %v2239
    %3040 = vst [vmem:[#allocation2 + $0x1638] sm:$0xff] %v2240
    %3041 = vst [vmem:[#allocation2 + $0x1640] sm:$0xff] %v2241
    %3042 = vst [vmem:[#allocation2 + $0x1648] sm:$0xff] %v2242
    %3043 = vst [vmem:[#allocation2 + $0x1650] sm:$0xff] %v2243
    %3044 = vst [vmem:[#allocation2 + $0x1658] sm:$0xff] %v2244
    %3045 = vst [vmem:[#allocation2 + $0x1660] sm:$0xff] %v2245
    %3046 = vst [vmem:[#allocation2 + $0x1668] sm:$0xff] %v2246
    %3047 = vst [vmem:[#allocation2 + $0x1670] sm:$0xff] %v2247
    %3048 = vst [vmem:[#allocation2 + $0x1678] sm:$0xff] %v2248
    %3049 = vst [vmem:[#allocation2 + $0x1680] sm:$0xff] %v2249
    %3050 = vst [vmem:[#allocation2 + $0x1688] sm:$0xff] %v2250
    %3051 = vst [vmem:[#allocation2 + $0x1690] sm:$0xff] %v2251
    %3052 = vst [vmem:[#allocation2 + $0x1698] sm:$0xff] %v2252
    %3053 = vst [vmem:[#allocation2 + $0x16a0] sm:$0xff] %v2253
    %3054 = vst [vmem:[#allocation2 + $0x16a8] sm:$0xff] %v2254
    %3055 = vst [vmem:[#allocation2 + $0x16b0] sm:$0xff] %v2255
    %3056 = vst [vmem:[#allocation2 + $0x16b8] sm:$0xff] %v2256
    %3057 = vst [vmem:[#allocation2 + $0x16c0] sm:$0xff] %v2257
    %3058 = vst [vmem:[#allocation2 + $0x16c8] sm:$0xff] %v2258
    %3059 = vst [vmem:[#allocation2 + $0x16d0] sm:$0xff] %v2259
    %3060 = vst [vmem:[#allocation2 + $0x16d8] sm:$0xff] %v2260
    %3061 = vst [vmem:[#allocation2 + $0x16e0] sm:$0xff] %v2261
    %3062 = vst [vmem:[#allocation2 + $0x16e8] sm:$0xff] %v2262
    %3063 = vst [vmem:[#allocation2 + $0x16f0] sm:$0xff] %v2263
    %3064 = vst [vmem:[#allocation2 + $0x16f8] sm:$0xff] %v2264
    %3065 = vst [vmem:[#allocation2 + $0x1700] sm:$0xff] %v2265
    %3066 = vst [vmem:[#allocation2 + $0x1708] sm:$0xff] %v2266
    %3067 = vst [vmem:[#allocation2 + $0x1710] sm:$0xff] %v2267
    %3068 = vst [vmem:[#allocation2 + $0x1718] sm:$0xff] %v2268
    %3069 = vst [vmem:[#allocation2 + $0x1720] sm:$0xff] %v2269
    %3070 = vst [vmem:[#allocation2 + $0x1728] sm:$0xff] %v2270
    %3071 = vst [vmem:[#allocation2 + $0x1730] sm:$0xff] %v2271
    %3072 = vst [vmem:[#allocation2 + $0x1738] sm:$0xff] %v2272
    %3073 = vst [vmem:[#allocation2 + $0x1740] sm:$0xff] %v2273
    %3074 = vst [vmem:[#allocation2 + $0x1748] sm:$0xff] %v2274
    %3075 = vst [vmem:[#allocation2 + $0x1750] sm:$0xff] %v2275
    %3076 = vst [vmem:[#allocation2 + $0x1758] sm:$0xff] %v2276
    %3077 = vst [vmem:[#allocation2 + $0x1760] sm:$0xff] %v2277
    %3078 = vst [vmem:[#allocation2 + $0x1768] sm:$0xff] %v2278
    %3079 = vst [vmem:[#allocation2 + $0x1770] sm:$0xff] %v2279
    %3080 = vst [vmem:[#allocation2 + $0x1778] sm:$0xff] %v2280
    %3081 = vst [vmem:[#allocation2 + $0x1780] sm:$0xff] %v2281
    %3082 = vst [vmem:[#allocation2 + $0x1788] sm:$0xff] %v2282
    %3083 = vst [vmem:[#allocation2 + $0x1790] sm:$0xff] %v2283
    %3084 = vst [vmem:[#allocation2 + $0x1798] sm:$0xff] %v2284
    %3085 = vst [vmem:[#allocation2 + $0x17a0] sm:$0xff] %v2285
    %3086 = vst [vmem:[#allocation2 + $0x17a8] sm:$0xff] %v2286
    %3087 = vst [vmem:[#allocation2 + $0x17b0] sm:$0xff] %v2287
    %3088 = vst [vmem:[#allocation2 + $0x17b8] sm:$0xff] %v2288
    %3089 = vst [vmem:[#allocation2 + $0x17c0] sm:$0xff] %v2289
    %3090 = vst [vmem:[#allocation2 + $0x17c8] sm:$0xff] %v2290
    %3091 = vst [vmem:[#allocation2 + $0x17d0] sm:$0xff] %v2291
    %3092 = vst [vmem:[#allocation2 + $0x17d8] sm:$0xff] %v2292
    %3093 = vst [vmem:[#allocation2 + $0x17e0] sm:$0xff] %v2293
    %3094 = vst [vmem:[#allocation2 + $0x17e8] sm:$0xff] %v2294
    %3095 = vst [vmem:[#allocation2 + $0x17f0] sm:$0xff] %v2295
    %3096 = vst [vmem:[#allocation2 + $0x17f8] sm:$0xff] %v2296
    %3097 = vst [vmem:[#allocation2 + $0x1800] sm:$0xff] %v2297
    %3098 = vst [vmem:[#allocation2 + $0x1808] sm:$0xff] %v2298
    %3099 = vst [vmem:[#allocation2 + $0x1810] sm:$0xff] %v2299
    %3100 = vst [vmem:[#allocation2 + $0x1818] sm:$0xff] %v2300
    %3101 = vst [vmem:[#allocation2 + $0x1820] sm:$0xff] %v2301
    %3102 = vst [vmem:[#allocation2 + $0x1828] sm:$0xff] %v2302
    %3103 = vst [vmem:[#allocation2 + $0x1830] sm:$0xff] %v2303
    %3104 = vst [vmem:[#allocation2 + $0x1838] sm:$0xff] %v2304
    %3105 = vst [vmem:[#allocation2 + $0x1840] sm:$0xff] %v2305
    %3106 = vst [vmem:[#allocation2 + $0x1848] sm:$0xff] %v2306
    %3107 = vst [vmem:[#allocation2 + $0x1850] sm:$0xff] %v2307
    %3108 = vst [vmem:[#allocation2 + $0x1858] sm:$0xff] %v2308
    %3109 = vst [vmem:[#allocation2 + $0x1860] sm:$0xff] %v2309
    %3110 = vst [vmem:[#allocation2 + $0x1868] sm:$0xff] %v2310
    %3111 = vst [vmem:[#allocation2 + $0x1870] sm:$0xff] %v2311
    %3112 = vst [vmem:[#allocation2 + $0x1878] sm:$0xff] %v2312
    %3113 = vst [vmem:[#allocation2 + $0x1880] sm:$0xff] %v2313
    %3114 = vst [vmem:[#allocation2 + $0x1888] sm:$0xff] %v2314
    %3115 = vst [vmem:[#allocation2 + $0x1890] sm:$0xff] %v2315
    %3116 = vst [vmem:[#allocation2 + $0x1898] sm:$0xff] %v2316
    %3117 = vst [vmem:[#allocation2 + $0x18a0] sm:$0xff] %v2317
    %3118 = vst [vmem:[#allocation2 + $0x18a8] sm:$0xff] %v2318
    %3119 = vst [vmem:[#allocation2 + $0x18b0] sm:$0xff] %v2319
    %3120 = vst [vmem:[#allocation2 + $0x18b8] sm:$0xff] %v2320
    %3121 = vst [vmem:[#allocation2 + $0x18c0] sm:$0xff] %v2321
    %3122 = vst [vmem:[#allocation2 + $0x18c8] sm:$0xff] %v2322
    %3123 = vst [vmem:[#allocation2 + $0x18d0] sm:$0xff] %v2323
    %3124 = vst [vmem:[#allocation2 + $0x18d8] sm:$0xff] %v2324
    %3125 = vst [vmem:[#allocation2 + $0x18e0] sm:$0xff] %v2325
    %3126 = vst [vmem:[#allocation2 + $0x18e8] sm:$0xff] %v2326
    %3127 = vst [vmem:[#allocation2 + $0x18f0] sm:$0xff] %v2327
    %3128 = vst [vmem:[#allocation2 + $0x18f8] sm:$0xff] %v2328
    %3129 = vst [vmem:[#allocation3] sm:$0xff] 0.0
    %3130 = vst [vmem:[#allocation3 + $0x8] sm:$0xff] 0.0
    %3131 = vst [vmem:[#allocation3 + $0x10] sm:$0xff] 0.0
    %3132 = vst [vmem:[#allocation3 + $0x18] sm:$0xff] 0.0
    %3133 = vst [vmem:[#allocation4] sm:$0xff] 0.0
    %3134 = vst [vmem:[#allocation4 + $0x8] sm:$0xff] 0.0
    %3135 = vst [vmem:[#allocation5] sm:$0xff] 0.0
    %3136 = vst [vmem:[#allocation5 + $0x8] sm:$0xff] 0.0
    %v3137 = vld [vmem:[#allocation2] sm:$0xff]
    %v3138 = vld [vmem:[#allocation2 + $0x8] sm:$0xff]
    %v3139 = vld [vmem:[#allocation2 + $0x10] sm:$0xff]
    %v3140 = vld [vmem:[#allocation2 + $0x18] sm:$0xff]
    %v3141 = vld [vmem:[#allocation2 + $0x20] sm:$0xff]
    %v3142 = vld [vmem:[#allocation2 + $0x28] sm:$0xff]
    %v3143 = vld [vmem:[#allocation2 + $0x30] sm:$0xff]
    %v3144 = vld [vmem:[#allocation2 + $0x38] sm:$0xff]
    %v3145 = vld [vmem:[#allocation4] sm:$0xff]
    %v3146 = vld [vmem:[#allocation4 + $0x8] sm:$0xff]
    %v3147 = vmul.f32 %v3137, 0.5
    %v3148 = vmul.f32 %v3138, 0.5
    %v3149 = vtanh.pop %v3147
    %v3150 = vtanh.pop %v3148
    %v3151 = vmul.f32 %v3149, 0.5
    %v3152 = vmul.f32 %v3150, 0.5
    %v3153 = vadd.f32 %v3151, 0.5
    %v3154 = vadd.f32 %v3152, 0.5
    %v3155 = vmul.f32 %v3139, 0.5
    %v3156 = vmul.f32 %v3140, 0.5
    %v3157 = vtanh.pop %v3155
    %v3158 = vtanh.pop %v3156
    %v3159 = vmul.f32 %v3157, 0.5
    %v3160 = vmul.f32 %v3158, 0.5
    %v3161 = vadd.f32 %v3159, 0.5
    %v3162 = vadd.f32 %v3160, 0.5
    %v3163 = vtanh.pop %v3141
    %v3164 = vtanh.pop %v3142
    %v3165 = vmul.f32 %v3143, 0.5
    %v3166 = vmul.f32 %v3144, 0.5
    %v3167 = vtanh.pop %v3165
    %v3168 = vtanh.pop %v3166
    %v3169 = vmul.f32 %v3167, 0.5
    %v3170 = vmul.f32 %v3168, 0.5
    %v3171 = vadd.f32 %v3169, 0.5
    %v3172 = vadd.f32 %v3170, 0.5
    %v3173 = vmul.f32 %v3161, %v3145
    %v3174 = vmul.f32 %v3162, %v3146
    %v3175 = vmul.f32 %v3153, %v3163
    %v3176 = vmul.f32 %v3154, %v3164
    %v3177 = vadd.f32 %v3173, %v3175
    %v3178 = vadd.f32 %v3174, %v3176
    %v3179 = vtanh.pop %v3177
    %v3180 = vtanh.pop %v3178
    %v3181 = vmul.f32 %v3171, %v3179
    %v3182 = vmul.f32 %v3172, %v3180
    %3183 = vst [vmem:[#allocation4] sm:$0xff] %v3177
    %3184 = vst [vmem:[#allocation4 + $0x8] sm:$0xff] %v3178
    %3185 = vst [vmem:[#allocation3] sm:$0xff] %v3181
    %3186 = vst [vmem:[#allocation3 + $0x8] sm:$0xff] %v3182
    loop: start=0, step=1, limit=50
    $region38: #{lstm_model_forward.1} parent=1 // loop_pre_header
      _
    $region39: #{lstm_model_forward.1} parent=1 // loop_header
      %s3188 = sphi 0, %s3192
      %p3189 = scmp.ge.s32.totalorder %s3188, 50
    $region40: #{lstm_model_forward.1} parent=1 // loop_header_branch
      %3191 = sbr.rel (%p3189) target = $region44
    $region41: #{lstm_model_forward.1} parent=1 // loop_body
      %s3193 = smul.u32 %s3188, 2
      %s3194 = sadd.s32 %s3193, 1
      %v3195 = vld [vmem:[#allocation3] sm:$0xff]
      %v3196 = vld [vmem:[#allocation3 + $0x8] sm:$0xff]
      %v3197 = vld [vmem:[#allocation3 + $0x10] sm:$0xff]
      %v3198 = vld [vmem:[#allocation3 + $0x18] sm:$0xff]
      %v3199 = vpack.c.bf16 %v3195, %v3195
      %v3200 = vpack.c.bf16 %v3196, %v3196
      %v3201 = vpack.c.bf16 %v3197, %v3197
      %v3202 = vpack.c.bf16 %v3198, %v3198
      %p3203 = scmp.lt.s32.totalorder %s3194, 99
      %s3204 = scalar_select %p3203, %s3194, 99
      %s3205 = smul.u32 %s3204, 8
      %v3206 = vld [vmem:[%s3] sm:$0xff]
      %v3207 = vld [vmem:[%s3 + $0x8] sm:$0xff]
      %v3208 = vld [vmem:[%s3 + $0x10] sm:$0xff]
      %v3209 = vld [vmem:[%s3 + $0x18] sm:$0xff]
      %v3210 = vld [vmem:[%s3 + $0x20] sm:$0xff]
      %v3211 = vld [vmem:[%s3 + $0x28] sm:$0xff]
      %v3212 = vld [vmem:[%s3 + $0x30] sm:$0xff]
      %v3213 = vld [vmem:[%s3 + $0x38] sm:$0xff]
      %v3214 = vld [vmem:[%s3 + $0x40] sm:$0xff]
      %v3215 = vld [vmem:[%s3 + $0x48] sm:$0xff]
      %v3216 = vld [vmem:[%s3 + $0x50] sm:$0xff]
      %v3217 = vld [vmem:[%s3 + $0x58] sm:$0xff]
      %v3218 = vld [vmem:[%s3 + $0x60] sm:$0xff]
      %v3219 = vld [vmem:[%s3 + $0x68] sm:$0xff]
      %v3220 = vld [vmem:[%s3 + $0x70] sm:$0xff]
      %v3221 = vld [vmem:[%s3 + $0x78] sm:$0xff]
      %v3222 = vld [vmem:[%s3 + $0x80] sm:$0xff]
      %v3223 = vld [vmem:[%s3 + $0x88] sm:$0xff]
      %v3224 = vld [vmem:[%s3 + $0x90] sm:$0xff]
      %v3225 = vld [vmem:[%s3 + $0x98] sm:$0xff]
      %v3226 = vld [vmem:[%s3 + $0xa0] sm:$0xff]
      %v3227 = vld [vmem:[%s3 + $0xa8] sm:$0xff]
      %v3228 = vld [vmem:[%s3 + $0xb0] sm:$0xff]
      %v3229 = vld [vmem:[%s3 + $0xb8] sm:$0xff]
      %v3230 = vld [vmem:[%s3 + $0xc0] sm:$0xff]
      %v3231 = vld [vmem:[%s3 + $0xc8] sm:$0xff]
      %v3232 = vld [vmem:[%s3 + $0xd0] sm:$0xff]
      %v3233 = vld [vmem:[%s3 + $0xd8] sm:$0xff]
      %v3234 = vld [vmem:[%s3 + $0xe0] sm:$0xff]
      %v3235 = vld [vmem:[%s3 + $0xe8] sm:$0xff]
      %v3236 = vld [vmem:[%s3 + $0xf0] sm:$0xff]
      %v3237 = vld [vmem:[%s3 + $0xf8] sm:$0xff]
      %v3238 = vld [vmem:[%s3 + $0x100] sm:$0xff]
      %v3239 = vld [vmem:[%s3 + $0x108] sm:$0xff]
      %v3240 = vld [vmem:[%s3 + $0x110] sm:$0xff]
      %v3241 = vld [vmem:[%s3 + $0x118] sm:$0xff]
      %v3242 = vld [vmem:[%s3 + $0x120] sm:$0xff]
      %v3243 = vld [vmem:[%s3 + $0x128] sm:$0xff]
      %v3244 = vld [vmem:[%s3 + $0x130] sm:$0xff]
      %v3245 = vld [vmem:[%s3 + $0x138] sm:$0xff]
      %v3246 = vld [vmem:[%s3 + $0x140] sm:$0xff]
      %v3247 = vld [vmem:[%s3 + $0x148] sm:$0xff]
      %v3248 = vld [vmem:[%s3 + $0x150] sm:$0xff]
      %v3249 = vld [vmem:[%s3 + $0x158] sm:$0xff]
      %v3250 = vld [vmem:[%s3 + $0x160] sm:$0xff]
      %v3251 = vld [vmem:[%s3 + $0x168] sm:$0xff]
      %v3252 = vld [vmem:[%s3 + $0x170] sm:$0xff]
      %v3253 = vld [vmem:[%s3 + $0x178] sm:$0xff]
      %v3254 = vld [vmem:[%s3 + $0x180] sm:$0xff]
      %v3255 = vld [vmem:[%s3 + $0x188] sm:$0xff]
      %v3256 = vld [vmem:[%s3 + $0x190] sm:$0xff]
      %v3257 = vld [vmem:[%s3 + $0x198] sm:$0xff]
      %v3258 = vld [vmem:[%s3 + $0x1a0] sm:$0xff]
      %v3259 = vld [vmem:[%s3 + $0x1a8] sm:$0xff]
      %v3260 = vld [vmem:[%s3 + $0x1b0] sm:$0xff]
      %v3261 = vld [vmem:[%s3 + $0x1b8] sm:$0xff]
      %v3262 = vld [vmem:[%s3 + $0x1c0] sm:$0xff]
      %v3263 = vld [vmem:[%s3 + $0x1c8] sm:$0xff]
      %v3264 = vld [vmem:[%s3 + $0x1d0] sm:$0xff]
      %v3265 = vld [vmem:[%s3 + $0x1d8] sm:$0xff]
      %v3266 = vld [vmem:[%s3 + $0x1e0] sm:$0xff]
      %v3267 = vld [vmem:[%s3 + $0x1e8] sm:$0xff]
      %v3268 = vld [vmem:[%s3 + $0x1f0] sm:$0xff]
      %v3269 = vld [vmem:[%s3 + $0x1f8] sm:$0xff]
      %v3270 = vld [vmem:[%s3 + $0x200] sm:$0xff]
      %v3271 = vld [vmem:[%s3 + $0x208] sm:$0xff]
      %v3272 = vld [vmem:[%s3 + $0x210] sm:$0xff]
      %v3273 = vld [vmem:[%s3 + $0x218] sm:$0xff]
      %v3274 = vld [vmem:[%s3 + $0x220] sm:$0xff]
      %v3275 = vld [vmem:[%s3 + $0x228] sm:$0xff]
      %v3276 = vld [vmem:[%s3 + $0x230] sm:$0xff]
      %v3277 = vld [vmem:[%s3 + $0x238] sm:$0xff]
      %v3278 = vld [vmem:[%s3 + $0x240] sm:$0xff]
      %v3279 = vld [vmem:[%s3 + $0x248] sm:$0xff]
      %v3280 = vld [vmem:[%s3 + $0x250] sm:$0xff]
      %v3281 = vld [vmem:[%s3 + $0x258] sm:$0xff]
      %v3282 = vld [vmem:[%s3 + $0x260] sm:$0xff]
      %v3283 = vld [vmem:[%s3 + $0x268] sm:$0xff]
      %v3284 = vld [vmem:[%s3 + $0x270] sm:$0xff]
      %v3285 = vld [vmem:[%s3 + $0x278] sm:$0xff]
      %v3286 = vld [vmem:[%s3 + $0x280] sm:$0xff]
      %v3287 = vld [vmem:[%s3 + $0x288] sm:$0xff]
      %v3288 = vld [vmem:[%s3 + $0x290] sm:$0xff]
      %v3289 = vld [vmem:[%s3 + $0x298] sm:$0xff]
      %v3290 = vld [vmem:[%s3 + $0x2a0] sm:$0xff]
      %v3291 = vld [vmem:[%s3 + $0x2a8] sm:$0xff]
      %v3292 = vld [vmem:[%s3 + $0x2b0] sm:$0xff]
      %v3293 = vld [vmem:[%s3 + $0x2b8] sm:$0xff]
      %v3294 = vld [vmem:[%s3 + $0x2c0] sm:$0xff]
      %v3295 = vld [vmem:[%s3 + $0x2c8] sm:$0xff]
      %v3296 = vld [vmem:[%s3 + $0x2d0] sm:$0xff]
      %v3297 = vld [vmem:[%s3 + $0x2d8] sm:$0xff]
      %v3298 = vld [vmem:[%s3 + $0x2e0] sm:$0xff]
      %v3299 = vld [vmem:[%s3 + $0x2e8] sm:$0xff]
      %v3300 = vld [vmem:[%s3 + $0x2f0] sm:$0xff]
      %v3301 = vld [vmem:[%s3 + $0x2f8] sm:$0xff]
      %v3302 = vld [vmem:[%s3 + $0x300] sm:$0xff]
      %v3303 = vld [vmem:[%s3 + $0x308] sm:$0xff]
      %v3304 = vld [vmem:[%s3 + $0x310] sm:$0xff]
      %v3305 = vld [vmem:[%s3 + $0x318] sm:$0xff]
      %v3306 = vld [vmem:[%s3 + $0x320] sm:$0xff]
      %v3307 = vld [vmem:[%s3 + $0x328] sm:$0xff]
      %v3308 = vld [vmem:[%s3 + $0x330] sm:$0xff]
      %v3309 = vld [vmem:[%s3 + $0x338] sm:$0xff]
      %v3310 = vld [vmem:[%s3 + $0x340] sm:$0xff]
      %v3311 = vld [vmem:[%s3 + $0x348] sm:$0xff]
      %v3312 = vld [vmem:[%s3 + $0x350] sm:$0xff]
      %v3313 = vld [vmem:[%s3 + $0x358] sm:$0xff]
      %v3314 = vld [vmem:[%s3 + $0x360] sm:$0xff]
      %v3315 = vld [vmem:[%s3 + $0x368] sm:$0xff]
      %v3316 = vld [vmem:[%s3 + $0x370] sm:$0xff]
      %v3317 = vld [vmem:[%s3 + $0x378] sm:$0xff]
      %v3318 = vld [vmem:[%s3 + $0x380] sm:$0xff]
      %v3319 = vld [vmem:[%s3 + $0x388] sm:$0xff]
      %v3320 = vld [vmem:[%s3 + $0x390] sm:$0xff]
      %v3321 = vld [vmem:[%s3 + $0x398] sm:$0xff]
      %v3322 = vld [vmem:[%s3 + $0x3a0] sm:$0xff]
      %v3323 = vld [vmem:[%s3 + $0x3a8] sm:$0xff]
      %v3324 = vld [vmem:[%s3 + $0x3b0] sm:$0xff]
      %v3325 = vld [vmem:[%s3 + $0x3b8] sm:$0xff]
      %v3326 = vld [vmem:[%s3 + $0x3c0] sm:$0xff]
      %v3327 = vld [vmem:[%s3 + $0x3c8] sm:$0xff]
      %v3328 = vld [vmem:[%s3 + $0x3d0] sm:$0xff]
      %v3329 = vld [vmem:[%s3 + $0x3d8] sm:$0xff]
      %v3330 = vld [vmem:[%s3 + $0x3e0] sm:$0xff]
      %v3331 = vld [vmem:[%s3 + $0x3e8] sm:$0xff]
      %v3332 = vld [vmem:[%s3 + $0x3f0] sm:$0xff]
      %v3333 = vld [vmem:[%s3 + $0x3f8] sm:$0xff]
      %s3334 = sshra.s32 %s3205, 3
      %s3335 = sand.u32 %s3205, 7
      %s3336 = smul.u32 %s3334, 8
      %s3337 = smul.addr %s3336, 8
      %s3338 = scalar_lea.vmem [#allocation2], %s3337
      %v3339 = vld [vmem:[%s3338] sm:$0xff]
      %v3340 = vld [vmem:[%s3338 + $0x8] sm:$0xff]
      %v3341 = vld [vmem:[%s3338 + $0x10] sm:$0xff]
      %v3342 = vld [vmem:[%s3338 + $0x18] sm:$0xff]
      %v3343 = vld [vmem:[%s3338 + $0x20] sm:$0xff]
      %v3344 = vld [vmem:[%s3338 + $0x28] sm:$0xff]
      %v3345 = vld [vmem:[%s3338 + $0x30] sm:$0xff]
      %v3346 = vld [vmem:[%s3338 + $0x38] sm:$0xff]
      %v3475 = vunpack.c.l.b16 %v3206
      %v3476 = vunpack.c.h.b16 %v3206
      %v3477 = vunpack.c.l.b16 %v3207
      %v3478 = vunpack.c.h.b16 %v3207
      %v3479 = vunpack.c.l.b16 %v3208
      %v3480 = vunpack.c.h.b16 %v3208
      %v3481 = vunpack.c.l.b16 %v3209
      %v3482 = vunpack.c.h.b16 %v3209
      %v3483 = vunpack.c.l.b16 %v3210
      %v3484 = vunpack.c.h.b16 %v3210
      %v3485 = vunpack.c.l.b16 %v3211
      %v3486 = vunpack.c.h.b16 %v3211
      %v3487 = vunpack.c.l.b16 %v3212
      %v3488 = vunpack.c.h.b16 %v3212
      %v3489 = vunpack.c.l.b16 %v3213
      %v3490 = vunpack.c.h.b16 %v3213
      %v3491 = vunpack.c.l.b16 %v3214
      %v3492 = vunpack.c.h.b16 %v3214
      %v3493 = vunpack.c.l.b16 %v3215
      %v3494 = vunpack.c.h.b16 %v3215
      %v3495 = vunpack.c.l.b16 %v3216
      %v3496 = vunpack.c.h.b16 %v3216
      %v3497 = vunpack.c.l.b16 %v3217
      %v3498 = vunpack.c.h.b16 %v3217
      %v3499 = vunpack.c.l.b16 %v3218
      %v3500 = vunpack.c.h.b16 %v3218
      %v3501 = vunpack.c.l.b16 %v3219
      %v3502 = vunpack.c.h.b16 %v3219
      %v3503 = vunpack.c.l.b16 %v3220
      %v3504 = vunpack.c.h.b16 %v3220
      %v3505 = vunpack.c.l.b16 %v3221
      %v3506 = vunpack.c.h.b16 %v3221
      %v3507 = vunpack.c.l.b16 %v3222
      %v3508 = vunpack.c.h.b16 %v3222
      %v3509 = vunpack.c.l.b16 %v3223
      %v3510 = vunpack.c.h.b16 %v3223
      %v3511 = vunpack.c.l.b16 %v3224
      %v3512 = vunpack.c.h.b16 %v3224
      %v3513 = vunpack.c.l.b16 %v3225
      %v3514 = vunpack.c.h.b16 %v3225
      %v3515 = vunpack.c.l.b16 %v3226
      %v3516 = vunpack.c.h.b16 %v3226
      %v3517 = vunpack.c.l.b16 %v3227
      %v3518 = vunpack.c.h.b16 %v3227
      %v3519 = vunpack.c.l.b16 %v3228
      %v3520 = vunpack.c.h.b16 %v3228
      %v3521 = vunpack.c.l.b16 %v3229
      %v3522 = vunpack.c.h.b16 %v3229
      %v3523 = vunpack.c.l.b16 %v3230
      %v3524 = vunpack.c.h.b16 %v3230
      %v3525 = vunpack.c.l.b16 %v3231
      %v3526 = vunpack.c.h.b16 %v3231
      %v3527 = vunpack.c.l.b16 %v3232
      %v3528 = vunpack.c.h.b16 %v3232
      %v3529 = vunpack.c.l.b16 %v3233
      %v3530 = vunpack.c.h.b16 %v3233
      %v3531 = vunpack.c.l.b16 %v3234
      %v3532 = vunpack.c.h.b16 %v3234
      %v3533 = vunpack.c.l.b16 %v3235
      %v3534 = vunpack.c.h.b16 %v3235
      %v3535 = vunpack.c.l.b16 %v3236
      %v3536 = vunpack.c.h.b16 %v3236
      %v3537 = vunpack.c.l.b16 %v3237
      %v3538 = vunpack.c.h.b16 %v3237
      %v3539 = vunpack.c.l.b16 %v3238
      %v3540 = vunpack.c.h.b16 %v3238
      %v3541 = vunpack.c.l.b16 %v3239
      %v3542 = vunpack.c.h.b16 %v3239
      %v3543 = vunpack.c.l.b16 %v3240
      %v3544 = vunpack.c.h.b16 %v3240
      %v3545 = vunpack.c.l.b16 %v3241
      %v3546 = vunpack.c.h.b16 %v3241
      %v3547 = vunpack.c.l.b16 %v3242
      %v3548 = vunpack.c.h.b16 %v3242
      %v3549 = vunpack.c.l.b16 %v3243
      %v3550 = vunpack.c.h.b16 %v3243
      %v3551 = vunpack.c.l.b16 %v3244
      %v3552 = vunpack.c.h.b16 %v3244
      %v3553 = vunpack.c.l.b16 %v3245
      %v3554 = vunpack.c.h.b16 %v3245
      %v3555 = vunpack.c.l.b16 %v3246
      %v3556 = vunpack.c.h.b16 %v3246
      %v3557 = vunpack.c.l.b16 %v3247
      %v3558 = vunpack.c.h.b16 %v3247
      %v3559 = vunpack.c.l.b16 %v3248
      %v3560 = vunpack.c.h.b16 %v3248
      %v3561 = vunpack.c.l.b16 %v3249
      %v3562 = vunpack.c.h.b16 %v3249
      %v3563 = vunpack.c.l.b16 %v3250
      %v3564 = vunpack.c.h.b16 %v3250
      %v3565 = vunpack.c.l.b16 %v3251
      %v3566 = vunpack.c.h.b16 %v3251
      %v3567 = vunpack.c.l.b16 %v3252
      %v3568 = vunpack.c.h.b16 %v3252
      %v3569 = vunpack.c.l.b16 %v3253
      %v3570 = vunpack.c.h.b16 %v3253
      %v3571 = vunpack.c.l.b16 %v3254
      %v3572 = vunpack.c.h.b16 %v3254
      %v3573 = vunpack.c.l.b16 %v3255
      %v3574 = vunpack.c.h.b16 %v3255
      %v3575 = vunpack.c.l.b16 %v3256
      %v3576 = vunpack.c.h.b16 %v3256
      %v3577 = vunpack.c.l.b16 %v3257
      %v3578 = vunpack.c.h.b16 %v3257
      %v3579 = vunpack.c.l.b16 %v3258
      %v3580 = vunpack.c.h.b16 %v3258
      %v3581 = vunpack.c.l.b16 %v3259
      %v3582 = vunpack.c.h.b16 %v3259
      %v3583 = vunpack.c.l.b16 %v3260
      %v3584 = vunpack.c.h.b16 %v3260
      %v3585 = vunpack.c.l.b16 %v3261
      %v3586 = vunpack.c.h.b16 %v3261
      %v3587 = vunpack.c.l.b16 %v3262
      %v3588 = vunpack.c.h.b16 %v3262
      %v3589 = vunpack.c.l.b16 %v3263
      %v3590 = vunpack.c.h.b16 %v3263
      %v3591 = vunpack.c.l.b16 %v3264
      %v3592 = vunpack.c.h.b16 %v3264
      %v3593 = vunpack.c.l.b16 %v3265
      %v3594 = vunpack.c.h.b16 %v3265
      %v3595 = vunpack.c.l.b16 %v3266
      %v3596 = vunpack.c.h.b16 %v3266
      %v3597 = vunpack.c.l.b16 %v3267
      %v3598 = vunpack.c.h.b16 %v3267
      %v3599 = vunpack.c.l.b16 %v3268
      %v3600 = vunpack.c.h.b16 %v3268
      %v3601 = vunpack.c.l.b16 %v3269
      %v3602 = vunpack.c.h.b16 %v3269
      %v3603 = vunpack.c.l.b16 %v3270
      %v3604 = vunpack.c.h.b16 %v3270
      %v3605 = vunpack.c.l.b16 %v3271
      %v3606 = vunpack.c.h.b16 %v3271
      %v3607 = vunpack.c.l.b16 %v3272
      %v3608 = vunpack.c.h.b16 %v3272
      %v3609 = vunpack.c.l.b16 %v3273
      %v3610 = vunpack.c.h.b16 %v3273
      %v3611 = vunpack.c.l.b16 %v3274
      %v3612 = vunpack.c.h.b16 %v3274
      %v3613 = vunpack.c.l.b16 %v3275
      %v3614 = vunpack.c.h.b16 %v3275
      %v3615 = vunpack.c.l.b16 %v3276
      %v3616 = vunpack.c.h.b16 %v3276
      %v3617 = vunpack.c.l.b16 %v3277
      %v3618 = vunpack.c.h.b16 %v3277
      %v3619 = vunpack.c.l.b16 %v3278
      %v3620 = vunpack.c.h.b16 %v3278
      %v3621 = vunpack.c.l.b16 %v3279
      %v3622 = vunpack.c.h.b16 %v3279
      %v3623 = vunpack.c.l.b16 %v3280
      %v3624 = vunpack.c.h.b16 %v3280
      %v3625 = vunpack.c.l.b16 %v3281
      %v3626 = vunpack.c.h.b16 %v3281
      %v3627 = vunpack.c.l.b16 %v3282
      %v3628 = vunpack.c.h.b16 %v3282
      %v3629 = vunpack.c.l.b16 %v3283
      %v3630 = vunpack.c.h.b16 %v3283
      %v3631 = vunpack.c.l.b16 %v3284
      %v3632 = vunpack.c.h.b16 %v3284
      %v3633 = vunpack.c.l.b16 %v3285
      %v3634 = vunpack.c.h.b16 %v3285
      %v3635 = vunpack.c.l.b16 %v3286
      %v3636 = vunpack.c.h.b16 %v3286
      %v3637 = vunpack.c.l.b16 %v3287
      %v3638 = vunpack.c.h.b16 %v3287
      %v3639 = vunpack.c.l.b16 %v3288
      %v3640 = vunpack.c.h.b16 %v3288
      %v3641 = vunpack.c.l.b16 %v3289
      %v3642 = vunpack.c.h.b16 %v3289
      %v3643 = vunpack.c.l.b16 %v3290
      %v3644 = vunpack.c.h.b16 %v3290
      %v3645 = vunpack.c.l.b16 %v3291
      %v3646 = vunpack.c.h.b16 %v3291
      %v3647 = vunpack.c.l.b16 %v3292
      %v3648 = vunpack.c.h.b16 %v3292
      %v3649 = vunpack.c.l.b16 %v3293
      %v3650 = vunpack.c.h.b16 %v3293
      %v3651 = vunpack.c.l.b16 %v3294
      %v3652 = vunpack.c.h.b16 %v3294
      %v3653 = vunpack.c.l.b16 %v3295
      %v3654 = vunpack.c.h.b16 %v3295
      %v3655 = vunpack.c.l.b16 %v3296
      %v3656 = vunpack.c.h.b16 %v3296
      %v3657 = vunpack.c.l.b16 %v3297
      %v3658 = vunpack.c.h.b16 %v3297
      %v3659 = vunpack.c.l.b16 %v3298
      %v3660 = vunpack.c.h.b16 %v3298
      %v3661 = vunpack.c.l.b16 %v3299
      %v3662 = vunpack.c.h.b16 %v3299
      %v3663 = vunpack.c.l.b16 %v3300
      %v3664 = vunpack.c.h.b16 %v3300
      %v3665 = vunpack.c.l.b16 %v3301
      %v3666 = vunpack.c.h.b16 %v3301
      %v3667 = vunpack.c.l.b16 %v3302
      %v3668 = vunpack.c.h.b16 %v3302
      %v3669 = vunpack.c.l.b16 %v3303
      %v3670 = vunpack.c.h.b16 %v3303
      %v3671 = vunpack.c.l.b16 %v3304
      %v3672 = vunpack.c.h.b16 %v3304
      %v3673 = vunpack.c.l.b16 %v3305
      %v3674 = vunpack.c.h.b16 %v3305
      %v3675 = vunpack.c.l.b16 %v3306
      %v3676 = vunpack.c.h.b16 %v3306
      %v3677 = vunpack.c.l.b16 %v3307
      %v3678 = vunpack.c.h.b16 %v3307
      %v3679 = vunpack.c.l.b16 %v3308
      %v3680 = vunpack.c.h.b16 %v3308
      %v3681 = vunpack.c.l.b16 %v3309
      %v3682 = vunpack.c.h.b16 %v3309
      %v3683 = vunpack.c.l.b16 %v3310
      %v3684 = vunpack.c.h.b16 %v3310
      %v3685 = vunpack.c.l.b16 %v3311
      %v3686 = vunpack.c.h.b16 %v3311
      %v3687 = vunpack.c.l.b16 %v3312
      %v3688 = vunpack.c.h.b16 %v3312
      %v3689 = vunpack.c.l.b16 %v3313
      %v3690 = vunpack.c.h.b16 %v3313
      %v3691 = vunpack.c.l.b16 %v3314
      %v3692 = vunpack.c.h.b16 %v3314
      %v3693 = vunpack.c.l.b16 %v3315
      %v3694 = vunpack.c.h.b16 %v3315
      %v3695 = vunpack.c.l.b16 %v3316
      %v3696 = vunpack.c.h.b16 %v3316
      %v3697 = vunpack.c.l.b16 %v3317
      %v3698 = vunpack.c.h.b16 %v3317
      %v3699 = vunpack.c.l.b16 %v3318
      %v3700 = vunpack.c.h.b16 %v3318
      %v3701 = vunpack.c.l.b16 %v3319
      %v3702 = vunpack.c.h.b16 %v3319
      %v3703 = vunpack.c.l.b16 %v3320
      %v3704 = vunpack.c.h.b16 %v3320
      %v3705 = vunpack.c.l.b16 %v3321
      %v3706 = vunpack.c.h.b16 %v3321
      %v3707 = vunpack.c.l.b16 %v3322
      %v3708 = vunpack.c.h.b16 %v3322
      %v3709 = vunpack.c.l.b16 %v3323
      %v3710 = vunpack.c.h.b16 %v3323
      %v3711 = vunpack.c.l.b16 %v3324
      %v3712 = vunpack.c.h.b16 %v3324
      %v3713 = vunpack.c.l.b16 %v3325
      %v3714 = vunpack.c.h.b16 %v3325
      %v3715 = vunpack.c.l.b16 %v3326
      %v3716 = vunpack.c.h.b16 %v3326
      %v3717 = vunpack.c.l.b16 %v3327
      %v3718 = vunpack.c.h.b16 %v3327
      %v3719 = vunpack.c.l.b16 %v3328
      %v3720 = vunpack.c.h.b16 %v3328
      %v3721 = vunpack.c.l.b16 %v3329
      %v3722 = vunpack.c.h.b16 %v3329
      %v3723 = vunpack.c.l.b16 %v3330
      %v3724 = vunpack.c.h.b16 %v3330
      %v3725 = vunpack.c.l.b16 %v3331
      %v3726 = vunpack.c.h.b16 %v3331
      %v3727 = vunpack.c.l.b16 %v3332
      %v3728 = vunpack.c.h.b16 %v3332
      %v3729 = vunpack.c.l.b16 %v3333
      %v3730 = vunpack.c.h.b16 %v3333
      %v3731 = vpack.c.b16 %v3483, %v3475
      %v3732 = vpack.c.b16 %v3484, %v3476
      %v3733 = vpack.c.b16 %v3485, %v3477
      %v3734 = vpack.c.b16 %v3486, %v3478
      %v3735 = vpack.c.b16 %v3487, %v3479
      %v3736 = vpack.c.b16 %v3488, %v3480
      %v3737 = vpack.c.b16 %v3489, %v3481
      %v3738 = vpack.c.b16 %v3490, %v3482
      %v3739 = vpack.c.b16 %v3499, %v3491
      %v3740 = vpack.c.b16 %v3500, %v3492
      %v3741 = vpack.c.b16 %v3501, %v3493
      %v3742 = vpack.c.b16 %v3502, %v3494
      %v3743 = vpack.c.b16 %v3503, %v3495
      %v3744 = vpack.c.b16 %v3504, %v3496
      %v3745 = vpack.c.b16 %v3505, %v3497
      %v3746 = vpack.c.b16 %v3506, %v3498
      %v3747 = vpack.c.b16 %v3515, %v3507
      %v3748 = vpack.c.b16 %v3516, %v3508
      %v3749 = vpack.c.b16 %v3517, %v3509
      %v3750 = vpack.c.b16 %v3518, %v3510
      %v3751 = vpack.c.b16 %v3519, %v3511
      %v3752 = vpack.c.b16 %v3520, %v3512
      %v3753 = vpack.c.b16 %v3521, %v3513
      %v3754 = vpack.c.b16 %v3522, %v3514
      %v3755 = vpack.c.b16 %v3531, %v3523
      %v3756 = vpack.c.b16 %v3532, %v3524
      %v3757 = vpack.c.b16 %v3533, %v3525
      %v3758 = vpack.c.b16 %v3534, %v3526
      %v3759 = vpack.c.b16 %v3535, %v3527
      %v3760 = vpack.c.b16 %v3536, %v3528
      %v3761 = vpack.c.b16 %v3537, %v3529
      %v3762 = vpack.c.b16 %v3538, %v3530
      %v3763 = vpack.c.b16 %v3547, %v3539
      %v3764 = vpack.c.b16 %v3548, %v3540
      %v3765 = vpack.c.b16 %v3549, %v3541
      %v3766 = vpack.c.b16 %v3550, %v3542
      %v3767 = vpack.c.b16 %v3551, %v3543
      %v3768 = vpack.c.b16 %v3552, %v3544
      %v3769 = vpack.c.b16 %v3553, %v3545
      %v3770 = vpack.c.b16 %v3554, %v3546
      %v3771 = vpack.c.b16 %v3563, %v3555
      %v3772 = vpack.c.b16 %v3564, %v3556
      %v3773 = vpack.c.b16 %v3565, %v3557
      %v3774 = vpack.c.b16 %v3566, %v3558
      %v3775 = vpack.c.b16 %v3567, %v3559
      %v3776 = vpack.c.b16 %v3568, %v3560
      %v3777 = vpack.c.b16 %v3569, %v3561
      %v3778 = vpack.c.b16 %v3570, %v3562
      %v3779 = vpack.c.b16 %v3579, %v3571
      %v3780 = vpack.c.b16 %v3580, %v3572
      %v3781 = vpack.c.b16 %v3581, %v3573
      %v3782 = vpack.c.b16 %v3582, %v3574
      %v3783 = vpack.c.b16 %v3583, %v3575
      %v3784 = vpack.c.b16 %v3584, %v3576
      %v3785 = vpack.c.b16 %v3585, %v3577
      %v3786 = vpack.c.b16 %v3586, %v3578
      %v3787 = vpack.c.b16 %v3595, %v3587
      %v3788 = vpack.c.b16 %v3596, %v3588
      %v3789 = vpack.c.b16 %v3597, %v3589
      %v3790 = vpack.c.b16 %v3598, %v3590
      %v3791 = vpack.c.b16 %v3599, %v3591
      %v3792 = vpack.c.b16 %v3600, %v3592
      %v3793 = vpack.c.b16 %v3601, %v3593
      %v3794 = vpack.c.b16 %v3602, %v3594
      %v3795 = vpack.c.b16 %v3611, %v3603
      %v3796 = vpack.c.b16 %v3612, %v3604
      %v3797 = vpack.c.b16 %v3613, %v3605
      %v3798 = vpack.c.b16 %v3614, %v3606
      %v3799 = vpack.c.b16 %v3615, %v3607
      %v3800 = vpack.c.b16 %v3616, %v3608
      %v3801 = vpack.c.b16 %v3617, %v3609
      %v3802 = vpack.c.b16 %v3618, %v3610
      %v3803 = vpack.c.b16 %v3627, %v3619
      %v3804 = vpack.c.b16 %v3628, %v3620
      %v3805 = vpack.c.b16 %v3629, %v3621
      %v3806 = vpack.c.b16 %v3630, %v3622
      %v3807 = vpack.c.b16 %v3631, %v3623
      %v3808 = vpack.c.b16 %v3632, %v3624
      %v3809 = vpack.c.b16 %v3633, %v3625
      %v3810 = vpack.c.b16 %v3634, %v3626
      %v3811 = vpack.c.b16 %v3643, %v3635
      %v3812 = vpack.c.b16 %v3644, %v3636
      %v3813 = vpack.c.b16 %v3645, %v3637
      %v3814 = vpack.c.b16 %v3646, %v3638
      %v3815 = vpack.c.b16 %v3647, %v3639
      %v3816 = vpack.c.b16 %v3648, %v3640
      %v3817 = vpack.c.b16 %v3649, %v3641
      %v3818 = vpack.c.b16 %v3650, %v3642
      %v3819 = vpack.c.b16 %v3659, %v3651
      %v3820 = vpack.c.b16 %v3660, %v3652
      %v3821 = vpack.c.b16 %v3661, %v3653
      %v3822 = vpack.c.b16 %v3662, %v3654
      %v3823 = vpack.c.b16 %v3663, %v3655
      %v3824 = vpack.c.b16 %v3664, %v3656
      %v3825 = vpack.c.b16 %v3665, %v3657
      %v3826 = vpack.c.b16 %v3666, %v3658
      %v3827 = vpack.c.b16 %v3675, %v3667
      %v3828 = vpack.c.b16 %v3676, %v3668
      %v3829 = vpack.c.b16 %v3677, %v3669
      %v3830 = vpack.c.b16 %v3678, %v3670
      %v3831 = vpack.c.b16 %v3679, %v3671
      %v3832 = vpack.c.b16 %v3680, %v3672
      %v3833 = vpack.c.b16 %v3681, %v3673
      %v3834 = vpack.c.b16 %v3682, %v3674
      %v3835 = vpack.c.b16 %v3691, %v3683
      %v3836 = vpack.c.b16 %v3692, %v3684
      %v3837 = vpack.c.b16 %v3693, %v3685
      %v3838 = vpack.c.b16 %v3694, %v3686
      %v3839 = vpack.c.b16 %v3695, %v3687
      %v3840 = vpack.c.b16 %v3696, %v3688
      %v3841 = vpack.c.b16 %v3697, %v3689
      %v3842 = vpack.c.b16 %v3698, %v3690
      %v3843 = vpack.c.b16 %v3707, %v3699
      %v3844 = vpack.c.b16 %v3708, %v3700
      %v3845 = vpack.c.b16 %v3709, %v3701
      %v3846 = vpack.c.b16 %v3710, %v3702
      %v3847 = vpack.c.b16 %v3711, %v3703
      %v3848 = vpack.c.b16 %v3712, %v3704
      %v3849 = vpack.c.b16 %v3713, %v3705
      %v3850 = vpack.c.b16 %v3714, %v3706
      %v3851 = vpack.c.b16 %v3723, %v3715
      %v3852 = vpack.c.b16 %v3724, %v3716
      %v3853 = vpack.c.b16 %v3725, %v3717
      %v3854 = vpack.c.b16 %v3726, %v3718
      %v3855 = vpack.c.b16 %v3727, %v3719
      %v3856 = vpack.c.b16 %v3728, %v3720
      %v3857 = vpack.c.b16 %v3729, %v3721
      %v3858 = vpack.c.b16 %v3730, %v3722
      %3987 = vmatprep.subr.bf16.mxu0 %v3732
      %3988 = vmatpush1.bf16.msra.mxu0 %v3731
      %3989 = vmatprep.subr.bf16.mxu0 %v3740
      %3990 = vmatpush1.bf16.msra.mxu0 %v3739
      %3991 = vmatprep.subr.bf16.mxu0 %v3748
      %3992 = vmatpush1.bf16.msra.mxu0 %v3747
      %3993 = vmatprep.subr.bf16.mxu0 %v3756
      %3994 = vmatpush1.bf16.msra.mxu0 %v3755
      %3995 = vmatprep.subr.bf16.mxu0 %v3764
      %3996 = vmatpush1.bf16.msra.mxu0 %v3763
      %3997 = vmatprep.subr.bf16.mxu0 %v3772
      %3998 = vmatpush1.bf16.msra.mxu0 %v3771
      %3999 = vmatprep.subr.bf16.mxu0 %v3780
      %4000 = vmatpush1.bf16.msra.mxu0 %v3779
      %4001 = vmatprep.subr.bf16.mxu0 %v3788
      %4002 = vmatpush1.bf16.msra.mxu0 %v3787
      %4003 = vmatprep.subr.bf16.mxu0 %v3796
      %4004 = vmatpush1.bf16.msra.mxu0 %v3795
      %4005 = vmatprep.subr.bf16.mxu0 %v3804
      %4006 = vmatpush1.bf16.msra.mxu0 %v3803
      %4007 = vmatprep.subr.bf16.mxu0 %v3812
      %4008 = vmatpush1.bf16.msra.mxu0 %v3811
      %4009 = vmatprep.subr.bf16.mxu0 %v3820
      %4010 = vmatpush1.bf16.msra.mxu0 %v3819
      %4011 = vmatprep.subr.bf16.mxu0 %v3828
      %4012 = vmatpush1.bf16.msra.mxu0 %v3827
      %4013 = vmatprep.subr.bf16.mxu0 %v3836
      %4014 = vmatpush1.bf16.msra.mxu0 %v3835
      %4015 = vmatprep.subr.bf16.mxu0 %v3844
      %4016 = vmatpush1.bf16.msra.mxu0 %v3843
      %4017 = vmatprep.subr.bf16.mxu0 %v3852
      %4018 = vmatpush1.bf16.msra.mxu0 %v3851
      %4019 = vmatprep.mubr.bf16.mxu0 %v3200
      %4020 = vmatmul.mubr.bf16.gmra.mrb[0].mxu0 %v3199
      %v4021 = vpop.f32.mrb[0].mxu0
      %v4022 = vadd.f32 %v3339, %v4021
      %v4023 = vpop.f32.mrb[0].mxu0
      %v4024 = vadd.f32 %v3340, %v4023
      %v4025 = vpop.f32.mrb[0].mxu0
      %v4026 = vpop.f32.mrb[0].mxu0
      %4027 = vdwg.mxu0
      %4028 = vmatprep.subr.bf16.mxu0 %v3734
      %4029 = vmatpush1.bf16.msra.mxu0 %v3733
      %4030 = vmatprep.subr.bf16.mxu0 %v3742
      %4031 = vmatpush1.bf16.msra.mxu0 %v3741
      %4032 = vmatprep.subr.bf16.mxu0 %v3750
      %4033 = vmatpush1.bf16.msra.mxu0 %v3749
      %4034 = vmatprep.subr.bf16.mxu0 %v3758
      %4035 = vmatpush1.bf16.msra.mxu0 %v3757
      %4036 = vmatprep.subr.bf16.mxu0 %v3766
      %4037 = vmatpush1.bf16.msra.mxu0 %v3765
      %4038 = vmatprep.subr.bf16.mxu0 %v3774
      %4039 = vmatpush1.bf16.msra.mxu0 %v3773
      %4040 = vmatprep.subr.bf16.mxu0 %v3782
      %4041 = vmatpush1.bf16.msra.mxu0 %v3781
      %4042 = vmatprep.subr.bf16.mxu0 %v3790
      %4043 = vmatpush1.bf16.msra.mxu0 %v3789
      %4044 = vmatprep.subr.bf16.mxu0 %v3798
      %4045 = vmatpush1.bf16.msra.mxu0 %v3797
      %4046 = vmatprep.subr.bf16.mxu0 %v3806
      %4047 = vmatpush1.bf16.msra.mxu0 %v3805
      %4048 = vmatprep.subr.bf16.mxu0 %v3814
      %4049 = vmatpush1.bf16.msra.mxu0 %v3813
      %4050 = vmatprep.subr.bf16.mxu0 %v3822
      %4051 = vmatpush1.bf16.msra.mxu0 %v3821
      %4052 = vmatprep.subr.bf16.mxu0 %v3830
      %4053 = vmatpush1.bf16.msra.mxu0 %v3829
      %4054 = vmatprep.subr.bf16.mxu0 %v3838
      %4055 = vmatpush1.bf16.msra.mxu0 %v3837
      %4056 = vmatprep.subr.bf16.mxu0 %v3846
      %4057 = vmatpush1.bf16.msra.mxu0 %v3845
      %4058 = vmatprep.subr.bf16.mxu0 %v3854
      %4059 = vmatpush1.bf16.msra.mxu0 %v3853
      %4060 = vmatprep.mubr.bf16.mxu0 %v3200
      %4061 = vmatmul.mubr.bf16.gmra.mrb[0].mxu0 %v3199
      %v4062 = vpop.f32.mrb[0].mxu0
      %v4063 = vadd.f32 %v3341, %v4062
      %v4064 = vpop.f32.mrb[0].mxu0
      %v4065 = vadd.f32 %v3342, %v4064
      %v4066 = vpop.f32.mrb[0].mxu0
      %v4067 = vpop.f32.mrb[0].mxu0
      %4068 = vdwg.mxu0
      %4069 = vmatprep.subr.bf16.mxu0 %v3736
      %4070 = vmatpush1.bf16.msra.mxu0 %v3735
      %4071 = vmatprep.subr.bf16.mxu0 %v3744
      %4072 = vmatpush1.bf16.msra.mxu0 %v3743
      %4073 = vmatprep.subr.bf16.mxu0 %v3752
      %4074 = vmatpush1.bf16.msra.mxu0 %v3751
      %4075 = vmatprep.subr.bf16.mxu0 %v3760
      %4076 = vmatpush1.bf16.msra.mxu0 %v3759
      %4077 = vmatprep.subr.bf16.mxu0 %v3768
      %4078 = vmatpush1.bf16.msra.mxu0 %v3767
      %4079 = vmatprep.subr.bf16.mxu0 %v3776
      %4080 = vmatpush1.bf16.msra.mxu0 %v3775
      %4081 = vmatprep.subr.bf16.mxu0 %v3784
      %4082 = vmatpush1.bf16.msra.mxu0 %v3783
      %4083 = vmatprep.subr.bf16.mxu0 %v3792
      %4084 = vmatpush1.bf16.msra.mxu0 %v3791
      %4085 = vmatprep.subr.bf16.mxu0 %v3800
      %4086 = vmatpush1.bf16.msra.mxu0 %v3799
      %4087 = vmatprep.subr.bf16.mxu0 %v3808
      %4088 = vmatpush1.bf16.msra.mxu0 %v3807
      %4089 = vmatprep.subr.bf16.mxu0 %v3816
      %4090 = vmatpush1.bf16.msra.mxu0 %v3815
      %4091 = vmatprep.subr.bf16.mxu0 %v3824
      %4092 = vmatpush1.bf16.msra.mxu0 %v3823
      %4093 = vmatprep.subr.bf16.mxu0 %v3832
      %4094 = vmatpush1.bf16.msra.mxu0 %v3831
      %4095 = vmatprep.subr.bf16.mxu0 %v3840
      %4096 = vmatpush1.bf16.msra.mxu0 %v3839
      %4097 = vmatprep.subr.bf16.mxu0 %v3848
      %4098 = vmatpush1.bf16.msra.mxu0 %v3847
      %4099 = vmatprep.subr.bf16.mxu0 %v3856
      %4100 = vmatpush1.bf16.msra.mxu0 %v3855
      %4101 = vmatprep.mubr.bf16.mxu0 %v3200
      %4102 = vmatmul.mubr.bf16.gmra.mrb[0].mxu0 %v3199
      %v4103 = vpop.f32.mrb[0].mxu0
      %v4104 = vadd.f32 %v3343, %v4103
      %v4105 = vpop.f32.mrb[0].mxu0
      %v4106 = vadd.f32 %v3344, %v4105
      %v4107 = vpop.f32.mrb[0].mxu0
      %v4108 = vpop.f32.mrb[0].mxu0
      %4109 = vdwg.mxu0
      %4110 = vmatprep.subr.bf16.mxu0 %v3738
      %4111 = vmatpush1.bf16.msra.mxu0 %v3737
      %4112 = vmatprep.subr.bf16.mxu0 %v3746
      %4113 = vmatpush1.bf16.msra.mxu0 %v3745
      %4114 = vmatprep.subr.bf16.mxu0 %v3754
      %4115 = vmatpush1.bf16.msra.mxu0 %v3753
      %4116 = vmatprep.subr.bf16.mxu0 %v3762
      %4117 = vmatpush1.bf16.msra.mxu0 %v3761
      %4118 = vmatprep.subr.bf16.mxu0 %v3770
      %4119 = vmatpush1.bf16.msra.mxu0 %v3769
      %4120 = vmatprep.subr.bf16.mxu0 %v3778
      %4121 = vmatpush1.bf16.msra.mxu0 %v3777
      %4122 = vmatprep.subr.bf16.mxu0 %v3786
      %4123 = vmatpush1.bf16.msra.mxu0 %v3785
      %4124 = vmatprep.subr.bf16.mxu0 %v3794
      %4125 = vmatpush1.bf16.msra.mxu0 %v3793
      %4126 = vmatprep.subr.bf16.mxu0 %v3802
      %4127 = vmatpush1.bf16.msra.mxu0 %v3801
      %4128 = vmatprep.subr.bf16.mxu0 %v3810
      %4129 = vmatpush1.bf16.msra.mxu0 %v3809
      %4130 = vmatprep.subr.bf16.mxu0 %v3818
      %4131 = vmatpush1.bf16.msra.mxu0 %v3817
      %4132 = vmatprep.subr.bf16.mxu0 %v3826
      %4133 = vmatpush1.bf16.msra.mxu0 %v3825
      %4134 = vmatprep.subr.bf16.mxu0 %v3834
      %4135 = vmatpush1.bf16.msra.mxu0 %v3833
      %4136 = vmatprep.subr.bf16.mxu0 %v3842
      %4137 = vmatpush1.bf16.msra.mxu0 %v3841
      %4138 = vmatprep.subr.bf16.mxu0 %v3850
      %4139 = vmatpush1.bf16.msra.mxu0 %v3849
      %4140 = vmatprep.subr.bf16.mxu0 %v3858
      %4141 = vmatpush1.bf16.msra.mxu0 %v3857
      %4142 = vmatprep.mubr.bf16.mxu0 %v3200
      %4143 = vmatmul.mubr.bf16.gmra.mrb[0].mxu0 %v3199
      %v4144 = vpop.f32.mrb[0].mxu0
      %v4145 = vadd.f32 %v3345, %v4144
      %v4146 = vpop.f32.mrb[0].mxu0
      %v4147 = vadd.f32 %v3346, %v4146
      %v4148 = vpop.f32.mrb[0].mxu0
      %v4149 = vpop.f32.mrb[0].mxu0
      %4150 = vdwg.mxu0
      %v4151 = vld [vmem:[#allocation7] sm:$0xff]
      %v4152 = vld [vmem:[#allocation7 + $0x8] sm:$0xff]
      %v4153 = vld [vmem:[#allocation7 + $0x10] sm:$0xff]
      %v4154 = vld [vmem:[#allocation7 + $0x18] sm:$0xff]
      %v4155 = vld [vmem:[#allocation7 + $0x20] sm:$0xff]
      %v4156 = vld [vmem:[#allocation7 + $0x28] sm:$0xff]
      %v4157 = vld [vmem:[#allocation7 + $0x30] sm:$0xff]
      %v4158 = vld [vmem:[#allocation7 + $0x38] sm:$0xff]
      %v4159 = vld [vmem:[#allocation7 + $0x40] sm:$0xff]
      %v4160 = vld [vmem:[#allocation7 + $0x48] sm:$0xff]
      %v4161 = vld [vmem:[#allocation7 + $0x50] sm:$0xff]
      %v4162 = vld [vmem:[#allocation7 + $0x58] sm:$0xff]
      %v4163 = vld [vmem:[#allocation7 + $0x60] sm:$0xff]
      %v4164 = vld [vmem:[#allocation7 + $0x68] sm:$0xff]
      %v4165 = vld [vmem:[#allocation7 + $0x70] sm:$0xff]
      %v4166 = vld [vmem:[#allocation7 + $0x78] sm:$0xff]
      %v4167 = vld [vmem:[#allocation7 + $0x80] sm:$0xff]
      %v4168 = vld [vmem:[#allocation7 + $0x88] sm:$0xff]
      %v4169 = vld [vmem:[#allocation7 + $0x90] sm:$0xff]
      %v4170 = vld [vmem:[#allocation7 + $0x98] sm:$0xff]
      %v4171 = vld [vmem:[#allocation7 + $0xa0] sm:$0xff]
      %v4172 = vld [vmem:[#allocation7 + $0xa8] sm:$0xff]
      %v4173 = vld [vmem:[#allocation7 + $0xb0] sm:$0xff]
      %v4174 = vld [vmem:[#allocation7 + $0xb8] sm:$0xff]
      %v4175 = vld [vmem:[#allocation7 + $0xc0] sm:$0xff]
      %v4176 = vld [vmem:[#allocation7 + $0xc8] sm:$0xff]
      %v4177 = vld [vmem:[#allocation7 + $0xd0] sm:$0xff]
      %v4178 = vld [vmem:[#allocation7 + $0xd8] sm:$0xff]
      %v4179 = vld [vmem:[#allocation7 + $0xe0] sm:$0xff]
      %v4180 = vld [vmem:[#allocation7 + $0xe8] sm:$0xff]
      %v4181 = vld [vmem:[#allocation7 + $0xf0] sm:$0xff]
      %v4182 = vld [vmem:[#allocation7 + $0xf8] sm:$0xff]
      %v4183 = vld [vmem:[#allocation7 + $0x100] sm:$0xff]
      %v4184 = vld [vmem:[#allocation7 + $0x108] sm:$0xff]
      %v4185 = vld [vmem:[#allocation7 + $0x110] sm:$0xff]
      %v4186 = vld [vmem:[#allocation7 + $0x118] sm:$0xff]
      %v4187 = vld [vmem:[#allocation7 + $0x120] sm:$0xff]
      %v4188 = vld [vmem:[#allocation7 + $0x128] sm:$0xff]
      %v4189 = vld [vmem:[#allocation7 + $0x130] sm:$0xff]
      %v4190 = vld [vmem:[#allocation7 + $0x138] sm:$0xff]
      %v4191 = vld [vmem:[#allocation7 + $0x140] sm:$0xff]
      %v4192 = vld [vmem:[#allocation7 + $0x148] sm:$0xff]
      %v4193 = vld [vmem:[#allocation7 + $0x150] sm:$0xff]
      %v4194 = vld [vmem:[#allocation7 + $0x158] sm:$0xff]
      %v4195 = vld [vmem:[#allocation7 + $0x160] sm:$0xff]
      %v4196 = vld [vmem:[#allocation7 + $0x168] sm:$0xff]
      %v4197 = vld [vmem:[#allocation7 + $0x170] sm:$0xff]
      %v4198 = vld [vmem:[#allocation7 + $0x178] sm:$0xff]
      %v4199 = vld [vmem:[#allocation7 + $0x180] sm:$0xff]
      %v4200 = vld [vmem:[#allocation7 + $0x188] sm:$0xff]
      %v4201 = vld [vmem:[#allocation7 + $0x190] sm:$0xff]
      %v4202 = vld [vmem:[#allocation7 + $0x198] sm:$0xff]
      %v4203 = vld [vmem:[#allocation7 + $0x1a0] sm:$0xff]
      %v4204 = vld [vmem:[#allocation7 + $0x1a8] sm:$0xff]
      %v4205 = vld [vmem:[#allocation7 + $0x1b0] sm:$0xff]
      %v4206 = vld [vmem:[#allocation7 + $0x1b8] sm:$0xff]
      %v4207 = vld [vmem:[#allocation7 + $0x1c0] sm:$0xff]
      %v4208 = vld [vmem:[#allocation7 + $0x1c8] sm:$0xff]
      %v4209 = vld [vmem:[#allocation7 + $0x1d0] sm:$0xff]
      %v4210 = vld [vmem:[#allocation7 + $0x1d8] sm:$0xff]
      %v4211 = vld [vmem:[#allocation7 + $0x1e0] sm:$0xff]
      %v4212 = vld [vmem:[#allocation7 + $0x1e8] sm:$0xff]
      %v4213 = vld [vmem:[#allocation7 + $0x1f0] sm:$0xff]
      %v4214 = vld [vmem:[#allocation7 + $0x1f8] sm:$0xff]
      %v4215 = vld [vmem:[#allocation7 + $0x200] sm:$0xff]
      %v4216 = vld [vmem:[#allocation7 + $0x208] sm:$0xff]
      %v4217 = vld [vmem:[#allocation7 + $0x210] sm:$0xff]
      %v4218 = vld [vmem:[#allocation7 + $0x218] sm:$0xff]
      %v4219 = vld [vmem:[#allocation7 + $0x220] sm:$0xff]
      %v4220 = vld [vmem:[#allocation7 + $0x228] sm:$0xff]
      %v4221 = vld [vmem:[#allocation7 + $0x230] sm:$0xff]
      %v4222 = vld [vmem:[#allocation7 + $0x238] sm:$0xff]
      %v4223 = vld [vmem:[#allocation7 + $0x240] sm:$0xff]
      %v4224 = vld [vmem:[#allocation7 + $0x248] sm:$0xff]
      %v4225 = vld [vmem:[#allocation7 + $0x250] sm:$0xff]
      %v4226 = vld [vmem:[#allocation7 + $0x258] sm:$0xff]
      %v4227 = vld [vmem:[#allocation7 + $0x260] sm:$0xff]
      %v4228 = vld [vmem:[#allocation7 + $0x268] sm:$0xff]
      %v4229 = vld [vmem:[#allocation7 + $0x270] sm:$0xff]
      %v4230 = vld [vmem:[#allocation7 + $0x278] sm:$0xff]
      %v4231 = vld [vmem:[#allocation7 + $0x280] sm:$0xff]
      %v4232 = vld [vmem:[#allocation7 + $0x288] sm:$0xff]
      %v4233 = vld [vmem:[#allocation7 + $0x290] sm:$0xff]
      %v4234 = vld [vmem:[#allocation7 + $0x298] sm:$0xff]
      %v4235 = vld [vmem:[#allocation7 + $0x2a0] sm:$0xff]
      %v4236 = vld [vmem:[#allocation7 + $0x2a8] sm:$0xff]
      %v4237 = vld [vmem:[#allocation7 + $0x2b0] sm:$0xff]
      %v4238 = vld [vmem:[#allocation7 + $0x2b8] sm:$0xff]
      %v4239 = vld [vmem:[#allocation7 + $0x2c0] sm:$0xff]
      %v4240 = vld [vmem:[#allocation7 + $0x2c8] sm:$0xff]
      %v4241 = vld [vmem:[#allocation7 + $0x2d0] sm:$0xff]
      %v4242 = vld [vmem:[#allocation7 + $0x2d8] sm:$0xff]
      %v4243 = vld [vmem:[#allocation7 + $0x2e0] sm:$0xff]
      %v4244 = vld [vmem:[#allocation7 + $0x2e8] sm:$0xff]
      %v4245 = vld [vmem:[#allocation7 + $0x2f0] sm:$0xff]
      %v4246 = vld [vmem:[#allocation7 + $0x2f8] sm:$0xff]
      %v4247 = vld [vmem:[#allocation7 + $0x300] sm:$0xff]
      %v4248 = vld [vmem:[#allocation7 + $0x308] sm:$0xff]
      %v4249 = vld [vmem:[#allocation7 + $0x310] sm:$0xff]
      %v4250 = vld [vmem:[#allocation7 + $0x318] sm:$0xff]
      %v4251 = vld [vmem:[#allocation7 + $0x320] sm:$0xff]
      %v4252 = vld [vmem:[#allocation7 + $0x328] sm:$0xff]
      %v4253 = vld [vmem:[#allocation7 + $0x330] sm:$0xff]
      %v4254 = vld [vmem:[#allocation7 + $0x338] sm:$0xff]
      %v4255 = vld [vmem:[#allocation7 + $0x340] sm:$0xff]
      %v4256 = vld [vmem:[#allocation7 + $0x348] sm:$0xff]
      %v4257 = vld [vmem:[#allocation7 + $0x350] sm:$0xff]
      %v4258 = vld [vmem:[#allocation7 + $0x358] sm:$0xff]
      %v4259 = vld [vmem:[#allocation7 + $0x360] sm:$0xff]
      %v4260 = vld [vmem:[#allocation7 + $0x368] sm:$0xff]
      %v4261 = vld [vmem:[#allocation7 + $0x370] sm:$0xff]
      %v4262 = vld [vmem:[#allocation7 + $0x378] sm:$0xff]
      %v4263 = vld [vmem:[#allocation7 + $0x380] sm:$0xff]
      %v4264 = vld [vmem:[#allocation7 + $0x388] sm:$0xff]
      %v4265 = vld [vmem:[#allocation7 + $0x390] sm:$0xff]
      %v4266 = vld [vmem:[#allocation7 + $0x398] sm:$0xff]
      %v4267 = vld [vmem:[#allocation7 + $0x3a0] sm:$0xff]
      %v4268 = vld [vmem:[#allocation7 + $0x3a8] sm:$0xff]
      %v4269 = vld [vmem:[#allocation7 + $0x3b0] sm:$0xff]
      %v4270 = vld [vmem:[#allocation7 + $0x3b8] sm:$0xff]
      %v4271 = vld [vmem:[#allocation7 + $0x3c0] sm:$0xff]
      %v4272 = vld [vmem:[#allocation7 + $0x3c8] sm:$0xff]
      %v4273 = vld [vmem:[#allocation7 + $0x3d0] sm:$0xff]
      %v4274 = vld [vmem:[#allocation7 + $0x3d8] sm:$0xff]
      %v4275 = vld [vmem:[#allocation7 + $0x3e0] sm:$0xff]
      %v4276 = vld [vmem:[#allocation7 + $0x3e8] sm:$0xff]
      %v4277 = vld [vmem:[#allocation7 + $0x3f0] sm:$0xff]
      %v4278 = vld [vmem:[#allocation7 + $0x3f8] sm:$0xff]
      %v4279 = vld [vmem:[#allocation7 + $0x400] sm:$0xff]
      %v4280 = vld [vmem:[#allocation7 + $0x408] sm:$0xff]
      %v4281 = vld [vmem:[#allocation7 + $0x410] sm:$0xff]
      %v4282 = vld [vmem:[#allocation7 + $0x418] sm:$0xff]
      %v4283 = vld [vmem:[#allocation7 + $0x420] sm:$0xff]
      %v4284 = vld [vmem:[#allocation7 + $0x428] sm:$0xff]
      %v4285 = vld [vmem:[#allocation7 + $0x430] sm:$0xff]
      %v4286 = vld [vmem:[#allocation7 + $0x438] sm:$0xff]
      %v4287 = vld [vmem:[#allocation7 + $0x440] sm:$0xff]
      %v4288 = vld [vmem:[#allocation7 + $0x448] sm:$0xff]
      %v4289 = vld [vmem:[#allocation7 + $0x450] sm:$0xff]
      %v4290 = vld [vmem:[#allocation7 + $0x458] sm:$0xff]
      %v4291 = vld [vmem:[#allocation7 + $0x460] sm:$0xff]
      %v4292 = vld [vmem:[#allocation7 + $0x468] sm:$0xff]
      %v4293 = vld [vmem:[#allocation7 + $0x470] sm:$0xff]
      %v4294 = vld [vmem:[#allocation7 + $0x478] sm:$0xff]
      %v4295 = vld [vmem:[#allocation7 + $0x480] sm:$0xff]
      %v4296 = vld [vmem:[#allocation7 + $0x488] sm:$0xff]
      %v4297 = vld [vmem:[#allocation7 + $0x490] sm:$0xff]
      %v4298 = vld [vmem:[#allocation7 + $0x498] sm:$0xff]
      %v4299 = vld [vmem:[#allocation7 + $0x4a0] sm:$0xff]
      %v4300 = vld [vmem:[#allocation7 + $0x4a8] sm:$0xff]
      %v4301 = vld [vmem:[#allocation7 + $0x4b0] sm:$0xff]
      %v4302 = vld [vmem:[#allocation7 + $0x4b8] sm:$0xff]
      %v4303 = vld [vmem:[#allocation7 + $0x4c0] sm:$0xff]
      %v4304 = vld [vmem:[#allocation7 + $0x4c8] sm:$0xff]
      %v4305 = vld [vmem:[#allocation7 + $0x4d0] sm:$0xff]
      %v4306 = vld [vmem:[#allocation7 + $0x4d8] sm:$0xff]
      %v4307 = vld [vmem:[#allocation7 + $0x4e0] sm:$0xff]
      %v4308 = vld [vmem:[#allocation7 + $0x4e8] sm:$0xff]
      %v4309 = vld [vmem:[#allocation7 + $0x4f0] sm:$0xff]
      %v4310 = vld [vmem:[#allocation7 + $0x4f8] sm:$0xff]
      %v4311 = vld [vmem:[#allocation7 + $0x500] sm:$0xff]
      %v4312 = vld [vmem:[#allocation7 + $0x508] sm:$0xff]
      %v4313 = vld [vmem:[#allocation7 + $0x510] sm:$0xff]
      %v4314 = vld [vmem:[#allocation7 + $0x518] sm:$0xff]
      %v4315 = vld [vmem:[#allocation7 + $0x520] sm:$0xff]
      %v4316 = vld [vmem:[#allocation7 + $0x528] sm:$0xff]
      %v4317 = vld [vmem:[#allocation7 + $0x530] sm:$0xff]
      %v4318 = vld [vmem:[#allocation7 + $0x538] sm:$0xff]
      %v4319 = vld [vmem:[#allocation7 + $0x540] sm:$0xff]
      %v4320 = vld [vmem:[#allocation7 + $0x548] sm:$0xff]
      %v4321 = vld [vmem:[#allocation7 + $0x550] sm:$0xff]
      %v4322 = vld [vmem:[#allocation7 + $0x558] sm:$0xff]
      %v4323 = vld [vmem:[#allocation7 + $0x560] sm:$0xff]
      %v4324 = vld [vmem:[#allocation7 + $0x568] sm:$0xff]
      %v4325 = vld [vmem:[#allocation7 + $0x570] sm:$0xff]
      %v4326 = vld [vmem:[#allocation7 + $0x578] sm:$0xff]
      %v4327 = vld [vmem:[#allocation7 + $0x580] sm:$0xff]
      %v4328 = vld [vmem:[#allocation7 + $0x588] sm:$0xff]
      %v4329 = vld [vmem:[#allocation7 + $0x590] sm:$0xff]
      %v4330 = vld [vmem:[#allocation7 + $0x598] sm:$0xff]
      %v4331 = vld [vmem:[#allocation7 + $0x5a0] sm:$0xff]
      %v4332 = vld [vmem:[#allocation7 + $0x5a8] sm:$0xff]
      %v4333 = vld [vmem:[#allocation7 + $0x5b0] sm:$0xff]
      %v4334 = vld [vmem:[#allocation7 + $0x5b8] sm:$0xff]
      %v4335 = vld [vmem:[#allocation7 + $0x5c0] sm:$0xff]
      %v4336 = vld [vmem:[#allocation7 + $0x5c8] sm:$0xff]
      %v4337 = vld [vmem:[#allocation7 + $0x5d0] sm:$0xff]
      %v4338 = vld [vmem:[#allocation7 + $0x5d8] sm:$0xff]
      %v4339 = vld [vmem:[#allocation7 + $0x5e0] sm:$0xff]
      %v4340 = vld [vmem:[#allocation7 + $0x5e8] sm:$0xff]
      %v4341 = vld [vmem:[#allocation7 + $0x5f0] sm:$0xff]
      %v4342 = vld [vmem:[#allocation7 + $0x5f8] sm:$0xff]
      %v4343 = vld [vmem:[#allocation7 + $0x600] sm:$0xff]
      %v4344 = vld [vmem:[#allocation7 + $0x608] sm:$0xff]
      %v4345 = vld [vmem:[#allocation7 + $0x610] sm:$0xff]
      %v4346 = vld [vmem:[#allocation7 + $0x618] sm:$0xff]
      %v4347 = vld [vmem:[#allocation7 + $0x620] sm:$0xff]
      %v4348 = vld [vmem:[#allocation7 + $0x628] sm:$0xff]
      %v4349 = vld [vmem:[#allocation7 + $0x630] sm:$0xff]
      %v4350 = vld [vmem:[#allocation7 + $0x638] sm:$0xff]
      %v4351 = vld [vmem:[#allocation7 + $0x640] sm:$0xff]
      %v4352 = vld [vmem:[#allocation7 + $0x648] sm:$0xff]
      %v4353 = vld [vmem:[#allocation7 + $0x650] sm:$0xff]
      %v4354 = vld [vmem:[#allocation7 + $0x658] sm:$0xff]
      %v4355 = vld [vmem:[#allocation7 + $0x660] sm:$0xff]
      %v4356 = vld [vmem:[#allocation7 + $0x668] sm:$0xff]
      %v4357 = vld [vmem:[#allocation7 + $0x670] sm:$0xff]
      %v4358 = vld [vmem:[#allocation7 + $0x678] sm:$0xff]
      %v4359 = vld [vmem:[#allocation7 + $0x680] sm:$0xff]
      %v4360 = vld [vmem:[#allocation7 + $0x688] sm:$0xff]
      %v4361 = vld [vmem:[#allocation7 + $0x690] sm:$0xff]
      %v4362 = vld [vmem:[#allocation7 + $0x698] sm:$0xff]
      %v4363 = vld [vmem:[#allocation7 + $0x6a0] sm:$0xff]
      %v4364 = vld [vmem:[#allocation7 + $0x6a8] sm:$0xff]
      %v4365 = vld [vmem:[#allocation7 + $0x6b0] sm:$0xff]
      %v4366 = vld [vmem:[#allocation7 + $0x6b8] sm:$0xff]
      %v4367 = vld [vmem:[#allocation7 + $0x6c0] sm:$0xff]
      %v4368 = vld [vmem:[#allocation7 + $0x6c8] sm:$0xff]
      %v4369 = vld [vmem:[#allocation7 + $0x6d0] sm:$0xff]
      %v4370 = vld [vmem:[#allocation7 + $0x6d8] sm:$0xff]
      %v4371 = vld [vmem:[#allocation7 + $0x6e0] sm:$0xff]
      %v4372 = vld [vmem:[#allocation7 + $0x6e8] sm:$0xff]
      %v4373 = vld [vmem:[#allocation7 + $0x6f0] sm:$0xff]
      %v4374 = vld [vmem:[#allocation7 + $0x6f8] sm:$0xff]
      %v4375 = vld [vmem:[#allocation7 + $0x700] sm:$0xff]
      %v4376 = vld [vmem:[#allocation7 + $0x708] sm:$0xff]
      %v4377 = vld [vmem:[#allocation7 + $0x710] sm:$0xff]
      %v4378 = vld [vmem:[#allocation7 + $0x718] sm:$0xff]
      %v4379 = vld [vmem:[#allocation7 + $0x720] sm:$0xff]
      %v4380 = vld [vmem:[#allocation7 + $0x728] sm:$0xff]
      %v4381 = vld [vmem:[#allocation7 + $0x730] sm:$0xff]
      %v4382 = vld [vmem:[#allocation7 + $0x738] sm:$0xff]
      %v4383 = vld [vmem:[#allocation7 + $0x740] sm:$0xff]
      %v4384 = vld [vmem:[#allocation7 + $0x748] sm:$0xff]
      %v4385 = vld [vmem:[#allocation7 + $0x750] sm:$0xff]
      %v4386 = vld [vmem:[#allocation7 + $0x758] sm:$0xff]
      %v4387 = vld [vmem:[#allocation7 + $0x760] sm:$0xff]
      %v4388 = vld [vmem:[#allocation7 + $0x768] sm:$0xff]
      %v4389 = vld [vmem:[#allocation7 + $0x770] sm:$0xff]
      %v4390 = vld [vmem:[#allocation7 + $0x778] sm:$0xff]
      %v4391 = vld [vmem:[#allocation7 + $0x780] sm:$0xff]
      %v4392 = vld [vmem:[#allocation7 + $0x788] sm:$0xff]
      %v4393 = vld [vmem:[#allocation7 + $0x790] sm:$0xff]
      %v4394 = vld [vmem:[#allocation7 + $0x798] sm:$0xff]
      %v4395 = vld [vmem:[#allocation7 + $0x7a0] sm:$0xff]
      %v4396 = vld [vmem:[#allocation7 + $0x7a8] sm:$0xff]
      %v4397 = vld [vmem:[#allocation7 + $0x7b0] sm:$0xff]
      %v4398 = vld [vmem:[#allocation7 + $0x7b8] sm:$0xff]
      %v4399 = vld [vmem:[#allocation7 + $0x7c0] sm:$0xff]
      %v4400 = vld [vmem:[#allocation7 + $0x7c8] sm:$0xff]
      %v4401 = vld [vmem:[#allocation7 + $0x7d0] sm:$0xff]
      %v4402 = vld [vmem:[#allocation7 + $0x7d8] sm:$0xff]
      %v4403 = vld [vmem:[#allocation7 + $0x7e0] sm:$0xff]
      %v4404 = vld [vmem:[#allocation7 + $0x7e8] sm:$0xff]
      %v4405 = vld [vmem:[#allocation7 + $0x7f0] sm:$0xff]
      %v4406 = vld [vmem:[#allocation7 + $0x7f8] sm:$0xff]
      %v4407 = vld [vmem:[%s5] sm:$0xff]
      %v4408 = vld [vmem:[%s5 + $0x8] sm:$0xff]
      %v4409 = vld [vmem:[%s5 + $0x10] sm:$0xff]
      %v4410 = vld [vmem:[%s5 + $0x18] sm:$0xff]
      %v4411 = vld [vmem:[%s5 + $0x20] sm:$0xff]
      %v4412 = vld [vmem:[%s5 + $0x28] sm:$0xff]
      %v4413 = vld [vmem:[%s5 + $0x30] sm:$0xff]
      %v4414 = vld [vmem:[%s5 + $0x38] sm:$0xff]
      %v4671 = vunpack.c.l.b16 %v4151
      %v4672 = vunpack.c.h.b16 %v4151
      %v4673 = vunpack.c.l.b16 %v4152
      %v4674 = vunpack.c.h.b16 %v4152
      %v4675 = vunpack.c.l.b16 %v4153
      %v4676 = vunpack.c.h.b16 %v4153
      %v4677 = vunpack.c.l.b16 %v4154
      %v4678 = vunpack.c.h.b16 %v4154
      %v4679 = vunpack.c.l.b16 %v4155
      %v4680 = vunpack.c.h.b16 %v4155
      %v4681 = vunpack.c.l.b16 %v4156
      %v4682 = vunpack.c.h.b16 %v4156
      %v4683 = vunpack.c.l.b16 %v4157
      %v4684 = vunpack.c.h.b16 %v4157
      %v4685 = vunpack.c.l.b16 %v4158
      %v4686 = vunpack.c.h.b16 %v4158
      %v4687 = vunpack.c.l.b16 %v4159
      %v4688 = vunpack.c.h.b16 %v4159
      %v4689 = vunpack.c.l.b16 %v4160
      %v4690 = vunpack.c.h.b16 %v4160
      %v4691 = vunpack.c.l.b16 %v4161
      %v4692 = vunpack.c.h.b16 %v4161
      %v4693 = vunpack.c.l.b16 %v4162
      %v4694 = vunpack.c.h.b16 %v4162
      %v4695 = vunpack.c.l.b16 %v4163
      %v4696 = vunpack.c.h.b16 %v4163
      %v4697 = vunpack.c.l.b16 %v4164
      %v4698 = vunpack.c.h.b16 %v4164
      %v4699 = vunpack.c.l.b16 %v4165
      %v4700 = vunpack.c.h.b16 %v4165
      %v4701 = vunpack.c.l.b16 %v4166
      %v4702 = vunpack.c.h.b16 %v4166
      %v4703 = vunpack.c.l.b16 %v4167
      %v4704 = vunpack.c.h.b16 %v4167
      %v4705 = vunpack.c.l.b16 %v4168
      %v4706 = vunpack.c.h.b16 %v4168
      %v4707 = vunpack.c.l.b16 %v4169
      %v4708 = vunpack.c.h.b16 %v4169
      %v4709 = vunpack.c.l.b16 %v4170
      %v4710 = vunpack.c.h.b16 %v4170
      %v4711 = vunpack.c.l.b16 %v4171
      %v4712 = vunpack.c.h.b16 %v4171
      %v4713 = vunpack.c.l.b16 %v4172
      %v4714 = vunpack.c.h.b16 %v4172
      %v4715 = vunpack.c.l.b16 %v4173
      %v4716 = vunpack.c.h.b16 %v4173
      %v4717 = vunpack.c.l.b16 %v4174
      %v4718 = vunpack.c.h.b16 %v4174
      %v4719 = vunpack.c.l.b16 %v4175
      %v4720 = vunpack.c.h.b16 %v4175
      %v4721 = vunpack.c.l.b16 %v4176
      %v4722 = vunpack.c.h.b16 %v4176
      %v4723 = vunpack.c.l.b16 %v4177
      %v4724 = vunpack.c.h.b16 %v4177
      %v4725 = vunpack.c.l.b16 %v4178
      %v4726 = vunpack.c.h.b16 %v4178
      %v4727 = vunpack.c.l.b16 %v4179
      %v4728 = vunpack.c.h.b16 %v4179
      %v4729 = vunpack.c.l.b16 %v4180
      %v4730 = vunpack.c.h.b16 %v4180
      %v4731 = vunpack.c.l.b16 %v4181
      %v4732 = vunpack.c.h.b16 %v4181
      %v4733 = vunpack.c.l.b16 %v4182
      %v4734 = vunpack.c.h.b16 %v4182
      %v4735 = vunpack.c.l.b16 %v4183
      %v4736 = vunpack.c.h.b16 %v4183
      %v4737 = vunpack.c.l.b16 %v4184
      %v4738 = vunpack.c.h.b16 %v4184
      %v4739 = vunpack.c.l.b16 %v4185
      %v4740 = vunpack.c.h.b16 %v4185
      %v4741 = vunpack.c.l.b16 %v4186
      %v4742 = vunpack.c.h.b16 %v4186
      %v4743 = vunpack.c.l.b16 %v4187
      %v4744 = vunpack.c.h.b16 %v4187
      %v4745 = vunpack.c.l.b16 %v4188
      %v4746 = vunpack.c.h.b16 %v4188
      %v4747 = vunpack.c.l.b16 %v4189
      %v4748 = vunpack.c.h.b16 %v4189
      %v4749 = vunpack.c.l.b16 %v4190
      %v4750 = vunpack.c.h.b16 %v4190
      %v4751 = vunpack.c.l.b16 %v4191
      %v4752 = vunpack.c.h.b16 %v4191
      %v4753 = vunpack.c.l.b16 %v4192
      %v4754 = vunpack.c.h.b16 %v4192
      %v4755 = vunpack.c.l.b16 %v4193
      %v4756 = vunpack.c.h.b16 %v4193
      %v4757 = vunpack.c.l.b16 %v4194
      %v4758 = vunpack.c.h.b16 %v4194
      %v4759 = vunpack.c.l.b16 %v4195
      %v4760 = vunpack.c.h.b16 %v4195
      %v4761 = vunpack.c.l.b16 %v4196
      %v4762 = vunpack.c.h.b16 %v4196
      %v4763 = vunpack.c.l.b16 %v4197
      %v4764 = vunpack.c.h.b16 %v4197
      %v4765 = vunpack.c.l.b16 %v4198
      %v4766 = vunpack.c.h.b16 %v4198
      %v4767 = vunpack.c.l.b16 %v4199
      %v4768 = vunpack.c.h.b16 %v4199
      %v4769 = vunpack.c.l.b16 %v4200
      %v4770 = vunpack.c.h.b16 %v4200
      %v4771 = vunpack.c.l.b16 %v4201
      %v4772 = vunpack.c.h.b16 %v4201
      %v4773 = vunpack.c.l.b16 %v4202
      %v4774 = vunpack.c.h.b16 %v4202
      %v4775 = vunpack.c.l.b16 %v4203
      %v4776 = vunpack.c.h.b16 %v4203
      %v4777 = vunpack.c.l.b16 %v4204
      %v4778 = vunpack.c.h.b16 %v4204
      %v4779 = vunpack.c.l.b16 %v4205
      %v4780 = vunpack.c.h.b16 %v4205
      %v4781 = vunpack.c.l.b16 %v4206
      %v4782 = vunpack.c.h.b16 %v4206
      %v4783 = vunpack.c.l.b16 %v4207
      %v4784 = vunpack.c.h.b16 %v4207
      %v4785 = vunpack.c.l.b16 %v4208
      %v4786 = vunpack.c.h.b16 %v4208
      %v4787 = vunpack.c.l.b16 %v4209
      %v4788 = vunpack.c.h.b16 %v4209
      %v4789 = vunpack.c.l.b16 %v4210
      %v4790 = vunpack.c.h.b16 %v4210
      %v4791 = vunpack.c.l.b16 %v4211
      %v4792 = vunpack.c.h.b16 %v4211
      %v4793 = vunpack.c.l.b16 %v4212
      %v4794 = vunpack.c.h.b16 %v4212
      %v4795 = vunpack.c.l.b16 %v4213
      %v4796 = vunpack.c.h.b16 %v4213
      %v4797 = vunpack.c.l.b16 %v4214
      %v4798 = vunpack.c.h.b16 %v4214
      %v4799 = vunpack.c.l.b16 %v4215
      %v4800 = vunpack.c.h.b16 %v4215
      %v4801 = vunpack.c.l.b16 %v4216
      %v4802 = vunpack.c.h.b16 %v4216
      %v4803 = vunpack.c.l.b16 %v4217
      %v4804 = vunpack.c.h.b16 %v4217
      %v4805 = vunpack.c.l.b16 %v4218
      %v4806 = vunpack.c.h.b16 %v4218
      %v4807 = vunpack.c.l.b16 %v4219
      %v4808 = vunpack.c.h.b16 %v4219
      %v4809 = vunpack.c.l.b16 %v4220
      %v4810 = vunpack.c.h.b16 %v4220
      %v4811 = vunpack.c.l.b16 %v4221
      %v4812 = vunpack.c.h.b16 %v4221
      %v4813 = vunpack.c.l.b16 %v4222
      %v4814 = vunpack.c.h.b16 %v4222
      %v4815 = vunpack.c.l.b16 %v4223
      %v4816 = vunpack.c.h.b16 %v4223
      %v4817 = vunpack.c.l.b16 %v4224
      %v4818 = vunpack.c.h.b16 %v4224
      %v4819 = vunpack.c.l.b16 %v4225
      %v4820 = vunpack.c.h.b16 %v4225
      %v4821 = vunpack.c.l.b16 %v4226
      %v4822 = vunpack.c.h.b16 %v4226
      %v4823 = vunpack.c.l.b16 %v4227
      %v4824 = vunpack.c.h.b16 %v4227
      %v4825 = vunpack.c.l.b16 %v4228
      %v4826 = vunpack.c.h.b16 %v4228
      %v4827 = vunpack.c.l.b16 %v4229
      %v4828 = vunpack.c.h.b16 %v4229
      %v4829 = vunpack.c.l.b16 %v4230
      %v4830 = vunpack.c.h.b16 %v4230
      %v4831 = vunpack.c.l.b16 %v4231
      %v4832 = vunpack.c.h.b16 %v4231
      %v4833 = vunpack.c.l.b16 %v4232
      %v4834 = vunpack.c.h.b16 %v4232
      %v4835 = vunpack.c.l.b16 %v4233
      %v4836 = vunpack.c.h.b16 %v4233
      %v4837 = vunpack.c.l.b16 %v4234
      %v4838 = vunpack.c.h.b16 %v4234
      %v4839 = vunpack.c.l.b16 %v4235
      %v4840 = vunpack.c.h.b16 %v4235
      %v4841 = vunpack.c.l.b16 %v4236
      %v4842 = vunpack.c.h.b16 %v4236
      %v4843 = vunpack.c.l.b16 %v4237
      %v4844 = vunpack.c.h.b16 %v4237
      %v4845 = vunpack.c.l.b16 %v4238
      %v4846 = vunpack.c.h.b16 %v4238
      %v4847 = vunpack.c.l.b16 %v4239
      %v4848 = vunpack.c.h.b16 %v4239
      %v4849 = vunpack.c.l.b16 %v4240
      %v4850 = vunpack.c.h.b16 %v4240
      %v4851 = vunpack.c.l.b16 %v4241
      %v4852 = vunpack.c.h.b16 %v4241
      %v4853 = vunpack.c.l.b16 %v4242
      %v4854 = vunpack.c.h.b16 %v4242
      %v4855 = vunpack.c.l.b16 %v4243
      %v4856 = vunpack.c.h.b16 %v4243
      %v4857 = vunpack.c.l.b16 %v4244
      %v4858 = vunpack.c.h.b16 %v4244
      %v4859 = vunpack.c.l.b16 %v4245
      %v4860 = vunpack.c.h.b16 %v4245
      %v4861 = vunpack.c.l.b16 %v4246
      %v4862 = vunpack.c.h.b16 %v4246
      %v4863 = vunpack.c.l.b16 %v4247
      %v4864 = vunpack.c.h.b16 %v4247
      %v4865 = vunpack.c.l.b16 %v4248
      %v4866 = vunpack.c.h.b16 %v4248
      %v4867 = vunpack.c.l.b16 %v4249
      %v4868 = vunpack.c.h.b16 %v4249
      %v4869 = vunpack.c.l.b16 %v4250
      %v4870 = vunpack.c.h.b16 %v4250
      %v4871 = vunpack.c.l.b16 %v4251
      %v4872 = vunpack.c.h.b16 %v4251
      %v4873 = vunpack.c.l.b16 %v4252
      %v4874 = vunpack.c.h.b16 %v4252
      %v4875 = vunpack.c.l.b16 %v4253
      %v4876 = vunpack.c.h.b16 %v4253
      %v4877 = vunpack.c.l.b16 %v4254
      %v4878 = vunpack.c.h.b16 %v4254
      %v4879 = vunpack.c.l.b16 %v4255
      %v4880 = vunpack.c.h.b16 %v4255
      %v4881 = vunpack.c.l.b16 %v4256
      %v4882 = vunpack.c.h.b16 %v4256
      %v4883 = vunpack.c.l.b16 %v4257
      %v4884 = vunpack.c.h.b16 %v4257
      %v4885 = vunpack.c.l.b16 %v4258
      %v4886 = vunpack.c.h.b16 %v4258
      %v4887 = vunpack.c.l.b16 %v4259
      %v4888 = vunpack.c.h.b16 %v4259
      %v4889 = vunpack.c.l.b16 %v4260
      %v4890 = vunpack.c.h.b16 %v4260
      %v4891 = vunpack.c.l.b16 %v4261
      %v4892 = vunpack.c.h.b16 %v4261
      %v4893 = vunpack.c.l.b16 %v4262
      %v4894 = vunpack.c.h.b16 %v4262
      %v4895 = vunpack.c.l.b16 %v4263
      %v4896 = vunpack.c.h.b16 %v4263
      %v4897 = vunpack.c.l.b16 %v4264
      %v4898 = vunpack.c.h.b16 %v4264
      %v4899 = vunpack.c.l.b16 %v4265
      %v4900 = vunpack.c.h.b16 %v4265
      %v4901 = vunpack.c.l.b16 %v4266
      %v4902 = vunpack.c.h.b16 %v4266
      %v4903 = vunpack.c.l.b16 %v4267
      %v4904 = vunpack.c.h.b16 %v4267
      %v4905 = vunpack.c.l.b16 %v4268
      %v4906 = vunpack.c.h.b16 %v4268
      %v4907 = vunpack.c.l.b16 %v4269
      %v4908 = vunpack.c.h.b16 %v4269
      %v4909 = vunpack.c.l.b16 %v4270
      %v4910 = vunpack.c.h.b16 %v4270
      %v4911 = vunpack.c.l.b16 %v4271
      %v4912 = vunpack.c.h.b16 %v4271
      %v4913 = vunpack.c.l.b16 %v4272
      %v4914 = vunpack.c.h.b16 %v4272
      %v4915 = vunpack.c.l.b16 %v4273
      %v4916 = vunpack.c.h.b16 %v4273
      %v4917 = vunpack.c.l.b16 %v4274
      %v4918 = vunpack.c.h.b16 %v4274
      %v4919 = vunpack.c.l.b16 %v4275
      %v4920 = vunpack.c.h.b16 %v4275
      %v4921 = vunpack.c.l.b16 %v4276
      %v4922 = vunpack.c.h.b16 %v4276
      %v4923 = vunpack.c.l.b16 %v4277
      %v4924 = vunpack.c.h.b16 %v4277
      %v4925 = vunpack.c.l.b16 %v4278
      %v4926 = vunpack.c.h.b16 %v4278
      %v4927 = vunpack.c.l.b16 %v4279
      %v4928 = vunpack.c.h.b16 %v4279
      %v4929 = vunpack.c.l.b16 %v4280
      %v4930 = vunpack.c.h.b16 %v4280
      %v4931 = vunpack.c.l.b16 %v4281
      %v4932 = vunpack.c.h.b16 %v4281
      %v4933 = vunpack.c.l.b16 %v4282
      %v4934 = vunpack.c.h.b16 %v4282
      %v4935 = vunpack.c.l.b16 %v4283
      %v4936 = vunpack.c.h.b16 %v4283
      %v4937 = vunpack.c.l.b16 %v4284
      %v4938 = vunpack.c.h.b16 %v4284
      %v4939 = vunpack.c.l.b16 %v4285
      %v4940 = vunpack.c.h.b16 %v4285
      %v4941 = vunpack.c.l.b16 %v4286
      %v4942 = vunpack.c.h.b16 %v4286
      %v4943 = vunpack.c.l.b16 %v4287
      %v4944 = vunpack.c.h.b16 %v4287
      %v4945 = vunpack.c.l.b16 %v4288
      %v4946 = vunpack.c.h.b16 %v4288
      %v4947 = vunpack.c.l.b16 %v4289
      %v4948 = vunpack.c.h.b16 %v4289
      %v4949 = vunpack.c.l.b16 %v4290
      %v4950 = vunpack.c.h.b16 %v4290
      %v4951 = vunpack.c.l.b16 %v4291
      %v4952 = vunpack.c.h.b16 %v4291
      %v4953 = vunpack.c.l.b16 %v4292
      %v4954 = vunpack.c.h.b16 %v4292
      %v4955 = vunpack.c.l.b16 %v4293
      %v4956 = vunpack.c.h.b16 %v4293
      %v4957 = vunpack.c.l.b16 %v4294
      %v4958 = vunpack.c.h.b16 %v4294
      %v4959 = vunpack.c.l.b16 %v4295
      %v4960 = vunpack.c.h.b16 %v4295
      %v4961 = vunpack.c.l.b16 %v4296
      %v4962 = vunpack.c.h.b16 %v4296
      %v4963 = vunpack.c.l.b16 %v4297
      %v4964 = vunpack.c.h.b16 %v4297
      %v4965 = vunpack.c.l.b16 %v4298
      %v4966 = vunpack.c.h.b16 %v4298
      %v4967 = vunpack.c.l.b16 %v4299
      %v4968 = vunpack.c.h.b16 %v4299
      %v4969 = vunpack.c.l.b16 %v4300
      %v4970 = vunpack.c.h.b16 %v4300
      %v4971 = vunpack.c.l.b16 %v4301
      %v4972 = vunpack.c.h.b16 %v4301
      %v4973 = vunpack.c.l.b16 %v4302
      %v4974 = vunpack.c.h.b16 %v4302
      %v4975 = vunpack.c.l.b16 %v4303
      %v4976 = vunpack.c.h.b16 %v4303
      %v4977 = vunpack.c.l.b16 %v4304
      %v4978 = vunpack.c.h.b16 %v4304
      %v4979 = vunpack.c.l.b16 %v4305
      %v4980 = vunpack.c.h.b16 %v4305
      %v4981 = vunpack.c.l.b16 %v4306
      %v4982 = vunpack.c.h.b16 %v4306
      %v4983 = vunpack.c.l.b16 %v4307
      %v4984 = vunpack.c.h.b16 %v4307
      %v4985 = vunpack.c.l.b16 %v4308
      %v4986 = vunpack.c.h.b16 %v4308
      %v4987 = vunpack.c.l.b16 %v4309
      %v4988 = vunpack.c.h.b16 %v4309
      %v4989 = vunpack.c.l.b16 %v4310
      %v4990 = vunpack.c.h.b16 %v4310
      %v4991 = vunpack.c.l.b16 %v4311
      %v4992 = vunpack.c.h.b16 %v4311
      %v4993 = vunpack.c.l.b16 %v4312
      %v4994 = vunpack.c.h.b16 %v4312
      %v4995 = vunpack.c.l.b16 %v4313
      %v4996 = vunpack.c.h.b16 %v4313
      %v4997 = vunpack.c.l.b16 %v4314
      %v4998 = vunpack.c.h.b16 %v4314
      %v4999 = vunpack.c.l.b16 %v4315
      %v5000 = vunpack.c.h.b16 %v4315
      %v5001 = vunpack.c.l.b16 %v4316
      %v5002 = vunpack.c.h.b16 %v4316
      %v5003 = vunpack.c.l.b16 %v4317
      %v5004 = vunpack.c.h.b16 %v4317
      %v5005 = vunpack.c.l.b16 %v4318
      %v5006 = vunpack.c.h.b16 %v4318
      %v5007 = vunpack.c.l.b16 %v4319
      %v5008 = vunpack.c.h.b16 %v4319
      %v5009 = vunpack.c.l.b16 %v4320
      %v5010 = vunpack.c.h.b16 %v4320
      %v5011 = vunpack.c.l.b16 %v4321
      %v5012 = vunpack.c.h.b16 %v4321
      %v5013 = vunpack.c.l.b16 %v4322
      %v5014 = vunpack.c.h.b16 %v4322
      %v5015 = vunpack.c.l.b16 %v4323
      %v5016 = vunpack.c.h.b16 %v4323
      %v5017 = vunpack.c.l.b16 %v4324
      %v5018 = vunpack.c.h.b16 %v4324
      %v5019 = vunpack.c.l.b16 %v4325
      %v5020 = vunpack.c.h.b16 %v4325
      %v5021 = vunpack.c.l.b16 %v4326
      %v5022 = vunpack.c.h.b16 %v4326
      %v5023 = vunpack.c.l.b16 %v4327
      %v5024 = vunpack.c.h.b16 %v4327
      %v5025 = vunpack.c.l.b16 %v4328
      %v5026 = vunpack.c.h.b16 %v4328
      %v5027 = vunpack.c.l.b16 %v4329
      %v5028 = vunpack.c.h.b16 %v4329
      %v5029 = vunpack.c.l.b16 %v4330
      %v5030 = vunpack.c.h.b16 %v4330
      %v5031 = vunpack.c.l.b16 %v4331
      %v5032 = vunpack.c.h.b16 %v4331
      %v5033 = vunpack.c.l.b16 %v4332
      %v5034 = vunpack.c.h.b16 %v4332
      %v5035 = vunpack.c.l.b16 %v4333
      %v5036 = vunpack.c.h.b16 %v4333
      %v5037 = vunpack.c.l.b16 %v4334
      %v5038 = vunpack.c.h.b16 %v4334
      %v5039 = vunpack.c.l.b16 %v4335
      %v5040 = vunpack.c.h.b16 %v4335
      %v5041 = vunpack.c.l.b16 %v4336
      %v5042 = vunpack.c.h.b16 %v4336
      %v5043 = vunpack.c.l.b16 %v4337
      %v5044 = vunpack.c.h.b16 %v4337
      %v5045 = vunpack.c.l.b16 %v4338
      %v5046 = vunpack.c.h.b16 %v4338
      %v5047 = vunpack.c.l.b16 %v4339
      %v5048 = vunpack.c.h.b16 %v4339
      %v5049 = vunpack.c.l.b16 %v4340
      %v5050 = vunpack.c.h.b16 %v4340
      %v5051 = vunpack.c.l.b16 %v4341
      %v5052 = vunpack.c.h.b16 %v4341
      %v5053 = vunpack.c.l.b16 %v4342
      %v5054 = vunpack.c.h.b16 %v4342
      %v5055 = vunpack.c.l.b16 %v4343
      %v5056 = vunpack.c.h.b16 %v4343
      %v5057 = vunpack.c.l.b16 %v4344
      %v5058 = vunpack.c.h.b16 %v4344
      %v5059 = vunpack.c.l.b16 %v4345
      %v5060 = vunpack.c.h.b16 %v4345
      %v5061 = vunpack.c.l.b16 %v4346
      %v5062 = vunpack.c.h.b16 %v4346
      %v5063 = vunpack.c.l.b16 %v4347
      %v5064 = vunpack.c.h.b16 %v4347
      %v5065 = vunpack.c.l.b16 %v4348
      %v5066 = vunpack.c.h.b16 %v4348
      %v5067 = vunpack.c.l.b16 %v4349
      %v5068 = vunpack.c.h.b16 %v4349
      %v5069 = vunpack.c.l.b16 %v4350
      %v5070 = vunpack.c.h.b16 %v4350
      %v5071 = vunpack.c.l.b16 %v4351
      %v5072 = vunpack.c.h.b16 %v4351
      %v5073 = vunpack.c.l.b16 %v4352
      %v5074 = vunpack.c.h.b16 %v4352
      %v5075 = vunpack.c.l.b16 %v4353
      %v5076 = vunpack.c.h.b16 %v4353
      %v5077 = vunpack.c.l.b16 %v4354
      %v5078 = vunpack.c.h.b16 %v4354
      %v5079 = vunpack.c.l.b16 %v4355
      %v5080 = vunpack.c.h.b16 %v4355
      %v5081 = vunpack.c.l.b16 %v4356
      %v5082 = vunpack.c.h.b16 %v4356
      %v5083 = vunpack.c.l.b16 %v4357
      %v5084 = vunpack.c.h.b16 %v4357
      %v5085 = vunpack.c.l.b16 %v4358
      %v5086 = vunpack.c.h.b16 %v4358
      %v5087 = vunpack.c.l.b16 %v4359
      %v5088 = vunpack.c.h.b16 %v4359
      %v5089 = vunpack.c.l.b16 %v4360
      %v5090 = vunpack.c.h.b16 %v4360
      %v5091 = vunpack.c.l.b16 %v4361
      %v5092 = vunpack.c.h.b16 %v4361
      %v5093 = vunpack.c.l.b16 %v4362
      %v5094 = vunpack.c.h.b16 %v4362
      %v5095 = vunpack.c.l.b16 %v4363
      %v5096 = vunpack.c.h.b16 %v4363
      %v5097 = vunpack.c.l.b16 %v4364
      %v5098 = vunpack.c.h.b16 %v4364
      %v5099 = vunpack.c.l.b16 %v4365
      %v5100 = vunpack.c.h.b16 %v4365
      %v5101 = vunpack.c.l.b16 %v4366
      %v5102 = vunpack.c.h.b16 %v4366
      %v5103 = vunpack.c.l.b16 %v4367
      %v5104 = vunpack.c.h.b16 %v4367
      %v5105 = vunpack.c.l.b16 %v4368
      %v5106 = vunpack.c.h.b16 %v4368
      %v5107 = vunpack.c.l.b16 %v4369
      %v5108 = vunpack.c.h.b16 %v4369
      %v5109 = vunpack.c.l.b16 %v4370
      %v5110 = vunpack.c.h.b16 %v4370
      %v5111 = vunpack.c.l.b16 %v4371
      %v5112 = vunpack.c.h.b16 %v4371
      %v5113 = vunpack.c.l.b16 %v4372
      %v5114 = vunpack.c.h.b16 %v4372
      %v5115 = vunpack.c.l.b16 %v4373
      %v5116 = vunpack.c.h.b16 %v4373
      %v5117 = vunpack.c.l.b16 %v4374
      %v5118 = vunpack.c.h.b16 %v4374
      %v5119 = vunpack.c.l.b16 %v4375
      %v5120 = vunpack.c.h.b16 %v4375
      %v5121 = vunpack.c.l.b16 %v4376
      %v5122 = vunpack.c.h.b16 %v4376
      %v5123 = vunpack.c.l.b16 %v4377
      %v5124 = vunpack.c.h.b16 %v4377
      %v5125 = vunpack.c.l.b16 %v4378
      %v5126 = vunpack.c.h.b16 %v4378
      %v5127 = vunpack.c.l.b16 %v4379
      %v5128 = vunpack.c.h.b16 %v4379
      %v5129 = vunpack.c.l.b16 %v4380
      %v5130 = vunpack.c.h.b16 %v4380
      %v5131 = vunpack.c.l.b16 %v4381
      %v5132 = vunpack.c.h.b16 %v4381
      %v5133 = vunpack.c.l.b16 %v4382
      %v5134 = vunpack.c.h.b16 %v4382
      %v5135 = vunpack.c.l.b16 %v4383
      %v5136 = vunpack.c.h.b16 %v4383
      %v5137 = vunpack.c.l.b16 %v4384
      %v5138 = vunpack.c.h.b16 %v4384
      %v5139 = vunpack.c.l.b16 %v4385
      %v5140 = vunpack.c.h.b16 %v4385
      %v5141 = vunpack.c.l.b16 %v4386
      %v5142 = vunpack.c.h.b16 %v4386
      %v5143 = vunpack.c.l.b16 %v4387
      %v5144 = vunpack.c.h.b16 %v4387
      %v5145 = vunpack.c.l.b16 %v4388
      %v5146 = vunpack.c.h.b16 %v4388
      %v5147 = vunpack.c.l.b16 %v4389
      %v5148 = vunpack.c.h.b16 %v4389
      %v5149 = vunpack.c.l.b16 %v4390
      %v5150 = vunpack.c.h.b16 %v4390
      %v5151 = vunpack.c.l.b16 %v4391
      %v5152 = vunpack.c.h.b16 %v4391
      %v5153 = vunpack.c.l.b16 %v4392
      %v5154 = vunpack.c.h.b16 %v4392
      %v5155 = vunpack.c.l.b16 %v4393
      %v5156 = vunpack.c.h.b16 %v4393
      %v5157 = vunpack.c.l.b16 %v4394
      %v5158 = vunpack.c.h.b16 %v4394
      %v5159 = vunpack.c.l.b16 %v4395
      %v5160 = vunpack.c.h.b16 %v4395
      %v5161 = vunpack.c.l.b16 %v4396
      %v5162 = vunpack.c.h.b16 %v4396
      %v5163 = vunpack.c.l.b16 %v4397
      %v5164 = vunpack.c.h.b16 %v4397
      %v5165 = vunpack.c.l.b16 %v4398
      %v5166 = vunpack.c.h.b16 %v4398
      %v5167 = vunpack.c.l.b16 %v4399
      %v5168 = vunpack.c.h.b16 %v4399
      %v5169 = vunpack.c.l.b16 %v4400
      %v5170 = vunpack.c.h.b16 %v4400
      %v5171 = vunpack.c.l.b16 %v4401
      %v5172 = vunpack.c.h.b16 %v4401
      %v5173 = vunpack.c.l.b16 %v4402
      %v5174 = vunpack.c.h.b16 %v4402
      %v5175 = vunpack.c.l.b16 %v4403
      %v5176 = vunpack.c.h.b16 %v4403
      %v5177 = vunpack.c.l.b16 %v4404
      %v5178 = vunpack.c.h.b16 %v4404
      %v5179 = vunpack.c.l.b16 %v4405
      %v5180 = vunpack.c.h.b16 %v4405
      %v5181 = vunpack.c.l.b16 %v4406
      %v5182 = vunpack.c.h.b16 %v4406
      %v5183 = vpack.c.b16 %v4679, %v4671
      %v5184 = vpack.c.b16 %v4680, %v4672
      %v5185 = vpack.c.b16 %v4681, %v4673
      %v5186 = vpack.c.b16 %v4682, %v4674
      %v5187 = vpack.c.b16 %v4683, %v4675
      %v5188 = vpack.c.b16 %v4684, %v4676
      %v5189 = vpack.c.b16 %v4685, %v4677
      %v5190 = vpack.c.b16 %v4686, %v4678
      %v5191 = vpack.c.b16 %v4695, %v4687
      %v5192 = vpack.c.b16 %v4696, %v4688
      %v5193 = vpack.c.b16 %v4697, %v4689
      %v5194 = vpack.c.b16 %v4698, %v4690
      %v5195 = vpack.c.b16 %v4699, %v4691
      %v5196 = vpack.c.b16 %v4700, %v4692
      %v5197 = vpack.c.b16 %v4701, %v4693
      %v5198 = vpack.c.b16 %v4702, %v4694
      %v5199 = vpack.c.b16 %v4711, %v4703
      %v5200 = vpack.c.b16 %v4712, %v4704
      %v5201 = vpack.c.b16 %v4713, %v4705
      %v5202 = vpack.c.b16 %v4714, %v4706
      %v5203 = vpack.c.b16 %v4715, %v4707
      %v5204 = vpack.c.b16 %v4716, %v4708
      %v5205 = vpack.c.b16 %v4717, %v4709
      %v5206 = vpack.c.b16 %v4718, %v4710
      %v5207 = vpack.c.b16 %v4727, %v4719
      %v5208 = vpack.c.b16 %v4728, %v4720
      %v5209 = vpack.c.b16 %v4729, %v4721
      %v5210 = vpack.c.b16 %v4730, %v4722
      %v5211 = vpack.c.b16 %v4731, %v4723
      %v5212 = vpack.c.b16 %v4732, %v4724
      %v5213 = vpack.c.b16 %v4733, %v4725
      %v5214 = vpack.c.b16 %v4734, %v4726
      %v5215 = vpack.c.b16 %v4743, %v4735
      %v5216 = vpack.c.b16 %v4744, %v4736
      %v5217 = vpack.c.b16 %v4745, %v4737
      %v5218 = vpack.c.b16 %v4746, %v4738
      %v5219 = vpack.c.b16 %v4747, %v4739
      %v5220 = vpack.c.b16 %v4748, %v4740
      %v5221 = vpack.c.b16 %v4749, %v4741
      %v5222 = vpack.c.b16 %v4750, %v4742
      %v5223 = vpack.c.b16 %v4759, %v4751
      %v5224 = vpack.c.b16 %v4760, %v4752
      %v5225 = vpack.c.b16 %v4761, %v4753
      %v5226 = vpack.c.b16 %v4762, %v4754
      %v5227 = vpack.c.b16 %v4763, %v4755
      %v5228 = vpack.c.b16 %v4764, %v4756
      %v5229 = vpack.c.b16 %v4765, %v4757
      %v5230 = vpack.c.b16 %v4766, %v4758
      %v5231 = vpack.c.b16 %v4775, %v4767
      %v5232 = vpack.c.b16 %v4776, %v4768
      %v5233 = vpack.c.b16 %v4777, %v4769
      %v5234 = vpack.c.b16 %v4778, %v4770
      %v5235 = vpack.c.b16 %v4779, %v4771
      %v5236 = vpack.c.b16 %v4780, %v4772
      %v5237 = vpack.c.b16 %v4781, %v4773
      %v5238 = vpack.c.b16 %v4782, %v4774
      %v5239 = vpack.c.b16 %v4791, %v4783
      %v5240 = vpack.c.b16 %v4792, %v4784
      %v5241 = vpack.c.b16 %v4793, %v4785
      %v5242 = vpack.c.b16 %v4794, %v4786
      %v5243 = vpack.c.b16 %v4795, %v4787
      %v5244 = vpack.c.b16 %v4796, %v4788
      %v5245 = vpack.c.b16 %v4797, %v4789
      %v5246 = vpack.c.b16 %v4798, %v4790
      %v5247 = vpack.c.b16 %v4807, %v4799
      %v5248 = vpack.c.b16 %v4808, %v4800
      %v5249 = vpack.c.b16 %v4809, %v4801
      %v5250 = vpack.c.b16 %v4810, %v4802
      %v5251 = vpack.c.b16 %v4811, %v4803
      %v5252 = vpack.c.b16 %v4812, %v4804
      %v5253 = vpack.c.b16 %v4813, %v4805
      %v5254 = vpack.c.b16 %v4814, %v4806
      %v5255 = vpack.c.b16 %v4823, %v4815
      %v5256 = vpack.c.b16 %v4824, %v4816
      %v5257 = vpack.c.b16 %v4825, %v4817
      %v5258 = vpack.c.b16 %v4826, %v4818
      %v5259 = vpack.c.b16 %v4827, %v4819
      %v5260 = vpack.c.b16 %v4828, %v4820
      %v5261 = vpack.c.b16 %v4829, %v4821
      %v5262 = vpack.c.b16 %v4830, %v4822
      %v5263 = vpack.c.b16 %v4839, %v4831
      %v5264 = vpack.c.b16 %v4840, %v4832
      %v5265 = vpack.c.b16 %v4841, %v4833
      %v5266 = vpack.c.b16 %v4842, %v4834
      %v5267 = vpack.c.b16 %v4843, %v4835
      %v5268 = vpack.c.b16 %v4844, %v4836
      %v5269 = vpack.c.b16 %v4845, %v4837
      %v5270 = vpack.c.b16 %v4846, %v4838
      %v5271 = vpack.c.b16 %v4855, %v4847
      %v5272 = vpack.c.b16 %v4856, %v4848
      %v5273 = vpack.c.b16 %v4857, %v4849
      %v5274 = vpack.c.b16 %v4858, %v4850
      %v5275 = vpack.c.b16 %v4859, %v4851
      %v5276 = vpack.c.b16 %v4860, %v4852
      %v5277 = vpack.c.b16 %v4861, %v4853
      %v5278 = vpack.c.b16 %v4862, %v4854
      %v5279 = vpack.c.b16 %v4871, %v4863
      %v5280 = vpack.c.b16 %v4872, %v4864
      %v5281 = vpack.c.b16 %v4873, %v4865
      %v5282 = vpack.c.b16 %v4874, %v4866
      %v5283 = vpack.c.b16 %v4875, %v4867
      %v5284 = vpack.c.b16 %v4876, %v4868
      %v5285 = vpack.c.b16 %v4877, %v4869
      %v5286 = vpack.c.b16 %v4878, %v4870
      %v5287 = vpack.c.b16 %v4887, %v4879
      %v5288 = vpack.c.b16 %v4888, %v4880
      %v5289 = vpack.c.b16 %v4889, %v4881
      %v5290 = vpack.c.b16 %v4890, %v4882
      %v5291 = vpack.c.b16 %v4891, %v4883
      %v5292 = vpack.c.b16 %v4892, %v4884
      %v5293 = vpack.c.b16 %v4893, %v4885
      %v5294 = vpack.c.b16 %v4894, %v4886
      %v5295 = vpack.c.b16 %v4903, %v4895
      %v5296 = vpack.c.b16 %v4904, %v4896
      %v5297 = vpack.c.b16 %v4905, %v4897
      %v5298 = vpack.c.b16 %v4906, %v4898
      %v5299 = vpack.c.b16 %v4907, %v4899
      %v5300 = vpack.c.b16 %v4908, %v4900
      %v5301 = vpack.c.b16 %v4909, %v4901
      %v5302 = vpack.c.b16 %v4910, %v4902
      %v5303 = vpack.c.b16 %v4919, %v4911
      %v5304 = vpack.c.b16 %v4920, %v4912
      %v5305 = vpack.c.b16 %v4921, %v4913
      %v5306 = vpack.c.b16 %v4922, %v4914
      %v5307 = vpack.c.b16 %v4923, %v4915
      %v5308 = vpack.c.b16 %v4924, %v4916
      %v5309 = vpack.c.b16 %v4925, %v4917
      %v5310 = vpack.c.b16 %v4926, %v4918
      %v5311 = vpack.c.b16 %v4935, %v4927
      %v5312 = vpack.c.b16 %v4936, %v4928
      %v5313 = vpack.c.b16 %v4937, %v4929
      %v5314 = vpack.c.b16 %v4938, %v4930
      %v5315 = vpack.c.b16 %v4939, %v4931
      %v5316 = vpack.c.b16 %v4940, %v4932
      %v5317 = vpack.c.b16 %v4941, %v4933
      %v5318 = vpack.c.b16 %v4942, %v4934
      %v5319 = vpack.c.b16 %v4951, %v4943
      %v5320 = vpack.c.b16 %v4952, %v4944
      %v5321 = vpack.c.b16 %v4953, %v4945
      %v5322 = vpack.c.b16 %v4954, %v4946
      %v5323 = vpack.c.b16 %v4955, %v4947
      %v5324 = vpack.c.b16 %v4956, %v4948
      %v5325 = vpack.c.b16 %v4957, %v4949
      %v5326 = vpack.c.b16 %v4958, %v4950
      %v5327 = vpack.c.b16 %v4967, %v4959
      %v5328 = vpack.c.b16 %v4968, %v4960
      %v5329 = vpack.c.b16 %v4969, %v4961
      %v5330 = vpack.c.b16 %v4970, %v4962
      %v5331 = vpack.c.b16 %v4971, %v4963
      %v5332 = vpack.c.b16 %v4972, %v4964
      %v5333 = vpack.c.b16 %v4973, %v4965
      %v5334 = vpack.c.b16 %v4974, %v4966
      %v5335 = vpack.c.b16 %v4983, %v4975
      %v5336 = vpack.c.b16 %v4984, %v4976
      %v5337 = vpack.c.b16 %v4985, %v4977
      %v5338 = vpack.c.b16 %v4986, %v4978
      %v5339 = vpack.c.b16 %v4987, %v4979
      %v5340 = vpack.c.b16 %v4988, %v4980
      %v5341 = vpack.c.b16 %v4989, %v4981
      %v5342 = vpack.c.b16 %v4990, %v4982
      %v5343 = vpack.c.b16 %v4999, %v4991
      %v5344 = vpack.c.b16 %v5000, %v4992
      %v5345 = vpack.c.b16 %v5001, %v4993
      %v5346 = vpack.c.b16 %v5002, %v4994
      %v5347 = vpack.c.b16 %v5003, %v4995
      %v5348 = vpack.c.b16 %v5004, %v4996
      %v5349 = vpack.c.b16 %v5005, %v4997
      %v5350 = vpack.c.b16 %v5006, %v4998
      %v5351 = vpack.c.b16 %v5015, %v5007
      %v5352 = vpack.c.b16 %v5016, %v5008
      %v5353 = vpack.c.b16 %v5017, %v5009
      %v5354 = vpack.c.b16 %v5018, %v5010
      %v5355 = vpack.c.b16 %v5019, %v5011
      %v5356 = vpack.c.b16 %v5020, %v5012
      %v5357 = vpack.c.b16 %v5021, %v5013
      %v5358 = vpack.c.b16 %v5022, %v5014
      %v5359 = vpack.c.b16 %v5031, %v5023
      %v5360 = vpack.c.b16 %v5032, %v5024
      %v5361 = vpack.c.b16 %v5033, %v5025
      %v5362 = vpack.c.b16 %v5034, %v5026
      %v5363 = vpack.c.b16 %v5035, %v5027
      %v5364 = vpack.c.b16 %v5036, %v5028
      %v5365 = vpack.c.b16 %v5037, %v5029
      %v5366 = vpack.c.b16 %v5038, %v5030
      %v5367 = vpack.c.b16 %v5047, %v5039
      %v5368 = vpack.c.b16 %v5048, %v5040
      %v5369 = vpack.c.b16 %v5049, %v5041
      %v5370 = vpack.c.b16 %v5050, %v5042
      %v5371 = vpack.c.b16 %v5051, %v5043
      %v5372 = vpack.c.b16 %v5052, %v5044
      %v5373 = vpack.c.b16 %v5053, %v5045
      %v5374 = vpack.c.b16 %v5054, %v5046
      %v5375 = vpack.c.b16 %v5063, %v5055
      %v5376 = vpack.c.b16 %v5064, %v5056
      %v5377 = vpack.c.b16 %v5065, %v5057
      %v5378 = vpack.c.b16 %v5066, %v5058
      %v5379 = vpack.c.b16 %v5067, %v5059
      %v5380 = vpack.c.b16 %v5068, %v5060
      %v5381 = vpack.c.b16 %v5069, %v5061
      %v5382 = vpack.c.b16 %v5070, %v5062
      %v5383 = vpack.c.b16 %v5079, %v5071
      %v5384 = vpack.c.b16 %v5080, %v5072
      %v5385 = vpack.c.b16 %v5081, %v5073
      %v5386 = vpack.c.b16 %v5082, %v5074
      %v5387 = vpack.c.b16 %v5083, %v5075
      %v5388 = vpack.c.b16 %v5084, %v5076
      %v5389 = vpack.c.b16 %v5085, %v5077
      %v5390 = vpack.c.b16 %v5086, %v5078
      %v5391 = vpack.c.b16 %v5095, %v5087
      %v5392 = vpack.c.b16 %v5096, %v5088
      %v5393 = vpack.c.b16 %v5097, %v5089
      %v5394 = vpack.c.b16 %v5098, %v5090
      %v5395 = vpack.c.b16 %v5099, %v5091
      %v5396 = vpack.c.b16 %v5100, %v5092
      %v5397 = vpack.c.b16 %v5101, %v5093
      %v5398 = vpack.c.b16 %v5102, %v5094
      %v5399 = vpack.c.b16 %v5111, %v5103
      %v5400 = vpack.c.b16 %v5112, %v5104
      %v5401 = vpack.c.b16 %v5113, %v5105
      %v5402 = vpack.c.b16 %v5114, %v5106
      %v5403 = vpack.c.b16 %v5115, %v5107
      %v5404 = vpack.c.b16 %v5116, %v5108
      %v5405 = vpack.c.b16 %v5117, %v5109
      %v5406 = vpack.c.b16 %v5118, %v5110
      %v5407 = vpack.c.b16 %v5127, %v5119
      %v5408 = vpack.c.b16 %v5128, %v5120
      %v5409 = vpack.c.b16 %v5129, %v5121
      %v5410 = vpack.c.b16 %v5130, %v5122
      %v5411 = vpack.c.b16 %v5131, %v5123
      %v5412 = vpack.c.b16 %v5132, %v5124
      %v5413 = vpack.c.b16 %v5133, %v5125
      %v5414 = vpack.c.b16 %v5134, %v5126
      %v5415 = vpack.c.b16 %v5143, %v5135
      %v5416 = vpack.c.b16 %v5144, %v5136
      %v5417 = vpack.c.b16 %v5145, %v5137
      %v5418 = vpack.c.b16 %v5146, %v5138
      %v5419 = vpack.c.b16 %v5147, %v5139
      %v5420 = vpack.c.b16 %v5148, %v5140
      %v5421 = vpack.c.b16 %v5149, %v5141
      %v5422 = vpack.c.b16 %v5150, %v5142
      %v5423 = vpack.c.b16 %v5159, %v5151
      %v5424 = vpack.c.b16 %v5160, %v5152
      %v5425 = vpack.c.b16 %v5161, %v5153
      %v5426 = vpack.c.b16 %v5162, %v5154
      %v5427 = vpack.c.b16 %v5163, %v5155
      %v5428 = vpack.c.b16 %v5164, %v5156
      %v5429 = vpack.c.b16 %v5165, %v5157
      %v5430 = vpack.c.b16 %v5166, %v5158
      %v5431 = vpack.c.b16 %v5175, %v5167
      %v5432 = vpack.c.b16 %v5176, %v5168
      %v5433 = vpack.c.b16 %v5177, %v5169
      %v5434 = vpack.c.b16 %v5178, %v5170
      %v5435 = vpack.c.b16 %v5179, %v5171
      %v5436 = vpack.c.b16 %v5180, %v5172
      %v5437 = vpack.c.b16 %v5181, %v5173
      %v5438 = vpack.c.b16 %v5182, %v5174
      %5695 = vmatprep.subr.bf16.mxu0 %v5184
      %5696 = vmatpush1.bf16.msra.mxu0 %v5183
      %5697 = vmatprep.subr.bf16.mxu0 %v5192
      %5698 = vmatpush1.bf16.msra.mxu0 %v5191
      %5699 = vmatprep.subr.bf16.mxu0 %v5200
      %5700 = vmatpush1.bf16.msra.mxu0 %v5199
      %5701 = vmatprep.subr.bf16.mxu0 %v5208
      %5702 = vmatpush1.bf16.msra.mxu0 %v5207
      %5703 = vmatprep.subr.bf16.mxu0 %v5216
      %5704 = vmatpush1.bf16.msra.mxu0 %v5215
      %5705 = vmatprep.subr.bf16.mxu0 %v5224
      %5706 = vmatpush1.bf16.msra.mxu0 %v5223
      %5707 = vmatprep.subr.bf16.mxu0 %v5232
      %5708 = vmatpush1.bf16.msra.mxu0 %v5231
      %5709 = vmatprep.subr.bf16.mxu0 %v5240
      %5710 = vmatpush1.bf16.msra.mxu0 %v5239
      %5711 = vmatprep.subr.bf16.mxu0 %v5248
      %5712 = vmatpush1.bf16.msra.mxu0 %v5247
      %5713 = vmatprep.subr.bf16.mxu0 %v5256
      %5714 = vmatpush1.bf16.msra.mxu0 %v5255
      %5715 = vmatprep.subr.bf16.mxu0 %v5264
      %5716 = vmatpush1.bf16.msra.mxu0 %v5263
      %5717 = vmatprep.subr.bf16.mxu0 %v5272
      %5718 = vmatpush1.bf16.msra.mxu0 %v5271
      %5719 = vmatprep.subr.bf16.mxu0 %v5280
      %5720 = vmatpush1.bf16.msra.mxu0 %v5279
      %5721 = vmatprep.subr.bf16.mxu0 %v5288
      %5722 = vmatpush1.bf16.msra.mxu0 %v5287
      %5723 = vmatprep.subr.bf16.mxu0 %v5296
      %5724 = vmatpush1.bf16.msra.mxu0 %v5295
      %5725 = vmatprep.subr.bf16.mxu0 %v5304
      %5726 = vmatpush1.bf16.msra.mxu0 %v5303
      %5727 = vmatprep.mubr.bf16.mxu0 %v3200
      %5728 = vmatmul.mubr.bf16.gmra.mrb[0].mxu0 %v3199
      %v5729 = vpop.f32.mrb[0].mxu0
      %v5730 = vadd.f32 %v4407, %v5729
      %v5731 = vpop.f32.mrb[0].mxu0
      %v5732 = vadd.f32 %v4408, %v5731
      %v5733 = vpop.f32.mrb[0].mxu0
      %v5734 = vpop.f32.mrb[0].mxu0
      %5735 = vdwg.mxu0
      %5736 = vmatprep.subr.bf16.mxu0 %v5312
      %5737 = vmatpush1.bf16.msra.mxu0 %v5311
      %5738 = vmatprep.subr.bf16.mxu0 %v5320
      %5739 = vmatpush1.bf16.msra.mxu0 %v5319
      %5740 = vmatprep.subr.bf16.mxu0 %v5328
      %5741 = vmatpush1.bf16.msra.mxu0 %v5327
      %5742 = vmatprep.subr.bf16.mxu0 %v5336
      %5743 = vmatpush1.bf16.msra.mxu0 %v5335
      %5744 = vmatprep.subr.bf16.mxu0 %v5344
      %5745 = vmatpush1.bf16.msra.mxu0 %v5343
      %5746 = vmatprep.subr.bf16.mxu0 %v5352
      %5747 = vmatpush1.bf16.msra.mxu0 %v5351
      %5748 = vmatprep.subr.bf16.mxu0 %v5360
      %5749 = vmatpush1.bf16.msra.mxu0 %v5359
      %5750 = vmatprep.subr.bf16.mxu0 %v5368
      %5751 = vmatpush1.bf16.msra.mxu0 %v5367
      %5752 = vmatprep.subr.bf16.mxu0 %v5376
      %5753 = vmatpush1.bf16.msra.mxu0 %v5375
      %5754 = vmatprep.subr.bf16.mxu0 %v5384
      %5755 = vmatpush1.bf16.msra.mxu0 %v5383
      %5756 = vmatprep.subr.bf16.mxu0 %v5392
      %5757 = vmatpush1.bf16.msra.mxu0 %v5391
      %5758 = vmatprep.subr.bf16.mxu0 %v5400
      %5759 = vmatpush1.bf16.msra.mxu0 %v5399
      %5760 = vmatprep.subr.bf16.mxu0 %v5408
      %5761 = vmatpush1.bf16.msra.mxu0 %v5407
      %5762 = vmatprep.subr.bf16.mxu0 %v5416
      %5763 = vmatpush1.bf16.msra.mxu0 %v5415
      %5764 = vmatprep.subr.bf16.mxu0 %v5424
      %5765 = vmatpush1.bf16.msra.mxu0 %v5423
      %5766 = vmatprep.subr.bf16.mxu0 %v5432
      %5767 = vmatpush1.bf16.msra.mxu0 %v5431
      %5768 = vmatprep.mubr.bf16.mxu0 %v3202
      %5769 = vmatmul.mubr.bf16.gmra.mrb[0].mxu0 %v3201
      %v5770 = vpop.f32.mrb[0].mxu0
      %v5771 = vadd.f32 %v5730, %v5770
      %v5772 = vpop.f32.mrb[0].mxu0
      %v5773 = vadd.f32 %v5732, %v5772
      %v5774 = vpop.f32.mrb[0].mxu0
      %v5775 = vpop.f32.mrb[0].mxu0
      %5776 = vdwg.mxu0
      %5777 = vmatprep.subr.bf16.mxu0 %v5186
      %5778 = vmatpush1.bf16.msra.mxu0 %v5185
      %5779 = vmatprep.subr.bf16.mxu0 %v5194
      %5780 = vmatpush1.bf16.msra.mxu0 %v5193
      %5781 = vmatprep.subr.bf16.mxu0 %v5202
      %5782 = vmatpush1.bf16.msra.mxu0 %v5201
      %5783 = vmatprep.subr.bf16.mxu0 %v5210
      %5784 = vmatpush1.bf16.msra.mxu0 %v5209
      %5785 = vmatprep.subr.bf16.mxu0 %v5218
      %5786 = vmatpush1.bf16.msra.mxu0 %v5217
      %5787 = vmatprep.subr.bf16.mxu0 %v5226
      %5788 = vmatpush1.bf16.msra.mxu0 %v5225
      %5789 = vmatprep.subr.bf16.mxu0 %v5234
      %5790 = vmatpush1.bf16.msra.mxu0 %v5233
      %5791 = vmatprep.subr.bf16.mxu0 %v5242
      %5792 = vmatpush1.bf16.msra.mxu0 %v5241
      %5793 = vmatprep.subr.bf16.mxu0 %v5250
      %5794 = vmatpush1.bf16.msra.mxu0 %v5249
      %5795 = vmatprep.subr.bf16.mxu0 %v5258
      %5796 = vmatpush1.bf16.msra.mxu0 %v5257
      %5797 = vmatprep.subr.bf16.mxu0 %v5266
      %5798 = vmatpush1.bf16.msra.mxu0 %v5265
      %5799 = vmatprep.subr.bf16.mxu0 %v5274
      %5800 = vmatpush1.bf16.msra.mxu0 %v5273
      %5801 = vmatprep.subr.bf16.mxu0 %v5282
      %5802 = vmatpush1.bf16.msra.mxu0 %v5281
      %5803 = vmatprep.subr.bf16.mxu0 %v5290
      %5804 = vmatpush1.bf16.msra.mxu0 %v5289
      %5805 = vmatprep.subr.bf16.mxu0 %v5298
      %5806 = vmatpush1.bf16.msra.mxu0 %v5297
      %5807 = vmatprep.subr.bf16.mxu0 %v5306
      %5808 = vmatpush1.bf16.msra.mxu0 %v5305
      %5809 = vmatprep.mubr.bf16.mxu0 %v3200
      %5810 = vmatmul.mubr.bf16.gmra.mrb[0].mxu0 %v3199
      %v5811 = vpop.f32.mrb[0].mxu0
      %v5812 = vadd.f32 %v4409, %v5811
      %v5813 = vpop.f32.mrb[0].mxu0
      %v5814 = vadd.f32 %v4410, %v5813
      %v5815 = vpop.f32.mrb[0].mxu0
      %v5816 = vpop.f32.mrb[0].mxu0
      %5817 = vdwg.mxu0
      %5818 = vmatprep.subr.bf16.mxu0 %v5314
      %5819 = vmatpush1.bf16.msra.mxu0 %v5313
      %5820 = vmatprep.subr.bf16.mxu0 %v5322
      %5821 = vmatpush1.bf16.msra.mxu0 %v5321
      %5822 = vmatprep.subr.bf16.mxu0 %v5330
      %5823 = vmatpush1.bf16.msra.mxu0 %v5329
      %5824 = vmatprep.subr.bf16.mxu0 %v5338
      %5825 = vmatpush1.bf16.msra.mxu0 %v5337
      %5826 = vmatprep.subr.bf16.mxu0 %v5346
      %5827 = vmatpush1.bf16.msra.mxu0 %v5345
      %5828 = vmatprep.subr.bf16.mxu0 %v5354
      %5829 = vmatpush1.bf16.msra.mxu0 %v5353
      %5830 = vmatprep.subr.bf16.mxu0 %v5362
      %5831 = vmatpush1.bf16.msra.mxu0 %v5361
      %5832 = vmatprep.subr.bf16.mxu0 %v5370
      %5833 = vmatpush1.bf16.msra.mxu0 %v5369
      %5834 = vmatprep.subr.bf16.mxu0 %v5378
      %5835 = vmatpush1.bf16.msra.mxu0 %v5377
      %5836 = vmatprep.subr.bf16.mxu0 %v5386
      %5837 = vmatpush1.bf16.msra.mxu0 %v5385
      %5838 = vmatprep.subr.bf16.mxu0 %v5394
      %5839 = vmatpush1.bf16.msra.mxu0 %v5393
      %5840 = vmatprep.subr.bf16.mxu0 %v5402
      %5841 = vmatpush1.bf16.msra.mxu0 %v5401
      %5842 = vmatprep.subr.bf16.mxu0 %v5410
      %5843 = vmatpush1.bf16.msra.mxu0 %v5409
      %5844 = vmatprep.subr.bf16.mxu0 %v5418
      %5845 = vmatpush1.bf16.msra.mxu0 %v5417
      %5846 = vmatprep.subr.bf16.mxu0 %v5426
      %5847 = vmatpush1.bf16.msra.mxu0 %v5425
      %5848 = vmatprep.subr.bf16.mxu0 %v5434
      %5849 = vmatpush1.bf16.msra.mxu0 %v5433
      %5850 = vmatprep.mubr.bf16.mxu0 %v3202
      %5851 = vmatmul.mubr.bf16.gmra.mrb[0].mxu0 %v3201
      %v5852 = vpop.f32.mrb[0].mxu0
      %v5853 = vadd.f32 %v5812, %v5852
      %v5854 = vpop.f32.mrb[0].mxu0
      %v5855 = vadd.f32 %v5814, %v5854
      %v5856 = vpop.f32.mrb[0].mxu0
      %v5857 = vpop.f32.mrb[0].mxu0
      %5858 = vdwg.mxu0
      %5859 = vmatprep.subr.bf16.mxu0 %v5188
      %5860 = vmatpush1.bf16.msra.mxu0 %v5187
      %5861 = vmatprep.subr.bf16.mxu0 %v5196
      %5862 = vmatpush1.bf16.msra.mxu0 %v5195
      %5863 = vmatprep.subr.bf16.mxu0 %v5204
      %5864 = vmatpush1.bf16.msra.mxu0 %v5203
      %5865 = vmatprep.subr.bf16.mxu0 %v5212
      %5866 = vmatpush1.bf16.msra.mxu0 %v5211
      %5867 = vmatprep.subr.bf16.mxu0 %v5220
      %5868 = vmatpush1.bf16.msra.mxu0 %v5219
      %5869 = vmatprep.subr.bf16.mxu0 %v5228
      %5870 = vmatpush1.bf16.msra.mxu0 %v5227
      %5871 = vmatprep.subr.bf16.mxu0 %v5236
      %5872 = vmatpush1.bf16.msra.mxu0 %v5235
      %5873 = vmatprep.subr.bf16.mxu0 %v5244
      %5874 = vmatpush1.bf16.msra.mxu0 %v5243
      %5875 = vmatprep.subr.bf16.mxu0 %v5252
      %5876 = vmatpush1.bf16.msra.mxu0 %v5251
      %5877 = vmatprep.subr.bf16.mxu0 %v5260
      %5878 = vmatpush1.bf16.msra.mxu0 %v5259
      %5879 = vmatprep.subr.bf16.mxu0 %v5268
      %5880 = vmatpush1.bf16.msra.mxu0 %v5267
      %5881 = vmatprep.subr.bf16.mxu0 %v5276
      %5882 = vmatpush1.bf16.msra.mxu0 %v5275
      %5883 = vmatprep.subr.bf16.mxu0 %v5284
      %5884 = vmatpush1.bf16.msra.mxu0 %v5283
      %5885 = vmatprep.subr.bf16.mxu0 %v5292
      %5886 = vmatpush1.bf16.msra.mxu0 %v5291
      %5887 = vmatprep.subr.bf16.mxu0 %v5300
      %5888 = vmatpush1.bf16.msra.mxu0 %v5299
      %5889 = vmatprep.subr.bf16.mxu0 %v5308
      %5890 = vmatpush1.bf16.msra.mxu0 %v5307
      %5891 = vmatprep.mubr.bf16.mxu0 %v3200
      %5892 = vmatmul.mubr.bf16.gmra.mrb[0].mxu0 %v3199
      %v5893 = vpop.f32.mrb[0].mxu0
      %v5894 = vadd.f32 %v4411, %v5893
      %v5895 = vpop.f32.mrb[0].mxu0
      %v5896 = vadd.f32 %v4412, %v5895
      %v5897 = vpop.f32.mrb[0].mxu0
      %v5898 = vpop.f32.mrb[0].mxu0
      %5899 = vdwg.mxu0
      %5900 = vmatprep.subr.bf16.mxu0 %v5316
      %5901 = vmatpush1.bf16.msra.mxu0 %v5315
      %5902 = vmatprep.subr.bf16.mxu0 %v5324
      %5903 = vmatpush1.bf16.msra.mxu0 %v5323
      %5904 = vmatprep.subr.bf16.mxu0 %v5332
      %5905 = vmatpush1.bf16.msra.mxu0 %v5331
      %5906 = vmatprep.subr.bf16.mxu0 %v5340
      %5907 = vmatpush1.bf16.msra.mxu0 %v5339
      %5908 = vmatprep.subr.bf16.mxu0 %v5348
      %5909 = vmatpush1.bf16.msra.mxu0 %v5347
      %5910 = vmatprep.subr.bf16.mxu0 %v5356
      %5911 = vmatpush1.bf16.msra.mxu0 %v5355
      %5912 = vmatprep.subr.bf16.mxu0 %v5364
      %5913 = vmatpush1.bf16.msra.mxu0 %v5363
      %5914 = vmatprep.subr.bf16.mxu0 %v5372
      %5915 = vmatpush1.bf16.msra.mxu0 %v5371
      %5916 = vmatprep.subr.bf16.mxu0 %v5380
      %5917 = vmatpush1.bf16.msra.mxu0 %v5379
      %5918 = vmatprep.subr.bf16.mxu0 %v5388
      %5919 = vmatpush1.bf16.msra.mxu0 %v5387
      %5920 = vmatprep.subr.bf16.mxu0 %v5396
      %5921 = vmatpush1.bf16.msra.mxu0 %v5395
      %5922 = vmatprep.subr.bf16.mxu0 %v5404
      %5923 = vmatpush1.bf16.msra.mxu0 %v5403
      %5924 = vmatprep.subr.bf16.mxu0 %v5412
      %5925 = vmatpush1.bf16.msra.mxu0 %v5411
      %5926 = vmatprep.subr.bf16.mxu0 %v5420
      %5927 = vmatpush1.bf16.msra.mxu0 %v5419
      %5928 = vmatprep.subr.bf16.mxu0 %v5428
      %5929 = vmatpush1.bf16.msra.mxu0 %v5427
      %5930 = vmatprep.subr.bf16.mxu0 %v5436
      %5931 = vmatpush1.bf16.msra.mxu0 %v5435
      %5932 = vmatprep.mubr.bf16.mxu0 %v3202
      %5933 = vmatmul.mubr.bf16.gmra.mrb[0].mxu0 %v3201
      %v5934 = vpop.f32.mrb[0].mxu0
      %v5935 = vadd.f32 %v5894, %v5934
      %v5936 = vpop.f32.mrb[0].mxu0
      %v5937 = vadd.f32 %v5896, %v5936
      %v5938 = vpop.f32.mrb[0].mxu0
      %v5939 = vpop.f32.mrb[0].mxu0
      %5940 = vdwg.mxu0
      %5941 = vmatprep.subr.bf16.mxu0 %v5190
      %5942 = vmatpush1.bf16.msra.mxu0 %v5189
      %5943 = vmatprep.subr.bf16.mxu0 %v5198
      %5944 = vmatpush1.bf16.msra.mxu0 %v5197
      %5945 = vmatprep.subr.bf16.mxu0 %v5206
      %5946 = vmatpush1.bf16.msra.mxu0 %v5205
      %5947 = vmatprep.subr.bf16.mxu0 %v5214
      %5948 = vmatpush1.bf16.msra.mxu0 %v5213
      %5949 = vmatprep.subr.bf16.mxu0 %v5222
      %5950 = vmatpush1.bf16.msra.mxu0 %v5221
      %5951 = vmatprep.subr.bf16.mxu0 %v5230
      %5952 = vmatpush1.bf16.msra.mxu0 %v5229
      %5953 = vmatprep.subr.bf16.mxu0 %v5238
      %5954 = vmatpush1.bf16.msra.mxu0 %v5237
      %5955 = vmatprep.subr.bf16.mxu0 %v5246
      %5956 = vmatpush1.bf16.msra.mxu0 %v5245
      %5957 = vmatprep.subr.bf16.mxu0 %v5254
      %5958 = vmatpush1.bf16.msra.mxu0 %v5253
      %5959 = vmatprep.subr.bf16.mxu0 %v5262
      %5960 = vmatpush1.bf16.msra.mxu0 %v5261
      %5961 = vmatprep.subr.bf16.mxu0 %v5270
      %5962 = vmatpush1.bf16.msra.mxu0 %v5269
      %5963 = vmatprep.subr.bf16.mxu0 %v5278
      %5964 = vmatpush1.bf16.msra.mxu0 %v5277
      %5965 = vmatprep.subr.bf16.mxu0 %v5286
      %5966 = vmatpush1.bf16.msra.mxu0 %v5285
      %5967 = vmatprep.subr.bf16.mxu0 %v5294
      %5968 = vmatpush1.bf16.msra.mxu0 %v5293
      %5969 = vmatprep.subr.bf16.mxu0 %v5302
      %5970 = vmatpush1.bf16.msra.mxu0 %v5301
      %5971 = vmatprep.subr.bf16.mxu0 %v5310
      %5972 = vmatpush1.bf16.msra.mxu0 %v5309
      %5973 = vmatprep.mubr.bf16.mxu0 %v3200
      %5974 = vmatmul.mubr.bf16.gmra.mrb[0].mxu0 %v3199
      %v5975 = vpop.f32.mrb[0].mxu0
      %v5976 = vadd.f32 %v4413, %v5975
      %v5977 = vpop.f32.mrb[0].mxu0
      %v5978 = vadd.f32 %v4414, %v5977
      %v5979 = vpop.f32.mrb[0].mxu0
      %v5980 = vpop.f32.mrb[0].mxu0
      %5981 = vdwg.mxu0
      %5982 = vmatprep.subr.bf16.mxu0 %v5318
      %5983 = vmatpush1.bf16.msra.mxu0 %v5317
      %5984 = vmatprep.subr.bf16.mxu0 %v5326
      %5985 = vmatpush1.bf16.msra.mxu0 %v5325
      %5986 = vmatprep.subr.bf16.mxu0 %v5334
      %5987 = vmatpush1.bf16.msra.mxu0 %v5333
      %5988 = vmatprep.subr.bf16.mxu0 %v5342
      %5989 = vmatpush1.bf16.msra.mxu0 %v5341
      %5990 = vmatprep.subr.bf16.mxu0 %v5350
      %5991 = vmatpush1.bf16.msra.mxu0 %v5349
      %5992 = vmatprep.subr.bf16.mxu0 %v5358
      %5993 = vmatpush1.bf16.msra.mxu0 %v5357
      %5994 = vmatprep.subr.bf16.mxu0 %v5366
      %5995 = vmatpush1.bf16.msra.mxu0 %v5365
      %5996 = vmatprep.subr.bf16.mxu0 %v5374
      %5997 = vmatpush1.bf16.msra.mxu0 %v5373
      %5998 = vmatprep.subr.bf16.mxu0 %v5382
      %5999 = vmatpush1.bf16.msra.mxu0 %v5381
      %6000 = vmatprep.subr.bf16.mxu0 %v5390
      %6001 = vmatpush1.bf16.msra.mxu0 %v5389
      %6002 = vmatprep.subr.bf16.mxu0 %v5398
      %6003 = vmatpush1.bf16.msra.mxu0 %v5397
      %6004 = vmatprep.subr.bf16.mxu0 %v5406
      %6005 = vmatpush1.bf16.msra.mxu0 %v5405
      %6006 = vmatprep.subr.bf16.mxu0 %v5414
      %6007 = vmatpush1.bf16.msra.mxu0 %v5413
      %6008 = vmatprep.subr.bf16.mxu0 %v5422
      %6009 = vmatpush1.bf16.msra.mxu0 %v5421
      %6010 = vmatprep.subr.bf16.mxu0 %v5430
      %6011 = vmatpush1.bf16.msra.mxu0 %v5429
      %6012 = vmatprep.subr.bf16.mxu0 %v5438
      %6013 = vmatpush1.bf16.msra.mxu0 %v5437
      %6014 = vmatprep.mubr.bf16.mxu0 %v3202
      %6015 = vmatmul.mubr.bf16.gmra.mrb[0].mxu0 %v3201
      %v6016 = vpop.f32.mrb[0].mxu0
      %v6017 = vadd.f32 %v5976, %v6016
      %v6018 = vpop.f32.mrb[0].mxu0
      %v6019 = vadd.f32 %v5978, %v6018
      %v6020 = vpop.f32.mrb[0].mxu0
      %v6021 = vpop.f32.mrb[0].mxu0
      %6022 = vdwg.mxu0
      %v6023 = vld [vmem:[#allocation4] sm:$0xff]
      %v6024 = vld [vmem:[#allocation4 + $0x8] sm:$0xff]
      %v6025 = vmul.f32 %v4022, 0.5
      %v6026 = vmul.f32 %v4024, 0.5
      %v6027 = vtanh.pop %v6025
      %v6028 = vtanh.pop %v6026
      %v6029 = vmul.f32 %v6027, 0.5
      %v6030 = vmul.f32 %v6028, 0.5
      %v6031 = vadd.f32 %v6029, 0.5
      %v6032 = vadd.f32 %v6030, 0.5
      %v6033 = vmul.f32 %v4063, 0.5
      %v6034 = vmul.f32 %v4065, 0.5
      %v6035 = vtanh.pop %v6033
      %v6036 = vtanh.pop %v6034
      %v6037 = vmul.f32 %v6035, 0.5
      %v6038 = vmul.f32 %v6036, 0.5
      %v6039 = vadd.f32 %v6037, 0.5
      %v6040 = vadd.f32 %v6038, 0.5
      %v6041 = vtanh.pop %v4104
      %v6042 = vtanh.pop %v4106
      %v6043 = vmul.f32 %v4145, 0.5
      %v6044 = vmul.f32 %v4147, 0.5
      %v6045 = vtanh.pop %v6043
      %v6046 = vtanh.pop %v6044
      %v6047 = vmul.f32 %v6045, 0.5
      %v6048 = vmul.f32 %v6046, 0.5
      %v6049 = vadd.f32 %v6047, 0.5
      %v6050 = vadd.f32 %v6048, 0.5
      %v6051 = vmul.f32 %v6039, %v6023
      %v6052 = vmul.f32 %v6040, %v6024
      %v6053 = vmul.f32 %v6031, %v6041
      %v6054 = vmul.f32 %v6032, %v6042
      %v6055 = vadd.f32 %v6051, %v6053
      %v6056 = vadd.f32 %v6052, %v6054
      %v6057 = vtanh.pop %v6055
      %v6058 = vtanh.pop %v6056
      %v6059 = vmul.f32 %v6049, %v6057
      %v6060 = vmul.f32 %v6050, %v6058
      %v6061 = vld [vmem:[#allocation5] sm:$0xff]
      %v6062 = vld [vmem:[#allocation5 + $0x8] sm:$0xff]
      %v6063 = vmul.f32 %v5771, 0.5
      %v6064 = vmul.f32 %v5773, 0.5
      %v6065 = vtanh.pop %v6063
      %v6066 = vtanh.pop %v6064
      %v6067 = vmul.f32 %v6065, 0.5
      %v6068 = vmul.f32 %v6066, 0.5
      %v6069 = vadd.f32 %v6067, 0.5
      %v6070 = vadd.f32 %v6068, 0.5
      %v6071 = vmul.f32 %v5853, 0.5
      %v6072 = vmul.f32 %v5855, 0.5
      %v6073 = vtanh.pop %v6071
      %v6074 = vtanh.pop %v6072
      %v6075 = vmul.f32 %v6073, 0.5
      %v6076 = vmul.f32 %v6074, 0.5
      %v6077 = vadd.f32 %v6075, 0.5
      %v6078 = vadd.f32 %v6076, 0.5
      %v6079 = vtanh.pop %v5935
      %v6080 = vtanh.pop %v5937
      %v6081 = vmul.f32 %v6017, 0.5
      %v6082 = vmul.f32 %v6019, 0.5
      %v6083 = vtanh.pop %v6081
      %v6084 = vtanh.pop %v6082
      %v6085 = vmul.f32 %v6083, 0.5
      %v6086 = vmul.f32 %v6084, 0.5
      %v6087 = vadd.f32 %v6085, 0.5
      %v6088 = vadd.f32 %v6086, 0.5
      %v6089 = vmul.f32 %v6077, %v6061
      %v6090 = vmul.f32 %v6078, %v6062
      %v6091 = vmul.f32 %v6069, %v6079
      %v6092 = vmul.f32 %v6070, %v6080
      %v6093 = vadd.f32 %v6089, %v6091
      %v6094 = vadd.f32 %v6090, %v6092
      %v6095 = vtanh.pop %v6093
      %v6096 = vtanh.pop %v6094
      %v6097 = vmul.f32 %v6087, %v6095
      %v6098 = vmul.f32 %v6088, %v6096
      %6099 = vst [vmem:[#allocation4] sm:$0xff] %v6055
      %6100 = vst [vmem:[#allocation4 + $0x8] sm:$0xff] %v6056
      %6101 = vst [vmem:[#allocation5] sm:$0xff] %v6093
      %6102 = vst [vmem:[#allocation5 + $0x8] sm:$0xff] %v6094
      %6103 = vst [vmem:[#allocation3] sm:$0xff] %v6059
      %6104 = vst [vmem:[#allocation3 + $0x8] sm:$0xff] %v6060
      %6105 = vst [vmem:[#allocation3 + $0x10] sm:$0xff] %v6097
      %6106 = vst [vmem:[#allocation3 + $0x18] sm:$0xff] %v6098
      %s6107 = sadd.s32 %s3193, 2
      %v6108 = vld [vmem:[#allocation3] sm:$0xff]
      %v6109 = vld [vmem:[#allocation3 + $0x8] sm:$0xff]
      %v6110 = vld [vmem:[#allocation3 + $0x10] sm:$0xff]
      %v6111 = vld [vmem:[#allocation3 + $0x18] sm:$0xff]
      %v6112 = vpack.c.bf16 %v6108, %v6108
      %v6113 = vpack.c.bf16 %v6109, %v6109
      %v6114 = vpack.c.bf16 %v6110, %v6110
      %v6115 = vpack.c.bf16 %v6111, %v6111
      %p6116 = scmp.lt.s32.totalorder %s6107, 99
      %s6117 = scalar_select %p6116, %s6107, 99
      %s6118 = smul.u32 %s6117, 8
      %v6119 = vld [vmem:[%s3] sm:$0xff]
      %v6120 = vld [vmem:[%s3 + $0x8] sm:$0xff]
      %v6121 = vld [vmem:[%s3 + $0x10] sm:$0xff]
      %v6122 = vld [vmem:[%s3 + $0x18] sm:$0xff]
      %v6123 = vld [vmem:[%s3 + $0x20] sm:$0xff]
      %v6124 = vld [vmem:[%s3 + $0x28] sm:$0xff]
      %v6125 = vld [vmem:[%s3 + $0x30] sm:$0xff]
      %v6126 = vld [vmem:[%s3 + $0x38] sm:$0xff]
      %v6127 = vld [vmem:[%s3 + $0x40] sm:$0xff]
      %v6128 = vld [vmem:[%s3 + $0x48] sm:$0xff]
      %v6129 = vld [vmem:[%s3 + $0x50] sm:$0xff]
      %v6130 = vld [vmem:[%s3 + $0x58] sm:$0xff]
      %v6131 = vld [vmem:[%s3 + $0x60] sm:$0xff]
      %v6132 = vld [vmem:[%s3 + $0x68] sm:$0xff]
      %v6133 = vld [vmem:[%s3 + $0x70] sm:$0xff]
      %v6134 = vld [vmem:[%s3 + $0x78] sm:$0xff]
      %v6135 = vld [vmem:[%s3 + $0x80] sm:$0xff]
      %v6136 = vld [vmem:[%s3 + $0x88] sm:$0xff]
      %v6137 = vld [vmem:[%s3 + $0x90] sm:$0xff]
      %v6138 = vld [vmem:[%s3 + $0x98] sm:$0xff]
      %v6139 = vld [vmem:[%s3 + $0xa0] sm:$0xff]
      %v6140 = vld [vmem:[%s3 + $0xa8] sm:$0xff]
      %v6141 = vld [vmem:[%s3 + $0xb0] sm:$0xff]
      %v6142 = vld [vmem:[%s3 + $0xb8] sm:$0xff]
      %v6143 = vld [vmem:[%s3 + $0xc0] sm:$0xff]
      %v6144 = vld [vmem:[%s3 + $0xc8] sm:$0xff]
      %v6145 = vld [vmem:[%s3 + $0xd0] sm:$0xff]
      %v6146 = vld [vmem:[%s3 + $0xd8] sm:$0xff]
      %v6147 = vld [vmem:[%s3 + $0xe0] sm:$0xff]
      %v6148 = vld [vmem:[%s3 + $0xe8] sm:$0xff]
      %v6149 = vld [vmem:[%s3 + $0xf0] sm:$0xff]
      %v6150 = vld [vmem:[%s3 + $0xf8] sm:$0xff]
      %v6151 = vld [vmem:[%s3 + $0x100] sm:$0xff]
      %v6152 = vld [vmem:[%s3 + $0x108] sm:$0xff]
      %v6153 = vld [vmem:[%s3 + $0x110] sm:$0xff]
      %v6154 = vld [vmem:[%s3 + $0x118] sm:$0xff]
      %v6155 = vld [vmem:[%s3 + $0x120] sm:$0xff]
      %v6156 = vld [vmem:[%s3 + $0x128] sm:$0xff]
      %v6157 = vld [vmem:[%s3 + $0x130] sm:$0xff]
      %v6158 = vld [vmem:[%s3 + $0x138] sm:$0xff]
      %v6159 = vld [vmem:[%s3 + $0x140] sm:$0xff]
      %v6160 = vld [vmem:[%s3 + $0x148] sm:$0xff]
      %v6161 = vld [vmem:[%s3 + $0x150] sm:$0xff]
      %v6162 = vld [vmem:[%s3 + $0x158] sm:$0xff]
      %v6163 = vld [vmem:[%s3 + $0x160] sm:$0xff]
      %v6164 = vld [vmem:[%s3 + $0x168] sm:$0xff]
      %v6165 = vld [vmem:[%s3 + $0x170] sm:$0xff]
      %v6166 = vld [vmem:[%s3 + $0x178] sm:$0xff]
      %v6167 = vld [vmem:[%s3 + $0x180] sm:$0xff]
      %v6168 = vld [vmem:[%s3 + $0x188] sm:$0xff]
      %v6169 = vld [vmem:[%s3 + $0x190] sm:$0xff]
      %v6170 = vld [vmem:[%s3 + $0x198] sm:$0xff]
      %v6171 = vld [vmem:[%s3 + $0x1a0] sm:$0xff]
      %v6172 = vld [vmem:[%s3 + $0x1a8] sm:$0xff]
      %v6173 = vld [vmem:[%s3 + $0x1b0] sm:$0xff]
      %v6174 = vld [vmem:[%s3 + $0x1b8] sm:$0xff]
      %v6175 = vld [vmem:[%s3 + $0x1c0] sm:$0xff]
      %v6176 = vld [vmem:[%s3 + $0x1c8] sm:$0xff]
      %v6177 = vld [vmem:[%s3 + $0x1d0] sm:$0xff]
      %v6178 = vld [vmem:[%s3 + $0x1d8] sm:$0xff]
      %v6179 = vld [vmem:[%s3 + $0x1e0] sm:$0xff]
      %v6180 = vld [vmem:[%s3 + $0x1e8] sm:$0xff]
      %v6181 = vld [vmem:[%s3 + $0x1f0] sm:$0xff]
      %v6182 = vld [vmem:[%s3 + $0x1f8] sm:$0xff]
      %v6183 = vld [vmem:[%s3 + $0x200] sm:$0xff]
      %v6184 = vld [vmem:[%s3 + $0x208] sm:$0xff]
      %v6185 = vld [vmem:[%s3 + $0x210] sm:$0xff]
      %v6186 = vld [vmem:[%s3 + $0x218] sm:$0xff]
      %v6187 = vld [vmem:[%s3 + $0x220] sm:$0xff]
      %v6188 = vld [vmem:[%s3 + $0x228] sm:$0xff]
      %v6189 = vld [vmem:[%s3 + $0x230] sm:$0xff]
      %v6190 = vld [vmem:[%s3 + $0x238] sm:$0xff]
      %v6191 = vld [vmem:[%s3 + $0x240] sm:$0xff]
      %v6192 = vld [vmem:[%s3 + $0x248] sm:$0xff]
      %v6193 = vld [vmem:[%s3 + $0x250] sm:$0xff]
      %v6194 = vld [vmem:[%s3 + $0x258] sm:$0xff]
      %v6195 = vld [vmem:[%s3 + $0x260] sm:$0xff]
      %v6196 = vld [vmem:[%s3 + $0x268] sm:$0xff]
      %v6197 = vld [vmem:[%s3 + $0x270] sm:$0xff]
      %v6198 = vld [vmem:[%s3 + $0x278] sm:$0xff]
      %v6199 = vld [vmem:[%s3 + $0x280] sm:$0xff]
      %v6200 = vld [vmem:[%s3 + $0x288] sm:$0xff]
      %v6201 = vld [vmem:[%s3 + $0x290] sm:$0xff]
      %v6202 = vld [vmem:[%s3 + $0x298] sm:$0xff]
      %v6203 = vld [vmem:[%s3 + $0x2a0] sm:$0xff]
      %v6204 = vld [vmem:[%s3 + $0x2a8] sm:$0xff]
      %v6205 = vld [vmem:[%s3 + $0x2b0] sm:$0xff]
      %v6206 = vld [vmem:[%s3 + $0x2b8] sm:$0xff]
      %v6207 = vld [vmem:[%s3 + $0x2c0] sm:$0xff]
      %v6208 = vld [vmem:[%s3 + $0x2c8] sm:$0xff]
      %v6209 = vld [vmem:[%s3 + $0x2d0] sm:$0xff]
      %v6210 = vld [vmem:[%s3 + $0x2d8] sm:$0xff]
      %v6211 = vld [vmem:[%s3 + $0x2e0] sm:$0xff]
      %v6212 = vld [vmem:[%s3 + $0x2e8] sm:$0xff]
      %v6213 = vld [vmem:[%s3 + $0x2f0] sm:$0xff]
      %v6214 = vld [vmem:[%s3 + $0x2f8] sm:$0xff]
      %v6215 = vld [vmem:[%s3 + $0x300] sm:$0xff]
      %v6216 = vld [vmem:[%s3 + $0x308] sm:$0xff]
      %v6217 = vld [vmem:[%s3 + $0x310] sm:$0xff]
      %v6218 = vld [vmem:[%s3 + $0x318] sm:$0xff]
      %v6219 = vld [vmem:[%s3 + $0x320] sm:$0xff]
      %v6220 = vld [vmem:[%s3 + $0x328] sm:$0xff]
      %v6221 = vld [vmem:[%s3 + $0x330] sm:$0xff]
      %v6222 = vld [vmem:[%s3 + $0x338] sm:$0xff]
      %v6223 = vld [vmem:[%s3 + $0x340] sm:$0xff]
      %v6224 = vld [vmem:[%s3 + $0x348] sm:$0xff]
      %v6225 = vld [vmem:[%s3 + $0x350] sm:$0xff]
      %v6226 = vld [vmem:[%s3 + $0x358] sm:$0xff]
      %v6227 = vld [vmem:[%s3 + $0x360] sm:$0xff]
      %v6228 = vld [vmem:[%s3 + $0x368] sm:$0xff]
      %v6229 = vld [vmem:[%s3 + $0x370] sm:$0xff]
      %v6230 = vld [vmem:[%s3 + $0x378] sm:$0xff]
      %v6231 = vld [vmem:[%s3 + $0x380] sm:$0xff]
      %v6232 = vld [vmem:[%s3 + $0x388] sm:$0xff]
      %v6233 = vld [vmem:[%s3 + $0x390] sm:$0xff]
      %v6234 = vld [vmem:[%s3 + $0x398] sm:$0xff]
      %v6235 = vld [vmem:[%s3 + $0x3a0] sm:$0xff]
      %v6236 = vld [vmem:[%s3 + $0x3a8] sm:$0xff]
      %v6237 = vld [vmem:[%s3 + $0x3b0] sm:$0xff]
      %v6238 = vld [vmem:[%s3 + $0x3b8] sm:$0xff]
      %v6239 = vld [vmem:[%s3 + $0x3c0] sm:$0xff]
      %v6240 = vld [vmem:[%s3 + $0x3c8] sm:$0xff]
      %v6241 = vld [vmem:[%s3 + $0x3d0] sm:$0xff]
      %v6242 = vld [vmem:[%s3 + $0x3d8] sm:$0xff]
      %v6243 = vld [vmem:[%s3 + $0x3e0] sm:$0xff]
      %v6244 = vld [vmem:[%s3 + $0x3e8] sm:$0xff]
      %v6245 = vld [vmem:[%s3 + $0x3f0] sm:$0xff]
      %v6246 = vld [vmem:[%s3 + $0x3f8] sm:$0xff]
      %s6247 = sshra.s32 %s6118, 3
      %s6248 = sand.u32 %s6118, 7
      %s6249 = smul.u32 %s6247, 8
      %s6250 = smul.addr %s6249, 8
      %s6251 = scalar_lea.vmem [#allocation2], %s6250
      %v6252 = vld [vmem:[%s6251] sm:$0xff]
      %v6253 = vld [vmem:[%s6251 + $0x8] sm:$0xff]
      %v6254 = vld [vmem:[%s6251 + $0x10] sm:$0xff]
      %v6255 = vld [vmem:[%s6251 + $0x18] sm:$0xff]
      %v6256 = vld [vmem:[%s6251 + $0x20] sm:$0xff]
      %v6257 = vld [vmem:[%s6251 + $0x28] sm:$0xff]
      %v6258 = vld [vmem:[%s6251 + $0x30] sm:$0xff]
      %v6259 = vld [vmem:[%s6251 + $0x38] sm:$0xff]
      %v6388 = vunpack.c.l.b16 %v6119
      %v6389 = vunpack.c.h.b16 %v6119
      %v6390 = vunpack.c.l.b16 %v6120
      %v6391 = vunpack.c.h.b16 %v6120
      %v6392 = vunpack.c.l.b16 %v6121
      %v6393 = vunpack.c.h.b16 %v6121
      %v6394 = vunpack.c.l.b16 %v6122
      %v6395 = vunpack.c.h.b16 %v6122
      %v6396 = vunpack.c.l.b16 %v6123
      %v6397 = vunpack.c.h.b16 %v6123
      %v6398 = vunpack.c.l.b16 %v6124
      %v6399 = vunpack.c.h.b16 %v6124
      %v6400 = vunpack.c.l.b16 %v6125
      %v6401 = vunpack.c.h.b16 %v6125
      %v6402 = vunpack.c.l.b16 %v6126
      %v6403 = vunpack.c.h.b16 %v6126
      %v6404 = vunpack.c.l.b16 %v6127
      %v6405 = vunpack.c.h.b16 %v6127
      %v6406 = vunpack.c.l.b16 %v6128
      %v6407 = vunpack.c.h.b16 %v6128
      %v6408 = vunpack.c.l.b16 %v6129
      %v6409 = vunpack.c.h.b16 %v6129
      %v6410 = vunpack.c.l.b16 %v6130
      %v6411 = vunpack.c.h.b16 %v6130
      %v6412 = vunpack.c.l.b16 %v6131
      %v6413 = vunpack.c.h.b16 %v6131
      %v6414 = vunpack.c.l.b16 %v6132
      %v6415 = vunpack.c.h.b16 %v6132
      %v6416 = vunpack.c.l.b16 %v6133
      %v6417 = vunpack.c.h.b16 %v6133
      %v6418 = vunpack.c.l.b16 %v6134
      %v6419 = vunpack.c.h.b16 %v6134
      %v6420 = vunpack.c.l.b16 %v6135
      %v6421 = vunpack.c.h.b16 %v6135
      %v6422 = vunpack.c.l.b16 %v6136
      %v6423 = vunpack.c.h.b16 %v6136
      %v6424 = vunpack.c.l.b16 %v6137
      %v6425 = vunpack.c.h.b16 %v6137
      %v6426 = vunpack.c.l.b16 %v6138
      %v6427 = vunpack.c.h.b16 %v6138
      %v6428 = vunpack.c.l.b16 %v6139
      %v6429 = vunpack.c.h.b16 %v6139
      %v6430 = vunpack.c.l.b16 %v6140
      %v6431 = vunpack.c.h.b16 %v6140
      %v6432 = vunpack.c.l.b16 %v6141
      %v6433 = vunpack.c.h.b16 %v6141
      %v6434 = vunpack.c.l.b16 %v6142
      %v6435 = vunpack.c.h.b16 %v6142
      %v6436 = vunpack.c.l.b16 %v6143
      %v6437 = vunpack.c.h.b16 %v6143
      %v6438 = vunpack.c.l.b16 %v6144
      %v6439 = vunpack.c.h.b16 %v6144
      %v6440 = vunpack.c.l.b16 %v6145
      %v6441 = vunpack.c.h.b16 %v6145
      %v6442 = vunpack.c.l.b16 %v6146
      %v6443 = vunpack.c.h.b16 %v6146
      %v6444 = vunpack.c.l.b16 %v6147
      %v6445 = vunpack.c.h.b16 %v6147
      %v6446 = vunpack.c.l.b16 %v6148
      %v6447 = vunpack.c.h.b16 %v6148
      %v6448 = vunpack.c.l.b16 %v6149
      %v6449 = vunpack.c.h.b16 %v6149
      %v6450 = vunpack.c.l.b16 %v6150
      %v6451 = vunpack.c.h.b16 %v6150
      %v6452 = vunpack.c.l.b16 %v6151
      %v6453 = vunpack.c.h.b16 %v6151
      %v6454 = vunpack.c.l.b16 %v6152
      %v6455 = vunpack.c.h.b16 %v6152
      %v6456 = vunpack.c.l.b16 %v6153
      %v6457 = vunpack.c.h.b16 %v6153
      %v6458 = vunpack.c.l.b16 %v6154
      %v6459 = vunpack.c.h.b16 %v6154
      %v6460 = vunpack.c.l.b16 %v6155
      %v6461 = vunpack.c.h.b16 %v6155
      %v6462 = vunpack.c.l.b16 %v6156
      %v6463 = vunpack.c.h.b16 %v6156
      %v6464 = vunpack.c.l.b16 %v6157
      %v6465 = vunpack.c.h.b16 %v6157
      %v6466 = vunpack.c.l.b16 %v6158
      %v6467 = vunpack.c.h.b16 %v6158
      %v6468 = vunpack.c.l.b16 %v6159
      %v6469 = vunpack.c.h.b16 %v6159
      %v6470 = vunpack.c.l.b16 %v6160
      %v6471 = vunpack.c.h.b16 %v6160
      %v6472 = vunpack.c.l.b16 %v6161
      %v6473 = vunpack.c.h.b16 %v6161
      %v6474 = vunpack.c.l.b16 %v6162
      %v6475 = vunpack.c.h.b16 %v6162
      %v6476 = vunpack.c.l.b16 %v6163
      %v6477 = vunpack.c.h.b16 %v6163
      %v6478 = vunpack.c.l.b16 %v6164
      %v6479 = vunpack.c.h.b16 %v6164
      %v6480 = vunpack.c.l.b16 %v6165
      %v6481 = vunpack.c.h.b16 %v6165
      %v6482 = vunpack.c.l.b16 %v6166
      %v6483 = vunpack.c.h.b16 %v6166
      %v6484 = vunpack.c.l.b16 %v6167
      %v6485 = vunpack.c.h.b16 %v6167
      %v6486 = vunpack.c.l.b16 %v6168
      %v6487 = vunpack.c.h.b16 %v6168
      %v6488 = vunpack.c.l.b16 %v6169
      %v6489 = vunpack.c.h.b16 %v6169
      %v6490 = vunpack.c.l.b16 %v6170
      %v6491 = vunpack.c.h.b16 %v6170
      %v6492 = vunpack.c.l.b16 %v6171
      %v6493 = vunpack.c.h.b16 %v6171
      %v6494 = vunpack.c.l.b16 %v6172
      %v6495 = vunpack.c.h.b16 %v6172
      %v6496 = vunpack.c.l.b16 %v6173
      %v6497 = vunpack.c.h.b16 %v6173
      %v6498 = vunpack.c.l.b16 %v6174
      %v6499 = vunpack.c.h.b16 %v6174
      %v6500 = vunpack.c.l.b16 %v6175
      %v6501 = vunpack.c.h.b16 %v6175
      %v6502 = vunpack.c.l.b16 %v6176
      %v6503 = vunpack.c.h.b16 %v6176
      %v6504 = vunpack.c.l.b16 %v6177
      %v6505 = vunpack.c.h.b16 %v6177
      %v6506 = vunpack.c.l.b16 %v6178
      %v6507 = vunpack.c.h.b16 %v6178
      %v6508 = vunpack.c.l.b16 %v6179
      %v6509 = vunpack.c.h.b16 %v6179
      %v6510 = vunpack.c.l.b16 %v6180
      %v6511 = vunpack.c.h.b16 %v6180
      %v6512 = vunpack.c.l.b16 %v6181
      %v6513 = vunpack.c.h.b16 %v6181
      %v6514 = vunpack.c.l.b16 %v6182
      %v6515 = vunpack.c.h.b16 %v6182
      %v6516 = vunpack.c.l.b16 %v6183
      %v6517 = vunpack.c.h.b16 %v6183
      %v6518 = vunpack.c.l.b16 %v6184
      %v6519 = vunpack.c.h.b16 %v6184
      %v6520 = vunpack.c.l.b16 %v6185
      %v6521 = vunpack.c.h.b16 %v6185
      %v6522 = vunpack.c.l.b16 %v6186
      %v6523 = vunpack.c.h.b16 %v6186
      %v6524 = vunpack.c.l.b16 %v6187
      %v6525 = vunpack.c.h.b16 %v6187
      %v6526 = vunpack.c.l.b16 %v6188
      %v6527 = vunpack.c.h.b16 %v6188
      %v6528 = vunpack.c.l.b16 %v6189
      %v6529 = vunpack.c.h.b16 %v6189
      %v6530 = vunpack.c.l.b16 %v6190
      %v6531 = vunpack.c.h.b16 %v6190
      %v6532 = vunpack.c.l.b16 %v6191
      %v6533 = vunpack.c.h.b16 %v6191
      %v6534 = vunpack.c.l.b16 %v6192
      %v6535 = vunpack.c.h.b16 %v6192
      %v6536 = vunpack.c.l.b16 %v6193
      %v6537 = vunpack.c.h.b16 %v6193
      %v6538 = vunpack.c.l.b16 %v6194
      %v6539 = vunpack.c.h.b16 %v6194
      %v6540 = vunpack.c.l.b16 %v6195
      %v6541 = vunpack.c.h.b16 %v6195
      %v6542 = vunpack.c.l.b16 %v6196
      %v6543 = vunpack.c.h.b16 %v6196
      %v6544 = vunpack.c.l.b16 %v6197
      %v6545 = vunpack.c.h.b16 %v6197
      %v6546 = vunpack.c.l.b16 %v6198
      %v6547 = vunpack.c.h.b16 %v6198
      %v6548 = vunpack.c.l.b16 %v6199
      %v6549 = vunpack.c.h.b16 %v6199
      %v6550 = vunpack.c.l.b16 %v6200
      %v6551 = vunpack.c.h.b16 %v6200
      %v6552 = vunpack.c.l.b16 %v6201
      %v6553 = vunpack.c.h.b16 %v6201
      %v6554 = vunpack.c.l.b16 %v6202
      %v6555 = vunpack.c.h.b16 %v6202
      %v6556 = vunpack.c.l.b16 %v6203
      %v6557 = vunpack.c.h.b16 %v6203
      %v6558 = vunpack.c.l.b16 %v6204
      %v6559 = vunpack.c.h.b16 %v6204
      %v6560 = vunpack.c.l.b16 %v6205
      %v6561 = vunpack.c.h.b16 %v6205
      %v6562 = vunpack.c.l.b16 %v6206
      %v6563 = vunpack.c.h.b16 %v6206
      %v6564 = vunpack.c.l.b16 %v6207
      %v6565 = vunpack.c.h.b16 %v6207
      %v6566 = vunpack.c.l.b16 %v6208
      %v6567 = vunpack.c.h.b16 %v6208
      %v6568 = vunpack.c.l.b16 %v6209
      %v6569 = vunpack.c.h.b16 %v6209
      %v6570 = vunpack.c.l.b16 %v6210
      %v6571 = vunpack.c.h.b16 %v6210
      %v6572 = vunpack.c.l.b16 %v6211
      %v6573 = vunpack.c.h.b16 %v6211
      %v6574 = vunpack.c.l.b16 %v6212
      %v6575 = vunpack.c.h.b16 %v6212
      %v6576 = vunpack.c.l.b16 %v6213
      %v6577 = vunpack.c.h.b16 %v6213
      %v6578 = vunpack.c.l.b16 %v6214
      %v6579 = vunpack.c.h.b16 %v6214
      %v6580 = vunpack.c.l.b16 %v6215
      %v6581 = vunpack.c.h.b16 %v6215
      %v6582 = vunpack.c.l.b16 %v6216
      %v6583 = vunpack.c.h.b16 %v6216
      %v6584 = vunpack.c.l.b16 %v6217
      %v6585 = vunpack.c.h.b16 %v6217
      %v6586 = vunpack.c.l.b16 %v6218
      %v6587 = vunpack.c.h.b16 %v6218
      %v6588 = vunpack.c.l.b16 %v6219
      %v6589 = vunpack.c.h.b16 %v6219
      %v6590 = vunpack.c.l.b16 %v6220
      %v6591 = vunpack.c.h.b16 %v6220
      %v6592 = vunpack.c.l.b16 %v6221
      %v6593 = vunpack.c.h.b16 %v6221
      %v6594 = vunpack.c.l.b16 %v6222
      %v6595 = vunpack.c.h.b16 %v6222
      %v6596 = vunpack.c.l.b16 %v6223
      %v6597 = vunpack.c.h.b16 %v6223
      %v6598 = vunpack.c.l.b16 %v6224
      %v6599 = vunpack.c.h.b16 %v6224
      %v6600 = vunpack.c.l.b16 %v6225
      %v6601 = vunpack.c.h.b16 %v6225
      %v6602 = vunpack.c.l.b16 %v6226
      %v6603 = vunpack.c.h.b16 %v6226
      %v6604 = vunpack.c.l.b16 %v6227
      %v6605 = vunpack.c.h.b16 %v6227
      %v6606 = vunpack.c.l.b16 %v6228
      %v6607 = vunpack.c.h.b16 %v6228
      %v6608 = vunpack.c.l.b16 %v6229
      %v6609 = vunpack.c.h.b16 %v6229
      %v6610 = vunpack.c.l.b16 %v6230
      %v6611 = vunpack.c.h.b16 %v6230
      %v6612 = vunpack.c.l.b16 %v6231
      %v6613 = vunpack.c.h.b16 %v6231
      %v6614 = vunpack.c.l.b16 %v6232
      %v6615 = vunpack.c.h.b16 %v6232
      %v6616 = vunpack.c.l.b16 %v6233
      %v6617 = vunpack.c.h.b16 %v6233
      %v6618 = vunpack.c.l.b16 %v6234
      %v6619 = vunpack.c.h.b16 %v6234
      %v6620 = vunpack.c.l.b16 %v6235
      %v6621 = vunpack.c.h.b16 %v6235
      %v6622 = vunpack.c.l.b16 %v6236
      %v6623 = vunpack.c.h.b16 %v6236
      %v6624 = vunpack.c.l.b16 %v6237
      %v6625 = vunpack.c.h.b16 %v6237
      %v6626 = vunpack.c.l.b16 %v6238
      %v6627 = vunpack.c.h.b16 %v6238
      %v6628 = vunpack.c.l.b16 %v6239
      %v6629 = vunpack.c.h.b16 %v6239
      %v6630 = vunpack.c.l.b16 %v6240
      %v6631 = vunpack.c.h.b16 %v6240
      %v6632 = vunpack.c.l.b16 %v6241
      %v6633 = vunpack.c.h.b16 %v6241
      %v6634 = vunpack.c.l.b16 %v6242
      %v6635 = vunpack.c.h.b16 %v6242
      %v6636 = vunpack.c.l.b16 %v6243
      %v6637 = vunpack.c.h.b16 %v6243
      %v6638 = vunpack.c.l.b16 %v6244
      %v6639 = vunpack.c.h.b16 %v6244
      %v6640 = vunpack.c.l.b16 %v6245
      %v6641 = vunpack.c.h.b16 %v6245
      %v6642 = vunpack.c.l.b16 %v6246
      %v6643 = vunpack.c.h.b16 %v6246
      %v6644 = vpack.c.b16 %v6396, %v6388
      %v6645 = vpack.c.b16 %v6397, %v6389
      %v6646 = vpack.c.b16 %v6398, %v6390
      %v6647 = vpack.c.b16 %v6399, %v6391
      %v6648 = vpack.c.b16 %v6400, %v6392
      %v6649 = vpack.c.b16 %v6401, %v6393
      %v6650 = vpack.c.b16 %v6402, %v6394
      %v6651 = vpack.c.b16 %v6403, %v6395
      %v6652 = vpack.c.b16 %v6412, %v6404
      %v6653 = vpack.c.b16 %v6413, %v6405
      %v6654 = vpack.c.b16 %v6414, %v6406
      %v6655 = vpack.c.b16 %v6415, %v6407
      %v6656 = vpack.c.b16 %v6416, %v6408
      %v6657 = vpack.c.b16 %v6417, %v6409
      %v6658 = vpack.c.b16 %v6418, %v6410
      %v6659 = vpack.c.b16 %v6419, %v6411
      %v6660 = vpack.c.b16 %v6428, %v6420
      %v6661 = vpack.c.b16 %v6429, %v6421
      %v6662 = vpack.c.b16 %v6430, %v6422
      %v6663 = vpack.c.b16 %v6431, %v6423
      %v6664 = vpack.c.b16 %v6432, %v6424
      %v6665 = vpack.c.b16 %v6433, %v6425
      %v6666 = vpack.c.b16 %v6434, %v6426
      %v6667 = vpack.c.b16 %v6435, %v6427
      %v6668 = vpack.c.b16 %v6444, %v6436
      %v6669 = vpack.c.b16 %v6445, %v6437
      %v6670 = vpack.c.b16 %v6446, %v6438
      %v6671 = vpack.c.b16 %v6447, %v6439
      %v6672 = vpack.c.b16 %v6448, %v6440
      %v6673 = vpack.c.b16 %v6449, %v6441
      %v6674 = vpack.c.b16 %v6450, %v6442
      %v6675 = vpack.c.b16 %v6451, %v6443
      %v6676 = vpack.c.b16 %v6460, %v6452
      %v6677 = vpack.c.b16 %v6461, %v6453
      %v6678 = vpack.c.b16 %v6462, %v6454
      %v6679 = vpack.c.b16 %v6463, %v6455
      %v6680 = vpack.c.b16 %v6464, %v6456
      %v6681 = vpack.c.b16 %v6465, %v6457
      %v6682 = vpack.c.b16 %v6466, %v6458
      %v6683 = vpack.c.b16 %v6467, %v6459
      %v6684 = vpack.c.b16 %v6476, %v6468
      %v6685 = vpack.c.b16 %v6477, %v6469
      %v6686 = vpack.c.b16 %v6478, %v6470
      %v6687 = vpack.c.b16 %v6479, %v6471
      %v6688 = vpack.c.b16 %v6480, %v6472
      %v6689 = vpack.c.b16 %v6481, %v6473
      %v6690 = vpack.c.b16 %v6482, %v6474
      %v6691 = vpack.c.b16 %v6483, %v6475
      %v6692 = vpack.c.b16 %v6492, %v6484
      %v6693 = vpack.c.b16 %v6493, %v6485
      %v6694 = vpack.c.b16 %v6494, %v6486
      %v6695 = vpack.c.b16 %v6495, %v6487
      %v6696 = vpack.c.b16 %v6496, %v6488
      %v6697 = vpack.c.b16 %v6497, %v6489
      %v6698 = vpack.c.b16 %v6498, %v6490
      %v6699 = vpack.c.b16 %v6499, %v6491
      %v6700 = vpack.c.b16 %v6508, %v6500
      %v6701 = vpack.c.b16 %v6509, %v6501
      %v6702 = vpack.c.b16 %v6510, %v6502
      %v6703 = vpack.c.b16 %v6511, %v6503
      %v6704 = vpack.c.b16 %v6512, %v6504
      %v6705 = vpack.c.b16 %v6513, %v6505
      %v6706 = vpack.c.b16 %v6514, %v6506
      %v6707 = vpack.c.b16 %v6515, %v6507
      %v6708 = vpack.c.b16 %v6524, %v6516
      %v6709 = vpack.c.b16 %v6525, %v6517
      %v6710 = vpack.c.b16 %v6526, %v6518
      %v6711 = vpack.c.b16 %v6527, %v6519
      %v6712 = vpack.c.b16 %v6528, %v6520
      %v6713 = vpack.c.b16 %v6529, %v6521
      %v6714 = vpack.c.b16 %v6530, %v6522
      %v6715 = vpack.c.b16 %v6531, %v6523
      %v6716 = vpack.c.b16 %v6540, %v6532
      %v6717 = vpack.c.b16 %v6541, %v6533
      %v6718 = vpack.c.b16 %v6542, %v6534
      %v6719 = vpack.c.b16 %v6543, %v6535
      %v6720 = vpack.c.b16 %v6544, %v6536
      %v6721 = vpack.c.b16 %v6545, %v6537
      %v6722 = vpack.c.b16 %v6546, %v6538
      %v6723 = vpack.c.b16 %v6547, %v6539
      %v6724 = vpack.c.b16 %v6556, %v6548
      %v6725 = vpack.c.b16 %v6557, %v6549
      %v6726 = vpack.c.b16 %v6558, %v6550
      %v6727 = vpack.c.b16 %v6559, %v6551
      %v6728 = vpack.c.b16 %v6560, %v6552
      %v6729 = vpack.c.b16 %v6561, %v6553
      %v6730 = vpack.c.b16 %v6562, %v6554
      %v6731 = vpack.c.b16 %v6563, %v6555
      %v6732 = vpack.c.b16 %v6572, %v6564
      %v6733 = vpack.c.b16 %v6573, %v6565
      %v6734 = vpack.c.b16 %v6574, %v6566
      %v6735 = vpack.c.b16 %v6575, %v6567
      %v6736 = vpack.c.b16 %v6576, %v6568
      %v6737 = vpack.c.b16 %v6577, %v6569
      %v6738 = vpack.c.b16 %v6578, %v6570
      %v6739 = vpack.c.b16 %v6579, %v6571
      %v6740 = vpack.c.b16 %v6588, %v6580
      %v6741 = vpack.c.b16 %v6589, %v6581
      %v6742 = vpack.c.b16 %v6590, %v6582
      %v6743 = vpack.c.b16 %v6591, %v6583
      %v6744 = vpack.c.b16 %v6592, %v6584
      %v6745 = vpack.c.b16 %v6593, %v6585
      %v6746 = vpack.c.b16 %v6594, %v6586
      %v6747 = vpack.c.b16 %v6595, %v6587
      %v6748 = vpack.c.b16 %v6604, %v6596
      %v6749 = vpack.c.b16 %v6605, %v6597
      %v6750 = vpack.c.b16 %v6606, %v6598
      %v6751 = vpack.c.b16 %v6607, %v6599
      %v6752 = vpack.c.b16 %v6608, %v6600
      %v6753 = vpack.c.b16 %v6609, %v6601
      %v6754 = vpack.c.b16 %v6610, %v6602
      %v6755 = vpack.c.b16 %v6611, %v6603
      %v6756 = vpack.c.b16 %v6620, %v6612
      %v6757 = vpack.c.b16 %v6621, %v6613
      %v6758 = vpack.c.b16 %v6622, %v6614
      %v6759 = vpack.c.b16 %v6623, %v6615
      %v6760 = vpack.c.b16 %v6624, %v6616
      %v6761 = vpack.c.b16 %v6625, %v6617
      %v6762 = vpack.c.b16 %v6626, %v6618
      %v6763 = vpack.c.b16 %v6627, %v6619
      %v6764 = vpack.c.b16 %v6636, %v6628
      %v6765 = vpack.c.b16 %v6637, %v6629
      %v6766 = vpack.c.b16 %v6638, %v6630
      %v6767 = vpack.c.b16 %v6639, %v6631
      %v6768 = vpack.c.b16 %v6640, %v6632
      %v6769 = vpack.c.b16 %v6641, %v6633
      %v6770 = vpack.c.b16 %v6642, %v6634
      %v6771 = vpack.c.b16 %v6643, %v6635
      %6900 = vmatprep.subr.bf16.mxu0 %v6645
      %6901 = vmatpush1.bf16.msra.mxu0 %v6644
      %6902 = vmatprep.subr.bf16.mxu0 %v6653
      %6903 = vmatpush1.bf16.msra.mxu0 %v6652
      %6904 = vmatprep.subr.bf16.mxu0 %v6661
      %6905 = vmatpush1.bf16.msra.mxu0 %v6660
      %6906 = vmatprep.subr.bf16.mxu0 %v6669
      %6907 = vmatpush1.bf16.msra.mxu0 %v6668
      %6908 = vmatprep.subr.bf16.mxu0 %v6677
      %6909 = vmatpush1.bf16.msra.mxu0 %v6676
      %6910 = vmatprep.subr.bf16.mxu0 %v6685
      %6911 = vmatpush1.bf16.msra.mxu0 %v6684
      %6912 = vmatprep.subr.bf16.mxu0 %v6693
      %6913 = vmatpush1.bf16.msra.mxu0 %v6692
      %6914 = vmatprep.subr.bf16.mxu0 %v6701
      %6915 = vmatpush1.bf16.msra.mxu0 %v6700
      %6916 = vmatprep.subr.bf16.mxu0 %v6709
      %6917 = vmatpush1.bf16.msra.mxu0 %v6708
      %6918 = vmatprep.subr.bf16.mxu0 %v6717
      %6919 = vmatpush1.bf16.msra.mxu0 %v6716
      %6920 = vmatprep.subr.bf16.mxu0 %v6725
      %6921 = vmatpush1.bf16.msra.mxu0 %v6724
      %6922 = vmatprep.subr.bf16.mxu0 %v6733
      %6923 = vmatpush1.bf16.msra.mxu0 %v6732
      %6924 = vmatprep.subr.bf16.mxu0 %v6741
      %6925 = vmatpush1.bf16.msra.mxu0 %v6740
      %6926 = vmatprep.subr.bf16.mxu0 %v6749
      %6927 = vmatpush1.bf16.msra.mxu0 %v6748
      %6928 = vmatprep.subr.bf16.mxu0 %v6757
      %6929 = vmatpush1.bf16.msra.mxu0 %v6756
      %6930 = vmatprep.subr.bf16.mxu0 %v6765
      %6931 = vmatpush1.bf16.msra.mxu0 %v6764
      %6932 = vmatprep.mubr.bf16.mxu0 %v6113
      %6933 = vmatmul.mubr.bf16.gmra.mrb[0].mxu0 %v6112
      %v6934 = vpop.f32.mrb[0].mxu0
      %v6935 = vadd.f32 %v6252, %v6934
      %v6936 = vpop.f32.mrb[0].mxu0
      %v6937 = vadd.f32 %v6253, %v6936
      %v6938 = vpop.f32.mrb[0].mxu0
      %v6939 = vpop.f32.mrb[0].mxu0
      %6940 = vdwg.mxu0
      %6941 = vmatprep.subr.bf16.mxu0 %v6647
      %6942 = vmatpush1.bf16.msra.mxu0 %v6646
      %6943 = vmatprep.subr.bf16.mxu0 %v6655
      %6944 = vmatpush1.bf16.msra.mxu0 %v6654
      %6945 = vmatprep.subr.bf16.mxu0 %v6663
      %6946 = vmatpush1.bf16.msra.mxu0 %v6662
      %6947 = vmatprep.subr.bf16.mxu0 %v6671
      %6948 = vmatpush1.bf16.msra.mxu0 %v6670
      %6949 = vmatprep.subr.bf16.mxu0 %v6679
      %6950 = vmatpush1.bf16.msra.mxu0 %v6678
      %6951 = vmatprep.subr.bf16.mxu0 %v6687
      %6952 = vmatpush1.bf16.msra.mxu0 %v6686
      %6953 = vmatprep.subr.bf16.mxu0 %v6695
      %6954 = vmatpush1.bf16.msra.mxu0 %v6694
      %6955 = vmatprep.subr.bf16.mxu0 %v6703
      %6956 = vmatpush1.bf16.msra.mxu0 %v6702
      %6957 = vmatprep.subr.bf16.mxu0 %v6711
      %6958 = vmatpush1.bf16.msra.mxu0 %v6710
      %6959 = vmatprep.subr.bf16.mxu0 %v6719
      %6960 = vmatpush1.bf16.msra.mxu0 %v6718
      %6961 = vmatprep.subr.bf16.mxu0 %v6727
      %6962 = vmatpush1.bf16.msra.mxu0 %v6726
      %6963 = vmatprep.subr.bf16.mxu0 %v6735
      %6964 = vmatpush1.bf16.msra.mxu0 %v6734
      %6965 = vmatprep.subr.bf16.mxu0 %v6743
      %6966 = vmatpush1.bf16.msra.mxu0 %v6742
      %6967 = vmatprep.subr.bf16.mxu0 %v6751
      %6968 = vmatpush1.bf16.msra.mxu0 %v6750
      %6969 = vmatprep.subr.bf16.mxu0 %v6759
      %6970 = vmatpush1.bf16.msra.mxu0 %v6758
      %6971 = vmatprep.subr.bf16.mxu0 %v6767
      %6972 = vmatpush1.bf16.msra.mxu0 %v6766
      %6973 = vmatprep.mubr.bf16.mxu0 %v6113
      %6974 = vmatmul.mubr.bf16.gmra.mrb[0].mxu0 %v6112
      %v6975 = vpop.f32.mrb[0].mxu0
      %v6976 = vadd.f32 %v6254, %v6975
      %v6977 = vpop.f32.mrb[0].mxu0
      %v6978 = vadd.f32 %v6255, %v6977
      %v6979 = vpop.f32.mrb[0].mxu0
      %v6980 = vpop.f32.mrb[0].mxu0
      %6981 = vdwg.mxu0
      %6982 = vmatprep.subr.bf16.mxu0 %v6649
      %6983 = vmatpush1.bf16.msra.mxu0 %v6648
      %6984 = vmatprep.subr.bf16.mxu0 %v6657
      %6985 = vmatpush1.bf16.msra.mxu0 %v6656
      %6986 = vmatprep.subr.bf16.mxu0 %v6665
      %6987 = vmatpush1.bf16.msra.mxu0 %v6664
      %6988 = vmatprep.subr.bf16.mxu0 %v6673
      %6989 = vmatpush1.bf16.msra.mxu0 %v6672
      %6990 = vmatprep.subr.bf16.mxu0 %v6681
      %6991 = vmatpush1.bf16.msra.mxu0 %v6680
      %6992 = vmatprep.subr.bf16.mxu0 %v6689
      %6993 = vmatpush1.bf16.msra.mxu0 %v6688
      %6994 = vmatprep.subr.bf16.mxu0 %v6697
      %6995 = vmatpush1.bf16.msra.mxu0 %v6696
      %6996 = vmatprep.subr.bf16.mxu0 %v6705
      %6997 = vmatpush1.bf16.msra.mxu0 %v6704
      %6998 = vmatprep.subr.bf16.mxu0 %v6713
      %6999 = vmatpush1.bf16.msra.mxu0 %v6712
      %7000 = vmatprep.subr.bf16.mxu0 %v6721
      %7001 = vmatpush1.bf16.msra.mxu0 %v6720
      %7002 = vmatprep.subr.bf16.mxu0 %v6729
      %7003 = vmatpush1.bf16.msra.mxu0 %v6728
      %7004 = vmatprep.subr.bf16.mxu0 %v6737
      %7005 = vmatpush1.bf16.msra.mxu0 %v6736
      %7006 = vmatprep.subr.bf16.mxu0 %v6745
      %7007 = vmatpush1.bf16.msra.mxu0 %v6744
      %7008 = vmatprep.subr.bf16.mxu0 %v6753
      %7009 = vmatpush1.bf16.msra.mxu0 %v6752
      %7010 = vmatprep.subr.bf16.mxu0 %v6761
      %7011 = vmatpush1.bf16.msra.mxu0 %v6760
      %7012 = vmatprep.subr.bf16.mxu0 %v6769
      %7013 = vmatpush1.bf16.msra.mxu0 %v6768
      %7014 = vmatprep.mubr.bf16.mxu0 %v6113
      %7015 = vmatmul.mubr.bf16.gmra.mrb[0].mxu0 %v6112
      %v7016 = vpop.f32.mrb[0].mxu0
      %v7017 = vadd.f32 %v6256, %v7016
      %v7018 = vpop.f32.mrb[0].mxu0
      %v7019 = vadd.f32 %v6257, %v7018
      %v7020 = vpop.f32.mrb[0].mxu0
      %v7021 = vpop.f32.mrb[0].mxu0
      %7022 = vdwg.mxu0
      %7023 = vmatprep.subr.bf16.mxu0 %v6651
      %7024 = vmatpush1.bf16.msra.mxu0 %v6650
      %7025 = vmatprep.subr.bf16.mxu0 %v6659
      %7026 = vmatpush1.bf16.msra.mxu0 %v6658
      %7027 = vmatprep.subr.bf16.mxu0 %v6667
      %7028 = vmatpush1.bf16.msra.mxu0 %v6666
      %7029 = vmatprep.subr.bf16.mxu0 %v6675
      %7030 = vmatpush1.bf16.msra.mxu0 %v6674
      %7031 = vmatprep.subr.bf16.mxu0 %v6683
      %7032 = vmatpush1.bf16.msra.mxu0 %v6682
      %7033 = vmatprep.subr.bf16.mxu0 %v6691
      %7034 = vmatpush1.bf16.msra.mxu0 %v6690
      %7035 = vmatprep.subr.bf16.mxu0 %v6699
      %7036 = vmatpush1.bf16.msra.mxu0 %v6698
      %7037 = vmatprep.subr.bf16.mxu0 %v6707
      %7038 = vmatpush1.bf16.msra.mxu0 %v6706
      %7039 = vmatprep.subr.bf16.mxu0 %v6715
      %7040 = vmatpush1.bf16.msra.mxu0 %v6714
      %7041 = vmatprep.subr.bf16.mxu0 %v6723
      %7042 = vmatpush1.bf16.msra.mxu0 %v6722
      %7043 = vmatprep.subr.bf16.mxu0 %v6731
      %7044 = vmatpush1.bf16.msra.mxu0 %v6730
      %7045 = vmatprep.subr.bf16.mxu0 %v6739
      %7046 = vmatpush1.bf16.msra.mxu0 %v6738
      %7047 = vmatprep.subr.bf16.mxu0 %v6747
      %7048 = vmatpush1.bf16.msra.mxu0 %v6746
      %7049 = vmatprep.subr.bf16.mxu0 %v6755
      %7050 = vmatpush1.bf16.msra.mxu0 %v6754
      %7051 = vmatprep.subr.bf16.mxu0 %v6763
      %7052 = vmatpush1.bf16.msra.mxu0 %v6762
      %7053 = vmatprep.subr.bf16.mxu0 %v6771
      %7054 = vmatpush1.bf16.msra.mxu0 %v6770
      %7055 = vmatprep.mubr.bf16.mxu0 %v6113
      %7056 = vmatmul.mubr.bf16.gmra.mrb[0].mxu0 %v6112
      %v7057 = vpop.f32.mrb[0].mxu0
      %v7058 = vadd.f32 %v6258, %v7057
      %v7059 = vpop.f32.mrb[0].mxu0
      %v7060 = vadd.f32 %v6259, %v7059
      %v7061 = vpop.f32.mrb[0].mxu0
      %v7062 = vpop.f32.mrb[0].mxu0
      %7063 = vdwg.mxu0
      %v7064 = vld [vmem:[#allocation7] sm:$0xff]
      %v7065 = vld [vmem:[#allocation7 + $0x8] sm:$0xff]
      %v7066 = vld [vmem:[#allocation7 + $0x10] sm:$0xff]
      %v7067 = vld [vmem:[#allocation7 + $0x18] sm:$0xff]
      %v7068 = vld [vmem:[#allocation7 + $0x20] sm:$0xff]
      %v7069 = vld [vmem:[#allocation7 + $0x28] sm:$0xff]
      %v7070 = vld [vmem:[#allocation7 + $0x30] sm:$0xff]
      %v7071 = vld [vmem:[#allocation7 + $0x38] sm:$0xff]
      %v7072 = vld [vmem:[#allocation7 + $0x40] sm:$0xff]
      %v7073 = vld [vmem:[#allocation7 + $0x48] sm:$0xff]
      %v7074 = vld [vmem:[#allocation7 + $0x50] sm:$0xff]
      %v7075 = vld [vmem:[#allocation7 + $0x58] sm:$0xff]
      %v7076 = vld [vmem:[#allocation7 + $0x60] sm:$0xff]
      %v7077 = vld [vmem:[#allocation7 + $0x68] sm:$0xff]
      %v7078 = vld [vmem:[#allocation7 + $0x70] sm:$0xff]
      %v7079 = vld [vmem:[#allocation7 + $0x78] sm:$0xff]
      %v7080 = vld [vmem:[#allocation7 + $0x80] sm:$0xff]
      %v7081 = vld [vmem:[#allocation7 + $0x88] sm:$0xff]
      %v7082 = vld [vmem:[#allocation7 + $0x90] sm:$0xff]
      %v7083 = vld [vmem:[#allocation7 + $0x98] sm:$0xff]
      %v7084 = vld [vmem:[#allocation7 + $0xa0] sm:$0xff]
      %v7085 = vld [vmem:[#allocation7 + $0xa8] sm:$0xff]
      %v7086 = vld [vmem:[#allocation7 + $0xb0] sm:$0xff]
      %v7087 = vld [vmem:[#allocation7 + $0xb8] sm:$0xff]
      %v7088 = vld [vmem:[#allocation7 + $0xc0] sm:$0xff]
      %v7089 = vld [vmem:[#allocation7 + $0xc8] sm:$0xff]
      %v7090 = vld [vmem:[#allocation7 + $0xd0] sm:$0xff]
      %v7091 = vld [vmem:[#allocation7 + $0xd8] sm:$0xff]
      %v7092 = vld [vmem:[#allocation7 + $0xe0] sm:$0xff]
      %v7093 = vld [vmem:[#allocation7 + $0xe8] sm:$0xff]
      %v7094 = vld [vmem:[#allocation7 + $0xf0] sm:$0xff]
      %v7095 = vld [vmem:[#allocation7 + $0xf8] sm:$0xff]
      %v7096 = vld [vmem:[#allocation7 + $0x100] sm:$0xff]
      %v7097 = vld [vmem:[#allocation7 + $0x108] sm:$0xff]
      %v7098 = vld [vmem:[#allocation7 + $0x110] sm:$0xff]
      %v7099 = vld [vmem:[#allocation7 + $0x118] sm:$0xff]
      %v7100 = vld [vmem:[#allocation7 + $0x120] sm:$0xff]
      %v7101 = vld [vmem:[#allocation7 + $0x128] sm:$0xff]
      %v7102 = vld [vmem:[#allocation7 + $0x130] sm:$0xff]
      %v7103 = vld [vmem:[#allocation7 + $0x138] sm:$0xff]
      %v7104 = vld [vmem:[#allocation7 + $0x140] sm:$0xff]
      %v7105 = vld [vmem:[#allocation7 + $0x148] sm:$0xff]
      %v7106 = vld [vmem:[#allocation7 + $0x150] sm:$0xff]
      %v7107 = vld [vmem:[#allocation7 + $0x158] sm:$0xff]
      %v7108 = vld [vmem:[#allocation7 + $0x160] sm:$0xff]
      %v7109 = vld [vmem:[#allocation7 + $0x168] sm:$0xff]
      %v7110 = vld [vmem:[#allocation7 + $0x170] sm:$0xff]
      %v7111 = vld [vmem:[#allocation7 + $0x178] sm:$0xff]
      %v7112 = vld [vmem:[#allocation7 + $0x180] sm:$0xff]
      %v7113 = vld [vmem:[#allocation7 + $0x188] sm:$0xff]
      %v7114 = vld [vmem:[#allocation7 + $0x190] sm:$0xff]
      %v7115 = vld [vmem:[#allocation7 + $0x198] sm:$0xff]
      %v7116 = vld [vmem:[#allocation7 + $0x1a0] sm:$0xff]
      %v7117 = vld [vmem:[#allocation7 + $0x1a8] sm:$0xff]
      %v7118 = vld [vmem:[#allocation7 + $0x1b0] sm:$0xff]
      %v7119 = vld [vmem:[#allocation7 + $0x1b8] sm:$0xff]
      %v7120 = vld [vmem:[#allocation7 + $0x1c0] sm:$0xff]
      %v7121 = vld [vmem:[#allocation7 + $0x1c8] sm:$0xff]
      %v7122 = vld [vmem:[#allocation7 + $0x1d0] sm:$0xff]
      %v7123 = vld [vmem:[#allocation7 + $0x1d8] sm:$0xff]
      %v7124 = vld [vmem:[#allocation7 + $0x1e0] sm:$0xff]
      %v7125 = vld [vmem:[#allocation7 + $0x1e8] sm:$0xff]
      %v7126 = vld [vmem:[#allocation7 + $0x1f0] sm:$0xff]
      %v7127 = vld [vmem:[#allocation7 + $0x1f8] sm:$0xff]
      %v7128 = vld [vmem:[#allocation7 + $0x200] sm:$0xff]
      %v7129 = vld [vmem:[#allocation7 + $0x208] sm:$0xff]
      %v7130 = vld [vmem:[#allocation7 + $0x210] sm:$0xff]
      %v7131 = vld [vmem:[#allocation7 + $0x218] sm:$0xff]
      %v7132 = vld [vmem:[#allocation7 + $0x220] sm:$0xff]
      %v7133 = vld [vmem:[#allocation7 + $0x228] sm:$0xff]
      %v7134 = vld [vmem:[#allocation7 + $0x230] sm:$0xff]
      %v7135 = vld [vmem:[#allocation7 + $0x238] sm:$0xff]
      %v7136 = vld [vmem:[#allocation7 + $0x240] sm:$0xff]
      %v7137 = vld [vmem:[#allocation7 + $0x248] sm:$0xff]
      %v7138 = vld [vmem:[#allocation7 + $0x250] sm:$0xff]
      %v7139 = vld [vmem:[#allocation7 + $0x258] sm:$0xff]
      %v7140 = vld [vmem:[#allocation7 + $0x260] sm:$0xff]
      %v7141 = vld [vmem:[#allocation7 + $0x268] sm:$0xff]
      %v7142 = vld [vmem:[#allocation7 + $0x270] sm:$0xff]
      %v7143 = vld [vmem:[#allocation7 + $0x278] sm:$0xff]
      %v7144 = vld [vmem:[#allocation7 + $0x280] sm:$0xff]
      %v7145 = vld [vmem:[#allocation7 + $0x288] sm:$0xff]
      %v7146 = vld [vmem:[#allocation7 + $0x290] sm:$0xff]
      %v7147 = vld [vmem:[#allocation7 + $0x298] sm:$0xff]
      %v7148 = vld [vmem:[#allocation7 + $0x2a0] sm:$0xff]
      %v7149 = vld [vmem:[#allocation7 + $0x2a8] sm:$0xff]
      %v7150 = vld [vmem:[#allocation7 + $0x2b0] sm:$0xff]
      %v7151 = vld [vmem:[#allocation7 + $0x2b8] sm:$0xff]
      %v7152 = vld [vmem:[#allocation7 + $0x2c0] sm:$0xff]
      %v7153 = vld [vmem:[#allocation7 + $0x2c8] sm:$0xff]
      %v7154 = vld [vmem:[#allocation7 + $0x2d0] sm:$0xff]
      %v7155 = vld [vmem:[#allocation7 + $0x2d8] sm:$0xff]
      %v7156 = vld [vmem:[#allocation7 + $0x2e0] sm:$0xff]
      %v7157 = vld [vmem:[#allocation7 + $0x2e8] sm:$0xff]
      %v7158 = vld [vmem:[#allocation7 + $0x2f0] sm:$0xff]
      %v7159 = vld [vmem:[#allocation7 + $0x2f8] sm:$0xff]
      %v7160 = vld [vmem:[#allocation7 + $0x300] sm:$0xff]
      %v7161 = vld [vmem:[#allocation7 + $0x308] sm:$0xff]
      %v7162 = vld [vmem:[#allocation7 + $0x310] sm:$0xff]
      %v7163 = vld [vmem:[#allocation7 + $0x318] sm:$0xff]
      %v7164 = vld [vmem:[#allocation7 + $0x320] sm:$0xff]
      %v7165 = vld [vmem:[#allocation7 + $0x328] sm:$0xff]
      %v7166 = vld [vmem:[#allocation7 + $0x330] sm:$0xff]
      %v7167 = vld [vmem:[#allocation7 + $0x338] sm:$0xff]
      %v7168 = vld [vmem:[#allocation7 + $0x340] sm:$0xff]
      %v7169 = vld [vmem:[#allocation7 + $0x348] sm:$0xff]
      %v7170 = vld [vmem:[#allocation7 + $0x350] sm:$0xff]
      %v7171 = vld [vmem:[#allocation7 + $0x358] sm:$0xff]
      %v7172 = vld [vmem:[#allocation7 + $0x360] sm:$0xff]
      %v7173 = vld [vmem:[#allocation7 + $0x368] sm:$0xff]
      %v7174 = vld [vmem:[#allocation7 + $0x370] sm:$0xff]
      %v7175 = vld [vmem:[#allocation7 + $0x378] sm:$0xff]
      %v7176 = vld [vmem:[#allocation7 + $0x380] sm:$0xff]
      %v7177 = vld [vmem:[#allocation7 + $0x388] sm:$0xff]
      %v7178 = vld [vmem:[#allocation7 + $0x390] sm:$0xff]
      %v7179 = vld [vmem:[#allocation7 + $0x398] sm:$0xff]
      %v7180 = vld [vmem:[#allocation7 + $0x3a0] sm:$0xff]
      %v7181 = vld [vmem:[#allocation7 + $0x3a8] sm:$0xff]
      %v7182 = vld [vmem:[#allocation7 + $0x3b0] sm:$0xff]
      %v7183 = vld [vmem:[#allocation7 + $0x3b8] sm:$0xff]
      %v7184 = vld [vmem:[#allocation7 + $0x3c0] sm:$0xff]
      %v7185 = vld [vmem:[#allocation7 + $0x3c8] sm:$0xff]
      %v7186 = vld [vmem:[#allocation7 + $0x3d0] sm:$0xff]
      %v7187 = vld [vmem:[#allocation7 + $0x3d8] sm:$0xff]
      %v7188 = vld [vmem:[#allocation7 + $0x3e0] sm:$0xff]
      %v7189 = vld [vmem:[#allocation7 + $0x3e8] sm:$0xff]
      %v7190 = vld [vmem:[#allocation7 + $0x3f0] sm:$0xff]
      %v7191 = vld [vmem:[#allocation7 + $0x3f8] sm:$0xff]
      %v7192 = vld [vmem:[#allocation7 + $0x400] sm:$0xff]
      %v7193 = vld [vmem:[#allocation7 + $0x408] sm:$0xff]
      %v7194 = vld [vmem:[#allocation7 + $0x410] sm:$0xff]
      %v7195 = vld [vmem:[#allocation7 + $0x418] sm:$0xff]
      %v7196 = vld [vmem:[#allocation7 + $0x420] sm:$0xff]
      %v7197 = vld [vmem:[#allocation7 + $0x428] sm:$0xff]
      %v7198 = vld [vmem:[#allocation7 + $0x430] sm:$0xff]
      %v7199 = vld [vmem:[#allocation7 + $0x438] sm:$0xff]
      %v7200 = vld [vmem:[#allocation7 + $0x440] sm:$0xff]
      %v7201 = vld [vmem:[#allocation7 + $0x448] sm:$0xff]
      %v7202 = vld [vmem:[#allocation7 + $0x450] sm:$0xff]
      %v7203 = vld [vmem:[#allocation7 + $0x458] sm:$0xff]
      %v7204 = vld [vmem:[#allocation7 + $0x460] sm:$0xff]
      %v7205 = vld [vmem:[#allocation7 + $0x468] sm:$0xff]
      %v7206 = vld [vmem:[#allocation7 + $0x470] sm:$0xff]
      %v7207 = vld [vmem:[#allocation7 + $0x478] sm:$0xff]
      %v7208 = vld [vmem:[#allocation7 + $0x480] sm:$0xff]
      %v7209 = vld [vmem:[#allocation7 + $0x488] sm:$0xff]
      %v7210 = vld [vmem:[#allocation7 + $0x490] sm:$0xff]
      %v7211 = vld [vmem:[#allocation7 + $0x498] sm:$0xff]
      %v7212 = vld [vmem:[#allocation7 + $0x4a0] sm:$0xff]
      %v7213 = vld [vmem:[#allocation7 + $0x4a8] sm:$0xff]
      %v7214 = vld [vmem:[#allocation7 + $0x4b0] sm:$0xff]
      %v7215 = vld [vmem:[#allocation7 + $0x4b8] sm:$0xff]
      %v7216 = vld [vmem:[#allocation7 + $0x4c0] sm:$0xff]
      %v7217 = vld [vmem:[#allocation7 + $0x4c8] sm:$0xff]
      %v7218 = vld [vmem:[#allocation7 + $0x4d0] sm:$0xff]
      %v7219 = vld [vmem:[#allocation7 + $0x4d8] sm:$0xff]
      %v7220 = vld [vmem:[#allocation7 + $0x4e0] sm:$0xff]
      %v7221 = vld [vmem:[#allocation7 + $0x4e8] sm:$0xff]
      %v7222 = vld [vmem:[#allocation7 + $0x4f0] sm:$0xff]
      %v7223 = vld [vmem:[#allocation7 + $0x4f8] sm:$0xff]
      %v7224 = vld [vmem:[#allocation7 + $0x500] sm:$0xff]
      %v7225 = vld [vmem:[#allocation7 + $0x508] sm:$0xff]
      %v7226 = vld [vmem:[#allocation7 + $0x510] sm:$0xff]
      %v7227 = vld [vmem:[#allocation7 + $0x518] sm:$0xff]
      %v7228 = vld [vmem:[#allocation7 + $0x520] sm:$0xff]
      %v7229 = vld [vmem:[#allocation7 + $0x528] sm:$0xff]
      %v7230 = vld [vmem:[#allocation7 + $0x530] sm:$0xff]
      %v7231 = vld [vmem:[#allocation7 + $0x538] sm:$0xff]
      %v7232 = vld [vmem:[#allocation7 + $0x540] sm:$0xff]
      %v7233 = vld [vmem:[#allocation7 + $0x548] sm:$0xff]
      %v7234 = vld [vmem:[#allocation7 + $0x550] sm:$0xff]
      %v7235 = vld [vmem:[#allocation7 + $0x558] sm:$0xff]
      %v7236 = vld [vmem:[#allocation7 + $0x560] sm:$0xff]
      %v7237 = vld [vmem:[#allocation7 + $0x568] sm:$0xff]
      %v7238 = vld [vmem:[#allocation7 + $0x570] sm:$0xff]
      %v7239 = vld [vmem:[#allocation7 + $0x578] sm:$0xff]
      %v7240 = vld [vmem:[#allocation7 + $0x580] sm:$0xff]
      %v7241 = vld [vmem:[#allocation7 + $0x588] sm:$0xff]
      %v7242 = vld [vmem:[#allocation7 + $0x590] sm:$0xff]
      %v7243 = vld [vmem:[#allocation7 + $0x598] sm:$0xff]
      %v7244 = vld [vmem:[#allocation7 + $0x5a0] sm:$0xff]
      %v7245 = vld [vmem:[#allocation7 + $0x5a8] sm:$0xff]
      %v7246 = vld [vmem:[#allocation7 + $0x5b0] sm:$0xff]
      %v7247 = vld [vmem:[#allocation7 + $0x5b8] sm:$0xff]
      %v7248 = vld [vmem:[#allocation7 + $0x5c0] sm:$0xff]
      %v7249 = vld [vmem:[#allocation7 + $0x5c8] sm:$0xff]
      %v7250 = vld [vmem:[#allocation7 + $0x5d0] sm:$0xff]
      %v7251 = vld [vmem:[#allocation7 + $0x5d8] sm:$0xff]
      %v7252 = vld [vmem:[#allocation7 + $0x5e0] sm:$0xff]
      %v7253 = vld [vmem:[#allocation7 + $0x5e8] sm:$0xff]
      %v7254 = vld [vmem:[#allocation7 + $0x5f0] sm:$0xff]
      %v7255 = vld [vmem:[#allocation7 + $0x5f8] sm:$0xff]
      %v7256 = vld [vmem:[#allocation7 + $0x600] sm:$0xff]
      %v7257 = vld [vmem:[#allocation7 + $0x608] sm:$0xff]
      %v7258 = vld [vmem:[#allocation7 + $0x610] sm:$0xff]
      %v7259 = vld [vmem:[#allocation7 + $0x618] sm:$0xff]
      %v7260 = vld [vmem:[#allocation7 + $0x620] sm:$0xff]
      %v7261 = vld [vmem:[#allocation7 + $0x628] sm:$0xff]
      %v7262 = vld [vmem:[#allocation7 + $0x630] sm:$0xff]
      %v7263 = vld [vmem:[#allocation7 + $0x638] sm:$0xff]
      %v7264 = vld [vmem:[#allocation7 + $0x640] sm:$0xff]
      %v7265 = vld [vmem:[#allocation7 + $0x648] sm:$0xff]
      %v7266 = vld [vmem:[#allocation7 + $0x650] sm:$0xff]
      %v7267 = vld [vmem:[#allocation7 + $0x658] sm:$0xff]
      %v7268 = vld [vmem:[#allocation7 + $0x660] sm:$0xff]
      %v7269 = vld [vmem:[#allocation7 + $0x668] sm:$0xff]
      %v7270 = vld [vmem:[#allocation7 + $0x670] sm:$0xff]
      %v7271 = vld [vmem:[#allocation7 + $0x678] sm:$0xff]
      %v7272 = vld [vmem:[#allocation7 + $0x680] sm:$0xff]
      %v7273 = vld [vmem:[#allocation7 + $0x688] sm:$0xff]
      %v7274 = vld [vmem:[#allocation7 + $0x690] sm:$0xff]
      %v7275 = vld [vmem:[#allocation7 + $0x698] sm:$0xff]
      %v7276 = vld [vmem:[#allocation7 + $0x6a0] sm:$0xff]
      %v7277 = vld [vmem:[#allocation7 + $0x6a8] sm:$0xff]
      %v7278 = vld [vmem:[#allocation7 + $0x6b0] sm:$0xff]
      %v7279 = vld [vmem:[#allocation7 + $0x6b8] sm:$0xff]
      %v7280 = vld [vmem:[#allocation7 + $0x6c0] sm:$0xff]
      %v7281 = vld [vmem:[#allocation7 + $0x6c8] sm:$0xff]
      %v7282 = vld [vmem:[#allocation7 + $0x6d0] sm:$0xff]
      %v7283 = vld [vmem:[#allocation7 + $0x6d8] sm:$0xff]
      %v7284 = vld [vmem:[#allocation7 + $0x6e0] sm:$0xff]
      %v7285 = vld [vmem:[#allocation7 + $0x6e8] sm:$0xff]
      %v7286 = vld [vmem:[#allocation7 + $0x6f0] sm:$0xff]
      %v7287 = vld [vmem:[#allocation7 + $0x6f8] sm:$0xff]
      %v7288 = vld [vmem:[#allocation7 + $0x700] sm:$0xff]
      %v7289 = vld [vmem:[#allocation7 + $0x708] sm:$0xff]
      %v7290 = vld [vmem:[#allocation7 + $0x710] sm:$0xff]
      %v7291 = vld [vmem:[#allocation7 + $0x718] sm:$0xff]
      %v7292 = vld [vmem:[#allocation7 + $0x720] sm:$0xff]
      %v7293 = vld [vmem:[#allocation7 + $0x728] sm:$0xff]
      %v7294 = vld [vmem:[#allocation7 + $0x730] sm:$0xff]
      %v7295 = vld [vmem:[#allocation7 + $0x738] sm:$0xff]
      %v7296 = vld [vmem:[#allocation7 + $0x740] sm:$0xff]
      %v7297 = vld [vmem:[#allocation7 + $0x748] sm:$0xff]
      %v7298 = vld [vmem:[#allocation7 + $0x750] sm:$0xff]
      %v7299 = vld [vmem:[#allocation7 + $0x758] sm:$0xff]
      %v7300 = vld [vmem:[#allocation7 + $0x760] sm:$0xff]
      %v7301 = vld [vmem:[#allocation7 + $0x768] sm:$0xff]
      %v7302 = vld [vmem:[#allocation7 + $0x770] sm:$0xff]
      %v7303 = vld [vmem:[#allocation7 + $0x778] sm:$0xff]
      %v7304 = vld [vmem:[#allocation7 + $0x780] sm:$0xff]
      %v7305 = vld [vmem:[#allocation7 + $0x788] sm:$0xff]
      %v7306 = vld [vmem:[#allocation7 + $0x790] sm:$0xff]
      %v7307 = vld [vmem:[#allocation7 + $0x798] sm:$0xff]
      %v7308 = vld [vmem:[#allocation7 + $0x7a0] sm:$0xff]
      %v7309 = vld [vmem:[#allocation7 + $0x7a8] sm:$0xff]
      %v7310 = vld [vmem:[#allocation7 + $0x7b0] sm:$0xff]
      %v7311 = vld [vmem:[#allocation7 + $0x7b8] sm:$0xff]
      %v7312 = vld [vmem:[#allocation7 + $0x7c0] sm:$0xff]
      %v7313 = vld [vmem:[#allocation7 + $0x7c8] sm:$0xff]
      %v7314 = vld [vmem:[#allocation7 + $0x7d0] sm:$0xff]
      %v7315 = vld [vmem:[#allocation7 + $0x7d8] sm:$0xff]
      %v7316 = vld [vmem:[#allocation7 + $0x7e0] sm:$0xff]
      %v7317 = vld [vmem:[#allocation7 + $0x7e8] sm:$0xff]
      %v7318 = vld [vmem:[#allocation7 + $0x7f0] sm:$0xff]
      %v7319 = vld [vmem:[#allocation7 + $0x7f8] sm:$0xff]
      %v7320 = vld [vmem:[%s5] sm:$0xff]
      %v7321 = vld [vmem:[%s5 + $0x8] sm:$0xff]
      %v7322 = vld [vmem:[%s5 + $0x10] sm:$0xff]
      %v7323 = vld [vmem:[%s5 + $0x18] sm:$0xff]
      %v7324 = vld [vmem:[%s5 + $0x20] sm:$0xff]
      %v7325 = vld [vmem:[%s5 + $0x28] sm:$0xff]
      %v7326 = vld [vmem:[%s5 + $0x30] sm:$0xff]
      %v7327 = vld [vmem:[%s5 + $0x38] sm:$0xff]
      %v7584 = vunpack.c.l.b16 %v7064
      %v7585 = vunpack.c.h.b16 %v7064
      %v7586 = vunpack.c.l.b16 %v7065
      %v7587 = vunpack.c.h.b16 %v7065
      %v7588 = vunpack.c.l.b16 %v7066
      %v7589 = vunpack.c.h.b16 %v7066
      %v7590 = vunpack.c.l.b16 %v7067
      %v7591 = vunpack.c.h.b16 %v7067
      %v7592 = vunpack.c.l.b16 %v7068
      %v7593 = vunpack.c.h.b16 %v7068
      %v7594 = vunpack.c.l.b16 %v7069
      %v7595 = vunpack.c.h.b16 %v7069
      %v7596 = vunpack.c.l.b16 %v7070
      %v7597 = vunpack.c.h.b16 %v7070
      %v7598 = vunpack.c.l.b16 %v7071
      %v7599 = vunpack.c.h.b16 %v7071
      %v7600 = vunpack.c.l.b16 %v7072
      %v7601 = vunpack.c.h.b16 %v7072
      %v7602 = vunpack.c.l.b16 %v7073
      %v7603 = vunpack.c.h.b16 %v7073
      %v7604 = vunpack.c.l.b16 %v7074
      %v7605 = vunpack.c.h.b16 %v7074
      %v7606 = vunpack.c.l.b16 %v7075
      %v7607 = vunpack.c.h.b16 %v7075
      %v7608 = vunpack.c.l.b16 %v7076
      %v7609 = vunpack.c.h.b16 %v7076
      %v7610 = vunpack.c.l.b16 %v7077
      %v7611 = vunpack.c.h.b16 %v7077
      %v7612 = vunpack.c.l.b16 %v7078
      %v7613 = vunpack.c.h.b16 %v7078
      %v7614 = vunpack.c.l.b16 %v7079
      %v7615 = vunpack.c.h.b16 %v7079
      %v7616 = vunpack.c.l.b16 %v7080
      %v7617 = vunpack.c.h.b16 %v7080
      %v7618 = vunpack.c.l.b16 %v7081
      %v7619 = vunpack.c.h.b16 %v7081
      %v7620 = vunpack.c.l.b16 %v7082
      %v7621 = vunpack.c.h.b16 %v7082
      %v7622 = vunpack.c.l.b16 %v7083
      %v7623 = vunpack.c.h.b16 %v7083
      %v7624 = vunpack.c.l.b16 %v7084
      %v7625 = vunpack.c.h.b16 %v7084
      %v7626 = vunpack.c.l.b16 %v7085
      %v7627 = vunpack.c.h.b16 %v7085
      %v7628 = vunpack.c.l.b16 %v7086
      %v7629 = vunpack.c.h.b16 %v7086
      %v7630 = vunpack.c.l.b16 %v7087
      %v7631 = vunpack.c.h.b16 %v7087
      %v7632 = vunpack.c.l.b16 %v7088
      %v7633 = vunpack.c.h.b16 %v7088
      %v7634 = vunpack.c.l.b16 %v7089
      %v7635 = vunpack.c.h.b16 %v7089
      %v7636 = vunpack.c.l.b16 %v7090
      %v7637 = vunpack.c.h.b16 %v7090
      %v7638 = vunpack.c.l.b16 %v7091
      %v7639 = vunpack.c.h.b16 %v7091
      %v7640 = vunpack.c.l.b16 %v7092
      %v7641 = vunpack.c.h.b16 %v7092
      %v7642 = vunpack.c.l.b16 %v7093
      %v7643 = vunpack.c.h.b16 %v7093
      %v7644 = vunpack.c.l.b16 %v7094
      %v7645 = vunpack.c.h.b16 %v7094
      %v7646 = vunpack.c.l.b16 %v7095
      %v7647 = vunpack.c.h.b16 %v7095
      %v7648 = vunpack.c.l.b16 %v7096
      %v7649 = vunpack.c.h.b16 %v7096
      %v7650 = vunpack.c.l.b16 %v7097
      %v7651 = vunpack.c.h.b16 %v7097
      %v7652 = vunpack.c.l.b16 %v7098
      %v7653 = vunpack.c.h.b16 %v7098
      %v7654 = vunpack.c.l.b16 %v7099
      %v7655 = vunpack.c.h.b16 %v7099
      %v7656 = vunpack.c.l.b16 %v7100
      %v7657 = vunpack.c.h.b16 %v7100
      %v7658 = vunpack.c.l.b16 %v7101
      %v7659 = vunpack.c.h.b16 %v7101
      %v7660 = vunpack.c.l.b16 %v7102
      %v7661 = vunpack.c.h.b16 %v7102
      %v7662 = vunpack.c.l.b16 %v7103
      %v7663 = vunpack.c.h.b16 %v7103
      %v7664 = vunpack.c.l.b16 %v7104
      %v7665 = vunpack.c.h.b16 %v7104
      %v7666 = vunpack.c.l.b16 %v7105
      %v7667 = vunpack.c.h.b16 %v7105
      %v7668 = vunpack.c.l.b16 %v7106
      %v7669 = vunpack.c.h.b16 %v7106
      %v7670 = vunpack.c.l.b16 %v7107
      %v7671 = vunpack.c.h.b16 %v7107
      %v7672 = vunpack.c.l.b16 %v7108
      %v7673 = vunpack.c.h.b16 %v7108
      %v7674 = vunpack.c.l.b16 %v7109
      %v7675 = vunpack.c.h.b16 %v7109
      %v7676 = vunpack.c.l.b16 %v7110
      %v7677 = vunpack.c.h.b16 %v7110
      %v7678 = vunpack.c.l.b16 %v7111
      %v7679 = vunpack.c.h.b16 %v7111
      %v7680 = vunpack.c.l.b16 %v7112
      %v7681 = vunpack.c.h.b16 %v7112
      %v7682 = vunpack.c.l.b16 %v7113
      %v7683 = vunpack.c.h.b16 %v7113
      %v7684 = vunpack.c.l.b16 %v7114
      %v7685 = vunpack.c.h.b16 %v7114
      %v7686 = vunpack.c.l.b16 %v7115
      %v7687 = vunpack.c.h.b16 %v7115
      %v7688 = vunpack.c.l.b16 %v7116
      %v7689 = vunpack.c.h.b16 %v7116
      %v7690 = vunpack.c.l.b16 %v7117
      %v7691 = vunpack.c.h.b16 %v7117
      %v7692 = vunpack.c.l.b16 %v7118
      %v7693 = vunpack.c.h.b16 %v7118
      %v7694 = vunpack.c.l.b16 %v7119
      %v7695 = vunpack.c.h.b16 %v7119
      %v7696 = vunpack.c.l.b16 %v7120
      %v7697 = vunpack.c.h.b16 %v7120
      %v7698 = vunpack.c.l.b16 %v7121
      %v7699 = vunpack.c.h.b16 %v7121
      %v7700 = vunpack.c.l.b16 %v7122
      %v7701 = vunpack.c.h.b16 %v7122
      %v7702 = vunpack.c.l.b16 %v7123
      %v7703 = vunpack.c.h.b16 %v7123
      %v7704 = vunpack.c.l.b16 %v7124
      %v7705 = vunpack.c.h.b16 %v7124
      %v7706 = vunpack.c.l.b16 %v7125
      %v7707 = vunpack.c.h.b16 %v7125
      %v7708 = vunpack.c.l.b16 %v7126
      %v7709 = vunpack.c.h.b16 %v7126
      %v7710 = vunpack.c.l.b16 %v7127
      %v7711 = vunpack.c.h.b16 %v7127
      %v7712 = vunpack.c.l.b16 %v7128
      %v7713 = vunpack.c.h.b16 %v7128
      %v7714 = vunpack.c.l.b16 %v7129
      %v7715 = vunpack.c.h.b16 %v7129
      %v7716 = vunpack.c.l.b16 %v7130
      %v7717 = vunpack.c.h.b16 %v7130
      %v7718 = vunpack.c.l.b16 %v7131
      %v7719 = vunpack.c.h.b16 %v7131
      %v7720 = vunpack.c.l.b16 %v7132
      %v7721 = vunpack.c.h.b16 %v7132
      %v7722 = vunpack.c.l.b16 %v7133
      %v7723 = vunpack.c.h.b16 %v7133
      %v7724 = vunpack.c.l.b16 %v7134
      %v7725 = vunpack.c.h.b16 %v7134
      %v7726 = vunpack.c.l.b16 %v7135
      %v7727 = vunpack.c.h.b16 %v7135
      %v7728 = vunpack.c.l.b16 %v7136
      %v7729 = vunpack.c.h.b16 %v7136
      %v7730 = vunpack.c.l.b16 %v7137
      %v7731 = vunpack.c.h.b16 %v7137
      %v7732 = vunpack.c.l.b16 %v7138
      %v7733 = vunpack.c.h.b16 %v7138
      %v7734 = vunpack.c.l.b16 %v7139
      %v7735 = vunpack.c.h.b16 %v7139
      %v7736 = vunpack.c.l.b16 %v7140
      %v7737 = vunpack.c.h.b16 %v7140
      %v7738 = vunpack.c.l.b16 %v7141
      %v7739 = vunpack.c.h.b16 %v7141
      %v7740 = vunpack.c.l.b16 %v7142
      %v7741 = vunpack.c.h.b16 %v7142
      %v7742 = vunpack.c.l.b16 %v7143
      %v7743 = vunpack.c.h.b16 %v7143
      %v7744 = vunpack.c.l.b16 %v7144
      %v7745 = vunpack.c.h.b16 %v7144
      %v7746 = vunpack.c.l.b16 %v7145
      %v7747 = vunpack.c.h.b16 %v7145
      %v7748 = vunpack.c.l.b16 %v7146
      %v7749 = vunpack.c.h.b16 %v7146
      %v7750 = vunpack.c.l.b16 %v7147
      %v7751 = vunpack.c.h.b16 %v7147
      %v7752 = vunpack.c.l.b16 %v7148
      %v7753 = vunpack.c.h.b16 %v7148
      %v7754 = vunpack.c.l.b16 %v7149
      %v7755 = vunpack.c.h.b16 %v7149
      %v7756 = vunpack.c.l.b16 %v7150
      %v7757 = vunpack.c.h.b16 %v7150
      %v7758 = vunpack.c.l.b16 %v7151
      %v7759 = vunpack.c.h.b16 %v7151
      %v7760 = vunpack.c.l.b16 %v7152
      %v7761 = vunpack.c.h.b16 %v7152
      %v7762 = vunpack.c.l.b16 %v7153
      %v7763 = vunpack.c.h.b16 %v7153
      %v7764 = vunpack.c.l.b16 %v7154
      %v7765 = vunpack.c.h.b16 %v7154
      %v7766 = vunpack.c.l.b16 %v7155
      %v7767 = vunpack.c.h.b16 %v7155
      %v7768 = vunpack.c.l.b16 %v7156
      %v7769 = vunpack.c.h.b16 %v7156
      %v7770 = vunpack.c.l.b16 %v7157
      %v7771 = vunpack.c.h.b16 %v7157
      %v7772 = vunpack.c.l.b16 %v7158
      %v7773 = vunpack.c.h.b16 %v7158
      %v7774 = vunpack.c.l.b16 %v7159
      %v7775 = vunpack.c.h.b16 %v7159
      %v7776 = vunpack.c.l.b16 %v7160
      %v7777 = vunpack.c.h.b16 %v7160
      %v7778 = vunpack.c.l.b16 %v7161
      %v7779 = vunpack.c.h.b16 %v7161
      %v7780 = vunpack.c.l.b16 %v7162
      %v7781 = vunpack.c.h.b16 %v7162
      %v7782 = vunpack.c.l.b16 %v7163
      %v7783 = vunpack.c.h.b16 %v7163
      %v7784 = vunpack.c.l.b16 %v7164
      %v7785 = vunpack.c.h.b16 %v7164
      %v7786 = vunpack.c.l.b16 %v7165
      %v7787 = vunpack.c.h.b16 %v7165
      %v7788 = vunpack.c.l.b16 %v7166
      %v7789 = vunpack.c.h.b16 %v7166
      %v7790 = vunpack.c.l.b16 %v7167
      %v7791 = vunpack.c.h.b16 %v7167
      %v7792 = vunpack.c.l.b16 %v7168
      %v7793 = vunpack.c.h.b16 %v7168
      %v7794 = vunpack.c.l.b16 %v7169
      %v7795 = vunpack.c.h.b16 %v7169
      %v7796 = vunpack.c.l.b16 %v7170
      %v7797 = vunpack.c.h.b16 %v7170
      %v7798 = vunpack.c.l.b16 %v7171
      %v7799 = vunpack.c.h.b16 %v7171
      %v7800 = vunpack.c.l.b16 %v7172
      %v7801 = vunpack.c.h.b16 %v7172
      %v7802 = vunpack.c.l.b16 %v7173
      %v7803 = vunpack.c.h.b16 %v7173
      %v7804 = vunpack.c.l.b16 %v7174
      %v7805 = vunpack.c.h.b16 %v7174
      %v7806 = vunpack.c.l.b16 %v7175
      %v7807 = vunpack.c.h.b16 %v7175
      %v7808 = vunpack.c.l.b16 %v7176
      %v7809 = vunpack.c.h.b16 %v7176
      %v7810 = vunpack.c.l.b16 %v7177
      %v7811 = vunpack.c.h.b16 %v7177
      %v7812 = vunpack.c.l.b16 %v7178
      %v7813 = vunpack.c.h.b16 %v7178
      %v7814 = vunpack.c.l.b16 %v7179
      %v7815 = vunpack.c.h.b16 %v7179
      %v7816 = vunpack.c.l.b16 %v7180
      %v7817 = vunpack.c.h.b16 %v7180
      %v7818 = vunpack.c.l.b16 %v7181
      %v7819 = vunpack.c.h.b16 %v7181
      %v7820 = vunpack.c.l.b16 %v7182
      %v7821 = vunpack.c.h.b16 %v7182
      %v7822 = vunpack.c.l.b16 %v7183
      %v7823 = vunpack.c.h.b16 %v7183
      %v7824 = vunpack.c.l.b16 %v7184
      %v7825 = vunpack.c.h.b16 %v7184
      %v7826 = vunpack.c.l.b16 %v7185
      %v7827 = vunpack.c.h.b16 %v7185
      %v7828 = vunpack.c.l.b16 %v7186
      %v7829 = vunpack.c.h.b16 %v7186
      %v7830 = vunpack.c.l.b16 %v7187
      %v7831 = vunpack.c.h.b16 %v7187
      %v7832 = vunpack.c.l.b16 %v7188
      %v7833 = vunpack.c.h.b16 %v7188
      %v7834 = vunpack.c.l.b16 %v7189
      %v7835 = vunpack.c.h.b16 %v7189
      %v7836 = vunpack.c.l.b16 %v7190
      %v7837 = vunpack.c.h.b16 %v7190
      %v7838 = vunpack.c.l.b16 %v7191
      %v7839 = vunpack.c.h.b16 %v7191
      %v7840 = vunpack.c.l.b16 %v7192
      %v7841 = vunpack.c.h.b16 %v7192
      %v7842 = vunpack.c.l.b16 %v7193
      %v7843 = vunpack.c.h.b16 %v7193
      %v7844 = vunpack.c.l.b16 %v7194
      %v7845 = vunpack.c.h.b16 %v7194
      %v7846 = vunpack.c.l.b16 %v7195
      %v7847 = vunpack.c.h.b16 %v7195
      %v7848 = vunpack.c.l.b16 %v7196
      %v7849 = vunpack.c.h.b16 %v7196
      %v7850 = vunpack.c.l.b16 %v7197
      %v7851 = vunpack.c.h.b16 %v7197
      %v7852 = vunpack.c.l.b16 %v7198
      %v7853 = vunpack.c.h.b16 %v7198
      %v7854 = vunpack.c.l.b16 %v7199
      %v7855 = vunpack.c.h.b16 %v7199
      %v7856 = vunpack.c.l.b16 %v7200
      %v7857 = vunpack.c.h.b16 %v7200
      %v7858 = vunpack.c.l.b16 %v7201
      %v7859 = vunpack.c.h.b16 %v7201
      %v7860 = vunpack.c.l.b16 %v7202
      %v7861 = vunpack.c.h.b16 %v7202
      %v7862 = vunpack.c.l.b16 %v7203
      %v7863 = vunpack.c.h.b16 %v7203
      %v7864 = vunpack.c.l.b16 %v7204
      %v7865 = vunpack.c.h.b16 %v7204
      %v7866 = vunpack.c.l.b16 %v7205
      %v7867 = vunpack.c.h.b16 %v7205
      %v7868 = vunpack.c.l.b16 %v7206
      %v7869 = vunpack.c.h.b16 %v7206
      %v7870 = vunpack.c.l.b16 %v7207
      %v7871 = vunpack.c.h.b16 %v7207
      %v7872 = vunpack.c.l.b16 %v7208
      %v7873 = vunpack.c.h.b16 %v7208
      %v7874 = vunpack.c.l.b16 %v7209
      %v7875 = vunpack.c.h.b16 %v7209
      %v7876 = vunpack.c.l.b16 %v7210
      %v7877 = vunpack.c.h.b16 %v7210
      %v7878 = vunpack.c.l.b16 %v7211
      %v7879 = vunpack.c.h.b16 %v7211
      %v7880 = vunpack.c.l.b16 %v7212
      %v7881 = vunpack.c.h.b16 %v7212
      %v7882 = vunpack.c.l.b16 %v7213
      %v7883 = vunpack.c.h.b16 %v7213
      %v7884 = vunpack.c.l.b16 %v7214
      %v7885 = vunpack.c.h.b16 %v7214
      %v7886 = vunpack.c.l.b16 %v7215
      %v7887 = vunpack.c.h.b16 %v7215
      %v7888 = vunpack.c.l.b16 %v7216
      %v7889 = vunpack.c.h.b16 %v7216
      %v7890 = vunpack.c.l.b16 %v7217
      %v7891 = vunpack.c.h.b16 %v7217
      %v7892 = vunpack.c.l.b16 %v7218
      %v7893 = vunpack.c.h.b16 %v7218
      %v7894 = vunpack.c.l.b16 %v7219
      %v7895 = vunpack.c.h.b16 %v7219
      %v7896 = vunpack.c.l.b16 %v7220
      %v7897 = vunpack.c.h.b16 %v7220
      %v7898 = vunpack.c.l.b16 %v7221
      %v7899 = vunpack.c.h.b16 %v7221
      %v7900 = vunpack.c.l.b16 %v7222
      %v7901 = vunpack.c.h.b16 %v7222
      %v7902 = vunpack.c.l.b16 %v7223
      %v7903 = vunpack.c.h.b16 %v7223
      %v7904 = vunpack.c.l.b16 %v7224
      %v7905 = vunpack.c.h.b16 %v7224
      %v7906 = vunpack.c.l.b16 %v7225
      %v7907 = vunpack.c.h.b16 %v7225
      %v7908 = vunpack.c.l.b16 %v7226
      %v7909 = vunpack.c.h.b16 %v7226
      %v7910 = vunpack.c.l.b16 %v7227
      %v7911 = vunpack.c.h.b16 %v7227
      %v7912 = vunpack.c.l.b16 %v7228
      %v7913 = vunpack.c.h.b16 %v7228
      %v7914 = vunpack.c.l.b16 %v7229
      %v7915 = vunpack.c.h.b16 %v7229
      %v7916 = vunpack.c.l.b16 %v7230
      %v7917 = vunpack.c.h.b16 %v7230
      %v7918 = vunpack.c.l.b16 %v7231
      %v7919 = vunpack.c.h.b16 %v7231
      %v7920 = vunpack.c.l.b16 %v7232
      %v7921 = vunpack.c.h.b16 %v7232
      %v7922 = vunpack.c.l.b16 %v7233
      %v7923 = vunpack.c.h.b16 %v7233
      %v7924 = vunpack.c.l.b16 %v7234
      %v7925 = vunpack.c.h.b16 %v7234
      %v7926 = vunpack.c.l.b16 %v7235
      %v7927 = vunpack.c.h.b16 %v7235
      %v7928 = vunpack.c.l.b16 %v7236
      %v7929 = vunpack.c.h.b16 %v7236
      %v7930 = vunpack.c.l.b16 %v7237
      %v7931 = vunpack.c.h.b16 %v7237
      %v7932 = vunpack.c.l.b16 %v7238
      %v7933 = vunpack.c.h.b16 %v7238
      %v7934 = vunpack.c.l.b16 %v7239
      %v7935 = vunpack.c.h.b16 %v7239
      %v7936 = vunpack.c.l.b16 %v7240
      %v7937 = vunpack.c.h.b16 %v7240
      %v7938 = vunpack.c.l.b16 %v7241
      %v7939 = vunpack.c.h.b16 %v7241
      %v7940 = vunpack.c.l.b16 %v7242
      %v7941 = vunpack.c.h.b16 %v7242
      %v7942 = vunpack.c.l.b16 %v7243
      %v7943 = vunpack.c.h.b16 %v7243
      %v7944 = vunpack.c.l.b16 %v7244
      %v7945 = vunpack.c.h.b16 %v7244
      %v7946 = vunpack.c.l.b16 %v7245
      %v7947 = vunpack.c.h.b16 %v7245
      %v7948 = vunpack.c.l.b16 %v7246
      %v7949 = vunpack.c.h.b16 %v7246
      %v7950 = vunpack.c.l.b16 %v7247
      %v7951 = vunpack.c.h.b16 %v7247
      %v7952 = vunpack.c.l.b16 %v7248
      %v7953 = vunpack.c.h.b16 %v7248
      %v7954 = vunpack.c.l.b16 %v7249
      %v7955 = vunpack.c.h.b16 %v7249
      %v7956 = vunpack.c.l.b16 %v7250
      %v7957 = vunpack.c.h.b16 %v7250
      %v7958 = vunpack.c.l.b16 %v7251
      %v7959 = vunpack.c.h.b16 %v7251
      %v7960 = vunpack.c.l.b16 %v7252
      %v7961 = vunpack.c.h.b16 %v7252
      %v7962 = vunpack.c.l.b16 %v7253
      %v7963 = vunpack.c.h.b16 %v7253
      %v7964 = vunpack.c.l.b16 %v7254
      %v7965 = vunpack.c.h.b16 %v7254
      %v7966 = vunpack.c.l.b16 %v7255
      %v7967 = vunpack.c.h.b16 %v7255
      %v7968 = vunpack.c.l.b16 %v7256
      %v7969 = vunpack.c.h.b16 %v7256
      %v7970 = vunpack.c.l.b16 %v7257
      %v7971 = vunpack.c.h.b16 %v7257
      %v7972 = vunpack.c.l.b16 %v7258
      %v7973 = vunpack.c.h.b16 %v7258
      %v7974 = vunpack.c.l.b16 %v7259
      %v7975 = vunpack.c.h.b16 %v7259
      %v7976 = vunpack.c.l.b16 %v7260
      %v7977 = vunpack.c.h.b16 %v7260
      %v7978 = vunpack.c.l.b16 %v7261
      %v7979 = vunpack.c.h.b16 %v7261
      %v7980 = vunpack.c.l.b16 %v7262
      %v7981 = vunpack.c.h.b16 %v7262
      %v7982 = vunpack.c.l.b16 %v7263
      %v7983 = vunpack.c.h.b16 %v7263
      %v7984 = vunpack.c.l.b16 %v7264
      %v7985 = vunpack.c.h.b16 %v7264
      %v7986 = vunpack.c.l.b16 %v7265
      %v7987 = vunpack.c.h.b16 %v7265
      %v7988 = vunpack.c.l.b16 %v7266
      %v7989 = vunpack.c.h.b16 %v7266
      %v7990 = vunpack.c.l.b16 %v7267
      %v7991 = vunpack.c.h.b16 %v7267
      %v7992 = vunpack.c.l.b16 %v7268
      %v7993 = vunpack.c.h.b16 %v7268
      %v7994 = vunpack.c.l.b16 %v7269
      %v7995 = vunpack.c.h.b16 %v7269
      %v7996 = vunpack.c.l.b16 %v7270
      %v7997 = vunpack.c.h.b16 %v7270
      %v7998 = vunpack.c.l.b16 %v7271
      %v7999 = vunpack.c.h.b16 %v7271
      %v8000 = vunpack.c.l.b16 %v7272
      %v8001 = vunpack.c.h.b16 %v7272
      %v8002 = vunpack.c.l.b16 %v7273
      %v8003 = vunpack.c.h.b16 %v7273
      %v8004 = vunpack.c.l.b16 %v7274
      %v8005 = vunpack.c.h.b16 %v7274
      %v8006 = vunpack.c.l.b16 %v7275
      %v8007 = vunpack.c.h.b16 %v7275
      %v8008 = vunpack.c.l.b16 %v7276
      %v8009 = vunpack.c.h.b16 %v7276
      %v8010 = vunpack.c.l.b16 %v7277
      %v8011 = vunpack.c.h.b16 %v7277
      %v8012 = vunpack.c.l.b16 %v7278
      %v8013 = vunpack.c.h.b16 %v7278
      %v8014 = vunpack.c.l.b16 %v7279
      %v8015 = vunpack.c.h.b16 %v7279
      %v8016 = vunpack.c.l.b16 %v7280
      %v8017 = vunpack.c.h.b16 %v7280
      %v8018 = vunpack.c.l.b16 %v7281
      %v8019 = vunpack.c.h.b16 %v7281
      %v8020 = vunpack.c.l.b16 %v7282
      %v8021 = vunpack.c.h.b16 %v7282
      %v8022 = vunpack.c.l.b16 %v7283
      %v8023 = vunpack.c.h.b16 %v7283
      %v8024 = vunpack.c.l.b16 %v7284
      %v8025 = vunpack.c.h.b16 %v7284
      %v8026 = vunpack.c.l.b16 %v7285
      %v8027 = vunpack.c.h.b16 %v7285
      %v8028 = vunpack.c.l.b16 %v7286
      %v8029 = vunpack.c.h.b16 %v7286
      %v8030 = vunpack.c.l.b16 %v7287
      %v8031 = vunpack.c.h.b16 %v7287
      %v8032 = vunpack.c.l.b16 %v7288
      %v8033 = vunpack.c.h.b16 %v7288
      %v8034 = vunpack.c.l.b16 %v7289
      %v8035 = vunpack.c.h.b16 %v7289
      %v8036 = vunpack.c.l.b16 %v7290
      %v8037 = vunpack.c.h.b16 %v7290
      %v8038 = vunpack.c.l.b16 %v7291
      %v8039 = vunpack.c.h.b16 %v7291
      %v8040 = vunpack.c.l.b16 %v7292
      %v8041 = vunpack.c.h.b16 %v7292
      %v8042 = vunpack.c.l.b16 %v7293
      %v8043 = vunpack.c.h.b16 %v7293
      %v8044 = vunpack.c.l.b16 %v7294
      %v8045 = vunpack.c.h.b16 %v7294
      %v8046 = vunpack.c.l.b16 %v7295
      %v8047 = vunpack.c.h.b16 %v7295
      %v8048 = vunpack.c.l.b16 %v7296
      %v8049 = vunpack.c.h.b16 %v7296
      %v8050 = vunpack.c.l.b16 %v7297
      %v8051 = vunpack.c.h.b16 %v7297
      %v8052 = vunpack.c.l.b16 %v7298
      %v8053 = vunpack.c.h.b16 %v7298
      %v8054 = vunpack.c.l.b16 %v7299
      %v8055 = vunpack.c.h.b16 %v7299
      %v8056 = vunpack.c.l.b16 %v7300
      %v8057 = vunpack.c.h.b16 %v7300
      %v8058 = vunpack.c.l.b16 %v7301
      %v8059 = vunpack.c.h.b16 %v7301
      %v8060 = vunpack.c.l.b16 %v7302
      %v8061 = vunpack.c.h.b16 %v7302
      %v8062 = vunpack.c.l.b16 %v7303
      %v8063 = vunpack.c.h.b16 %v7303
      %v8064 = vunpack.c.l.b16 %v7304
      %v8065 = vunpack.c.h.b16 %v7304
      %v8066 = vunpack.c.l.b16 %v7305
      %v8067 = vunpack.c.h.b16 %v7305
      %v8068 = vunpack.c.l.b16 %v7306
      %v8069 = vunpack.c.h.b16 %v7306
      %v8070 = vunpack.c.l.b16 %v7307
      %v8071 = vunpack.c.h.b16 %v7307
      %v8072 = vunpack.c.l.b16 %v7308
      %v8073 = vunpack.c.h.b16 %v7308
      %v8074 = vunpack.c.l.b16 %v7309
      %v8075 = vunpack.c.h.b16 %v7309
      %v8076 = vunpack.c.l.b16 %v7310
      %v8077 = vunpack.c.h.b16 %v7310
      %v8078 = vunpack.c.l.b16 %v7311
      %v8079 = vunpack.c.h.b16 %v7311
      %v8080 = vunpack.c.l.b16 %v7312
      %v8081 = vunpack.c.h.b16 %v7312
      %v8082 = vunpack.c.l.b16 %v7313
      %v8083 = vunpack.c.h.b16 %v7313
      %v8084 = vunpack.c.l.b16 %v7314
      %v8085 = vunpack.c.h.b16 %v7314
      %v8086 = vunpack.c.l.b16 %v7315
      %v8087 = vunpack.c.h.b16 %v7315
      %v8088 = vunpack.c.l.b16 %v7316
      %v8089 = vunpack.c.h.b16 %v7316
      %v8090 = vunpack.c.l.b16 %v7317
      %v8091 = vunpack.c.h.b16 %v7317
      %v8092 = vunpack.c.l.b16 %v7318
      %v8093 = vunpack.c.h.b16 %v7318
      %v8094 = vunpack.c.l.b16 %v7319
      %v8095 = vunpack.c.h.b16 %v7319
      %v8096 = vpack.c.b16 %v7592, %v7584
      %v8097 = vpack.c.b16 %v7593, %v7585
      %v8098 = vpack.c.b16 %v7594, %v7586
      %v8099 = vpack.c.b16 %v7595, %v7587
      %v8100 = vpack.c.b16 %v7596, %v7588
      %v8101 = vpack.c.b16 %v7597, %v7589
      %v8102 = vpack.c.b16 %v7598, %v7590
      %v8103 = vpack.c.b16 %v7599, %v7591
      %v8104 = vpack.c.b16 %v7608, %v7600
      %v8105 = vpack.c.b16 %v7609, %v7601
      %v8106 = vpack.c.b16 %v7610, %v7602
      %v8107 = vpack.c.b16 %v7611, %v7603
      %v8108 = vpack.c.b16 %v7612, %v7604
      %v8109 = vpack.c.b16 %v7613, %v7605
      %v8110 = vpack.c.b16 %v7614, %v7606
      %v8111 = vpack.c.b16 %v7615, %v7607
      %v8112 = vpack.c.b16 %v7624, %v7616
      %v8113 = vpack.c.b16 %v7625, %v7617
      %v8114 = vpack.c.b16 %v7626, %v7618
      %v8115 = vpack.c.b16 %v7627, %v7619
      %v8116 = vpack.c.b16 %v7628, %v7620
      %v8117 = vpack.c.b16 %v7629, %v7621
      %v8118 = vpack.c.b16 %v7630, %v7622
      %v8119 = vpack.c.b16 %v7631, %v7623
      %v8120 = vpack.c.b16 %v7640, %v7632
      %v8121 = vpack.c.b16 %v7641, %v7633
      %v8122 = vpack.c.b16 %v7642, %v7634
      %v8123 = vpack.c.b16 %v7643, %v7635
      %v8124 = vpack.c.b16 %v7644, %v7636
      %v8125 = vpack.c.b16 %v7645, %v7637
      %v8126 = vpack.c.b16 %v7646, %v7638
      %v8127 = vpack.c.b16 %v7647, %v7639
      %v8128 = vpack.c.b16 %v7656, %v7648
      %v8129 = vpack.c.b16 %v7657, %v7649
      %v8130 = vpack.c.b16 %v7658, %v7650
      %v8131 = vpack.c.b16 %v7659, %v7651
      %v8132 = vpack.c.b16 %v7660, %v7652
      %v8133 = vpack.c.b16 %v7661, %v7653
      %v8134 = vpack.c.b16 %v7662, %v7654
      %v8135 = vpack.c.b16 %v7663, %v7655
      %v8136 = vpack.c.b16 %v7672, %v7664
      %v8137 = vpack.c.b16 %v7673, %v7665
      %v8138 = vpack.c.b16 %v7674, %v7666
      %v8139 = vpack.c.b16 %v7675, %v7667
      %v8140 = vpack.c.b16 %v7676, %v7668
      %v8141 = vpack.c.b16 %v7677, %v7669
      %v8142 = vpack.c.b16 %v7678, %v7670
      %v8143 = vpack.c.b16 %v7679, %v7671
      %v8144 = vpack.c.b16 %v7688, %v7680
      %v8145 = vpack.c.b16 %v7689, %v7681
      %v8146 = vpack.c.b16 %v7690, %v7682
      %v8147 = vpack.c.b16 %v7691, %v7683
      %v8148 = vpack.c.b16 %v7692, %v7684
      %v8149 = vpack.c.b16 %v7693, %v7685
      %v8150 = vpack.c.b16 %v7694, %v7686
      %v8151 = vpack.c.b16 %v7695, %v7687
      %v8152 = vpack.c.b16 %v7704, %v7696
      %v8153 = vpack.c.b16 %v7705, %v7697
      %v8154 = vpack.c.b16 %v7706, %v7698
      %v8155 = vpack.c.b16 %v7707, %v7699
      %v8156 = vpack.c.b16 %v7708, %v7700
      %v8157 = vpack.c.b16 %v7709, %v7701
      %v8158 = vpack.c.b16 %v7710, %v7702
      %v8159 = vpack.c.b16 %v7711, %v7703
      %v8160 = vpack.c.b16 %v7720, %v7712
      %v8161 = vpack.c.b16 %v7721, %v7713
      %v8162 = vpack.c.b16 %v7722, %v7714
      %v8163 = vpack.c.b16 %v7723, %v7715
      %v8164 = vpack.c.b16 %v7724, %v7716
      %v8165 = vpack.c.b16 %v7725, %v7717
      %v8166 = vpack.c.b16 %v7726, %v7718
      %v8167 = vpack.c.b16 %v7727, %v7719
      %v8168 = vpack.c.b16 %v7736, %v7728
      %v8169 = vpack.c.b16 %v7737, %v7729
      %v8170 = vpack.c.b16 %v7738, %v7730
      %v8171 = vpack.c.b16 %v7739, %v7731
      %v8172 = vpack.c.b16 %v7740, %v7732
      %v8173 = vpack.c.b16 %v7741, %v7733
      %v8174 = vpack.c.b16 %v7742, %v7734
      %v8175 = vpack.c.b16 %v7743, %v7735
      %v8176 = vpack.c.b16 %v7752, %v7744
      %v8177 = vpack.c.b16 %v7753, %v7745
      %v8178 = vpack.c.b16 %v7754, %v7746
      %v8179 = vpack.c.b16 %v7755, %v7747
      %v8180 = vpack.c.b16 %v7756, %v7748
      %v8181 = vpack.c.b16 %v7757, %v7749
      %v8182 = vpack.c.b16 %v7758, %v7750
      %v8183 = vpack.c.b16 %v7759, %v7751
      %v8184 = vpack.c.b16 %v7768, %v7760
      %v8185 = vpack.c.b16 %v7769, %v7761
      %v8186 = vpack.c.b16 %v7770, %v7762
      %v8187 = vpack.c.b16 %v7771, %v7763
      %v8188 = vpack.c.b16 %v7772, %v7764
      %v8189 = vpack.c.b16 %v7773, %v7765
      %v8190 = vpack.c.b16 %v7774, %v7766
      %v8191 = vpack.c.b16 %v7775, %v7767
      %v8192 = vpack.c.b16 %v7784, %v7776
      %v8193 = vpack.c.b16 %v7785, %v7777
      %v8194 = vpack.c.b16 %v7786, %v7778
      %v8195 = vpack.c.b16 %v7787, %v7779
      %v8196 = vpack.c.b16 %v7788, %v7780
      %v8197 = vpack.c.b16 %v7789, %v7781
      %v8198 = vpack.c.b16 %v7790, %v7782
      %v8199 = vpack.c.b16 %v7791, %v7783
      %v8200 = vpack.c.b16 %v7800, %v7792
      %v8201 = vpack.c.b16 %v7801, %v7793
      %v8202 = vpack.c.b16 %v7802, %v7794
      %v8203 = vpack.c.b16 %v7803, %v7795
      %v8204 = vpack.c.b16 %v7804, %v7796
      %v8205 = vpack.c.b16 %v7805, %v7797
      %v8206 = vpack.c.b16 %v7806, %v7798
      %v8207 = vpack.c.b16 %v7807, %v7799
      %v8208 = vpack.c.b16 %v7816, %v7808
      %v8209 = vpack.c.b16 %v7817, %v7809
      %v8210 = vpack.c.b16 %v7818, %v7810
      %v8211 = vpack.c.b16 %v7819, %v7811
      %v8212 = vpack.c.b16 %v7820, %v7812
      %v8213 = vpack.c.b16 %v7821, %v7813
      %v8214 = vpack.c.b16 %v7822, %v7814
      %v8215 = vpack.c.b16 %v7823, %v7815
      %v8216 = vpack.c.b16 %v7832, %v7824
      %v8217 = vpack.c.b16 %v7833, %v7825
      %v8218 = vpack.c.b16 %v7834, %v7826
      %v8219 = vpack.c.b16 %v7835, %v7827
      %v8220 = vpack.c.b16 %v7836, %v7828
      %v8221 = vpack.c.b16 %v7837, %v7829
      %v8222 = vpack.c.b16 %v7838, %v7830
      %v8223 = vpack.c.b16 %v7839, %v7831
      %v8224 = vpack.c.b16 %v7848, %v7840
      %v8225 = vpack.c.b16 %v7849, %v7841
      %v8226 = vpack.c.b16 %v7850, %v7842
      %v8227 = vpack.c.b16 %v7851, %v7843
      %v8228 = vpack.c.b16 %v7852, %v7844
      %v8229 = vpack.c.b16 %v7853, %v7845
      %v8230 = vpack.c.b16 %v7854, %v7846
      %v8231 = vpack.c.b16 %v7855, %v7847
      %v8232 = vpack.c.b16 %v7864, %v7856
      %v8233 = vpack.c.b16 %v7865, %v7857
      %v8234 = vpack.c.b16 %v7866, %v7858
      %v8235 = vpack.c.b16 %v7867, %v7859
      %v8236 = vpack.c.b16 %v7868, %v7860
      %v8237 = vpack.c.b16 %v7869, %v7861
      %v8238 = vpack.c.b16 %v7870, %v7862
      %v8239 = vpack.c.b16 %v7871, %v7863
      %v8240 = vpack.c.b16 %v7880, %v7872
      %v8241 = vpack.c.b16 %v7881, %v7873
      %v8242 = vpack.c.b16 %v7882, %v7874
      %v8243 = vpack.c.b16 %v7883, %v7875
      %v8244 = vpack.c.b16 %v7884, %v7876
      %v8245 = vpack.c.b16 %v7885, %v7877
      %v8246 = vpack.c.b16 %v7886, %v7878
      %v8247 = vpack.c.b16 %v7887, %v7879
      %v8248 = vpack.c.b16 %v7896, %v7888
      %v8249 = vpack.c.b16 %v7897, %v7889
      %v8250 = vpack.c.b16 %v7898, %v7890
      %v8251 = vpack.c.b16 %v7899, %v7891
      %v8252 = vpack.c.b16 %v7900, %v7892
      %v8253 = vpack.c.b16 %v7901, %v7893
      %v8254 = vpack.c.b16 %v7902, %v7894
      %v8255 = vpack.c.b16 %v7903, %v7895
      %v8256 = vpack.c.b16 %v7912, %v7904
      %v8257 = vpack.c.b16 %v7913, %v7905
      %v8258 = vpack.c.b16 %v7914, %v7906
      %v8259 = vpack.c.b16 %v7915, %v7907
      %v8260 = vpack.c.b16 %v7916, %v7908
      %v8261 = vpack.c.b16 %v7917, %v7909
      %v8262 = vpack.c.b16 %v7918, %v7910
      %v8263 = vpack.c.b16 %v7919, %v7911
      %v8264 = vpack.c.b16 %v7928, %v7920
      %v8265 = vpack.c.b16 %v7929, %v7921
      %v8266 = vpack.c.b16 %v7930, %v7922
      %v8267 = vpack.c.b16 %v7931, %v7923
      %v8268 = vpack.c.b16 %v7932, %v7924
      %v8269 = vpack.c.b16 %v7933, %v7925
      %v8270 = vpack.c.b16 %v7934, %v7926
      %v8271 = vpack.c.b16 %v7935, %v7927
      %v8272 = vpack.c.b16 %v7944, %v7936
      %v8273 = vpack.c.b16 %v7945, %v7937
      %v8274 = vpack.c.b16 %v7946, %v7938
      %v8275 = vpack.c.b16 %v7947, %v7939
      %v8276 = vpack.c.b16 %v7948, %v7940
      %v8277 = vpack.c.b16 %v7949, %v7941
      %v8278 = vpack.c.b16 %v7950, %v7942
      %v8279 = vpack.c.b16 %v7951, %v7943
      %v8280 = vpack.c.b16 %v7960, %v7952
      %v8281 = vpack.c.b16 %v7961, %v7953
      %v8282 = vpack.c.b16 %v7962, %v7954
      %v8283 = vpack.c.b16 %v7963, %v7955
      %v8284 = vpack.c.b16 %v7964, %v7956
      %v8285 = vpack.c.b16 %v7965, %v7957
      %v8286 = vpack.c.b16 %v7966, %v7958
      %v8287 = vpack.c.b16 %v7967, %v7959
      %v8288 = vpack.c.b16 %v7976, %v7968
      %v8289 = vpack.c.b16 %v7977, %v7969
      %v8290 = vpack.c.b16 %v7978, %v7970
      %v8291 = vpack.c.b16 %v7979, %v7971
      %v8292 = vpack.c.b16 %v7980, %v7972
      %v8293 = vpack.c.b16 %v7981, %v7973
      %v8294 = vpack.c.b16 %v7982, %v7974
      %v8295 = vpack.c.b16 %v7983, %v7975
      %v8296 = vpack.c.b16 %v7992, %v7984
      %v8297 = vpack.c.b16 %v7993, %v7985
      %v8298 = vpack.c.b16 %v7994, %v7986
      %v8299 = vpack.c.b16 %v7995, %v7987
      %v8300 = vpack.c.b16 %v7996, %v7988
      %v8301 = vpack.c.b16 %v7997, %v7989
      %v8302 = vpack.c.b16 %v7998, %v7990
      %v8303 = vpack.c.b16 %v7999, %v7991
      %v8304 = vpack.c.b16 %v8008, %v8000
      %v8305 = vpack.c.b16 %v8009, %v8001
      %v8306 = vpack.c.b16 %v8010, %v8002
      %v8307 = vpack.c.b16 %v8011, %v8003
      %v8308 = vpack.c.b16 %v8012, %v8004
      %v8309 = vpack.c.b16 %v8013, %v8005
      %v8310 = vpack.c.b16 %v8014, %v8006
      %v8311 = vpack.c.b16 %v8015, %v8007
      %v8312 = vpack.c.b16 %v8024, %v8016
      %v8313 = vpack.c.b16 %v8025, %v8017
      %v8314 = vpack.c.b16 %v8026, %v8018
      %v8315 = vpack.c.b16 %v8027, %v8019
      %v8316 = vpack.c.b16 %v8028, %v8020
      %v8317 = vpack.c.b16 %v8029, %v8021
      %v8318 = vpack.c.b16 %v8030, %v8022
      %v8319 = vpack.c.b16 %v8031, %v8023
      %v8320 = vpack.c.b16 %v8040, %v8032
      %v8321 = vpack.c.b16 %v8041, %v8033
      %v8322 = vpack.c.b16 %v8042, %v8034
      %v8323 = vpack.c.b16 %v8043, %v8035
      %v8324 = vpack.c.b16 %v8044, %v8036
      %v8325 = vpack.c.b16 %v8045, %v8037
      %v8326 = vpack.c.b16 %v8046, %v8038
      %v8327 = vpack.c.b16 %v8047, %v8039
      %v8328 = vpack.c.b16 %v8056, %v8048
      %v8329 = vpack.c.b16 %v8057, %v8049
      %v8330 = vpack.c.b16 %v8058, %v8050
      %v8331 = vpack.c.b16 %v8059, %v8051
      %v8332 = vpack.c.b16 %v8060, %v8052
      %v8333 = vpack.c.b16 %v8061, %v8053
      %v8334 = vpack.c.b16 %v8062, %v8054
      %v8335 = vpack.c.b16 %v8063, %v8055
      %v8336 = vpack.c.b16 %v8072, %v8064
      %v8337 = vpack.c.b16 %v8073, %v8065
      %v8338 = vpack.c.b16 %v8074, %v8066
      %v8339 = vpack.c.b16 %v8075, %v8067
      %v8340 = vpack.c.b16 %v8076, %v8068
      %v8341 = vpack.c.b16 %v8077, %v8069
      %v8342 = vpack.c.b16 %v8078, %v8070
      %v8343 = vpack.c.b16 %v8079, %v8071
      %v8344 = vpack.c.b16 %v8088, %v8080
      %v8345 = vpack.c.b16 %v8089, %v8081
      %v8346 = vpack.c.b16 %v8090, %v8082
      %v8347 = vpack.c.b16 %v8091, %v8083
      %v8348 = vpack.c.b16 %v8092, %v8084
      %v8349 = vpack.c.b16 %v8093, %v8085
      %v8350 = vpack.c.b16 %v8094, %v8086
      %v8351 = vpack.c.b16 %v8095, %v8087
      %8608 = vmatprep.subr.bf16.mxu0 %v8097
      %8609 = vmatpush1.bf16.msra.mxu0 %v8096
      %8610 = vmatprep.subr.bf16.mxu0 %v8105
      %8611 = vmatpush1.bf16.msra.mxu0 %v8104
      %8612 = vmatprep.subr.bf16.mxu0 %v8113
      %8613 = vmatpush1.bf16.msra.mxu0 %v8112
      %8614 = vmatprep.subr.bf16.mxu0 %v8121
      %8615 = vmatpush1.bf16.msra.mxu0 %v8120
      %8616 = vmatprep.subr.bf16.mxu0 %v8129
      %8617 = vmatpush1.bf16.msra.mxu0 %v8128
      %8618 = vmatprep.subr.bf16.mxu0 %v8137
      %8619 = vmatpush1.bf16.msra.mxu0 %v8136
      %8620 = vmatprep.subr.bf16.mxu0 %v8145
      %8621 = vmatpush1.bf16.msra.mxu0 %v8144
      %8622 = vmatprep.subr.bf16.mxu0 %v8153
      %8623 = vmatpush1.bf16.msra.mxu0 %v8152
      %8624 = vmatprep.subr.bf16.mxu0 %v8161
      %8625 = vmatpush1.bf16.msra.mxu0 %v8160
      %8626 = vmatprep.subr.bf16.mxu0 %v8169
      %8627 = vmatpush1.bf16.msra.mxu0 %v8168
      %8628 = vmatprep.subr.bf16.mxu0 %v8177
      %8629 = vmatpush1.bf16.msra.mxu0 %v8176
      %8630 = vmatprep.subr.bf16.mxu0 %v8185
      %8631 = vmatpush1.bf16.msra.mxu0 %v8184
      %8632 = vmatprep.subr.bf16.mxu0 %v8193
      %8633 = vmatpush1.bf16.msra.mxu0 %v8192
      %8634 = vmatprep.subr.bf16.mxu0 %v8201
      %8635 = vmatpush1.bf16.msra.mxu0 %v8200
      %8636 = vmatprep.subr.bf16.mxu0 %v8209
      %8637 = vmatpush1.bf16.msra.mxu0 %v8208
      %8638 = vmatprep.subr.bf16.mxu0 %v8217
      %8639 = vmatpush1.bf16.msra.mxu0 %v8216
      %8640 = vmatprep.mubr.bf16.mxu0 %v6113
      %8641 = vmatmul.mubr.bf16.gmra.mrb[0].mxu0 %v6112
      %v8642 = vpop.f32.mrb[0].mxu0
      %v8643 = vadd.f32 %v7320, %v8642
      %v8644 = vpop.f32.mrb[0].mxu0
      %v8645 = vadd.f32 %v7321, %v8644
      %v8646 = vpop.f32.mrb[0].mxu0
      %v8647 = vpop.f32.mrb[0].mxu0
      %8648 = vdwg.mxu0
      %8649 = vmatprep.subr.bf16.mxu0 %v8225
      %8650 = vmatpush1.bf16.msra.mxu0 %v8224
      %8651 = vmatprep.subr.bf16.mxu0 %v8233
      %8652 = vmatpush1.bf16.msra.mxu0 %v8232
      %8653 = vmatprep.subr.bf16.mxu0 %v8241
      %8654 = vmatpush1.bf16.msra.mxu0 %v8240
      %8655 = vmatprep.subr.bf16.mxu0 %v8249
      %8656 = vmatpush1.bf16.msra.mxu0 %v8248
      %8657 = vmatprep.subr.bf16.mxu0 %v8257
      %8658 = vmatpush1.bf16.msra.mxu0 %v8256
      %8659 = vmatprep.subr.bf16.mxu0 %v8265
      %8660 = vmatpush1.bf16.msra.mxu0 %v8264
      %8661 = vmatprep.subr.bf16.mxu0 %v8273
      %8662 = vmatpush1.bf16.msra.mxu0 %v8272
      %8663 = vmatprep.subr.bf16.mxu0 %v8281
      %8664 = vmatpush1.bf16.msra.mxu0 %v8280
      %8665 = vmatprep.subr.bf16.mxu0 %v8289
      %8666 = vmatpush1.bf16.msra.mxu0 %v8288
      %8667 = vmatprep.subr.bf16.mxu0 %v8297
      %8668 = vmatpush1.bf16.msra.mxu0 %v8296
      %8669 = vmatprep.subr.bf16.mxu0 %v8305
      %8670 = vmatpush1.bf16.msra.mxu0 %v8304
      %8671 = vmatprep.subr.bf16.mxu0 %v8313
      %8672 = vmatpush1.bf16.msra.mxu0 %v8312
      %8673 = vmatprep.subr.bf16.mxu0 %v8321
      %8674 = vmatpush1.bf16.msra.mxu0 %v8320
      %8675 = vmatprep.subr.bf16.mxu0 %v8329
      %8676 = vmatpush1.bf16.msra.mxu0 %v8328
      %8677 = vmatprep.subr.bf16.mxu0 %v8337
      %8678 = vmatpush1.bf16.msra.mxu0 %v8336
      %8679 = vmatprep.subr.bf16.mxu0 %v8345
      %8680 = vmatpush1.bf16.msra.mxu0 %v8344
      %8681 = vmatprep.mubr.bf16.mxu0 %v6115
      %8682 = vmatmul.mubr.bf16.gmra.mrb[0].mxu0 %v6114
      %v8683 = vpop.f32.mrb[0].mxu0
      %v8684 = vadd.f32 %v8643, %v8683
      %v8685 = vpop.f32.mrb[0].mxu0
      %v8686 = vadd.f32 %v8645, %v8685
      %v8687 = vpop.f32.mrb[0].mxu0
      %v8688 = vpop.f32.mrb[0].mxu0
      %8689 = vdwg.mxu0
      %8690 = vmatprep.subr.bf16.mxu0 %v8099
      %8691 = vmatpush1.bf16.msra.mxu0 %v8098
      %8692 = vmatprep.subr.bf16.mxu0 %v8107
      %8693 = vmatpush1.bf16.msra.mxu0 %v8106
      %8694 = vmatprep.subr.bf16.mxu0 %v8115
      %8695 = vmatpush1.bf16.msra.mxu0 %v8114
      %8696 = vmatprep.subr.bf16.mxu0 %v8123
      %8697 = vmatpush1.bf16.msra.mxu0 %v8122
      %8698 = vmatprep.subr.bf16.mxu0 %v8131
      %8699 = vmatpush1.bf16.msra.mxu0 %v8130
      %8700 = vmatprep.subr.bf16.mxu0 %v8139
      %8701 = vmatpush1.bf16.msra.mxu0 %v8138
      %8702 = vmatprep.subr.bf16.mxu0 %v8147
      %8703 = vmatpush1.bf16.msra.mxu0 %v8146
      %8704 = vmatprep.subr.bf16.mxu0 %v8155
      %8705 = vmatpush1.bf16.msra.mxu0 %v8154
      %8706 = vmatprep.subr.bf16.mxu0 %v8163
      %8707 = vmatpush1.bf16.msra.mxu0 %v8162
      %8708 = vmatprep.subr.bf16.mxu0 %v8171
      %8709 = vmatpush1.bf16.msra.mxu0 %v8170
      %8710 = vmatprep.subr.bf16.mxu0 %v8179
      %8711 = vmatpush1.bf16.msra.mxu0 %v8178
      %8712 = vmatprep.subr.bf16.mxu0 %v8187
      %8713 = vmatpush1.bf16.msra.mxu0 %v8186
      %8714 = vmatprep.subr.bf16.mxu0 %v8195
      %8715 = vmatpush1.bf16.msra.mxu0 %v8194
      %8716 = vmatprep.subr.bf16.mxu0 %v8203
      %8717 = vmatpush1.bf16.msra.mxu0 %v8202
      %8718 = vmatprep.subr.bf16.mxu0 %v8211
      %8719 = vmatpush1.bf16.msra.mxu0 %v8210
      %8720 = vmatprep.subr.bf16.mxu0 %v8219
      %8721 = vmatpush1.bf16.msra.mxu0 %v8218
      %8722 = vmatprep.mubr.bf16.mxu0 %v6113
      %8723 = vmatmul.mubr.bf16.gmra.mrb[0].mxu0 %v6112
      %v8724 = vpop.f32.mrb[0].mxu0
      %v8725 = vadd.f32 %v7322, %v8724
      %v8726 = vpop.f32.mrb[0].mxu0
      %v8727 = vadd.f32 %v7323, %v8726
      %v8728 = vpop.f32.mrb[0].mxu0
      %v8729 = vpop.f32.mrb[0].mxu0
      %8730 = vdwg.mxu0
      %8731 = vmatprep.subr.bf16.mxu0 %v8227
      %8732 = vmatpush1.bf16.msra.mxu0 %v8226
      %8733 = vmatprep.subr.bf16.mxu0 %v8235
      %8734 = vmatpush1.bf16.msra.mxu0 %v8234
      %8735 = vmatprep.subr.bf16.mxu0 %v8243
      %8736 = vmatpush1.bf16.msra.mxu0 %v8242
      %8737 = vmatprep.subr.bf16.mxu0 %v8251
      %8738 = vmatpush1.bf16.msra.mxu0 %v8250
      %8739 = vmatprep.subr.bf16.mxu0 %v8259
      %8740 = vmatpush1.bf16.msra.mxu0 %v8258
      %8741 = vmatprep.subr.bf16.mxu0 %v8267
      %8742 = vmatpush1.bf16.msra.mxu0 %v8266
      %8743 = vmatprep.subr.bf16.mxu0 %v8275
      %8744 = vmatpush1.bf16.msra.mxu0 %v8274
      %8745 = vmatprep.subr.bf16.mxu0 %v8283
      %8746 = vmatpush1.bf16.msra.mxu0 %v8282
      %8747 = vmatprep.subr.bf16.mxu0 %v8291
      %8748 = vmatpush1.bf16.msra.mxu0 %v8290
      %8749 = vmatprep.subr.bf16.mxu0 %v8299
      %8750 = vmatpush1.bf16.msra.mxu0 %v8298
      %8751 = vmatprep.subr.bf16.mxu0 %v8307
      %8752 = vmatpush1.bf16.msra.mxu0 %v8306
      %8753 = vmatprep.subr.bf16.mxu0 %v8315
      %8754 = vmatpush1.bf16.msra.mxu0 %v8314
      %8755 = vmatprep.subr.bf16.mxu0 %v8323
      %8756 = vmatpush1.bf16.msra.mxu0 %v8322
      %8757 = vmatprep.subr.bf16.mxu0 %v8331
      %8758 = vmatpush1.bf16.msra.mxu0 %v8330
      %8759 = vmatprep.subr.bf16.mxu0 %v8339
      %8760 = vmatpush1.bf16.msra.mxu0 %v8338
      %8761 = vmatprep.subr.bf16.mxu0 %v8347
      %8762 = vmatpush1.bf16.msra.mxu0 %v8346
      %8763 = vmatprep.mubr.bf16.mxu0 %v6115
      %8764 = vmatmul.mubr.bf16.gmra.mrb[0].mxu0 %v6114
      %v8765 = vpop.f32.mrb[0].mxu0
      %v8766 = vadd.f32 %v8725, %v8765
      %v8767 = vpop.f32.mrb[0].mxu0
      %v8768 = vadd.f32 %v8727, %v8767
      %v8769 = vpop.f32.mrb[0].mxu0
      %v8770 = vpop.f32.mrb[0].mxu0
      %8771 = vdwg.mxu0
      %8772 = vmatprep.subr.bf16.mxu0 %v8101
      %8773 = vmatpush1.bf16.msra.mxu0 %v8100
      %8774 = vmatprep.subr.bf16.mxu0 %v8109
      %8775 = vmatpush1.bf16.msra.mxu0 %v8108
      %8776 = vmatprep.subr.bf16.mxu0 %v8117
      %8777 = vmatpush1.bf16.msra.mxu0 %v8116
      %8778 = vmatprep.subr.bf16.mxu0 %v8125
      %8779 = vmatpush1.bf16.msra.mxu0 %v8124
      %8780 = vmatprep.subr.bf16.mxu0 %v8133
      %8781 = vmatpush1.bf16.msra.mxu0 %v8132
      %8782 = vmatprep.subr.bf16.mxu0 %v8141
      %8783 = vmatpush1.bf16.msra.mxu0 %v8140
      %8784 = vmatprep.subr.bf16.mxu0 %v8149
      %8785 = vmatpush1.bf16.msra.mxu0 %v8148
      %8786 = vmatprep.subr.bf16.mxu0 %v8157
      %8787 = vmatpush1.bf16.msra.mxu0 %v8156
      %8788 = vmatprep.subr.bf16.mxu0 %v8165
      %8789 = vmatpush1.bf16.msra.mxu0 %v8164
      %8790 = vmatprep.subr.bf16.mxu0 %v8173
      %8791 = vmatpush1.bf16.msra.mxu0 %v8172
      %8792 = vmatprep.subr.bf16.mxu0 %v8181
      %8793 = vmatpush1.bf16.msra.mxu0 %v8180
      %8794 = vmatprep.subr.bf16.mxu0 %v8189
      %8795 = vmatpush1.bf16.msra.mxu0 %v8188
      %8796 = vmatprep.subr.bf16.mxu0 %v8197
      %8797 = vmatpush1.bf16.msra.mxu0 %v8196
      %8798 = vmatprep.subr.bf16.mxu0 %v8205
      %8799 = vmatpush1.bf16.msra.mxu0 %v8204
      %8800 = vmatprep.subr.bf16.mxu0 %v8213
      %8801 = vmatpush1.bf16.msra.mxu0 %v8212
      %8802 = vmatprep.subr.bf16.mxu0 %v8221
      %8803 = vmatpush1.bf16.msra.mxu0 %v8220
      %8804 = vmatprep.mubr.bf16.mxu0 %v6113
      %8805 = vmatmul.mubr.bf16.gmra.mrb[0].mxu0 %v6112
      %v8806 = vpop.f32.mrb[0].mxu0
      %v8807 = vadd.f32 %v7324, %v8806
      %v8808 = vpop.f32.mrb[0].mxu0
      %v8809 = vadd.f32 %v7325, %v8808
      %v8810 = vpop.f32.mrb[0].mxu0
      %v8811 = vpop.f32.mrb[0].mxu0
      %8812 = vdwg.mxu0
      %8813 = vmatprep.subr.bf16.mxu0 %v8229
      %8814 = vmatpush1.bf16.msra.mxu0 %v8228
      %8815 = vmatprep.subr.bf16.mxu0 %v8237
      %8816 = vmatpush1.bf16.msra.mxu0 %v8236
      %8817 = vmatprep.subr.bf16.mxu0 %v8245
      %8818 = vmatpush1.bf16.msra.mxu0 %v8244
      %8819 = vmatprep.subr.bf16.mxu0 %v8253
      %8820 = vmatpush1.bf16.msra.mxu0 %v8252
      %8821 = vmatprep.subr.bf16.mxu0 %v8261
      %8822 = vmatpush1.bf16.msra.mxu0 %v8260
      %8823 = vmatprep.subr.bf16.mxu0 %v8269
      %8824 = vmatpush1.bf16.msra.mxu0 %v8268
      %8825 = vmatprep.subr.bf16.mxu0 %v8277
      %8826 = vmatpush1.bf16.msra.mxu0 %v8276
      %8827 = vmatprep.subr.bf16.mxu0 %v8285
      %8828 = vmatpush1.bf16.msra.mxu0 %v8284
      %8829 = vmatprep.subr.bf16.mxu0 %v8293
      %8830 = vmatpush1.bf16.msra.mxu0 %v8292
      %8831 = vmatprep.subr.bf16.mxu0 %v8301
      %8832 = vmatpush1.bf16.msra.mxu0 %v8300
      %8833 = vmatprep.subr.bf16.mxu0 %v8309
      %8834 = vmatpush1.bf16.msra.mxu0 %v8308
      %8835 = vmatprep.subr.bf16.mxu0 %v8317
      %8836 = vmatpush1.bf16.msra.mxu0 %v8316
      %8837 = vmatprep.subr.bf16.mxu0 %v8325
      %8838 = vmatpush1.bf16.msra.mxu0 %v8324
      %8839 = vmatprep.subr.bf16.mxu0 %v8333
      %8840 = vmatpush1.bf16.msra.mxu0 %v8332
      %8841 = vmatprep.subr.bf16.mxu0 %v8341
      %8842 = vmatpush1.bf16.msra.mxu0 %v8340
      %8843 = vmatprep.subr.bf16.mxu0 %v8349
      %8844 = vmatpush1.bf16.msra.mxu0 %v8348
      %8845 = vmatprep.mubr.bf16.mxu0 %v6115
      %8846 = vmatmul.mubr.bf16.gmra.mrb[0].mxu0 %v6114
      %v8847 = vpop.f32.mrb[0].mxu0
      %v8848 = vadd.f32 %v8807, %v8847
      %v8849 = vpop.f32.mrb[0].mxu0
      %v8850 = vadd.f32 %v8809, %v8849
      %v8851 = vpop.f32.mrb[0].mxu0
      %v8852 = vpop.f32.mrb[0].mxu0
      %8853 = vdwg.mxu0
      %8854 = vmatprep.subr.bf16.mxu0 %v8103
      %8855 = vmatpush1.bf16.msra.mxu0 %v8102
      %8856 = vmatprep.subr.bf16.mxu0 %v8111
      %8857 = vmatpush1.bf16.msra.mxu0 %v8110
      %8858 = vmatprep.subr.bf16.mxu0 %v8119
      %8859 = vmatpush1.bf16.msra.mxu0 %v8118
      %8860 = vmatprep.subr.bf16.mxu0 %v8127
      %8861 = vmatpush1.bf16.msra.mxu0 %v8126
      %8862 = vmatprep.subr.bf16.mxu0 %v8135
      %8863 = vmatpush1.bf16.msra.mxu0 %v8134
      %8864 = vmatprep.subr.bf16.mxu0 %v8143
      %8865 = vmatpush1.bf16.msra.mxu0 %v8142
      %8866 = vmatprep.subr.bf16.mxu0 %v8151
      %8867 = vmatpush1.bf16.msra.mxu0 %v8150
      %8868 = vmatprep.subr.bf16.mxu0 %v8159
      %8869 = vmatpush1.bf16.msra.mxu0 %v8158
      %8870 = vmatprep.subr.bf16.mxu0 %v8167
      %8871 = vmatpush1.bf16.msra.mxu0 %v8166
      %8872 = vmatprep.subr.bf16.mxu0 %v8175
      %8873 = vmatpush1.bf16.msra.mxu0 %v8174
      %8874 = vmatprep.subr.bf16.mxu0 %v8183
      %8875 = vmatpush1.bf16.msra.mxu0 %v8182
      %8876 = vmatprep.subr.bf16.mxu0 %v8191
      %8877 = vmatpush1.bf16.msra.mxu0 %v8190
      %8878 = vmatprep.subr.bf16.mxu0 %v8199
      %8879 = vmatpush1.bf16.msra.mxu0 %v8198
      %8880 = vmatprep.subr.bf16.mxu0 %v8207
      %8881 = vmatpush1.bf16.msra.mxu0 %v8206
      %8882 = vmatprep.subr.bf16.mxu0 %v8215
      %8883 = vmatpush1.bf16.msra.mxu0 %v8214
      %8884 = vmatprep.subr.bf16.mxu0 %v8223
      %8885 = vmatpush1.bf16.msra.mxu0 %v8222
      %8886 = vmatprep.mubr.bf16.mxu0 %v6113
      %8887 = vmatmul.mubr.bf16.gmra.mrb[0].mxu0 %v6112
      %v8888 = vpop.f32.mrb[0].mxu0
      %v8889 = vadd.f32 %v7326, %v8888
      %v8890 = vpop.f32.mrb[0].mxu0
      %v8891 = vadd.f32 %v7327, %v8890
      %v8892 = vpop.f32.mrb[0].mxu0
      %v8893 = vpop.f32.mrb[0].mxu0
      %8894 = vdwg.mxu0
      %8895 = vmatprep.subr.bf16.mxu0 %v8231
      %8896 = vmatpush1.bf16.msra.mxu0 %v8230
      %8897 = vmatprep.subr.bf16.mxu0 %v8239
      %8898 = vmatpush1.bf16.msra.mxu0 %v8238
      %8899 = vmatprep.subr.bf16.mxu0 %v8247
      %8900 = vmatpush1.bf16.msra.mxu0 %v8246
      %8901 = vmatprep.subr.bf16.mxu0 %v8255
      %8902 = vmatpush1.bf16.msra.mxu0 %v8254
      %8903 = vmatprep.subr.bf16.mxu0 %v8263
      %8904 = vmatpush1.bf16.msra.mxu0 %v8262
      %8905 = vmatprep.subr.bf16.mxu0 %v8271
      %8906 = vmatpush1.bf16.msra.mxu0 %v8270
      %8907 = vmatprep.subr.bf16.mxu0 %v8279
      %8908 = vmatpush1.bf16.msra.mxu0 %v8278
      %8909 = vmatprep.subr.bf16.mxu0 %v8287
      %8910 = vmatpush1.bf16.msra.mxu0 %v8286
      %8911 = vmatprep.subr.bf16.mxu0 %v8295
      %8912 = vmatpush1.bf16.msra.mxu0 %v8294
      %8913 = vmatprep.subr.bf16.mxu0 %v8303
      %8914 = vmatpush1.bf16.msra.mxu0 %v8302
      %8915 = vmatprep.subr.bf16.mxu0 %v8311
      %8916 = vmatpush1.bf16.msra.mxu0 %v8310
      %8917 = vmatprep.subr.bf16.mxu0 %v8319
      %8918 = vmatpush1.bf16.msra.mxu0 %v8318
      %8919 = vmatprep.subr.bf16.mxu0 %v8327
      %8920 = vmatpush1.bf16.msra.mxu0 %v8326
      %8921 = vmatprep.subr.bf16.mxu0 %v8335
      %8922 = vmatpush1.bf16.msra.mxu0 %v8334
      %8923 = vmatprep.subr.bf16.mxu0 %v8343
      %8924 = vmatpush1.bf16.msra.mxu0 %v8342
      %8925 = vmatprep.subr.bf16.mxu0 %v8351
      %8926 = vmatpush1.bf16.msra.mxu0 %v8350
      %8927 = vmatprep.mubr.bf16.mxu0 %v6115
      %8928 = vmatmul.mubr.bf16.gmra.mrb[0].mxu0 %v6114
      %v8929 = vpop.f32.mrb[0].mxu0
      %v8930 = vadd.f32 %v8889, %v8929
      %v8931 = vpop.f32.mrb[0].mxu0
      %v8932 = vadd.f32 %v8891, %v8931
      %v8933 = vpop.f32.mrb[0].mxu0
      %v8934 = vpop.f32.mrb[0].mxu0
      %8935 = vdwg.mxu0
      %v8936 = vld [vmem:[#allocation4] sm:$0xff]
      %v8937 = vld [vmem:[#allocation4 + $0x8] sm:$0xff]
      %v8938 = vmul.f32 %v6935, 0.5
      %v8939 = vmul.f32 %v6937, 0.5
      %v8940 = vtanh.pop %v8938
      %v8941 = vtanh.pop %v8939
      %v8942 = vmul.f32 %v8940, 0.5
      %v8943 = vmul.f32 %v8941, 0.5
      %v8944 = vadd.f32 %v8942, 0.5
      %v8945 = vadd.f32 %v8943, 0.5
      %v8946 = vmul.f32 %v6976, 0.5
      %v8947 = vmul.f32 %v6978, 0.5
      %v8948 = vtanh.pop %v8946
      %v8949 = vtanh.pop %v8947
      %v8950 = vmul.f32 %v8948, 0.5
      %v8951 = vmul.f32 %v8949, 0.5
      %v8952 = vadd.f32 %v8950, 0.5
      %v8953 = vadd.f32 %v8951, 0.5
      %v8954 = vtanh.pop %v7017
      %v8955 = vtanh.pop %v7019
      %v8956 = vmul.f32 %v7058, 0.5
      %v8957 = vmul.f32 %v7060, 0.5
      %v8958 = vtanh.pop %v8956
      %v8959 = vtanh.pop %v8957
      %v8960 = vmul.f32 %v8958, 0.5
      %v8961 = vmul.f32 %v8959, 0.5
      %v8962 = vadd.f32 %v8960, 0.5
      %v8963 = vadd.f32 %v8961, 0.5
      %v8964 = vmul.f32 %v8952, %v8936
      %v8965 = vmul.f32 %v8953, %v8937
      %v8966 = vmul.f32 %v8944, %v8954
      %v8967 = vmul.f32 %v8945, %v8955
      %v8968 = vadd.f32 %v8964, %v8966
      %v8969 = vadd.f32 %v8965, %v8967
      %v8970 = vtanh.pop %v8968
      %v8971 = vtanh.pop %v8969
      %v8972 = vmul.f32 %v8962, %v8970
      %v8973 = vmul.f32 %v8963, %v8971
      %v8974 = vld [vmem:[#allocation5] sm:$0xff]
      %v8975 = vld [vmem:[#allocation5 + $0x8] sm:$0xff]
      %v8976 = vmul.f32 %v8684, 0.5
      %v8977 = vmul.f32 %v8686, 0.5
      %v8978 = vtanh.pop %v8976
      %v8979 = vtanh.pop %v8977
      %v8980 = vmul.f32 %v8978, 0.5
      %v8981 = vmul.f32 %v8979, 0.5
      %v8982 = vadd.f32 %v8980, 0.5
      %v8983 = vadd.f32 %v8981, 0.5
      %v8984 = vmul.f32 %v8766, 0.5
      %v8985 = vmul.f32 %v8768, 0.5
      %v8986 = vtanh.pop %v8984
      %v8987 = vtanh.pop %v8985
      %v8988 = vmul.f32 %v8986, 0.5
      %v8989 = vmul.f32 %v8987, 0.5
      %v8990 = vadd.f32 %v8988, 0.5
      %v8991 = vadd.f32 %v8989, 0.5
      %v8992 = vtanh.pop %v8848
      %v8993 = vtanh.pop %v8850
      %v8994 = vmul.f32 %v8930, 0.5
      %v8995 = vmul.f32 %v8932, 0.5
      %v8996 = vtanh.pop %v8994
      %v8997 = vtanh.pop %v8995
      %v8998 = vmul.f32 %v8996, 0.5
      %v8999 = vmul.f32 %v8997, 0.5
      %v9000 = vadd.f32 %v8998, 0.5
      %v9001 = vadd.f32 %v8999, 0.5
      %v9002 = vmul.f32 %v8990, %v8974
      %v9003 = vmul.f32 %v8991, %v8975
      %v9004 = vmul.f32 %v8982, %v8992
      %v9005 = vmul.f32 %v8983, %v8993
      %v9006 = vadd.f32 %v9002, %v9004
      %v9007 = vadd.f32 %v9003, %v9005
      %v9008 = vtanh.pop %v9006
      %v9009 = vtanh.pop %v9007
      %v9010 = vmul.f32 %v9000, %v9008
      %v9011 = vmul.f32 %v9001, %v9009
      %9012 = vst [vmem:[#allocation4] sm:$0xff] %v8968
      %9013 = vst [vmem:[#allocation4 + $0x8] sm:$0xff] %v8969
      %9014 = vst [vmem:[#allocation5] sm:$0xff] %v9006
      %9015 = vst [vmem:[#allocation5 + $0x8] sm:$0xff] %v9007
      %9016 = vst [vmem:[#allocation3] sm:$0xff] %v8972
      %9017 = vst [vmem:[#allocation3 + $0x8] sm:$0xff] %v8973
      %9018 = vst [vmem:[#allocation3 + $0x10] sm:$0xff] %v9010
      %9019 = vst [vmem:[#allocation3 + $0x18] sm:$0xff] %v9011
    $region42: #{lstm_model_forward.1} parent=1 // loop_footer
      %s3192 = sadd.s32 1, %s3188
    $region43: #{lstm_model_forward.1} parent=1 // loop_footer_branch
      %3187 = sbr.rel target = $region39
    $region44: #{lstm_model_forward.1} parent=1 // loop_exit
      _
    %v9020 = vld [vmem:[#allocation3 + $0x10] sm:$0xff]
    %v9021 = vld [vmem:[#allocation3 + $0x18] sm:$0xff]
    %v9022 = vld [vmem:[%s6] sm:$0xff]
    %v9023 = vld [vmem:[%s6 + $0x8] sm:$0xff]
    %v9024 = vld [vmem:[%s6 + $0x10] sm:$0xff]
    %v9025 = vld [vmem:[%s6 + $0x18] sm:$0xff]
    %v9026 = vld [vmem:[%s6 + $0x20] sm:$0xff]
    %v9027 = vld [vmem:[%s6 + $0x28] sm:$0xff]
    %v9028 = vld [vmem:[%s6 + $0x30] sm:$0xff]
    %v9029 = vld [vmem:[%s6 + $0x38] sm:$0xff]
    %v9030 = vld [vmem:[%s6 + $0x40] sm:$0xff]
    %v9031 = vld [vmem:[%s6 + $0x48] sm:$0xff]
    %v9032 = vld [vmem:[%s6 + $0x50] sm:$0xff]
    %v9033 = vld [vmem:[%s6 + $0x58] sm:$0xff]
    %v9034 = vld [vmem:[%s6 + $0x60] sm:$0xff]
    %v9035 = vld [vmem:[%s6 + $0x68] sm:$0xff]
    %v9036 = vld [vmem:[%s6 + $0x70] sm:$0xff]
    %v9037 = vld [vmem:[%s6 + $0x78] sm:$0xff]
    %v9038 = vld [vmem:[%s6 + $0x80] sm:$0xff]
    %v9039 = vld [vmem:[%s6 + $0x88] sm:$0xff]
    %v9040 = vld [vmem:[%s6 + $0x90] sm:$0xff]
    %v9041 = vld [vmem:[%s6 + $0x98] sm:$0xff]
    %v9042 = vld [vmem:[%s6 + $0xa0] sm:$0xff]
    %v9043 = vld [vmem:[%s6 + $0xa8] sm:$0xff]
    %v9044 = vld [vmem:[%s6 + $0xb0] sm:$0xff]
    %v9045 = vld [vmem:[%s6 + $0xb8] sm:$0xff]
    %v9046 = vld [vmem:[%s6 + $0xc0] sm:$0xff]
    %v9047 = vld [vmem:[%s6 + $0xc8] sm:$0xff]
    %v9048 = vld [vmem:[%s6 + $0xd0] sm:$0xff]
    %v9049 = vld [vmem:[%s6 + $0xd8] sm:$0xff]
    %v9050 = vld [vmem:[%s6 + $0xe0] sm:$0xff]
    %v9051 = vld [vmem:[%s6 + $0xe8] sm:$0xff]
    %v9052 = vld [vmem:[%s6 + $0xf0] sm:$0xff]
    %v9053 = vld [vmem:[%s6 + $0xf8] sm:$0xff]
    %v9054 = vld [vmem:[#allocation6] sm:$0x1]
    %v9056 = vlaneseq
    %v9057 = vshrl.u32 %v9056, 7
    %v9058 = vsub.s32 0, %v9057
    %v9059 = vrot.slane %v9054, %v9058
    %9061 = vmatprep.subr.mxu0 0.0
    %9062 = vmatpush1.msra.mxu0 %v9022
    %9063 = vmatprep.subr.mxu0 0.0
    %9064 = vmatpush1.msra.mxu0 %v9023
    %9065 = vmatprep.subr.mxu0 0.0
    %9066 = vmatpush1.msra.mxu0 %v9024
    %9067 = vmatprep.subr.mxu0 0.0
    %9068 = vmatpush1.msra.mxu0 %v9025
    %9069 = vmatprep.subr.mxu0 0.0
    %9070 = vmatpush1.msra.mxu0 %v9026
    %9071 = vmatprep.subr.mxu0 0.0
    %9072 = vmatpush1.msra.mxu0 %v9027
    %9073 = vmatprep.subr.mxu0 0.0
    %9074 = vmatpush1.msra.mxu0 %v9028
    %9075 = vmatprep.subr.mxu0 0.0
    %9076 = vmatpush1.msra.mxu0 %v9029
    %9077 = vmatprep.subr.mxu0 0.0
    %9078 = vmatpush1.msra.mxu0 %v9030
    %9079 = vmatprep.subr.mxu0 0.0
    %9080 = vmatpush1.msra.mxu0 %v9031
    %9081 = vmatprep.subr.mxu0 0.0
    %9082 = vmatpush1.msra.mxu0 %v9032
    %9083 = vmatprep.subr.mxu0 0.0
    %9084 = vmatpush1.msra.mxu0 %v9033
    %9085 = vmatprep.subr.mxu0 0.0
    %9086 = vmatpush1.msra.mxu0 %v9034
    %9087 = vmatprep.subr.mxu0 0.0
    %9088 = vmatpush1.msra.mxu0 %v9035
    %9089 = vmatprep.subr.mxu0 0.0
    %9090 = vmatpush1.msra.mxu0 %v9036
    %9091 = vmatprep.subr.mxu0 0.0
    %9092 = vmatpush1.msra.mxu0 %v9037
    %9093 = vmatprep.subr.mxu0 0.0
    %9094 = vmatpush1.msra.mxu0 %v9038
    %9095 = vmatprep.subr.mxu0 0.0
    %9096 = vmatpush1.msra.mxu0 %v9039
    %9097 = vmatprep.subr.mxu0 0.0
    %9098 = vmatpush1.msra.mxu0 %v9040
    %9099 = vmatprep.subr.mxu0 0.0
    %9100 = vmatpush1.msra.mxu0 %v9041
    %9101 = vmatprep.subr.mxu0 0.0
    %9102 = vmatpush1.msra.mxu0 %v9042
    %9103 = vmatprep.subr.mxu0 0.0
    %9104 = vmatpush1.msra.mxu0 %v9043
    %9105 = vmatprep.subr.mxu0 0.0
    %9106 = vmatpush1.msra.mxu0 %v9044
    %9107 = vmatprep.subr.mxu0 0.0
    %9108 = vmatpush1.msra.mxu0 %v9045
    %9109 = vmatprep.subr.mxu0 0.0
    %9110 = vmatpush1.msra.mxu0 %v9046
    %9111 = vmatprep.subr.mxu0 0.0
    %9112 = vmatpush1.msra.mxu0 %v9047
    %9113 = vmatprep.subr.mxu0 0.0
    %9114 = vmatpush1.msra.mxu0 %v9048
    %9115 = vmatprep.subr.mxu0 0.0
    %9116 = vmatpush1.msra.mxu0 %v9049
    %9117 = vmatprep.subr.mxu0 0.0
    %9118 = vmatpush1.msra.mxu0 %v9050
    %9119 = vmatprep.subr.mxu0 0.0
    %9120 = vmatpush1.msra.mxu0 %v9051
    %9121 = vmatprep.subr.mxu0 0.0
    %9122 = vmatpush1.msra.mxu0 %v9052
    %9123 = vmatprep.subr.mxu0 0.0
    %9124 = vmatpush1.msra.mxu0 %v9053
    %9125 = vmatprep.mubr.f32.mxu0 %v9021
    %9126 = vmatmul.mubr.f32.gmra.mrb[0].mxu0 %v9020
    %v9127 = vpop.f32.mrb[0].mxu0
    %v9128 = vadd.f32 %v9059, %v9127
    %v9129 = vpop.f32.mrb[0].mxu0
    %9130 = vdwg.mxu0
    %vm9131 = vcmask 7168
    %9132 = vst.msk [vmem:[%s8] sm:$0xff] %vm9131, %v9128
    // Predicated region
    $region45: #{lstm_model_forward.1} parent=1 // pred_check
      _
    $region46: #{lstm_model_forward.1} parent=1 // pred_check_branch
      %9134 = sbr.rel (0) target = $region48
    $region47: #{lstm_model_forward.1} parent=1 // pred_region
      _
    $region48: #{lstm_model_forward.1} parent=1 // pred_fallthru
      _
    // Predicated region
    $region49: #{lstm_model_forward.1} parent=1 // pred_check
      _
    $region50: #{lstm_model_forward.1} parent=1 // pred_check_branch
      %9136 = sbr.rel (0) target = $region52
    $region51: #{lstm_model_forward.1} parent=1 // pred_region
      _
    $region52: #{lstm_model_forward.1} parent=1 // pred_fallthru
      _
    %9137 = vsyncpa [#allocation8], 1

</llo_original>
